<compile_context>
chip_gen: v5e
topology: v5e:2x2
jax: 0.10.0
libtpu: 0.0.40
codegen_flags: <defaults>
</compile_context>

<pallas_src>
import functools
import math

import jax
import jax.numpy as jnp
from jax import lax
from jax.experimental import pallas as pl
from jax.experimental.pallas import tpu as pltpu

_EPS = 1e-6
_NEG_INF = -1e9


# ----------------------------------------------------------------------------
# In-kernel helpers (traced inside the Pallas kernels)
# ----------------------------------------------------------------------------

def _prenorm(x, g, b):
    """Reference LayerNorm: g * (x - mean) / (std_unbiased + eps) + b."""
    d = x.shape[-1]
    mean = jnp.mean(x, axis=-1, keepdims=True)
    var = jnp.sum((x - mean) ** 2, axis=-1, keepdims=True) * (1.0 / (d - 1))
    inv = pl.reciprocal(jnp.sqrt(var) + _EPS, approx=False)
    return g * (x - mean) * inv + b


def _mha_heads_and_outproj(q, k, v, mask, wo, num_heads):
    """All-heads scaled-dot-product attention with the output projection folded in.

    q: (Sq, D)  k, v: (Sk, D)  mask: (Sq, Sk) or (1, Sk) int32  wo: (D, D)
    Returns (Sq, D) == concat_h(softmax(q_h k_h^T / sqrt(dk)) v_h) @ Wo  (no bias).
    """
    d = q.shape[-1]
    dk = d // num_heads
    scale = 1.0 / math.sqrt(dk)
    out = None
    for h in range(num_heads):
        sl = slice(h * dk, (h + 1) * dk)
        # q_h @ k_h^T without an explicit transpose (contract last axes of both).
        s = lax.dot_general(q[:, sl], k[:, sl], (((1,), (1,)), ((), ())),
                            preferred_element_type=jnp.float32) * scale
        s = jnp.where(mask == 0, _NEG_INF, s)
        s = s - jnp.max(s, axis=-1, keepdims=True)
        p = jnp.exp(s)
        p = p * pl.reciprocal(jnp.sum(p, axis=-1, keepdims=True), approx=True)
        ctx = jnp.dot(p, v[:, sl], preferred_element_type=jnp.float32)      # (Sq, dk)
        contrib = jnp.dot(ctx, wo[sl, :], preferred_element_type=jnp.float32)  # (Sq, D)
        out = contrib if out is None else out + contrib
    return out


# ----------------------------------------------------------------------------
# Fused sublayer kernels (one pallas_call per sublayer, grid over batch)
# ----------------------------------------------------------------------------

def _self_attn_sublayer_kernel(x_ref, mask_ref, g_ref, b_ref,
                               wqkv_ref, bqkv_ref, wo_ref, bo_ref,
                               o_ref, *, num_heads):
    x = x_ref[0].astype(jnp.float32)                       # (Sq, D)
    d = x.shape[-1]
    y = _prenorm(x, g_ref[...], b_ref[...])
    # Fused QKV projection against concatenated (D, 3D) weight.
    qkv = jnp.dot(y, wqkv_ref[...], preferred_element_type=jnp.float32) + bqkv_ref[...]
    q = qkv[:, :d]
    k = qkv[:, d:2 * d]
    v = qkv[:, 2 * d:]
    mask = mask_ref[0]                                     # (Sq, Sq) int32
    attn = _mha_heads_and_outproj(q, k, v, mask, wo_ref[...], num_heads)
    o_ref[0] = (x + attn + bo_ref[...]).astype(o_ref.dtype)   # residual fused in


def _src_attn_sublayer_kernel(x_ref, mem_ref, mask_ref, g_ref, b_ref,
                              wq_ref, bq_ref, wkv_ref, bkv_ref, wo_ref, bo_ref,
                              o_ref, *, num_heads):
    x = x_ref[0].astype(jnp.float32)                       # (Sq, D)
    d = x.shape[-1]
    y = _prenorm(x, g_ref[...], b_ref[...])
    q = jnp.dot(y, wq_ref[...], preferred_element_type=jnp.float32) + bq_ref[...]
    m = mem_ref[0].astype(jnp.float32)                     # memory is NOT normed (ref)
    kv = jnp.dot(m, wkv_ref[...], preferred_element_type=jnp.float32) + bkv_ref[...]
    k = kv[:, :d]
    v = kv[:, d:]
    mask = mask_ref[0]                                     # (1, Sk) int32, broadcasts
    attn = _mha_heads_and_outproj(q, k, v, mask, wo_ref[...], num_heads)
    o_ref[0] = (x + attn + bo_ref[...]).astype(o_ref.dtype)


def _ffn_sublayer_kernel(x_ref, g_ref, b_ref, w1_ref, b1_ref, w2_ref, b2_ref, o_ref):
    x = x_ref[0].astype(jnp.float32)                       # (S, D)
    y = _prenorm(x, g_ref[...], b_ref[...])
    h = jnp.dot(y, w1_ref[...], preferred_element_type=jnp.float32) + b1_ref[...]
    h = jnp.maximum(h, 0.0)
    out = jnp.dot(h, w2_ref[...], preferred_element_type=jnp.float32) + b2_ref[...]
    o_ref[0] = (x + out).astype(o_ref.dtype)               # residual fused in


def _final_norm_kernel(x_ref, g_ref, b_ref, o_ref):
    x = x_ref[0].astype(jnp.float32)
    o_ref[0] = _prenorm(x, g_ref[...], b_ref[...]).astype(o_ref.dtype)


# ----------------------------------------------------------------------------
# pallas_call wrappers
# ----------------------------------------------------------------------------

def _cparams():
    return pltpu.CompilerParams(
        dimension_semantics=("parallel",),
        vmem_limit_bytes=32 * 1024 * 1024,
    )


def self_attn_sublayer(x, tgt_mask, ln_g, ln_b, p, num_heads):
    B, Sq, D = x.shape
    kernel = functools.partial(_self_attn_sublayer_kernel, num_heads=num_heads)
    return pl.pallas_call(
        kernel,
        out_shape=jax.ShapeDtypeStruct((B, Sq, D), x.dtype),
        grid=(B,),
        in_specs=[
            pl.BlockSpec((1, Sq, D), lambda b: (b, 0, 0)),
            pl.BlockSpec((1, Sq, Sq), lambda b: (b, 0, 0)),
            pl.BlockSpec((1, D), lambda b: (0, 0)),
            pl.BlockSpec((1, D), lambda b: (0, 0)),
            pl.BlockSpec((D, 3 * D), lambda b: (0, 0)),   # weights stay VMEM-resident
            pl.BlockSpec((1, 3 * D), lambda b: (0, 0)),
            pl.BlockSpec((D, D), lambda b: (0, 0)),
            pl.BlockSpec((1, D), lambda b: (0, 0)),
        ],
        out_specs=pl.BlockSpec((1, Sq, D), lambda b: (b, 0, 0)),
        compiler_params=_cparams(),
    )(x, tgt_mask, ln_g.reshape(1, D), ln_b.reshape(1, D),
      p["wqkv"], p["bqkv"].reshape(1, 3 * D), p["wo"], p["bo"].reshape(1, D))


def src_attn_sublayer(x, memory, src_mask, ln_g, ln_b, p, num_heads):
    B, Sq, D = x.shape
    Sk = memory.shape[1]
    kernel = functools.partial(_src_attn_sublayer_kernel, num_heads=num_heads)
    return pl.pallas_call(
        kernel,
        out_shape=jax.ShapeDtypeStruct((B, Sq, D), x.dtype),
        grid=(B,),
        in_specs=[
            pl.BlockSpec((1, Sq, D), lambda b: (b, 0, 0)),
            pl.BlockSpec((1, Sk, D), lambda b: (b, 0, 0)),
            pl.BlockSpec((1, 1, Sk), lambda b: (b, 0, 0)),
            pl.BlockSpec((1, D), lambda b: (0, 0)),
            pl.BlockSpec((1, D), lambda b: (0, 0)),
            pl.BlockSpec((D, D), lambda b: (0, 0)),
            pl.BlockSpec((1, D), lambda b: (0, 0)),
            pl.BlockSpec((D, 2 * D), lambda b: (0, 0)),
            pl.BlockSpec((1, 2 * D), lambda b: (0, 0)),
            pl.BlockSpec((D, D), lambda b: (0, 0)),
            pl.BlockSpec((1, D), lambda b: (0, 0)),
        ],
        out_specs=pl.BlockSpec((1, Sq, D), lambda b: (b, 0, 0)),
        compiler_params=_cparams(),
    )(x, memory, src_mask, ln_g.reshape(1, D), ln_b.reshape(1, D),
      p["wq"], p["bq"].reshape(1, D), p["wkv"], p["bkv"].reshape(1, 2 * D),
      p["wo"], p["bo"].reshape(1, D))


def ffn_sublayer(x, ln_g, ln_b, w1, b1, w2, b2):
    B, S, D = x.shape
    Dff = w1.shape[1]
    return pl.pallas_call(
        _ffn_sublayer_kernel,
        out_shape=jax.ShapeDtypeStruct((B, S, D), x.dtype),
        grid=(B,),
        in_specs=[
            pl.BlockSpec((1, S, D), lambda b: (b, 0, 0)),
            pl.BlockSpec((1, D), lambda b: (0, 0)),
            pl.BlockSpec((1, D), lambda b: (0, 0)),
            pl.BlockSpec((D, Dff), lambda b: (0, 0)),
            pl.BlockSpec((1, Dff), lambda b: (0, 0)),
            pl.BlockSpec((Dff, D), lambda b: (0, 0)),
            pl.BlockSpec((1, D), lambda b: (0, 0)),
        ],
        out_specs=pl.BlockSpec((1, S, D), lambda b: (b, 0, 0)),
        compiler_params=_cparams(),
    )(x, ln_g.reshape(1, D), ln_b.reshape(1, D),
      w1, b1.reshape(1, Dff), w2, b2.reshape(1, D))


def final_layernorm(x, gamma, beta):
    B, S, D = x.shape
    return pl.pallas_call(
        _final_norm_kernel,
        out_shape=jax.ShapeDtypeStruct((B, S, D), x.dtype),
        grid=(B,),
        in_specs=[
            pl.BlockSpec((1, S, D), lambda b: (b, 0, 0)),
            pl.BlockSpec((1, D), lambda b: (0, 0)),
            pl.BlockSpec((1, D), lambda b: (0, 0)),
        ],
        out_specs=pl.BlockSpec((1, S, D), lambda b: (b, 0, 0)),
        compiler_params=_cparams(),
    )(x, gamma.reshape(1, D), beta.reshape(1, D))


# ----------------------------------------------------------------------------
# Decoder forward (parameter plumbing only; all hot math lives in the kernels)
# ----------------------------------------------------------------------------

def decoder_forward(x, memory, src_mask, tgt_mask, params, num_heads):
    # Masks as int32 (cheaper DMA than broadcast f32; exact 0/1 semantics).
    tgt_mask_i = (tgt_mask != 0).astype(jnp.int32)
    src_mask_i = (src_mask != 0).astype(jnp.int32)
    for lp in params["layers"]:
        # sublayer 0: pre-norm self-attention + residual (fully fused kernel)
        x = self_attn_sublayer(x, tgt_mask_i, lp["ln0_g"], lp["ln0_b"],
                               lp["self_attn"], num_heads)
        # sublayer 1: pre-norm source attention (memory NOT normed) + residual
        x = src_attn_sublayer(x, memory, src_mask_i, lp["ln1_g"], lp["ln1_b"],
                              lp["src_attn"], num_heads)
        # sublayer 2: pre-norm position-wise feed-forward + residual
        x = ffn_sublayer(x, lp["ln2_g"], lp["ln2_b"],
                         lp["w1"], lp["b1"], lp["w2"], lp["b2"])
    return final_layernorm(x, params["norm_g"], params["norm_b"])


def init_params(key, d_model, d_ff, n_layers):
    def lin(k, din, dout):
        k1, k2 = jax.random.split(k)
        w = jax.random.normal(k1, (din, dout), jnp.float32) / jnp.sqrt(din)
        b = 0.01 * jax.random.normal(k2, (dout,), jnp.float32)
        return w, b

    def self_attn_params(k):
        ks = jax.random.split(k, 4)
        wq, bq = lin(ks[0], d_model, d_model)
        wk, bk = lin(ks[1], d_model, d_model)
        wv, bv = lin(ks[2], d_model, d_model)
        wo, bo = lin(ks[3], d_model, d_model)
        return dict(wqkv=jnp.concatenate([wq, wk, wv], axis=1),
                    bqkv=jnp.concatenate([bq, bk, bv]),
                    wo=wo, bo=bo)

    def src_attn_params(k):
        ks = jax.random.split(k, 4)
        wq, bq = lin(ks[0], d_model, d_model)
        wk, bk = lin(ks[1], d_model, d_model)
        wv, bv = lin(ks[2], d_model, d_model)
        wo, bo = lin(ks[3], d_model, d_model)
        return dict(wq=wq, bq=bq,
                    wkv=jnp.concatenate([wk, wv], axis=1),
                    bkv=jnp.concatenate([bk, bv]),
                    wo=wo, bo=bo)

    layers = []
    keys = jax.random.split(key, n_layers + 1)
    for i in range(n_layers):
        ks = jax.random.split(keys[i], 4)
        w1, b1 = lin(ks[2], d_model, d_ff)
        w2, b2 = lin(ks[3], d_ff, d_model)
        layers.append(dict(
            self_attn=self_attn_params(ks[0]),
            src_attn=src_attn_params(ks[1]),
            w1=w1, b1=b1, w2=w2, b2=b2,
            ln0_g=jnp.ones((d_model,), jnp.float32), ln0_b=jnp.zeros((d_model,), jnp.float32),
            ln1_g=jnp.ones((d_model,), jnp.float32), ln1_b=jnp.zeros((d_model,), jnp.float32),
            ln2_g=jnp.ones((d_model,), jnp.float32), ln2_b=jnp.zeros((d_model,), jnp.float32),
        ))
    return dict(
        layers=layers,
        norm_g=jnp.ones((d_model,), jnp.float32),
        norm_b=jnp.zeros((d_model,), jnp.float32),
    )


if __name__ == "__main__":
    B, S_DEC, S_ENC = 2, 8, 16
    D_MODEL, D_FF, HEADS, N_LAYERS = 32, 64, 4, 2

    key = jax.random.PRNGKey(0)
    kx, km, kp = jax.random.split(key, 3)

    x = jax.random.normal(kx, (B, S_DEC, D_MODEL), jnp.float32)
    memory = jax.random.normal(km, (B, S_ENC, D_MODEL), jnp.float32)

    # src_mask: (B, 1, S_enc) — second batch has 4 padded (masked) encoder positions
    src_mask = jnp.ones((B, 1, S_ENC), jnp.float32).at[1, 0, S_ENC - 4:].set(0.0)
    # tgt_mask: (B, S_dec, S_dec) — causal (subsequent) masking
    tgt_mask = jnp.broadcast_to(
        jnp.tril(jnp.ones((S_DEC, S_DEC), jnp.float32)), (B, S_DEC, S_DEC))

    params = init_params(kp, D_MODEL, D_FF, N_LAYERS)

    fwd = jax.jit(lambda x, m, sm, tm, p: decoder_forward(x, m, sm, tm, p, HEADS))
    out = fwd(x, memory, src_mask, tgt_mask, params)
    out = jax.block_until_ready(out)

    assert out.shape == (B, S_DEC, D_MODEL)
    assert bool(jnp.all(jnp.isfinite(out)))
    print("KERNEL_OK")
</pallas_src>

<mosaic_0001>
module attributes {stable_mosaic.version = 11 : i64} {
  func.func @_self_attn_sublayer_kernel(%arg0: i32, %arg1: memref<1x8x32xf32, #tpu.memory_space<vmem>>, %arg2: memref<1x8x8xi32, #tpu.memory_space<vmem>>, %arg3: memref<1x32xf32, #tpu.memory_space<vmem>>, %arg4: memref<1x32xf32, #tpu.memory_space<vmem>>, %arg5: memref<32x96xf32, #tpu.memory_space<vmem>>, %arg6: memref<1x96xf32, #tpu.memory_space<vmem>>, %arg7: memref<32x32xf32, #tpu.memory_space<vmem>>, %arg8: memref<1x32xf32, #tpu.memory_space<vmem>>, %arg9: memref<1x8x32xf32, #tpu.memory_space<vmem>>) attributes {dimension_semantics = [#tpu.dimension_semantics<parallel>], iteration_bounds = array<i64: 2>, scalar_prefetch = 0 : i64, scratch_operands = 0 : i64, tpu.core_type = #tpu.core_type<tc>, window_params = [{transform_indices = @transform_0, window_bounds = array<i64: 1, 8, 32>}, {transform_indices = @transform_1, window_bounds = array<i64: 1, 8, 8>}, {pipeline_mode = #tpu.pipeline_mode<synchronous>, transform_indices = @transform_2, window_bounds = array<i64: 1, 32>}, {pipeline_mode = #tpu.pipeline_mode<synchronous>, transform_indices = @transform_3, window_bounds = array<i64: 1, 32>}, {pipeline_mode = #tpu.pipeline_mode<synchronous>, transform_indices = @transform_4, window_bounds = array<i64: 32, 96>}, {pipeline_mode = #tpu.pipeline_mode<synchronous>, transform_indices = @transform_5, window_bounds = array<i64: 1, 96>}, {pipeline_mode = #tpu.pipeline_mode<synchronous>, transform_indices = @transform_6, window_bounds = array<i64: 32, 32>}, {pipeline_mode = #tpu.pipeline_mode<synchronous>, transform_indices = @transform_7, window_bounds = array<i64: 1, 32>}, {transform_indices = @transform_8, window_bounds = array<i64: 1, 8, 32>}]} {
    %c0 = arith.constant 0 : index
    %c0_0 = arith.constant 0 : index
    %c0_1 = arith.constant 0 : index
    %0 = vector.load %arg1[%c0, %c0_0, %c0_1] : memref<1x8x32xf32, #tpu.memory_space<vmem>>, vector<1x8x32xf32>
    %1 = vector.shape_cast %0 : vector<1x8x32xf32> to vector<8x32xf32>
    %c0_2 = arith.constant 0 : index
    %c0_3 = arith.constant 0 : index
    %2 = vector.load %arg3[%c0_2, %c0_3] : memref<1x32xf32, #tpu.memory_space<vmem>>, vector<1x32xf32>
    %c0_4 = arith.constant 0 : index
    %c0_5 = arith.constant 0 : index
    %3 = vector.load %arg4[%c0_4, %c0_5] : memref<1x32xf32, #tpu.memory_space<vmem>>, vector<1x32xf32>
    %cst = arith.constant dense<0.000000e+00> : vector<8xf32>
    %4 = vector.multi_reduction <add>, %1, %cst [1] : vector<8x32xf32> to vector<8xf32>
    %5 = vector.shape_cast %4 : vector<8xf32> to vector<8x1xf32>
    %cst_6 = arith.constant 3.200000e+01 : f32
    %6 = vector.broadcast %cst_6 : f32 to vector<8x1xf32>
    %7 = arith.divf %5, %6 : vector<8x1xf32>
    %8 = vector.broadcast %7 : vector<8x1xf32> to vector<8x32xf32>
    %9 = arith.subf %1, %8 : vector<8x32xf32>
    %10 = arith.mulf %9, %9 : vector<8x32xf32>
    %cst_7 = arith.constant dense<0.000000e+00> : vector<8xf32>
    %11 = vector.multi_reduction <add>, %10, %cst_7 [1] : vector<8x32xf32> to vector<8xf32>
    %12 = vector.shape_cast %11 : vector<8xf32> to vector<8x1xf32>
    %cst_8 = arith.constant 0.0322580636 : f32
    %13 = vector.broadcast %cst_8 : f32 to vector<8x1xf32>
    %14 = arith.mulf %12, %13 : vector<8x1xf32>
    %15 = math.sqrt %14 : vector<8x1xf32>
    %cst_9 = arith.constant 9.99999997E-7 : f32
    %16 = vector.broadcast %cst_9 : f32 to vector<8x1xf32>
    %17 = arith.addf %15, %16 : vector<8x1xf32>
    %18 = tpu.reciprocal %17 : vector<8x1xf32> -> vector<8x1xf32>
    %19 = vector.broadcast %7 : vector<8x1xf32> to vector<8x32xf32>
    %20 = arith.subf %1, %19 : vector<8x32xf32>
    %21 = vector.broadcast %2 : vector<1x32xf32> to vector<8x32xf32>
    %22 = arith.mulf %21, %20 : vector<8x32xf32>
    %23 = vector.broadcast %18 : vector<8x1xf32> to vector<8x32xf32>
    %24 = arith.mulf %22, %23 : vector<8x32xf32>
    %25 = vector.broadcast %3 : vector<1x32xf32> to vector<8x32xf32>
    %26 = arith.addf %24, %25 : vector<8x32xf32>
    %c0_10 = arith.constant 0 : index
    %c0_11 = arith.constant 0 : index
    %27 = vector.load %arg5[%c0_10, %c0_11] : memref<32x96xf32, #tpu.memory_space<vmem>>, vector<32x96xf32>
    %cst_12 = arith.constant dense<0.000000e+00> : vector<8x96xf32>
    %28 = tpu.matmul %26, %27, %cst_12 {dimension_numbers = #tpu.dot_dimension_numbers<[1], [0], [0], [1], [0, 0, 1, 1], [], []>} : vector<8x32xf32>, vector<32x96xf32>, vector<8x96xf32> -> vector<8x96xf32>
    %c0_13 = arith.constant 0 : index
    %c0_14 = arith.constant 0 : index
    %29 = vector.load %arg6[%c0_13, %c0_14] : memref<1x96xf32, #tpu.memory_space<vmem>>, vector<1x96xf32>
    %30 = vector.broadcast %29 : vector<1x96xf32> to vector<8x96xf32>
    %31 = arith.addf %28, %30 : vector<8x96xf32>
    %32 = vector.extract_strided_slice %31 {offsets = [0, 0], sizes = [8, 32], strides = [1, 1]} : vector<8x96xf32> to vector<8x32xf32>
    %33 = vector.extract_strided_slice %31 {offsets = [0, 32], sizes = [8, 32], strides = [1, 1]} : vector<8x96xf32> to vector<8x32xf32>
    %34 = vector.extract_strided_slice %31 {offsets = [0, 64], sizes = [8, 32], strides = [1, 1]} : vector<8x96xf32> to vector<8x32xf32>
    %c0_15 = arith.constant 0 : index
    %c0_16 = arith.constant 0 : index
    %c0_17 = arith.constant 0 : index
    %35 = vector.load %arg2[%c0_15, %c0_16, %c0_17] : memref<1x8x8xi32, #tpu.memory_space<vmem>>, vector<1x8x8xi32>
    %36 = vector.shape_cast %35 : vector<1x8x8xi32> to vector<8x8xi32>
    %c0_18 = arith.constant 0 : index
    %c0_19 = arith.constant 0 : index
    %37 = vector.load %arg7[%c0_18, %c0_19] : memref<32x32xf32, #tpu.memory_space<vmem>>, vector<32x32xf32>
    %38 = vector.extract_strided_slice %32 {offsets = [0, 0], sizes = [8, 8], strides = [1, 1]} : vector<8x32xf32> to vector<8x8xf32>
    %39 = vector.extract_strided_slice %33 {offsets = [0, 0], sizes = [8, 8], strides = [1, 1]} : vector<8x32xf32> to vector<8x8xf32>
    %cst_20 = arith.constant dense<0.000000e+00> : vector<8x8xf32>
    %40 = tpu.matmul %38, %39, %cst_20 {dimension_numbers = #tpu.dot_dimension_numbers<[1], [1], [0], [0], [0, 0, 1, 0], [], []>} : vector<8x8xf32>, vector<8x8xf32>, vector<8x8xf32> -> vector<8x8xf32>
    %cst_21 = arith.constant 0.353553385 : f32
    %41 = vector.broadcast %cst_21 : f32 to vector<8x8xf32>
    %42 = arith.mulf %40, %41 : vector<8x8xf32>
    %c0_i32 = arith.constant 0 : i32
    %43 = vector.broadcast %c0_i32 : i32 to vector<8x8xi32>
    %44 = arith.cmpi eq, %36, %43 : vector<8x8xi32>
    %cst_22 = arith.constant -1.000000e+09 : f32
    %45 = vector.broadcast %cst_22 : f32 to vector<8x8xf32>
    %46 = arith.select %44, %45, %42 : vector<8x8xi1>, vector<8x8xf32>
    %cst_23 = arith.constant dense<0xFF800000> : vector<8xf32>
    %47 = vector.multi_reduction <maximumf>, %46, %cst_23 [1] : vector<8x8xf32> to vector<8xf32>
    %48 = vector.shape_cast %47 : vector<8xf32> to vector<8x1xf32>
    %49 = vector.broadcast %48 : vector<8x1xf32> to vector<8x8xf32>
    %50 = arith.subf %46, %49 : vector<8x8xf32>
    %51 = math.exp %50 : vector<8x8xf32>
    %cst_24 = arith.constant dense<0.000000e+00> : vector<8xf32>
    %52 = vector.multi_reduction <add>, %51, %cst_24 [1] : vector<8x8xf32> to vector<8xf32>
    %53 = vector.shape_cast %52 : vector<8xf32> to vector<8x1xf32>
    %54 = tpu.reciprocal %53 {approx = true} : vector<8x1xf32> -> vector<8x1xf32>
    %55 = vector.broadcast %54 : vector<8x1xf32> to vector<8x8xf32>
    %56 = arith.mulf %51, %55 : vector<8x8xf32>
    %57 = vector.extract_strided_slice %34 {offsets = [0, 0], sizes = [8, 8], strides = [1, 1]} : vector<8x32xf32> to vector<8x8xf32>
    %cst_25 = arith.constant dense<0.000000e+00> : vector<8x8xf32>
    %58 = tpu.matmul %56, %57, %cst_25 {dimension_numbers = #tpu.dot_dimension_numbers<[1], [0], [0], [1], [0, 0, 1, 1], [], []>} : vector<8x8xf32>, vector<8x8xf32>, vector<8x8xf32> -> vector<8x8xf32>
    %59 = vector.extract_strided_slice %37 {offsets = [0, 0], sizes = [8, 32], strides = [1, 1]} : vector<32x32xf32> to vector<8x32xf32>
    %cst_26 = arith.constant dense<0.000000e+00> : vector<8x32xf32>
    %60 = tpu.matmul %58, %59, %cst_26 {dimension_numbers = #tpu.dot_dimension_numbers<[1], [0], [0], [1], [0, 0, 1, 1], [], []>} : vector<8x8xf32>, vector<8x32xf32>, vector<8x32xf32> -> vector<8x32xf32>
    %61 = vector.extract_strided_slice %32 {offsets = [0, 8], sizes = [8, 8], strides = [1, 1]} : vector<8x32xf32> to vector<8x8xf32>
    %62 = vector.extract_strided_slice %33 {offsets = [0, 8], sizes = [8, 8], strides = [1, 1]} : vector<8x32xf32> to vector<8x8xf32>
    %cst_27 = arith.constant dense<0.000000e+00> : vector<8x8xf32>
    %63 = tpu.matmul %61, %62, %cst_27 {dimension_numbers = #tpu.dot_dimension_numbers<[1], [1], [0], [0], [0, 0, 1, 0], [], []>} : vector<8x8xf32>, vector<8x8xf32>, vector<8x8xf32> -> vector<8x8xf32>
    %cst_28 = arith.constant 0.353553385 : f32
    %64 = vector.broadcast %cst_28 : f32 to vector<8x8xf32>
    %65 = arith.mulf %63, %64 : vector<8x8xf32>
    %c0_i32_29 = arith.constant 0 : i32
    %66 = vector.broadcast %c0_i32_29 : i32 to vector<8x8xi32>
    %67 = arith.cmpi eq, %36, %66 : vector<8x8xi32>
    %cst_30 = arith.constant -1.000000e+09 : f32
    %68 = vector.broadcast %cst_30 : f32 to vector<8x8xf32>
    %69 = arith.select %67, %68, %65 : vector<8x8xi1>, vector<8x8xf32>
    %cst_31 = arith.constant dense<0xFF800000> : vector<8xf32>
    %70 = vector.multi_reduction <maximumf>, %69, %cst_31 [1] : vector<8x8xf32> to vector<8xf32>
    %71 = vector.shape_cast %70 : vector<8xf32> to vector<8x1xf32>
    %72 = vector.broadcast %71 : vector<8x1xf32> to vector<8x8xf32>
    %73 = arith.subf %69, %72 : vector<8x8xf32>
    %74 = math.exp %73 : vector<8x8xf32>
    %cst_32 = arith.constant dense<0.000000e+00> : vector<8xf32>
    %75 = vector.multi_reduction <add>, %74, %cst_32 [1] : vector<8x8xf32> to vector<8xf32>
    %76 = vector.shape_cast %75 : vector<8xf32> to vector<8x1xf32>
    %77 = tpu.reciprocal %76 {approx = true} : vector<8x1xf32> -> vector<8x1xf32>
    %78 = vector.broadcast %77 : vector<8x1xf32> to vector<8x8xf32>
    %79 = arith.mulf %74, %78 : vector<8x8xf32>
    %80 = vector.extract_strided_slice %34 {offsets = [0, 8], sizes = [8, 8], strides = [1, 1]} : vector<8x32xf32> to vector<8x8xf32>
    %cst_33 = arith.constant dense<0.000000e+00> : vector<8x8xf32>
    %81 = tpu.matmul %79, %80, %cst_33 {dimension_numbers = #tpu.dot_dimension_numbers<[1], [0], [0], [1], [0, 0, 1, 1], [], []>} : vector<8x8xf32>, vector<8x8xf32>, vector<8x8xf32> -> vector<8x8xf32>
    %82 = vector.extract_strided_slice %37 {offsets = [8, 0], sizes = [8, 32], strides = [1, 1]} : vector<32x32xf32> to vector<8x32xf32>
    %cst_34 = arith.constant dense<0.000000e+00> : vector<8x32xf32>
    %83 = tpu.matmul %81, %82, %cst_34 {dimension_numbers = #tpu.dot_dimension_numbers<[1], [0], [0], [1], [0, 0, 1, 1], [], []>} : vector<8x8xf32>, vector<8x32xf32>, vector<8x32xf32> -> vector<8x32xf32>
    %84 = arith.addf %60, %83 : vector<8x32xf32>
    %85 = vector.extract_strided_slice %32 {offsets = [0, 16], sizes = [8, 8], strides = [1, 1]} : vector<8x32xf32> to vector<8x8xf32>
    %86 = vector.extract_strided_slice %33 {offsets = [0, 16], sizes = [8, 8], strides = [1, 1]} : vector<8x32xf32> to vector<8x8xf32>
    %cst_35 = arith.constant dense<0.000000e+00> : vector<8x8xf32>
    %87 = tpu.matmul %85, %86, %cst_35 {dimension_numbers = #tpu.dot_dimension_numbers<[1], [1], [0], [0], [0, 0, 1, 0], [], []>} : vector<8x8xf32>, vector<8x8xf32>, vector<8x8xf32> -> vector<8x8xf32>
    %cst_36 = arith.constant 0.353553385 : f32
    %88 = vector.broadcast %cst_36 : f32 to vector<8x8xf32>
    %89 = arith.mulf %87, %88 : vector<8x8xf32>
    %c0_i32_37 = arith.constant 0 : i32
    %90 = vector.broadcast %c0_i32_37 : i32 to vector<8x8xi32>
    %91 = arith.cmpi eq, %36, %90 : vector<8x8xi32>
    %cst_38 = arith.constant -1.000000e+09 : f32
    %92 = vector.broadcast %cst_38 : f32 to vector<8x8xf32>
    %93 = arith.select %91, %92, %89 : vector<8x8xi1>, vector<8x8xf32>
    %cst_39 = arith.constant dense<0xFF800000> : vector<8xf32>
    %94 = vector.multi_reduction <maximumf>, %93, %cst_39 [1] : vector<8x8xf32> to vector<8xf32>
    %95 = vector.shape_cast %94 : vector<8xf32> to vector<8x1xf32>
    %96 = vector.broadcast %95 : vector<8x1xf32> to vector<8x8xf32>
    %97 = arith.subf %93, %96 : vector<8x8xf32>
    %98 = math.exp %97 : vector<8x8xf32>
    %cst_40 = arith.constant dense<0.000000e+00> : vector<8xf32>
    %99 = vector.multi_reduction <add>, %98, %cst_40 [1] : vector<8x8xf32> to vector<8xf32>
    %100 = vector.shape_cast %99 : vector<8xf32> to vector<8x1xf32>
    %101 = tpu.reciprocal %100 {approx = true} : vector<8x1xf32> -> vector<8x1xf32>
    %102 = vector.broadcast %101 : vector<8x1xf32> to vector<8x8xf32>
    %103 = arith.mulf %98, %102 : vector<8x8xf32>
    %104 = vector.extract_strided_slice %34 {offsets = [0, 16], sizes = [8, 8], strides = [1, 1]} : vector<8x32xf32> to vector<8x8xf32>
    %cst_41 = arith.constant dense<0.000000e+00> : vector<8x8xf32>
    %105 = tpu.matmul %103, %104, %cst_41 {dimension_numbers = #tpu.dot_dimension_numbers<[1], [0], [0], [1], [0, 0, 1, 1], [], []>} : vector<8x8xf32>, vector<8x8xf32>, vector<8x8xf32> -> vector<8x8xf32>
    %106 = vector.extract_strided_slice %37 {offsets = [16, 0], sizes = [8, 32], strides = [1, 1]} : vector<32x32xf32> to vector<8x32xf32>
    %cst_42 = arith.constant dense<0.000000e+00> : vector<8x32xf32>
    %107 = tpu.matmul %105, %106, %cst_42 {dimension_numbers = #tpu.dot_dimension_numbers<[1], [0], [0], [1], [0, 0, 1, 1], [], []>} : vector<8x8xf32>, vector<8x32xf32>, vector<8x32xf32> -> vector<8x32xf32>
    %108 = arith.addf %84, %107 : vector<8x32xf32>
    %109 = vector.extract_strided_slice %32 {offsets = [0, 24], sizes = [8, 8], strides = [1, 1]} : vector<8x32xf32> to vector<8x8xf32>
    %110 = vector.extract_strided_slice %33 {offsets = [0, 24], sizes = [8, 8], strides = [1, 1]} : vector<8x32xf32> to vector<8x8xf32>
    %cst_43 = arith.constant dense<0.000000e+00> : vector<8x8xf32>
    %111 = tpu.matmul %109, %110, %cst_43 {dimension_numbers = #tpu.dot_dimension_numbers<[1], [1], [0], [0], [0, 0, 1, 0], [], []>} : vector<8x8xf32>, vector<8x8xf32>, vector<8x8xf32> -> vector<8x8xf32>
    %cst_44 = arith.constant 0.353553385 : f32
    %112 = vector.broadcast %cst_44 : f32 to vector<8x8xf32>
    %113 = arith.mulf %111, %112 : vector<8x8xf32>
    %c0_i32_45 = arith.constant 0 : i32
    %114 = vector.broadcast %c0_i32_45 : i32 to vector<8x8xi32>
    %115 = arith.cmpi eq, %36, %114 : vector<8x8xi32>
    %cst_46 = arith.constant -1.000000e+09 : f32
    %116 = vector.broadcast %cst_46 : f32 to vector<8x8xf32>
    %117 = arith.select %115, %116, %113 : vector<8x8xi1>, vector<8x8xf32>
    %cst_47 = arith.constant dense<0xFF800000> : vector<8xf32>
    %118 = vector.multi_reduction <maximumf>, %117, %cst_47 [1] : vector<8x8xf32> to vector<8xf32>
    %119 = vector.shape_cast %118 : vector<8xf32> to vector<8x1xf32>
    %120 = vector.broadcast %119 : vector<8x1xf32> to vector<8x8xf32>
    %121 = arith.subf %117, %120 : vector<8x8xf32>
    %122 = math.exp %121 : vector<8x8xf32>
    %cst_48 = arith.constant dense<0.000000e+00> : vector<8xf32>
    %123 = vector.multi_reduction <add>, %122, %cst_48 [1] : vector<8x8xf32> to vector<8xf32>
    %124 = vector.shape_cast %123 : vector<8xf32> to vector<8x1xf32>
    %125 = tpu.reciprocal %124 {approx = true} : vector<8x1xf32> -> vector<8x1xf32>
    %126 = vector.broadcast %125 : vector<8x1xf32> to vector<8x8xf32>
    %127 = arith.mulf %122, %126 : vector<8x8xf32>
    %128 = vector.extract_strided_slice %34 {offsets = [0, 24], sizes = [8, 8], strides = [1, 1]} : vector<8x32xf32> to vector<8x8xf32>
    %cst_49 = arith.constant dense<0.000000e+00> : vector<8x8xf32>
    %129 = tpu.matmul %127, %128, %cst_49 {dimension_numbers = #tpu.dot_dimension_numbers<[1], [0], [0], [1], [0, 0, 1, 1], [], []>} : vector<8x8xf32>, vector<8x8xf32>, vector<8x8xf32> -> vector<8x8xf32>
    %130 = vector.extract_strided_slice %37 {offsets = [24, 0], sizes = [8, 32], strides = [1, 1]} : vector<32x32xf32> to vector<8x32xf32>
    %cst_50 = arith.constant dense<0.000000e+00> : vector<8x32xf32>
    %131 = tpu.matmul %129, %130, %cst_50 {dimension_numbers = #tpu.dot_dimension_numbers<[1], [0], [0], [1], [0, 0, 1, 1], [], []>} : vector<8x8xf32>, vector<8x32xf32>, vector<8x32xf32> -> vector<8x32xf32>
    %132 = arith.addf %108, %131 : vector<8x32xf32>
    %133 = arith.addf %1, %132 : vector<8x32xf32>
    %c0_51 = arith.constant 0 : index
    %c0_52 = arith.constant 0 : index
    %134 = vector.load %arg8[%c0_51, %c0_52] : memref<1x32xf32, #tpu.memory_space<vmem>>, vector<1x32xf32>
    %135 = vector.broadcast %134 : vector<1x32xf32> to vector<8x32xf32>
    %136 = arith.addf %133, %135 : vector<8x32xf32>
    %c0_53 = arith.constant 0 : index
    %c0_54 = arith.constant 0 : index
    %c0_55 = arith.constant 0 : index
    %137 = vector.load %arg9[%c0_53, %c0_54, %c0_55] : memref<1x8x32xf32, #tpu.memory_space<vmem>>, vector<1x8x32xf32>
    %138 = vector.shape_cast %137 : vector<1x8x32xf32> to vector<8x32xf32>
    %139 = vector.shape_cast %136 : vector<8x32xf32> to vector<1x8x32xf32>
    tpu.vector_store %arg9[%c0_53, %c0_54, %c0_55], %139 {strides = array<i32>} : memref<1x8x32xf32, #tpu.memory_space<vmem>>, vector<1x8x32xf32>,
    return
  }
  func.func @transform_0(%arg0: i32) -> (i32, i32, i32) {
    %c0_i32 = arith.constant 0 : i32
    %c0_i32_0 = arith.constant 0 : i32
    %c0_i32_1 = arith.constant 0 : i32
    return %arg0, %c0_i32, %c0_i32_0 : i32, i32, i32
  }
  func.func @transform_1(%arg0: i32) -> (i32, i32, i32) {
    %c0_i32 = arith.constant 0 : i32
    %c0_i32_0 = arith.constant 0 : i32
    %c0_i32_1 = arith.constant 0 : i32
    return %arg0, %c0_i32, %c0_i32_0 : i32, i32, i32
  }
  func.func @transform_2(%arg0: i32) -> (i32, i32) {
    %c0_i32 = arith.constant 0 : i32
    %c0_i32_0 = arith.constant 0 : i32
    %c0_i32_1 = arith.constant 0 : i32
    return %c0_i32, %c0_i32_0 : i32, i32
  }
  func.func @transform_3(%arg0: i32) -> (i32, i32) {
    %c0_i32 = arith.constant 0 : i32
    %c0_i32_0 = arith.constant 0 : i32
    %c0_i32_1 = arith.constant 0 : i32
    return %c0_i32, %c0_i32_0 : i32, i32
  }
  func.func @transform_4(%arg0: i32) -> (i32, i32) {
    %c0_i32 = arith.constant 0 : i32
    %c0_i32_0 = arith.constant 0 : i32
    %c0_i32_1 = arith.constant 0 : i32
    return %c0_i32, %c0_i32_0 : i32, i32
  }
  func.func @transform_5(%arg0: i32) -> (i32, i32) {
    %c0_i32 = arith.constant 0 : i32
    %c0_i32_0 = arith.constant 0 : i32
    %c0_i32_1 = arith.constant 0 : i32
    return %c0_i32, %c0_i32_0 : i32, i32
  }
  func.func @transform_6(%arg0: i32) -> (i32, i32) {
    %c0_i32 = arith.constant 0 : i32
    %c0_i32_0 = arith.constant 0 : i32
    %c0_i32_1 = arith.constant 0 : i32
    return %c0_i32, %c0_i32_0 : i32, i32
  }
  func.func @transform_7(%arg0: i32) -> (i32, i32) {
    %c0_i32 = arith.constant 0 : i32
    %c0_i32_0 = arith.constant 0 : i32
    %c0_i32_1 = arith.constant 0 : i32
    return %c0_i32, %c0_i32_0 : i32, i32
  }
  func.func @transform_8(%arg0: i32) -> (i32, i32, i32) {
    %c0_i32 = arith.constant 0 : i32
    %c0_i32_0 = arith.constant 0 : i32
    %c0_i32_1 = arith.constant 0 : i32
    return %arg0, %c0_i32, %c0_i32_0 : i32, i32, i32
  }
}

module attributes {stable_mosaic.version = 11 : i64} {
  func.func @_src_attn_sublayer_kernel(%arg0: i32, %arg1: memref<1x8x32xf32, #tpu.memory_space<vmem>>, %arg2: memref<1x16x32xf32, #tpu.memory_space<vmem>>, %arg3: memref<1x1x16xi32, #tpu.memory_space<vmem>>, %arg4: memref<1x32xf32, #tpu.memory_space<vmem>>, %arg5: memref<1x32xf32, #tpu.memory_space<vmem>>, %arg6: memref<32x32xf32, #tpu.memory_space<vmem>>, %arg7: memref<1x32xf32, #tpu.memory_space<vmem>>, %arg8: memref<32x64xf32, #tpu.memory_space<vmem>>, %arg9: memref<1x64xf32, #tpu.memory_space<vmem>>, %arg10: memref<32x32xf32, #tpu.memory_space<vmem>>, %arg11: memref<1x32xf32, #tpu.memory_space<vmem>>, %arg12: memref<1x8x32xf32, #tpu.memory_space<vmem>>) attributes {dimension_semantics = [#tpu.dimension_semantics<parallel>], iteration_bounds = array<i64: 2>, scalar_prefetch = 0 : i64, scratch_operands = 0 : i64, tpu.core_type = #tpu.core_type<tc>, window_params = [{transform_indices = @transform_0, window_bounds = array<i64: 1, 8, 32>}, {transform_indices = @transform_1, window_bounds = array<i64: 1, 16, 32>}, {transform_indices = @transform_2, window_bounds = array<i64: 1, 1, 16>}, {pipeline_mode = #tpu.pipeline_mode<synchronous>, transform_indices = @transform_3, window_bounds = array<i64: 1, 32>}, {pipeline_mode = #tpu.pipeline_mode<synchronous>, transform_indices = @transform_4, window_bounds = array<i64: 1, 32>}, {pipeline_mode = #tpu.pipeline_mode<synchronous>, transform_indices = @transform_5, window_bounds = array<i64: 32, 32>}, {pipeline_mode = #tpu.pipeline_mode<synchronous>, transform_indices = @transform_6, window_bounds = array<i64: 1, 32>}, {pipeline_mode = #tpu.pipeline_mode<synchronous>, transform_indices = @transform_7, window_bounds = array<i64: 32, 64>}, {pipeline_mode = #tpu.pipeline_mode<synchronous>, transform_indices = @transform_8, window_bounds = array<i64: 1, 64>}, {pipeline_mode = #tpu.pipeline_mode<synchronous>, transform_indices = @transform_9, window_bounds = array<i64: 32, 32>}, {pipeline_mode = #tpu.pipeline_mode<synchronous>, transform_indices = @transform_10, window_bounds = array<i64: 1, 32>}, {transform_indices = @transform_11, window_bounds = array<i64: 1, 8, 32>}]} {
    %c0 = arith.constant 0 : index
    %c0_0 = arith.constant 0 : index
    %c0_1 = arith.constant 0 : index
    %0 = vector.load %arg1[%c0, %c0_0, %c0_1] : memref<1x8x32xf32, #tpu.memory_space<vmem>>, vector<1x8x32xf32>
    %1 = vector.shape_cast %0 : vector<1x8x32xf32> to vector<8x32xf32>
    %c0_2 = arith.constant 0 : index
    %c0_3 = arith.constant 0 : index
    %2 = vector.load %arg4[%c0_2, %c0_3] : memref<1x32xf32, #tpu.memory_space<vmem>>, vector<1x32xf32>
    %c0_4 = arith.constant 0 : index
    %c0_5 = arith.constant 0 : index
    %3 = vector.load %arg5[%c0_4, %c0_5] : memref<1x32xf32, #tpu.memory_space<vmem>>, vector<1x32xf32>
    %cst = arith.constant dense<0.000000e+00> : vector<8xf32>
    %4 = vector.multi_reduction <add>, %1, %cst [1] : vector<8x32xf32> to vector<8xf32>
    %5 = vector.shape_cast %4 : vector<8xf32> to vector<8x1xf32>
    %cst_6 = arith.constant 3.200000e+01 : f32
    %6 = vector.broadcast %cst_6 : f32 to vector<8x1xf32>
    %7 = arith.divf %5, %6 : vector<8x1xf32>
    %8 = vector.broadcast %7 : vector<8x1xf32> to vector<8x32xf32>
    %9 = arith.subf %1, %8 : vector<8x32xf32>
    %10 = arith.mulf %9, %9 : vector<8x32xf32>
    %cst_7 = arith.constant dense<0.000000e+00> : vector<8xf32>
    %11 = vector.multi_reduction <add>, %10, %cst_7 [1] : vector<8x32xf32> to vector<8xf32>
    %12 = vector.shape_cast %11 : vector<8xf32> to vector<8x1xf32>
    %cst_8 = arith.constant 0.0322580636 : f32
    %13 = vector.broadcast %cst_8 : f32 to vector<8x1xf32>
    %14 = arith.mulf %12, %13 : vector<8x1xf32>
    %15 = math.sqrt %14 : vector<8x1xf32>
    %cst_9 = arith.constant 9.99999997E-7 : f32
    %16 = vector.broadcast %cst_9 : f32 to vector<8x1xf32>
    %17 = arith.addf %15, %16 : vector<8x1xf32>
    %18 = tpu.reciprocal %17 : vector<8x1xf32> -> vector<8x1xf32>
    %19 = vector.broadcast %7 : vector<8x1xf32> to vector<8x32xf32>
    %20 = arith.subf %1, %19 : vector<8x32xf32>
    %21 = vector.broadcast %2 : vector<1x32xf32> to vector<8x32xf32>
    %22 = arith.mulf %21, %20 : vector<8x32xf32>
    %23 = vector.broadcast %18 : vector<8x1xf32> to vector<8x32xf32>
    %24 = arith.mulf %22, %23 : vector<8x32xf32>
    %25 = vector.broadcast %3 : vector<1x32xf32> to vector<8x32xf32>
    %26 = arith.addf %24, %25 : vector<8x32xf32>
    %c0_10 = arith.constant 0 : index
    %c0_11 = arith.constant 0 : index
    %27 = vector.load %arg6[%c0_10, %c0_11] : memref<32x32xf32, #tpu.memory_space<vmem>>, vector<32x32xf32>
    %cst_12 = arith.constant dense<0.000000e+00> : vector<8x32xf32>
    %28 = tpu.matmul %26, %27, %cst_12 {dimension_numbers = #tpu.dot_dimension_numbers<[1], [0], [0], [1], [0, 0, 1, 1], [], []>} : vector<8x32xf32>, vector<32x32xf32>, vector<8x32xf32> -> vector<8x32xf32>
    %c0_13 = arith.constant 0 : index
    %c0_14 = arith.constant 0 : index
    %29 = vector.load %arg7[%c0_13, %c0_14] : memref<1x32xf32, #tpu.memory_space<vmem>>, vector<1x32xf32>
    %30 = vector.broadcast %29 : vector<1x32xf32> to vector<8x32xf32>
    %31 = arith.addf %28, %30 : vector<8x32xf32>
    %c0_15 = arith.constant 0 : index
    %c0_16 = arith.constant 0 : index
    %c0_17 = arith.constant 0 : index
    %32 = vector.load %arg2[%c0_15, %c0_16, %c0_17] : memref<1x16x32xf32, #tpu.memory_space<vmem>>, vector<1x16x32xf32>
    %33 = vector.shape_cast %32 : vector<1x16x32xf32> to vector<16x32xf32>
    %c0_18 = arith.constant 0 : index
    %c0_19 = arith.constant 0 : index
    %34 = vector.load %arg8[%c0_18, %c0_19] : memref<32x64xf32, #tpu.memory_space<vmem>>, vector<32x64xf32>
    %cst_20 = arith.constant dense<0.000000e+00> : vector<16x64xf32>
    %35 = tpu.matmul %33, %34, %cst_20 {dimension_numbers = #tpu.dot_dimension_numbers<[1], [0], [0], [1], [0, 0, 1, 1], [], []>} : vector<16x32xf32>, vector<32x64xf32>, vector<16x64xf32> -> vector<16x64xf32>
    %c0_21 = arith.constant 0 : index
    %c0_22 = arith.constant 0 : index
    %36 = vector.load %arg9[%c0_21, %c0_22] : memref<1x64xf32, #tpu.memory_space<vmem>>, vector<1x64xf32>
    %37 = vector.broadcast %36 : vector<1x64xf32> to vector<16x64xf32>
    %38 = arith.addf %35, %37 : vector<16x64xf32>
    %39 = vector.extract_strided_slice %38 {offsets = [0, 0], sizes = [16, 32], strides = [1, 1]} : vector<16x64xf32> to vector<16x32xf32>
    %40 = vector.extract_strided_slice %38 {offsets = [0, 32], sizes = [16, 32], strides = [1, 1]} : vector<16x64xf32> to vector<16x32xf32>
    %c0_23 = arith.constant 0 : index
    %c0_24 = arith.constant 0 : index
    %c0_25 = arith.constant 0 : index
    %41 = vector.load %arg3[%c0_23, %c0_24, %c0_25] : memref<1x1x16xi32, #tpu.memory_space<vmem>>, vector<1x1x16xi32>
    %42 = vector.shape_cast %41 : vector<1x1x16xi32> to vector<1x16xi32>
    %c0_26 = arith.constant 0 : index
    %c0_27 = arith.constant 0 : index
    %43 = vector.load %arg10[%c0_26, %c0_27] : memref<32x32xf32, #tpu.memory_space<vmem>>, vector<32x32xf32>
    %44 = vector.extract_strided_slice %31 {offsets = [0, 0], sizes = [8, 8], strides = [1, 1]} : vector<8x32xf32> to vector<8x8xf32>
    %45 = vector.extract_strided_slice %39 {offsets = [0, 0], sizes = [16, 8], strides = [1, 1]} : vector<16x32xf32> to vector<16x8xf32>
    %cst_28 = arith.constant dense<0.000000e+00> : vector<8x16xf32>
    %46 = tpu.matmul %44, %45, %cst_28 {dimension_numbers = #tpu.dot_dimension_numbers<[1], [1], [0], [0], [0, 0, 1, 0], [], []>} : vector<8x8xf32>, vector<16x8xf32>, vector<8x16xf32> -> vector<8x16xf32>
    %cst_29 = arith.constant 0.353553385 : f32
    %47 = vector.broadcast %cst_29 : f32 to vector<8x16xf32>
    %48 = arith.mulf %46, %47 : vector<8x16xf32>
    %c0_i32 = arith.constant 0 : i32
    %49 = vector.broadcast %c0_i32 : i32 to vector<1x16xi32>
    %50 = arith.cmpi eq, %42, %49 : vector<1x16xi32>
    %cst_30 = arith.constant -1.000000e+09 : f32
    %51 = vector.shape_cast %50 : vector<1x16xi1> to vector<1x16xi1>
    %52 = vector.broadcast %51 : vector<1x16xi1> to vector<8x16xi1>
    %53 = vector.broadcast %cst_30 : f32 to vector<8x16xf32>
    %54 = arith.select %52, %53, %48 : vector<8x16xi1>, vector<8x16xf32>
    %cst_31 = arith.constant dense<0xFF800000> : vector<8xf32>
    %55 = vector.multi_reduction <maximumf>, %54, %cst_31 [1] : vector<8x16xf32> to vector<8xf32>
    %56 = vector.shape_cast %55 : vector<8xf32> to vector<8x1xf32>
    %57 = vector.broadcast %56 : vector<8x1xf32> to vector<8x16xf32>
    %58 = arith.subf %54, %57 : vector<8x16xf32>
    %59 = math.exp %58 : vector<8x16xf32>
    %cst_32 = arith.constant dense<0.000000e+00> : vector<8xf32>
    %60 = vector.multi_reduction <add>, %59, %cst_32 [1] : vector<8x16xf32> to vector<8xf32>
    %61 = vector.shape_cast %60 : vector<8xf32> to vector<8x1xf32>
    %62 = tpu.reciprocal %61 {approx = true} : vector<8x1xf32> -> vector<8x1xf32>
    %63 = vector.broadcast %62 : vector<8x1xf32> to vector<8x16xf32>
    %64 = arith.mulf %59, %63 : vector<8x16xf32>
    %65 = vector.extract_strided_slice %40 {offsets = [0, 0], sizes = [16, 8], strides = [1, 1]} : vector<16x32xf32> to vector<16x8xf32>
    %cst_33 = arith.constant dense<0.000000e+00> : vector<8x8xf32>
    %66 = tpu.matmul %64, %65, %cst_33 {dimension_numbers = #tpu.dot_dimension_numbers<[1], [0], [0], [1], [0, 0, 1, 1], [], []>} : vector<8x16xf32>, vector<16x8xf32>, vector<8x8xf32> -> vector<8x8xf32>
    %67 = vector.extract_strided_slice %43 {offsets = [0, 0], sizes = [8, 32], strides = [1, 1]} : vector<32x32xf32> to vector<8x32xf32>
    %cst_34 = arith.constant dense<0.000000e+00> : vector<8x32xf32>
    %68 = tpu.matmul %66, %67, %cst_34 {dimension_numbers = #tpu.dot_dimension_numbers<[1], [0], [0], [1], [0, 0, 1, 1], [], []>} : vector<8x8xf32>, vector<8x32xf32>, vector<8x32xf32> -> vector<8x32xf32>
    %69 = vector.extract_strided_slice %31 {offsets = [0, 8], sizes = [8, 8], strides = [1, 1]} : vector<8x32xf32> to vector<8x8xf32>
    %70 = vector.extract_strided_slice %39 {offsets = [0, 8], sizes = [16, 8], strides = [1, 1]} : vector<16x32xf32> to vector<16x8xf32>
    %cst_35 = arith.constant dense<0.000000e+00> : vector<8x16xf32>
    %71 = tpu.matmul %69, %70, %cst_35 {dimension_numbers = #tpu.dot_dimension_numbers<[1], [1], [0], [0], [0, 0, 1, 0], [], []>} : vector<8x8xf32>, vector<16x8xf32>, vector<8x16xf32> -> vector<8x16xf32>
    %cst_36 = arith.constant 0.353553385 : f32
    %72 = vector.broadcast %cst_36 : f32 to vector<8x16xf32>
    %73 = arith.mulf %71, %72 : vector<8x16xf32>
    %c0_i32_37 = arith.constant 0 : i32
    %74 = vector.broadcast %c0_i32_37 : i32 to vector<1x16xi32>
    %75 = arith.cmpi eq, %42, %74 : vector<1x16xi32>
    %cst_38 = arith.constant -1.000000e+09 : f32
    %76 = vector.shape_cast %75 : vector<1x16xi1> to vector<1x16xi1>
    %77 = vector.broadcast %76 : vector<1x16xi1> to vector<8x16xi1>
    %78 = vector.broadcast %cst_38 : f32 to vector<8x16xf32>
    %79 = arith.select %77, %78, %73 : vector<8x16xi1>, vector<8x16xf32>
    %cst_39 = arith.constant dense<0xFF800000> : vector<8xf32>
    %80 = vector.multi_reduction <maximumf>, %79, %cst_39 [1] : vector<8x16xf32> to vector<8xf32>
    %81 = vector.shape_cast %80 : vector<8xf32> to vector<8x1xf32>
    %82 = vector.broadcast %81 : vector<8x1xf32> to vector<8x16xf32>
    %83 = arith.subf %79, %82 : vector<8x16xf32>
    %84 = math.exp %83 : vector<8x16xf32>
    %cst_40 = arith.constant dense<0.000000e+00> : vector<8xf32>
    %85 = vector.multi_reduction <add>, %84, %cst_40 [1] : vector<8x16xf32> to vector<8xf32>
    %86 = vector.shape_cast %85 : vector<8xf32> to vector<8x1xf32>
    %87 = tpu.reciprocal %86 {approx = true} : vector<8x1xf32> -> vector<8x1xf32>
    %88 = vector.broadcast %87 : vector<8x1xf32> to vector<8x16xf32>
    %89 = arith.mulf %84, %88 : vector<8x16xf32>
    %90 = vector.extract_strided_slice %40 {offsets = [0, 8], sizes = [16, 8], strides = [1, 1]} : vector<16x32xf32> to vector<16x8xf32>
    %cst_41 = arith.constant dense<0.000000e+00> : vector<8x8xf32>
    %91 = tpu.matmul %89, %90, %cst_41 {dimension_numbers = #tpu.dot_dimension_numbers<[1], [0], [0], [1], [0, 0, 1, 1], [], []>} : vector<8x16xf32>, vector<16x8xf32>, vector<8x8xf32> -> vector<8x8xf32>
    %92 = vector.extract_strided_slice %43 {offsets = [8, 0], sizes = [8, 32], strides = [1, 1]} : vector<32x32xf32> to vector<8x32xf32>
    %cst_42 = arith.constant dense<0.000000e+00> : vector<8x32xf32>
    %93 = tpu.matmul %91, %92, %cst_42 {dimension_numbers = #tpu.dot_dimension_numbers<[1], [0], [0], [1], [0, 0, 1, 1], [], []>} : vector<8x8xf32>, vector<8x32xf32>, vector<8x32xf32> -> vector<8x32xf32>
    %94 = arith.addf %68, %93 : vector<8x32xf32>
    %95 = vector.extract_strided_slice %31 {offsets = [0, 16], sizes = [8, 8], strides = [1, 1]} : vector<8x32xf32> to vector<8x8xf32>
    %96 = vector.extract_strided_slice %39 {offsets = [0, 16], sizes = [16, 8], strides = [1, 1]} : vector<16x32xf32> to vector<16x8xf32>
    %cst_43 = arith.constant dense<0.000000e+00> : vector<8x16xf32>
    %97 = tpu.matmul %95, %96, %cst_43 {dimension_numbers = #tpu.dot_dimension_numbers<[1], [1], [0], [0], [0, 0, 1, 0], [], []>} : vector<8x8xf32>, vector<16x8xf32>, vector<8x16xf32> -> vector<8x16xf32>
    %cst_44 = arith.constant 0.353553385 : f32
    %98 = vector.broadcast %cst_44 : f32 to vector<8x16xf32>
    %99 = arith.mulf %97, %98 : vector<8x16xf32>
    %c0_i32_45 = arith.constant 0 : i32
    %100 = vector.broadcast %c0_i32_45 : i32 to vector<1x16xi32>
    %101 = arith.cmpi eq, %42, %100 : vector<1x16xi32>
    %cst_46 = arith.constant -1.000000e+09 : f32
    %102 = vector.shape_cast %101 : vector<1x16xi1> to vector<1x16xi1>
    %103 = vector.broadcast %102 : vector<1x16xi1> to vector<8x16xi1>
    %104 = vector.broadcast %cst_46 : f32 to vector<8x16xf32>
    %105 = arith.select %103, %104, %99 : vector<8x16xi1>, vector<8x16xf32>
    %cst_47 = arith.constant dense<0xFF800000> : vector<8xf32>
    %106 = vector.multi_reduction <maximumf>, %105, %cst_47 [1] : vector<8x16xf32> to vector<8xf32>
    %107 = vector.shape_cast %106 : vector<8xf32> to vector<8x1xf32>
    %108 = vector.broadcast %107 : vector<8x1xf32> to vector<8x16xf32>
    %109 = arith.subf %105, %108 : vector<8x16xf32>
    %110 = math.exp %109 : vector<8x16xf32>
    %cst_48 = arith.constant dense<0.000000e+00> : vector<8xf32>
    %111 = vector.multi_reduction <add>, %110, %cst_48 [1] : vector<8x16xf32> to vector<8xf32>
    %112 = vector.shape_cast %111 : vector<8xf32> to vector<8x1xf32>
    %113 = tpu.reciprocal %112 {approx = true} : vector<8x1xf32> -> vector<8x1xf32>
    %114 = vector.broadcast %113 : vector<8x1xf32> to vector<8x16xf32>
    %115 = arith.mulf %110, %114 : vector<8x16xf32>
    %116 = vector.extract_strided_slice %40 {offsets = [0, 16], sizes = [16, 8], strides = [1, 1]} : vector<16x32xf32> to vector<16x8xf32>
    %cst_49 = arith.constant dense<0.000000e+00> : vector<8x8xf32>
    %117 = tpu.matmul %115, %116, %cst_49 {dimension_numbers = #tpu.dot_dimension_numbers<[1], [0], [0], [1], [0, 0, 1, 1], [], []>} : vector<8x16xf32>, vector<16x8xf32>, vector<8x8xf32> -> vector<8x8xf32>
    %118 = vector.extract_strided_slice %43 {offsets = [16, 0], sizes = [8, 32], strides = [1, 1]} : vector<32x32xf32> to vector<8x32xf32>
    %cst_50 = arith.constant dense<0.000000e+00> : vector<8x32xf32>
    %119 = tpu.matmul %117, %118, %cst_50 {dimension_numbers = #tpu.dot_dimension_numbers<[1], [0], [0], [1], [0, 0, 1, 1], [], []>} : vector<8x8xf32>, vector<8x32xf32>, vector<8x32xf32> -> vector<8x32xf32>
    %120 = arith.addf %94, %119 : vector<8x32xf32>
    %121 = vector.extract_strided_slice %31 {offsets = [0, 24], sizes = [8, 8], strides = [1, 1]} : vector<8x32xf32> to vector<8x8xf32>
    %122 = vector.extract_strided_slice %39 {offsets = [0, 24], sizes = [16, 8], strides = [1, 1]} : vector<16x32xf32> to vector<16x8xf32>
    %cst_51 = arith.constant dense<0.000000e+00> : vector<8x16xf32>
    %123 = tpu.matmul %121, %122, %cst_51 {dimension_numbers = #tpu.dot_dimension_numbers<[1], [1], [0], [0], [0, 0, 1, 0], [], []>} : vector<8x8xf32>, vector<16x8xf32>, vector<8x16xf32> -> vector<8x16xf32>
    %cst_52 = arith.constant 0.353553385 : f32
    %124 = vector.broadcast %cst_52 : f32 to vector<8x16xf32>
    %125 = arith.mulf %123, %124 : vector<8x16xf32>
    %c0_i32_53 = arith.constant 0 : i32
    %126 = vector.broadcast %c0_i32_53 : i32 to vector<1x16xi32>
    %127 = arith.cmpi eq, %42, %126 : vector<1x16xi32>
    %cst_54 = arith.constant -1.000000e+09 : f32
    %128 = vector.shape_cast %127 : vector<1x16xi1> to vector<1x16xi1>
    %129 = vector.broadcast %128 : vector<1x16xi1> to vector<8x16xi1>
    %130 = vector.broadcast %cst_54 : f32 to vector<8x16xf32>
    %131 = arith.select %129, %130, %125 : vector<8x16xi1>, vector<8x16xf32>
    %cst_55 = arith.constant dense<0xFF800000> : vector<8xf32>
    %132 = vector.multi_reduction <maximumf>, %131, %cst_55 [1] : vector<8x16xf32> to vector<8xf32>
    %133 = vector.shape_cast %132 : vector<8xf32> to vector<8x1xf32>
    %134 = vector.broadcast %133 : vector<8x1xf32> to vector<8x16xf32>
    %135 = arith.subf %131, %134 : vector<8x16xf32>
    %136 = math.exp %135 : vector<8x16xf32>
    %cst_56 = arith.constant dense<0.000000e+00> : vector<8xf32>
    %137 = vector.multi_reduction <add>, %136, %cst_56 [1] : vector<8x16xf32> to vector<8xf32>
    %138 = vector.shape_cast %137 : vector<8xf32> to vector<8x1xf32>
    %139 = tpu.reciprocal %138 {approx = true} : vector<8x1xf32> -> vector<8x1xf32>
    %140 = vector.broadcast %139 : vector<8x1xf32> to vector<8x16xf32>
    %141 = arith.mulf %136, %140 : vector<8x16xf32>
    %142 = vector.extract_strided_slice %40 {offsets = [0, 24], sizes = [16, 8], strides = [1, 1]} : vector<16x32xf32> to vector<16x8xf32>
    %cst_57 = arith.constant dense<0.000000e+00> : vector<8x8xf32>
    %143 = tpu.matmul %141, %142, %cst_57 {dimension_numbers = #tpu.dot_dimension_numbers<[1], [0], [0], [1], [0, 0, 1, 1], [], []>} : vector<8x16xf32>, vector<16x8xf32>, vector<8x8xf32> -> vector<8x8xf32>
    %144 = vector.extract_strided_slice %43 {offsets = [24, 0], sizes = [8, 32], strides = [1, 1]} : vector<32x32xf32> to vector<8x32xf32>
    %cst_58 = arith.constant dense<0.000000e+00> : vector<8x32xf32>
    %145 = tpu.matmul %143, %144, %cst_58 {dimension_numbers = #tpu.dot_dimension_numbers<[1], [0], [0], [1], [0, 0, 1, 1], [], []>} : vector<8x8xf32>, vector<8x32xf32>, vector<8x32xf32> -> vector<8x32xf32>
    %146 = arith.addf %120, %145 : vector<8x32xf32>
    %147 = arith.addf %1, %146 : vector<8x32xf32>
    %c0_59 = arith.constant 0 : index
    %c0_60 = arith.constant 0 : index
    %148 = vector.load %arg11[%c0_59, %c0_60] : memref<1x32xf32, #tpu.memory_space<vmem>>, vector<1x32xf32>
    %149 = vector.broadcast %148 : vector<1x32xf32> to vector<8x32xf32>
    %150 = arith.addf %147, %149 : vector<8x32xf32>
    %c0_61 = arith.constant 0 : index
    %c0_62 = arith.constant 0 : index
    %c0_63 = arith.constant 0 : index
    %151 = vector.load %arg12[%c0_61, %c0_62, %c0_63] : memref<1x8x32xf32, #tpu.memory_space<vmem>>, vector<1x8x32xf32>
    %152 = vector.shape_cast %151 : vector<1x8x32xf32> to vector<8x32xf32>
    %153 = vector.shape_cast %150 : vector<8x32xf32> to vector<1x8x32xf32>
    tpu.vector_store %arg12[%c0_61, %c0_62, %c0_63], %153 {strides = array<i32>} : memref<1x8x32xf32, #tpu.memory_space<vmem>>, vector<1x8x32xf32>,
    return
  }
  func.func @transform_0(%arg0: i32) -> (i32, i32, i32) {
    %c0_i32 = arith.constant 0 : i32
    %c0_i32_0 = arith.constant 0 : i32
    %c0_i32_1 = arith.constant 0 : i32
    return %arg0, %c0_i32, %c0_i32_0 : i32, i32, i32
  }
  func.func @transform_1(%arg0: i32) -> (i32, i32, i32) {
    %c0_i32 = arith.constant 0 : i32
    %c0_i32_0 = arith.constant 0 : i32
    %c0_i32_1 = arith.constant 0 : i32
    return %arg0, %c0_i32, %c0_i32_0 : i32, i32, i32
  }
  func.func @transform_2(%arg0: i32) -> (i32, i32, i32) {
    %c0_i32 = arith.constant 0 : i32
    %c0_i32_0 = arith.constant 0 : i32
    %c0_i32_1 = arith.constant 0 : i32
    return %arg0, %c0_i32, %c0_i32_0 : i32, i32, i32
  }
  func.func @transform_3(%arg0: i32) -> (i32, i32) {
    %c0_i32 = arith.constant 0 : i32
    %c0_i32_0 = arith.constant 0 : i32
    %c0_i32_1 = arith.constant 0 : i32
    return %c0_i32, %c0_i32_0 : i32, i32
  }
  func.func @transform_4(%arg0: i32) -> (i32, i32) {
    %c0_i32 = arith.constant 0 : i32
    %c0_i32_0 = arith.constant 0 : i32
    %c0_i32_1 = arith.constant 0 : i32
    return %c0_i32, %c0_i32_0 : i32, i32
  }
  func.func @transform_5(%arg0: i32) -> (i32, i32) {
    %c0_i32 = arith.constant 0 : i32
    %c0_i32_0 = arith.constant 0 : i32
    %c0_i32_1 = arith.constant 0 : i32
    return %c0_i32, %c0_i32_0 : i32, i32
  }
  func.func @transform_6(%arg0: i32) -> (i32, i32) {
    %c0_i32 = arith.constant 0 : i32
    %c0_i32_0 = arith.constant 0 : i32
    %c0_i32_1 = arith.constant 0 : i32
    return %c0_i32, %c0_i32_0 : i32, i32
  }
  func.func @transform_7(%arg0: i32) -> (i32, i32) {
    %c0_i32 = arith.constant 0 : i32
    %c0_i32_0 = arith.constant 0 : i32
    %c0_i32_1 = arith.constant 0 : i32
    return %c0_i32, %c0_i32_0 : i32, i32
  }
  func.func @transform_8(%arg0: i32) -> (i32, i32) {
    %c0_i32 = arith.constant 0 : i32
    %c0_i32_0 = arith.constant 0 : i32
    %c0_i32_1 = arith.constant 0 : i32
    return %c0_i32, %c0_i32_0 : i32, i32
  }
  func.func @transform_9(%arg0: i32) -> (i32, i32) {
    %c0_i32 = arith.constant 0 : i32
    %c0_i32_0 = arith.constant 0 : i32
    %c0_i32_1 = arith.constant 0 : i32
    return %c0_i32, %c0_i32_0 : i32, i32
  }
  func.func @transform_10(%arg0: i32) -> (i32, i32) {
    %c0_i32 = arith.constant 0 : i32
    %c0_i32_0 = arith.constant 0 : i32
    %c0_i32_1 = arith.constant 0 : i32
    return %c0_i32, %c0_i32_0 : i32, i32
  }
  func.func @transform_11(%arg0: i32) -> (i32, i32, i32) {
    %c0_i32 = arith.constant 0 : i32
    %c0_i32_0 = arith.constant 0 : i32
    %c0_i32_1 = arith.constant 0 : i32
    return %arg0, %c0_i32, %c0_i32_0 : i32, i32, i32
  }
}

module attributes {stable_mosaic.version = 11 : i64} {
  func.func @_ffn_sublayer_kernel(%arg0: i32, %arg1: memref<1x8x32xf32, #tpu.memory_space<vmem>>, %arg2: memref<1x32xf32, #tpu.memory_space<vmem>>, %arg3: memref<1x32xf32, #tpu.memory_space<vmem>>, %arg4: memref<32x64xf32, #tpu.memory_space<vmem>>, %arg5: memref<1x64xf32, #tpu.memory_space<vmem>>, %arg6: memref<64x32xf32, #tpu.memory_space<vmem>>, %arg7: memref<1x32xf32, #tpu.memory_space<vmem>>, %arg8: memref<1x8x32xf32, #tpu.memory_space<vmem>>) attributes {dimension_semantics = [#tpu.dimension_semantics<parallel>], iteration_bounds = array<i64: 2>, scalar_prefetch = 0 : i64, scratch_operands = 0 : i64, tpu.core_type = #tpu.core_type<tc>, window_params = [{transform_indices = @transform_0, window_bounds = array<i64: 1, 8, 32>}, {pipeline_mode = #tpu.pipeline_mode<synchronous>, transform_indices = @transform_1, window_bounds = array<i64: 1, 32>}, {pipeline_mode = #tpu.pipeline_mode<synchronous>, transform_indices = @transform_2, window_bounds = array<i64: 1, 32>}, {pipeline_mode = #tpu.pipeline_mode<synchronous>, transform_indices = @transform_3, window_bounds = array<i64: 32, 64>}, {pipeline_mode = #tpu.pipeline_mode<synchronous>, transform_indices = @transform_4, window_bounds = array<i64: 1, 64>}, {pipeline_mode = #tpu.pipeline_mode<synchronous>, transform_indices = @transform_5, window_bounds = array<i64: 64, 32>}, {pipeline_mode = #tpu.pipeline_mode<synchronous>, transform_indices = @transform_6, window_bounds = array<i64: 1, 32>}, {transform_indices = @transform_7, window_bounds = array<i64: 1, 8, 32>}]} {
    %c0 = arith.constant 0 : index
    %c0_0 = arith.constant 0 : index
    %c0_1 = arith.constant 0 : index
    %0 = vector.load %arg1[%c0, %c0_0, %c0_1] : memref<1x8x32xf32, #tpu.memory_space<vmem>>, vector<1x8x32xf32>
    %1 = vector.shape_cast %0 : vector<1x8x32xf32> to vector<8x32xf32>
    %c0_2 = arith.constant 0 : index
    %c0_3 = arith.constant 0 : index
    %2 = vector.load %arg2[%c0_2, %c0_3] : memref<1x32xf32, #tpu.memory_space<vmem>>, vector<1x32xf32>
    %c0_4 = arith.constant 0 : index
    %c0_5 = arith.constant 0 : index
    %3 = vector.load %arg3[%c0_4, %c0_5] : memref<1x32xf32, #tpu.memory_space<vmem>>, vector<1x32xf32>
    %cst = arith.constant dense<0.000000e+00> : vector<8xf32>
    %4 = vector.multi_reduction <add>, %1, %cst [1] : vector<8x32xf32> to vector<8xf32>
    %5 = vector.shape_cast %4 : vector<8xf32> to vector<8x1xf32>
    %cst_6 = arith.constant 3.200000e+01 : f32
    %6 = vector.broadcast %cst_6 : f32 to vector<8x1xf32>
    %7 = arith.divf %5, %6 : vector<8x1xf32>
    %8 = vector.broadcast %7 : vector<8x1xf32> to vector<8x32xf32>
    %9 = arith.subf %1, %8 : vector<8x32xf32>
    %10 = arith.mulf %9, %9 : vector<8x32xf32>
    %cst_7 = arith.constant dense<0.000000e+00> : vector<8xf32>
    %11 = vector.multi_reduction <add>, %10, %cst_7 [1] : vector<8x32xf32> to vector<8xf32>
    %12 = vector.shape_cast %11 : vector<8xf32> to vector<8x1xf32>
    %cst_8 = arith.constant 0.0322580636 : f32
    %13 = vector.broadcast %cst_8 : f32 to vector<8x1xf32>
    %14 = arith.mulf %12, %13 : vector<8x1xf32>
    %15 = math.sqrt %14 : vector<8x1xf32>
    %cst_9 = arith.constant 9.99999997E-7 : f32
    %16 = vector.broadcast %cst_9 : f32 to vector<8x1xf32>
    %17 = arith.addf %15, %16 : vector<8x1xf32>
    %18 = tpu.reciprocal %17 : vector<8x1xf32> -> vector<8x1xf32>
    %19 = vector.broadcast %7 : vector<8x1xf32> to vector<8x32xf32>
    %20 = arith.subf %1, %19 : vector<8x32xf32>
    %21 = vector.broadcast %2 : vector<1x32xf32> to vector<8x32xf32>
    %22 = arith.mulf %21, %20 : vector<8x32xf32>
    %23 = vector.broadcast %18 : vector<8x1xf32> to vector<8x32xf32>
    %24 = arith.mulf %22, %23 : vector<8x32xf32>
    %25 = vector.broadcast %3 : vector<1x32xf32> to vector<8x32xf32>
    %26 = arith.addf %24, %25 : vector<8x32xf32>
    %c0_10 = arith.constant 0 : index
    %c0_11 = arith.constant 0 : index
    %27 = vector.load %arg4[%c0_10, %c0_11] : memref<32x64xf32, #tpu.memory_space<vmem>>, vector<32x64xf32>
    %cst_12 = arith.constant dense<0.000000e+00> : vector<8x64xf32>
    %28 = tpu.matmul %26, %27, %cst_12 {dimension_numbers = #tpu.dot_dimension_numbers<[1], [0], [0], [1], [0, 0, 1, 1], [], []>} : vector<8x32xf32>, vector<32x64xf32>, vector<8x64xf32> -> vector<8x64xf32>
    %c0_13 = arith.constant 0 : index
    %c0_14 = arith.constant 0 : index
    %29 = vector.load %arg5[%c0_13, %c0_14] : memref<1x64xf32, #tpu.memory_space<vmem>>, vector<1x64xf32>
    %30 = vector.broadcast %29 : vector<1x64xf32> to vector<8x64xf32>
    %31 = arith.addf %28, %30 : vector<8x64xf32>
    %cst_15 = arith.constant 0.000000e+00 : f32
    %32 = vector.broadcast %cst_15 : f32 to vector<8x64xf32>
    %33 = arith.maximumf %31, %32 : vector<8x64xf32>
    %c0_16 = arith.constant 0 : index
    %c0_17 = arith.constant 0 : index
    %34 = vector.load %arg6[%c0_16, %c0_17] : memref<64x32xf32, #tpu.memory_space<vmem>>, vector<64x32xf32>
    %cst_18 = arith.constant dense<0.000000e+00> : vector<8x32xf32>
    %35 = tpu.matmul %33, %34, %cst_18 {dimension_numbers = #tpu.dot_dimension_numbers<[1], [0], [0], [1], [0, 0, 1, 1], [], []>} : vector<8x64xf32>, vector<64x32xf32>, vector<8x32xf32> -> vector<8x32xf32>
    %c0_19 = arith.constant 0 : index
    %c0_20 = arith.constant 0 : index
    %36 = vector.load %arg7[%c0_19, %c0_20] : memref<1x32xf32, #tpu.memory_space<vmem>>, vector<1x32xf32>
    %37 = vector.broadcast %36 : vector<1x32xf32> to vector<8x32xf32>
    %38 = arith.addf %35, %37 : vector<8x32xf32>
    %39 = arith.addf %1, %38 : vector<8x32xf32>
    %c0_21 = arith.constant 0 : index
    %c0_22 = arith.constant 0 : index
    %c0_23 = arith.constant 0 : index
    %40 = vector.load %arg8[%c0_21, %c0_22, %c0_23] : memref<1x8x32xf32, #tpu.memory_space<vmem>>, vector<1x8x32xf32>
    %41 = vector.shape_cast %40 : vector<1x8x32xf32> to vector<8x32xf32>
    %42 = vector.shape_cast %39 : vector<8x32xf32> to vector<1x8x32xf32>
    tpu.vector_store %arg8[%c0_21, %c0_22, %c0_23], %42 {strides = array<i32>} : memref<1x8x32xf32, #tpu.memory_space<vmem>>, vector<1x8x32xf32>,
    return
  }
  func.func @transform_0(%arg0: i32) -> (i32, i32, i32) {
    %c0_i32 = arith.constant 0 : i32
    %c0_i32_0 = arith.constant 0 : i32
    %c0_i32_1 = arith.constant 0 : i32
    return %arg0, %c0_i32, %c0_i32_0 : i32, i32, i32
  }
  func.func @transform_1(%arg0: i32) -> (i32, i32) {
    %c0_i32 = arith.constant 0 : i32
    %c0_i32_0 = arith.constant 0 : i32
    %c0_i32_1 = arith.constant 0 : i32
    return %c0_i32, %c0_i32_0 : i32, i32
  }
  func.func @transform_2(%arg0: i32) -> (i32, i32) {
    %c0_i32 = arith.constant 0 : i32
    %c0_i32_0 = arith.constant 0 : i32
    %c0_i32_1 = arith.constant 0 : i32
    return %c0_i32, %c0_i32_0 : i32, i32
  }
  func.func @transform_3(%arg0: i32) -> (i32, i32) {
    %c0_i32 = arith.constant 0 : i32
    %c0_i32_0 = arith.constant 0 : i32
    %c0_i32_1 = arith.constant 0 : i32
    return %c0_i32, %c0_i32_0 : i32, i32
  }
  func.func @transform_4(%arg0: i32) -> (i32, i32) {
    %c0_i32 = arith.constant 0 : i32
    %c0_i32_0 = arith.constant 0 : i32
    %c0_i32_1 = arith.constant 0 : i32
    return %c0_i32, %c0_i32_0 : i32, i32
  }
  func.func @transform_5(%arg0: i32) -> (i32, i32) {
    %c0_i32 = arith.constant 0 : i32
    %c0_i32_0 = arith.constant 0 : i32
    %c0_i32_1 = arith.constant 0 : i32
    return %c0_i32, %c0_i32_0 : i32, i32
  }
  func.func @transform_6(%arg0: i32) -> (i32, i32) {
    %c0_i32 = arith.constant 0 : i32
    %c0_i32_0 = arith.constant 0 : i32
    %c0_i32_1 = arith.constant 0 : i32
    return %c0_i32, %c0_i32_0 : i32, i32
  }
  func.func @transform_7(%arg0: i32) -> (i32, i32, i32) {
    %c0_i32 = arith.constant 0 : i32
    %c0_i32_0 = arith.constant 0 : i32
    %c0_i32_1 = arith.constant 0 : i32
    return %arg0, %c0_i32, %c0_i32_0 : i32, i32, i32
  }
}

module attributes {stable_mosaic.version = 11 : i64} {
  func.func @_self_attn_sublayer_kernel(%arg0: i32, %arg1: memref<1x8x32xf32, #tpu.memory_space<vmem>>, %arg2: memref<1x8x8xi32, #tpu.memory_space<vmem>>, %arg3: memref<1x32xf32, #tpu.memory_space<vmem>>, %arg4: memref<1x32xf32, #tpu.memory_space<vmem>>, %arg5: memref<32x96xf32, #tpu.memory_space<vmem>>, %arg6: memref<1x96xf32, #tpu.memory_space<vmem>>, %arg7: memref<32x32xf32, #tpu.memory_space<vmem>>, %arg8: memref<1x32xf32, #tpu.memory_space<vmem>>, %arg9: memref<1x8x32xf32, #tpu.memory_space<vmem>>) attributes {dimension_semantics = [#tpu.dimension_semantics<parallel>], iteration_bounds = array<i64: 2>, scalar_prefetch = 0 : i64, scratch_operands = 0 : i64, tpu.core_type = #tpu.core_type<tc>, window_params = [{transform_indices = @transform_0, window_bounds = array<i64: 1, 8, 32>}, {transform_indices = @transform_1, window_bounds = array<i64: 1, 8, 8>}, {pipeline_mode = #tpu.pipeline_mode<synchronous>, transform_indices = @transform_2, window_bounds = array<i64: 1, 32>}, {pipeline_mode = #tpu.pipeline_mode<synchronous>, transform_indices = @transform_3, window_bounds = array<i64: 1, 32>}, {pipeline_mode = #tpu.pipeline_mode<synchronous>, transform_indices = @transform_4, window_bounds = array<i64: 32, 96>}, {pipeline_mode = #tpu.pipeline_mode<synchronous>, transform_indices = @transform_5, window_bounds = array<i64: 1, 96>}, {pipeline_mode = #tpu.pipeline_mode<synchronous>, transform_indices = @transform_6, window_bounds = array<i64: 32, 32>}, {pipeline_mode = #tpu.pipeline_mode<synchronous>, transform_indices = @transform_7, window_bounds = array<i64: 1, 32>}, {transform_indices = @transform_8, window_bounds = array<i64: 1, 8, 32>}]} {
    %c0 = arith.constant 0 : index
    %c0_0 = arith.constant 0 : index
    %c0_1 = arith.constant 0 : index
    %0 = vector.load %arg1[%c0, %c0_0, %c0_1] : memref<1x8x32xf32, #tpu.memory_space<vmem>>, vector<1x8x32xf32>
    %1 = vector.shape_cast %0 : vector<1x8x32xf32> to vector<8x32xf32>
    %c0_2 = arith.constant 0 : index
    %c0_3 = arith.constant 0 : index
    %2 = vector.load %arg3[%c0_2, %c0_3] : memref<1x32xf32, #tpu.memory_space<vmem>>, vector<1x32xf32>
    %c0_4 = arith.constant 0 : index
    %c0_5 = arith.constant 0 : index
    %3 = vector.load %arg4[%c0_4, %c0_5] : memref<1x32xf32, #tpu.memory_space<vmem>>, vector<1x32xf32>
    %cst = arith.constant dense<0.000000e+00> : vector<8xf32>
    %4 = vector.multi_reduction <add>, %1, %cst [1] : vector<8x32xf32> to vector<8xf32>
    %5 = vector.shape_cast %4 : vector<8xf32> to vector<8x1xf32>
    %cst_6 = arith.constant 3.200000e+01 : f32
    %6 = vector.broadcast %cst_6 : f32 to vector<8x1xf32>
    %7 = arith.divf %5, %6 : vector<8x1xf32>
    %8 = vector.broadcast %7 : vector<8x1xf32> to vector<8x32xf32>
    %9 = arith.subf %1, %8 : vector<8x32xf32>
    %10 = arith.mulf %9, %9 : vector<8x32xf32>
    %cst_7 = arith.constant dense<0.000000e+00> : vector<8xf32>
    %11 = vector.multi_reduction <add>, %10, %cst_7 [1] : vector<8x32xf32> to vector<8xf32>
    %12 = vector.shape_cast %11 : vector<8xf32> to vector<8x1xf32>
    %cst_8 = arith.constant 0.0322580636 : f32
    %13 = vector.broadcast %cst_8 : f32 to vector<8x1xf32>
    %14 = arith.mulf %12, %13 : vector<8x1xf32>
    %15 = math.sqrt %14 : vector<8x1xf32>
    %cst_9 = arith.constant 9.99999997E-7 : f32
    %16 = vector.broadcast %cst_9 : f32 to vector<8x1xf32>
    %17 = arith.addf %15, %16 : vector<8x1xf32>
    %18 = tpu.reciprocal %17 : vector<8x1xf32> -> vector<8x1xf32>
    %19 = vector.broadcast %7 : vector<8x1xf32> to vector<8x32xf32>
    %20 = arith.subf %1, %19 : vector<8x32xf32>
    %21 = vector.broadcast %2 : vector<1x32xf32> to vector<8x32xf32>
    %22 = arith.mulf %21, %20 : vector<8x32xf32>
    %23 = vector.broadcast %18 : vector<8x1xf32> to vector<8x32xf32>
    %24 = arith.mulf %22, %23 : vector<8x32xf32>
    %25 = vector.broadcast %3 : vector<1x32xf32> to vector<8x32xf32>
    %26 = arith.addf %24, %25 : vector<8x32xf32>
    %c0_10 = arith.constant 0 : index
    %c0_11 = arith.constant 0 : index
    %27 = vector.load %arg5[%c0_10, %c0_11] : memref<32x96xf32, #tpu.memory_space<vmem>>, vector<32x96xf32>
    %cst_12 = arith.constant dense<0.000000e+00> : vector<8x96xf32>
    %28 = tpu.matmul %26, %27, %cst_12 {dimension_numbers = #tpu.dot_dimension_numbers<[1], [0], [0], [1], [0, 0, 1, 1], [], []>} : vector<8x32xf32>, vector<32x96xf32>, vector<8x96xf32> -> vector<8x96xf32>
    %c0_13 = arith.constant 0 : index
    %c0_14 = arith.constant 0 : index
    %29 = vector.load %arg6[%c0_13, %c0_14] : memref<1x96xf32, #tpu.memory_space<vmem>>, vector<1x96xf32>
    %30 = vector.broadcast %29 : vector<1x96xf32> to vector<8x96xf32>
    %31 = arith.addf %28, %30 : vector<8x96xf32>
    %32 = vector.extract_strided_slice %31 {offsets = [0, 0], sizes = [8, 32], strides = [1, 1]} : vector<8x96xf32> to vector<8x32xf32>
    %33 = vector.extract_strided_slice %31 {offsets = [0, 32], sizes = [8, 32], strides = [1, 1]} : vector<8x96xf32> to vector<8x32xf32>
    %34 = vector.extract_strided_slice %31 {offsets = [0, 64], sizes = [8, 32], strides = [1, 1]} : vector<8x96xf32> to vector<8x32xf32>
    %c0_15 = arith.constant 0 : index
    %c0_16 = arith.constant 0 : index
    %c0_17 = arith.constant 0 : index
    %35 = vector.load %arg2[%c0_15, %c0_16, %c0_17] : memref<1x8x8xi32, #tpu.memory_space<vmem>>, vector<1x8x8xi32>
    %36 = vector.shape_cast %35 : vector<1x8x8xi32> to vector<8x8xi32>
    %c0_18 = arith.constant 0 : index
    %c0_19 = arith.constant 0 : index
    %37 = vector.load %arg7[%c0_18, %c0_19] : memref<32x32xf32, #tpu.memory_space<vmem>>, vector<32x32xf32>
    %38 = vector.extract_strided_slice %32 {offsets = [0, 0], sizes = [8, 8], strides = [1, 1]} : vector<8x32xf32> to vector<8x8xf32>
    %39 = vector.extract_strided_slice %33 {offsets = [0, 0], sizes = [8, 8], strides = [1, 1]} : vector<8x32xf32> to vector<8x8xf32>
    %cst_20 = arith.constant dense<0.000000e+00> : vector<8x8xf32>
    %40 = tpu.matmul %38, %39, %cst_20 {dimension_numbers = #tpu.dot_dimension_numbers<[1], [1], [0], [0], [0, 0, 1, 0], [], []>} : vector<8x8xf32>, vector<8x8xf32>, vector<8x8xf32> -> vector<8x8xf32>
    %cst_21 = arith.constant 0.353553385 : f32
    %41 = vector.broadcast %cst_21 : f32 to vector<8x8xf32>
    %42 = arith.mulf %40, %41 : vector<8x8xf32>
    %c0_i32 = arith.constant 0 : i32
    %43 = vector.broadcast %c0_i32 : i32 to vector<8x8xi32>
    %44 = arith.cmpi eq, %36, %43 : vector<8x8xi32>
    %cst_22 = arith.constant -1.000000e+09 : f32
    %45 = vector.broadcast %cst_22 : f32 to vector<8x8xf32>
    %46 = arith.select %44, %45, %42 : vector<8x8xi1>, vector<8x8xf32>
    %cst_23 = arith.constant dense<0xFF800000> : vector<8xf32>
    %47 = vector.multi_reduction <maximumf>, %46, %cst_23 [1] : vector<8x8xf32> to vector<8xf32>
    %48 = vector.shape_cast %47 : vector<8xf32> to vector<8x1xf32>
    %49 = vector.broadcast %48 : vector<8x1xf32> to vector<8x8xf32>
    %50 = arith.subf %46, %49 : vector<8x8xf32>
    %51 = math.exp %50 : vector<8x8xf32>
    %cst_24 = arith.constant dense<0.000000e+00> : vector<8xf32>
    %52 = vector.multi_reduction <add>, %51, %cst_24 [1] : vector<8x8xf32> to vector<8xf32>
    %53 = vector.shape_cast %52 : vector<8xf32> to vector<8x1xf32>
    %54 = tpu.reciprocal %53 {approx = true} : vector<8x1xf32> -> vector<8x1xf32>
    %55 = vector.broadcast %54 : vector<8x1xf32> to vector<8x8xf32>
    %56 = arith.mulf %51, %55 : vector<8x8xf32>
    %57 = vector.extract_strided_slice %34 {offsets = [0, 0], sizes = [8, 8], strides = [1, 1]} : vector<8x32xf32> to vector<8x8xf32>
    %cst_25 = arith.constant dense<0.000000e+00> : vector<8x8xf32>
    %58 = tpu.matmul %56, %57, %cst_25 {dimension_numbers = #tpu.dot_dimension_numbers<[1], [0], [0], [1], [0, 0, 1, 1], [], []>} : vector<8x8xf32>, vector<8x8xf32>, vector<8x8xf32> -> vector<8x8xf32>
    %59 = vector.extract_strided_slice %37 {offsets = [0, 0], sizes = [8, 32], strides = [1, 1]} : vector<32x32xf32> to vector<8x32xf32>
    %cst_26 = arith.constant dense<0.000000e+00> : vector<8x32xf32>
    %60 = tpu.matmul %58, %59, %cst_26 {dimension_numbers = #tpu.dot_dimension_numbers<[1], [0], [0], [1], [0, 0, 1, 1], [], []>} : vector<8x8xf32>, vector<8x32xf32>, vector<8x32xf32> -> vector<8x32xf32>
    %61 = vector.extract_strided_slice %32 {offsets = [0, 8], sizes = [8, 8], strides = [1, 1]} : vector<8x32xf32> to vector<8x8xf32>
    %62 = vector.extract_strided_slice %33 {offsets = [0, 8], sizes = [8, 8], strides = [1, 1]} : vector<8x32xf32> to vector<8x8xf32>
    %cst_27 = arith.constant dense<0.000000e+00> : vector<8x8xf32>
    %63 = tpu.matmul %61, %62, %cst_27 {dimension_numbers = #tpu.dot_dimension_numbers<[1], [1], [0], [0], [0, 0, 1, 0], [], []>} : vector<8x8xf32>, vector<8x8xf32>, vector<8x8xf32> -> vector<8x8xf32>
    %cst_28 = arith.constant 0.353553385 : f32
    %64 = vector.broadcast %cst_28 : f32 to vector<8x8xf32>
    %65 = arith.mulf %63, %64 : vector<8x8xf32>
    %c0_i32_29 = arith.constant 0 : i32
    %66 = vector.broadcast %c0_i32_29 : i32 to vector<8x8xi32>
    %67 = arith.cmpi eq, %36, %66 : vector<8x8xi32>
    %cst_30 = arith.constant -1.000000e+09 : f32
    %68 = vector.broadcast %cst_30 : f32 to vector<8x8xf32>
    %69 = arith.select %67, %68, %65 : vector<8x8xi1>, vector<8x8xf32>
    %cst_31 = arith.constant dense<0xFF800000> : vector<8xf32>
    %70 = vector.multi_reduction <maximumf>, %69, %cst_31 [1] : vector<8x8xf32> to vector<8xf32>
    %71 = vector.shape_cast %70 : vector<8xf32> to vector<8x1xf32>
    %72 = vector.broadcast %71 : vector<8x1xf32> to vector<8x8xf32>
    %73 = arith.subf %69, %72 : vector<8x8xf32>
    %74 = math.exp %73 : vector<8x8xf32>
    %cst_32 = arith.constant dense<0.000000e+00> : vector<8xf32>
    %75 = vector.multi_reduction <add>, %74, %cst_32 [1] : vector<8x8xf32> to vector<8xf32>
    %76 = vector.shape_cast %75 : vector<8xf32> to vector<8x1xf32>
    %77 = tpu.reciprocal %76 {approx = true} : vector<8x1xf32> -> vector<8x1xf32>
    %78 = vector.broadcast %77 : vector<8x1xf32> to vector<8x8xf32>
    %79 = arith.mulf %74, %78 : vector<8x8xf32>
    %80 = vector.extract_strided_slice %34 {offsets = [0, 8], sizes = [8, 8], strides = [1, 1]} : vector<8x32xf32> to vector<8x8xf32>
    %cst_33 = arith.constant dense<0.000000e+00> : vector<8x8xf32>
    %81 = tpu.matmul %79, %80, %cst_33 {dimension_numbers = #tpu.dot_dimension_numbers<[1], [0], [0], [1], [0, 0, 1, 1], [], []>} : vector<8x8xf32>, vector<8x8xf32>, vector<8x8xf32> -> vector<8x8xf32>
    %82 = vector.extract_strided_slice %37 {offsets = [8, 0], sizes = [8, 32], strides = [1, 1]} : vector<32x32xf32> to vector<8x32xf32>
    %cst_34 = arith.constant dense<0.000000e+00> : vector<8x32xf32>
    %83 = tpu.matmul %81, %82, %cst_34 {dimension_numbers = #tpu.dot_dimension_numbers<[1], [0], [0], [1], [0, 0, 1, 1], [], []>} : vector<8x8xf32>, vector<8x32xf32>, vector<8x32xf32> -> vector<8x32xf32>
    %84 = arith.addf %60, %83 : vector<8x32xf32>
    %85 = vector.extract_strided_slice %32 {offsets = [0, 16], sizes = [8, 8], strides = [1, 1]} : vector<8x32xf32> to vector<8x8xf32>
    %86 = vector.extract_strided_slice %33 {offsets = [0, 16], sizes = [8, 8], strides = [1, 1]} : vector<8x32xf32> to vector<8x8xf32>
    %cst_35 = arith.constant dense<0.000000e+00> : vector<8x8xf32>
    %87 = tpu.matmul %85, %86, %cst_35 {dimension_numbers = #tpu.dot_dimension_numbers<[1], [1], [0], [0], [0, 0, 1, 0], [], []>} : vector<8x8xf32>, vector<8x8xf32>, vector<8x8xf32> -> vector<8x8xf32>
    %cst_36 = arith.constant 0.353553385 : f32
    %88 = vector.broadcast %cst_36 : f32 to vector<8x8xf32>
    %89 = arith.mulf %87, %88 : vector<8x8xf32>
    %c0_i32_37 = arith.constant 0 : i32
    %90 = vector.broadcast %c0_i32_37 : i32 to vector<8x8xi32>
    %91 = arith.cmpi eq, %36, %90 : vector<8x8xi32>
    %cst_38 = arith.constant -1.000000e+09 : f32
    %92 = vector.broadcast %cst_38 : f32 to vector<8x8xf32>
    %93 = arith.select %91, %92, %89 : vector<8x8xi1>, vector<8x8xf32>
    %cst_39 = arith.constant dense<0xFF800000> : vector<8xf32>
    %94 = vector.multi_reduction <maximumf>, %93, %cst_39 [1] : vector<8x8xf32> to vector<8xf32>
    %95 = vector.shape_cast %94 : vector<8xf32> to vector<8x1xf32>
    %96 = vector.broadcast %95 : vector<8x1xf32> to vector<8x8xf32>
    %97 = arith.subf %93, %96 : vector<8x8xf32>
    %98 = math.exp %97 : vector<8x8xf32>
    %cst_40 = arith.constant dense<0.000000e+00> : vector<8xf32>
    %99 = vector.multi_reduction <add>, %98, %cst_40 [1] : vector<8x8xf32> to vector<8xf32>
    %100 = vector.shape_cast %99 : vector<8xf32> to vector<8x1xf32>
    %101 = tpu.reciprocal %100 {approx = true} : vector<8x1xf32> -> vector<8x1xf32>
    %102 = vector.broadcast %101 : vector<8x1xf32> to vector<8x8xf32>
    %103 = arith.mulf %98, %102 : vector<8x8xf32>
    %104 = vector.extract_strided_slice %34 {offsets = [0, 16], sizes = [8, 8], strides = [1, 1]} : vector<8x32xf32> to vector<8x8xf32>
    %cst_41 = arith.constant dense<0.000000e+00> : vector<8x8xf32>
    %105 = tpu.matmul %103, %104, %cst_41 {dimension_numbers = #tpu.dot_dimension_numbers<[1], [0], [0], [1], [0, 0, 1, 1], [], []>} : vector<8x8xf32>, vector<8x8xf32>, vector<8x8xf32> -> vector<8x8xf32>
    %106 = vector.extract_strided_slice %37 {offsets = [16, 0], sizes = [8, 32], strides = [1, 1]} : vector<32x32xf32> to vector<8x32xf32>
    %cst_42 = arith.constant dense<0.000000e+00> : vector<8x32xf32>
    %107 = tpu.matmul %105, %106, %cst_42 {dimension_numbers = #tpu.dot_dimension_numbers<[1], [0], [0], [1], [0, 0, 1, 1], [], []>} : vector<8x8xf32>, vector<8x32xf32>, vector<8x32xf32> -> vector<8x32xf32>
    %108 = arith.addf %84, %107 : vector<8x32xf32>
    %109 = vector.extract_strided_slice %32 {offsets = [0, 24], sizes = [8, 8], strides = [1, 1]} : vector<8x32xf32> to vector<8x8xf32>
    %110 = vector.extract_strided_slice %33 {offsets = [0, 24], sizes = [8, 8], strides = [1, 1]} : vector<8x32xf32> to vector<8x8xf32>
    %cst_43 = arith.constant dense<0.000000e+00> : vector<8x8xf32>
    %111 = tpu.matmul %109, %110, %cst_43 {dimension_numbers = #tpu.dot_dimension_numbers<[1], [1], [0], [0], [0, 0, 1, 0], [], []>} : vector<8x8xf32>, vector<8x8xf32>, vector<8x8xf32> -> vector<8x8xf32>
    %cst_44 = arith.constant 0.353553385 : f32
    %112 = vector.broadcast %cst_44 : f32 to vector<8x8xf32>
    %113 = arith.mulf %111, %112 : vector<8x8xf32>
    %c0_i32_45 = arith.constant 0 : i32
    %114 = vector.broadcast %c0_i32_45 : i32 to vector<8x8xi32>
    %115 = arith.cmpi eq, %36, %114 : vector<8x8xi32>
    %cst_46 = arith.constant -1.000000e+09 : f32
    %116 = vector.broadcast %cst_46 : f32 to vector<8x8xf32>
    %117 = arith.select %115, %116, %113 : vector<8x8xi1>, vector<8x8xf32>
    %cst_47 = arith.constant dense<0xFF800000> : vector<8xf32>
    %118 = vector.multi_reduction <maximumf>, %117, %cst_47 [1] : vector<8x8xf32> to vector<8xf32>
    %119 = vector.shape_cast %118 : vector<8xf32> to vector<8x1xf32>
    %120 = vector.broadcast %119 : vector<8x1xf32> to vector<8x8xf32>
    %121 = arith.subf %117, %120 : vector<8x8xf32>
    %122 = math.exp %121 : vector<8x8xf32>
    %cst_48 = arith.constant dense<0.000000e+00> : vector<8xf32>
    %123 = vector.multi_reduction <add>, %122, %cst_48 [1] : vector<8x8xf32> to vector<8xf32>
    %124 = vector.shape_cast %123 : vector<8xf32> to vector<8x1xf32>
    %125 = tpu.reciprocal %124 {approx = true} : vector<8x1xf32> -> vector<8x1xf32>
    %126 = vector.broadcast %125 : vector<8x1xf32> to vector<8x8xf32>
    %127 = arith.mulf %122, %126 : vector<8x8xf32>
    %128 = vector.extract_strided_slice %34 {offsets = [0, 24], sizes = [8, 8], strides = [1, 1]} : vector<8x32xf32> to vector<8x8xf32>
    %cst_49 = arith.constant dense<0.000000e+00> : vector<8x8xf32>
    %129 = tpu.matmul %127, %128, %cst_49 {dimension_numbers = #tpu.dot_dimension_numbers<[1], [0], [0], [1], [0, 0, 1, 1], [], []>} : vector<8x8xf32>, vector<8x8xf32>, vector<8x8xf32> -> vector<8x8xf32>
    %130 = vector.extract_strided_slice %37 {offsets = [24, 0], sizes = [8, 32], strides = [1, 1]} : vector<32x32xf32> to vector<8x32xf32>
    %cst_50 = arith.constant dense<0.000000e+00> : vector<8x32xf32>
    %131 = tpu.matmul %129, %130, %cst_50 {dimension_numbers = #tpu.dot_dimension_numbers<[1], [0], [0], [1], [0, 0, 1, 1], [], []>} : vector<8x8xf32>, vector<8x32xf32>, vector<8x32xf32> -> vector<8x32xf32>
    %132 = arith.addf %108, %131 : vector<8x32xf32>
    %133 = arith.addf %1, %132 : vector<8x32xf32>
    %c0_51 = arith.constant 0 : index
    %c0_52 = arith.constant 0 : index
    %134 = vector.load %arg8[%c0_51, %c0_52] : memref<1x32xf32, #tpu.memory_space<vmem>>, vector<1x32xf32>
    %135 = vector.broadcast %134 : vector<1x32xf32> to vector<8x32xf32>
    %136 = arith.addf %133, %135 : vector<8x32xf32>
    %c0_53 = arith.constant 0 : index
    %c0_54 = arith.constant 0 : index
    %c0_55 = arith.constant 0 : index
    %137 = vector.load %arg9[%c0_53, %c0_54, %c0_55] : memref<1x8x32xf32, #tpu.memory_space<vmem>>, vector<1x8x32xf32>
    %138 = vector.shape_cast %137 : vector<1x8x32xf32> to vector<8x32xf32>
    %139 = vector.shape_cast %136 : vector<8x32xf32> to vector<1x8x32xf32>
    tpu.vector_store %arg9[%c0_53, %c0_54, %c0_55], %139 {strides = array<i32>} : memref<1x8x32xf32, #tpu.memory_space<vmem>>, vector<1x8x32xf32>,
    return
  }
  func.func @transform_0(%arg0: i32) -> (i32, i32, i32) {
    %c0_i32 = arith.constant 0 : i32
    %c0_i32_0 = arith.constant 0 : i32
    %c0_i32_1 = arith.constant 0 : i32
    return %arg0, %c0_i32, %c0_i32_0 : i32, i32, i32
  }
  func.func @transform_1(%arg0: i32) -> (i32, i32, i32) {
    %c0_i32 = arith.constant 0 : i32
    %c0_i32_0 = arith.constant 0 : i32
    %c0_i32_1 = arith.constant 0 : i32
    return %arg0, %c0_i32, %c0_i32_0 : i32, i32, i32
  }
  func.func @transform_2(%arg0: i32) -> (i32, i32) {
    %c0_i32 = arith.constant 0 : i32
    %c0_i32_0 = arith.constant 0 : i32
    %c0_i32_1 = arith.constant 0 : i32
    return %c0_i32, %c0_i32_0 : i32, i32
  }
  func.func @transform_3(%arg0: i32) -> (i32, i32) {
    %c0_i32 = arith.constant 0 : i32
    %c0_i32_0 = arith.constant 0 : i32
    %c0_i32_1 = arith.constant 0 : i32
    return %c0_i32, %c0_i32_0 : i32, i32
  }
  func.func @transform_4(%arg0: i32) -> (i32, i32) {
    %c0_i32 = arith.constant 0 : i32
    %c0_i32_0 = arith.constant 0 : i32
    %c0_i32_1 = arith.constant 0 : i32
    return %c0_i32, %c0_i32_0 : i32, i32
  }
  func.func @transform_5(%arg0: i32) -> (i32, i32) {
    %c0_i32 = arith.constant 0 : i32
    %c0_i32_0 = arith.constant 0 : i32
    %c0_i32_1 = arith.constant 0 : i32
    return %c0_i32, %c0_i32_0 : i32, i32
  }
  func.func @transform_6(%arg0: i32) -> (i32, i32) {
    %c0_i32 = arith.constant 0 : i32
    %c0_i32_0 = arith.constant 0 : i32
    %c0_i32_1 = arith.constant 0 : i32
    return %c0_i32, %c0_i32_0 : i32, i32
  }
  func.func @transform_7(%arg0: i32) -> (i32, i32) {
    %c0_i32 = arith.constant 0 : i32
    %c0_i32_0 = arith.constant 0 : i32
    %c0_i32_1 = arith.constant 0 : i32
    return %c0_i32, %c0_i32_0 : i32, i32
  }
  func.func @transform_8(%arg0: i32) -> (i32, i32, i32) {
    %c0_i32 = arith.constant 0 : i32
    %c0_i32_0 = arith.constant 0 : i32
    %c0_i32_1 = arith.constant 0 : i32
    return %arg0, %c0_i32, %c0_i32_0 : i32, i32, i32
  }
}

module attributes {stable_mosaic.version = 11 : i64} {
  func.func @_ffn_sublayer_kernel(%arg0: i32, %arg1: memref<1x8x32xf32, #tpu.memory_space<vmem>>, %arg2: memref<1x32xf32, #tpu.memory_space<vmem>>, %arg3: memref<1x32xf32, #tpu.memory_space<vmem>>, %arg4: memref<32x64xf32, #tpu.memory_space<vmem>>, %arg5: memref<1x64xf32, #tpu.memory_space<vmem>>, %arg6: memref<64x32xf32, #tpu.memory_space<vmem>>, %arg7: memref<1x32xf32, #tpu.memory_space<vmem>>, %arg8: memref<1x8x32xf32, #tpu.memory_space<vmem>>) attributes {dimension_semantics = [#tpu.dimension_semantics<parallel>], iteration_bounds = array<i64: 2>, scalar_prefetch = 0 : i64, scratch_operands = 0 : i64, tpu.core_type = #tpu.core_type<tc>, window_params = [{transform_indices = @transform_0, window_bounds = array<i64: 1, 8, 32>}, {pipeline_mode = #tpu.pipeline_mode<synchronous>, transform_indices = @transform_1, window_bounds = array<i64: 1, 32>}, {pipeline_mode = #tpu.pipeline_mode<synchronous>, transform_indices = @transform_2, window_bounds = array<i64: 1, 32>}, {pipeline_mode = #tpu.pipeline_mode<synchronous>, transform_indices = @transform_3, window_bounds = array<i64: 32, 64>}, {pipeline_mode = #tpu.pipeline_mode<synchronous>, transform_indices = @transform_4, window_bounds = array<i64: 1, 64>}, {pipeline_mode = #tpu.pipeline_mode<synchronous>, transform_indices = @transform_5, window_bounds = array<i64: 64, 32>}, {pipeline_mode = #tpu.pipeline_mode<synchronous>, transform_indices = @transform_6, window_bounds = array<i64: 1, 32>}, {transform_indices = @transform_7, window_bounds = array<i64: 1, 8, 32>}]} {
    %c0 = arith.constant 0 : index
    %c0_0 = arith.constant 0 : index
    %c0_1 = arith.constant 0 : index
    %0 = vector.load %arg1[%c0, %c0_0, %c0_1] : memref<1x8x32xf32, #tpu.memory_space<vmem>>, vector<1x8x32xf32>
    %1 = vector.shape_cast %0 : vector<1x8x32xf32> to vector<8x32xf32>
    %c0_2 = arith.constant 0 : index
    %c0_3 = arith.constant 0 : index
    %2 = vector.load %arg2[%c0_2, %c0_3] : memref<1x32xf32, #tpu.memory_space<vmem>>, vector<1x32xf32>
    %c0_4 = arith.constant 0 : index
    %c0_5 = arith.constant 0 : index
    %3 = vector.load %arg3[%c0_4, %c0_5] : memref<1x32xf32, #tpu.memory_space<vmem>>, vector<1x32xf32>
    %cst = arith.constant dense<0.000000e+00> : vector<8xf32>
    %4 = vector.multi_reduction <add>, %1, %cst [1] : vector<8x32xf32> to vector<8xf32>
    %5 = vector.shape_cast %4 : vector<8xf32> to vector<8x1xf32>
    %cst_6 = arith.constant 3.200000e+01 : f32
    %6 = vector.broadcast %cst_6 : f32 to vector<8x1xf32>
    %7 = arith.divf %5, %6 : vector<8x1xf32>
    %8 = vector.broadcast %7 : vector<8x1xf32> to vector<8x32xf32>
    %9 = arith.subf %1, %8 : vector<8x32xf32>
    %10 = arith.mulf %9, %9 : vector<8x32xf32>
    %cst_7 = arith.constant dense<0.000000e+00> : vector<8xf32>
    %11 = vector.multi_reduction <add>, %10, %cst_7 [1] : vector<8x32xf32> to vector<8xf32>
    %12 = vector.shape_cast %11 : vector<8xf32> to vector<8x1xf32>
    %cst_8 = arith.constant 0.0322580636 : f32
    %13 = vector.broadcast %cst_8 : f32 to vector<8x1xf32>
    %14 = arith.mulf %12, %13 : vector<8x1xf32>
    %15 = math.sqrt %14 : vector<8x1xf32>
    %cst_9 = arith.constant 9.99999997E-7 : f32
    %16 = vector.broadcast %cst_9 : f32 to vector<8x1xf32>
    %17 = arith.addf %15, %16 : vector<8x1xf32>
    %18 = tpu.reciprocal %17 : vector<8x1xf32> -> vector<8x1xf32>
    %19 = vector.broadcast %7 : vector<8x1xf32> to vector<8x32xf32>
    %20 = arith.subf %1, %19 : vector<8x32xf32>
    %21 = vector.broadcast %2 : vector<1x32xf32> to vector<8x32xf32>
    %22 = arith.mulf %21, %20 : vector<8x32xf32>
    %23 = vector.broadcast %18 : vector<8x1xf32> to vector<8x32xf32>
    %24 = arith.mulf %22, %23 : vector<8x32xf32>
    %25 = vector.broadcast %3 : vector<1x32xf32> to vector<8x32xf32>
    %26 = arith.addf %24, %25 : vector<8x32xf32>
    %c0_10 = arith.constant 0 : index
    %c0_11 = arith.constant 0 : index
    %27 = vector.load %arg4[%c0_10, %c0_11] : memref<32x64xf32, #tpu.memory_space<vmem>>, vector<32x64xf32>
    %cst_12 = arith.constant dense<0.000000e+00> : vector<8x64xf32>
    %28 = tpu.matmul %26, %27, %cst_12 {dimension_numbers = #tpu.dot_dimension_numbers<[1], [0], [0], [1], [0, 0, 1, 1], [], []>} : vector<8x32xf32>, vector<32x64xf32>, vector<8x64xf32> -> vector<8x64xf32>
    %c0_13 = arith.constant 0 : index
    %c0_14 = arith.constant 0 : index
    %29 = vector.load %arg5[%c0_13, %c0_14] : memref<1x64xf32, #tpu.memory_space<vmem>>, vector<1x64xf32>
    %30 = vector.broadcast %29 : vector<1x64xf32> to vector<8x64xf32>
    %31 = arith.addf %28, %30 : vector<8x64xf32>
    %cst_15 = arith.constant 0.000000e+00 : f32
    %32 = vector.broadcast %cst_15 : f32 to vector<8x64xf32>
    %33 = arith.maximumf %31, %32 : vector<8x64xf32>
    %c0_16 = arith.constant 0 : index
    %c0_17 = arith.constant 0 : index
    %34 = vector.load %arg6[%c0_16, %c0_17] : memref<64x32xf32, #tpu.memory_space<vmem>>, vector<64x32xf32>
    %cst_18 = arith.constant dense<0.000000e+00> : vector<8x32xf32>
    %35 = tpu.matmul %33, %34, %cst_18 {dimension_numbers = #tpu.dot_dimension_numbers<[1], [0], [0], [1], [0, 0, 1, 1], [], []>} : vector<8x64xf32>, vector<64x32xf32>, vector<8x32xf32> -> vector<8x32xf32>
    %c0_19 = arith.constant 0 : index
    %c0_20 = arith.constant 0 : index
    %36 = vector.load %arg7[%c0_19, %c0_20] : memref<1x32xf32, #tpu.memory_space<vmem>>, vector<1x32xf32>
    %37 = vector.broadcast %36 : vector<1x32xf32> to vector<8x32xf32>
    %38 = arith.addf %35, %37 : vector<8x32xf32>
    %39 = arith.addf %1, %38 : vector<8x32xf32>
    %c0_21 = arith.constant 0 : index
    %c0_22 = arith.constant 0 : index
    %c0_23 = arith.constant 0 : index
    %40 = vector.load %arg8[%c0_21, %c0_22, %c0_23] : memref<1x8x32xf32, #tpu.memory_space<vmem>>, vector<1x8x32xf32>
    %41 = vector.shape_cast %40 : vector<1x8x32xf32> to vector<8x32xf32>
    %42 = vector.shape_cast %39 : vector<8x32xf32> to vector<1x8x32xf32>
    tpu.vector_store %arg8[%c0_21, %c0_22, %c0_23], %42 {strides = array<i32>} : memref<1x8x32xf32, #tpu.memory_space<vmem>>, vector<1x8x32xf32>,
    return
  }
  func.func @transform_0(%arg0: i32) -> (i32, i32, i32) {
    %c0_i32 = arith.constant 0 : i32
    %c0_i32_0 = arith.constant 0 : i32
    %c0_i32_1 = arith.constant 0 : i32
    return %arg0, %c0_i32, %c0_i32_0 : i32, i32, i32
  }
  func.func @transform_1(%arg0: i32) -> (i32, i32) {
    %c0_i32 = arith.constant 0 : i32
    %c0_i32_0 = arith.constant 0 : i32
    %c0_i32_1 = arith.constant 0 : i32
    return %c0_i32, %c0_i32_0 : i32, i32
  }
  func.func @transform_2(%arg0: i32) -> (i32, i32) {
    %c0_i32 = arith.constant 0 : i32
    %c0_i32_0 = arith.constant 0 : i32
    %c0_i32_1 = arith.constant 0 : i32
    return %c0_i32, %c0_i32_0 : i32, i32
  }
  func.func @transform_3(%arg0: i32) -> (i32, i32) {
    %c0_i32 = arith.constant 0 : i32
    %c0_i32_0 = arith.constant 0 : i32
    %c0_i32_1 = arith.constant 0 : i32
    return %c0_i32, %c0_i32_0 : i32, i32
  }
  func.func @transform_4(%arg0: i32) -> (i32, i32) {
    %c0_i32 = arith.constant 0 : i32
    %c0_i32_0 = arith.constant 0 : i32
    %c0_i32_1 = arith.constant 0 : i32
    return %c0_i32, %c0_i32_0 : i32, i32
  }
  func.func @transform_5(%arg0: i32) -> (i32, i32) {
    %c0_i32 = arith.constant 0 : i32
    %c0_i32_0 = arith.constant 0 : i32
    %c0_i32_1 = arith.constant 0 : i32
    return %c0_i32, %c0_i32_0 : i32, i32
  }
  func.func @transform_6(%arg0: i32) -> (i32, i32) {
    %c0_i32 = arith.constant 0 : i32
    %c0_i32_0 = arith.constant 0 : i32
    %c0_i32_1 = arith.constant 0 : i32
    return %c0_i32, %c0_i32_0 : i32, i32
  }
  func.func @transform_7(%arg0: i32) -> (i32, i32, i32) {
    %c0_i32 = arith.constant 0 : i32
    %c0_i32_0 = arith.constant 0 : i32
    %c0_i32_1 = arith.constant 0 : i32
    return %arg0, %c0_i32, %c0_i32_0 : i32, i32, i32
  }
}

module attributes {stable_mosaic.version = 11 : i64} {
  func.func @_final_norm_kernel(%arg0: i32, %arg1: memref<1x8x32xf32, #tpu.memory_space<vmem>>, %arg2: memref<1x32xf32, #tpu.memory_space<vmem>>, %arg3: memref<1x32xf32, #tpu.memory_space<vmem>>, %arg4: memref<1x8x32xf32, #tpu.memory_space<vmem>>) attributes {dimension_semantics = [#tpu.dimension_semantics<parallel>], iteration_bounds = array<i64: 2>, scalar_prefetch = 0 : i64, scratch_operands = 0 : i64, tpu.core_type = #tpu.core_type<tc>, window_params = [{transform_indices = @transform_0, window_bounds = array<i64: 1, 8, 32>}, {pipeline_mode = #tpu.pipeline_mode<synchronous>, transform_indices = @transform_1, window_bounds = array<i64: 1, 32>}, {pipeline_mode = #tpu.pipeline_mode<synchronous>, transform_indices = @transform_2, window_bounds = array<i64: 1, 32>}, {transform_indices = @transform_3, window_bounds = array<i64: 1, 8, 32>}]} {
    %c0 = arith.constant 0 : index
    %c0_0 = arith.constant 0 : index
    %c0_1 = arith.constant 0 : index
    %0 = vector.load %arg1[%c0, %c0_0, %c0_1] : memref<1x8x32xf32, #tpu.memory_space<vmem>>, vector<1x8x32xf32>
    %1 = vector.shape_cast %0 : vector<1x8x32xf32> to vector<8x32xf32>
    %c0_2 = arith.constant 0 : index
    %c0_3 = arith.constant 0 : index
    %2 = vector.load %arg2[%c0_2, %c0_3] : memref<1x32xf32, #tpu.memory_space<vmem>>, vector<1x32xf32>
    %c0_4 = arith.constant 0 : index
    %c0_5 = arith.constant 0 : index
    %3 = vector.load %arg3[%c0_4, %c0_5] : memref<1x32xf32, #tpu.memory_space<vmem>>, vector<1x32xf32>
    %cst = arith.constant dense<0.000000e+00> : vector<8xf32>
    %4 = vector.multi_reduction <add>, %1, %cst [1] : vector<8x32xf32> to vector<8xf32>
    %5 = vector.shape_cast %4 : vector<8xf32> to vector<8x1xf32>
    %cst_6 = arith.constant 3.200000e+01 : f32
    %6 = vector.broadcast %cst_6 : f32 to vector<8x1xf32>
    %7 = arith.divf %5, %6 : vector<8x1xf32>
    %8 = vector.broadcast %7 : vector<8x1xf32> to vector<8x32xf32>
    %9 = arith.subf %1, %8 : vector<8x32xf32>
    %10 = arith.mulf %9, %9 : vector<8x32xf32>
    %cst_7 = arith.constant dense<0.000000e+00> : vector<8xf32>
    %11 = vector.multi_reduction <add>, %10, %cst_7 [1] : vector<8x32xf32> to vector<8xf32>
    %12 = vector.shape_cast %11 : vector<8xf32> to vector<8x1xf32>
    %cst_8 = arith.constant 0.0322580636 : f32
    %13 = vector.broadcast %cst_8 : f32 to vector<8x1xf32>
    %14 = arith.mulf %12, %13 : vector<8x1xf32>
    %15 = math.sqrt %14 : vector<8x1xf32>
    %cst_9 = arith.constant 9.99999997E-7 : f32
    %16 = vector.broadcast %cst_9 : f32 to vector<8x1xf32>
    %17 = arith.addf %15, %16 : vector<8x1xf32>
    %18 = tpu.reciprocal %17 : vector<8x1xf32> -> vector<8x1xf32>
    %19 = vector.broadcast %7 : vector<8x1xf32> to vector<8x32xf32>
    %20 = arith.subf %1, %19 : vector<8x32xf32>
    %21 = vector.broadcast %2 : vector<1x32xf32> to vector<8x32xf32>
    %22 = arith.mulf %21, %20 : vector<8x32xf32>
    %23 = vector.broadcast %18 : vector<8x1xf32> to vector<8x32xf32>
    %24 = arith.mulf %22, %23 : vector<8x32xf32>
    %25 = vector.broadcast %3 : vector<1x32xf32> to vector<8x32xf32>
    %26 = arith.addf %24, %25 : vector<8x32xf32>
    %c0_10 = arith.constant 0 : index
    %c0_11 = arith.constant 0 : index
    %c0_12 = arith.constant 0 : index
    %27 = vector.load %arg4[%c0_10, %c0_11, %c0_12] : memref<1x8x32xf32, #tpu.memory_space<vmem>>, vector<1x8x32xf32>
    %28 = vector.shape_cast %27 : vector<1x8x32xf32> to vector<8x32xf32>
    %29 = vector.shape_cast %26 : vector<8x32xf32> to vector<1x8x32xf32>
    tpu.vector_store %arg4[%c0_10, %c0_11, %c0_12], %29 {strides = array<i32>} : memref<1x8x32xf32, #tpu.memory_space<vmem>>, vector<1x8x32xf32>,
    return
  }
  func.func @transform_0(%arg0: i32) -> (i32, i32, i32) {
    %c0_i32 = arith.constant 0 : i32
    %c0_i32_0 = arith.constant 0 : i32
    %c0_i32_1 = arith.constant 0 : i32
    return %arg0, %c0_i32, %c0_i32_0 : i32, i32, i32
  }
  func.func @transform_1(%arg0: i32) -> (i32, i32) {
    %c0_i32 = arith.constant 0 : i32
    %c0_i32_0 = arith.constant 0 : i32
    %c0_i32_1 = arith.constant 0 : i32
    return %c0_i32, %c0_i32_0 : i32, i32
  }
  func.func @transform_2(%arg0: i32) -> (i32, i32) {
    %c0_i32 = arith.constant 0 : i32
    %c0_i32_0 = arith.constant 0 : i32
    %c0_i32_1 = arith.constant 0 : i32
    return %c0_i32, %c0_i32_0 : i32, i32
  }
  func.func @transform_3(%arg0: i32) -> (i32, i32, i32) {
    %c0_i32 = arith.constant 0 : i32
    %c0_i32_0 = arith.constant 0 : i32
    %c0_i32_1 = arith.constant 0 : i32
    return %arg0, %c0_i32, %c0_i32_0 : i32, i32, i32
  }
}

module attributes {stable_mosaic.version = 11 : i64} {
  func.func @_src_attn_sublayer_kernel(%arg0: i32, %arg1: memref<1x8x32xf32, #tpu.memory_space<vmem>>, %arg2: memref<1x16x32xf32, #tpu.memory_space<vmem>>, %arg3: memref<1x1x16xi32, #tpu.memory_space<vmem>>, %arg4: memref<1x32xf32, #tpu.memory_space<vmem>>, %arg5: memref<1x32xf32, #tpu.memory_space<vmem>>, %arg6: memref<32x32xf32, #tpu.memory_space<vmem>>, %arg7: memref<1x32xf32, #tpu.memory_space<vmem>>, %arg8: memref<32x64xf32, #tpu.memory_space<vmem>>, %arg9: memref<1x64xf32, #tpu.memory_space<vmem>>, %arg10: memref<32x32xf32, #tpu.memory_space<vmem>>, %arg11: memref<1x32xf32, #tpu.memory_space<vmem>>, %arg12: memref<1x8x32xf32, #tpu.memory_space<vmem>>) attributes {dimension_semantics = [#tpu.dimension_semantics<parallel>], iteration_bounds = array<i64: 2>, scalar_prefetch = 0 : i64, scratch_operands = 0 : i64, tpu.core_type = #tpu.core_type<tc>, window_params = [{transform_indices = @transform_0, window_bounds = array<i64: 1, 8, 32>}, {transform_indices = @transform_1, window_bounds = array<i64: 1, 16, 32>}, {transform_indices = @transform_2, window_bounds = array<i64: 1, 1, 16>}, {pipeline_mode = #tpu.pipeline_mode<synchronous>, transform_indices = @transform_3, window_bounds = array<i64: 1, 32>}, {pipeline_mode = #tpu.pipeline_mode<synchronous>, transform_indices = @transform_4, window_bounds = array<i64: 1, 32>}, {pipeline_mode = #tpu.pipeline_mode<synchronous>, transform_indices = @transform_5, window_bounds = array<i64: 32, 32>}, {pipeline_mode = #tpu.pipeline_mode<synchronous>, transform_indices = @transform_6, window_bounds = array<i64: 1, 32>}, {pipeline_mode = #tpu.pipeline_mode<synchronous>, transform_indices = @transform_7, window_bounds = array<i64: 32, 64>}, {pipeline_mode = #tpu.pipeline_mode<synchronous>, transform_indices = @transform_8, window_bounds = array<i64: 1, 64>}, {pipeline_mode = #tpu.pipeline_mode<synchronous>, transform_indices = @transform_9, window_bounds = array<i64: 32, 32>}, {pipeline_mode = #tpu.pipeline_mode<synchronous>, transform_indices = @transform_10, window_bounds = array<i64: 1, 32>}, {transform_indices = @transform_11, window_bounds = array<i64: 1, 8, 32>}]} {
    %c0 = arith.constant 0 : index
    %c0_0 = arith.constant 0 : index
    %c0_1 = arith.constant 0 : index
    %0 = vector.load %arg1[%c0, %c0_0, %c0_1] : memref<1x8x32xf32, #tpu.memory_space<vmem>>, vector<1x8x32xf32>
    %1 = vector.shape_cast %0 : vector<1x8x32xf32> to vector<8x32xf32>
    %c0_2 = arith.constant 0 : index
    %c0_3 = arith.constant 0 : index
    %2 = vector.load %arg4[%c0_2, %c0_3] : memref<1x32xf32, #tpu.memory_space<vmem>>, vector<1x32xf32>
    %c0_4 = arith.constant 0 : index
    %c0_5 = arith.constant 0 : index
    %3 = vector.load %arg5[%c0_4, %c0_5] : memref<1x32xf32, #tpu.memory_space<vmem>>, vector<1x32xf32>
    %cst = arith.constant dense<0.000000e+00> : vector<8xf32>
    %4 = vector.multi_reduction <add>, %1, %cst [1] : vector<8x32xf32> to vector<8xf32>
    %5 = vector.shape_cast %4 : vector<8xf32> to vector<8x1xf32>
    %cst_6 = arith.constant 3.200000e+01 : f32
    %6 = vector.broadcast %cst_6 : f32 to vector<8x1xf32>
    %7 = arith.divf %5, %6 : vector<8x1xf32>
    %8 = vector.broadcast %7 : vector<8x1xf32> to vector<8x32xf32>
    %9 = arith.subf %1, %8 : vector<8x32xf32>
    %10 = arith.mulf %9, %9 : vector<8x32xf32>
    %cst_7 = arith.constant dense<0.000000e+00> : vector<8xf32>
    %11 = vector.multi_reduction <add>, %10, %cst_7 [1] : vector<8x32xf32> to vector<8xf32>
    %12 = vector.shape_cast %11 : vector<8xf32> to vector<8x1xf32>
    %cst_8 = arith.constant 0.0322580636 : f32
    %13 = vector.broadcast %cst_8 : f32 to vector<8x1xf32>
    %14 = arith.mulf %12, %13 : vector<8x1xf32>
    %15 = math.sqrt %14 : vector<8x1xf32>
    %cst_9 = arith.constant 9.99999997E-7 : f32
    %16 = vector.broadcast %cst_9 : f32 to vector<8x1xf32>
    %17 = arith.addf %15, %16 : vector<8x1xf32>
    %18 = tpu.reciprocal %17 : vector<8x1xf32> -> vector<8x1xf32>
    %19 = vector.broadcast %7 : vector<8x1xf32> to vector<8x32xf32>
    %20 = arith.subf %1, %19 : vector<8x32xf32>
    %21 = vector.broadcast %2 : vector<1x32xf32> to vector<8x32xf32>
    %22 = arith.mulf %21, %20 : vector<8x32xf32>
    %23 = vector.broadcast %18 : vector<8x1xf32> to vector<8x32xf32>
    %24 = arith.mulf %22, %23 : vector<8x32xf32>
    %25 = vector.broadcast %3 : vector<1x32xf32> to vector<8x32xf32>
    %26 = arith.addf %24, %25 : vector<8x32xf32>
    %c0_10 = arith.constant 0 : index
    %c0_11 = arith.constant 0 : index
    %27 = vector.load %arg6[%c0_10, %c0_11] : memref<32x32xf32, #tpu.memory_space<vmem>>, vector<32x32xf32>
    %cst_12 = arith.constant dense<0.000000e+00> : vector<8x32xf32>
    %28 = tpu.matmul %26, %27, %cst_12 {dimension_numbers = #tpu.dot_dimension_numbers<[1], [0], [0], [1], [0, 0, 1, 1], [], []>} : vector<8x32xf32>, vector<32x32xf32>, vector<8x32xf32> -> vector<8x32xf32>
    %c0_13 = arith.constant 0 : index
    %c0_14 = arith.constant 0 : index
    %29 = vector.load %arg7[%c0_13, %c0_14] : memref<1x32xf32, #tpu.memory_space<vmem>>, vector<1x32xf32>
    %30 = vector.broadcast %29 : vector<1x32xf32> to vector<8x32xf32>
    %31 = arith.addf %28, %30 : vector<8x32xf32>
    %c0_15 = arith.constant 0 : index
    %c0_16 = arith.constant 0 : index
    %c0_17 = arith.constant 0 : index
    %32 = vector.load %arg2[%c0_15, %c0_16, %c0_17] : memref<1x16x32xf32, #tpu.memory_space<vmem>>, vector<1x16x32xf32>
    %33 = vector.shape_cast %32 : vector<1x16x32xf32> to vector<16x32xf32>
    %c0_18 = arith.constant 0 : index
    %c0_19 = arith.constant 0 : index
    %34 = vector.load %arg8[%c0_18, %c0_19] : memref<32x64xf32, #tpu.memory_space<vmem>>, vector<32x64xf32>
    %cst_20 = arith.constant dense<0.000000e+00> : vector<16x64xf32>
    %35 = tpu.matmul %33, %34, %cst_20 {dimension_numbers = #tpu.dot_dimension_numbers<[1], [0], [0], [1], [0, 0, 1, 1], [], []>} : vector<16x32xf32>, vector<32x64xf32>, vector<16x64xf32> -> vector<16x64xf32>
    %c0_21 = arith.constant 0 : index
    %c0_22 = arith.constant 0 : index
    %36 = vector.load %arg9[%c0_21, %c0_22] : memref<1x64xf32, #tpu.memory_space<vmem>>, vector<1x64xf32>
    %37 = vector.broadcast %36 : vector<1x64xf32> to vector<16x64xf32>
    %38 = arith.addf %35, %37 : vector<16x64xf32>
    %39 = vector.extract_strided_slice %38 {offsets = [0, 0], sizes = [16, 32], strides = [1, 1]} : vector<16x64xf32> to vector<16x32xf32>
    %40 = vector.extract_strided_slice %38 {offsets = [0, 32], sizes = [16, 32], strides = [1, 1]} : vector<16x64xf32> to vector<16x32xf32>
    %c0_23 = arith.constant 0 : index
    %c0_24 = arith.constant 0 : index
    %c0_25 = arith.constant 0 : index
    %41 = vector.load %arg3[%c0_23, %c0_24, %c0_25] : memref<1x1x16xi32, #tpu.memory_space<vmem>>, vector<1x1x16xi32>
    %42 = vector.shape_cast %41 : vector<1x1x16xi32> to vector<1x16xi32>
    %c0_26 = arith.constant 0 : index
    %c0_27 = arith.constant 0 : index
    %43 = vector.load %arg10[%c0_26, %c0_27] : memref<32x32xf32, #tpu.memory_space<vmem>>, vector<32x32xf32>
    %44 = vector.extract_strided_slice %31 {offsets = [0, 0], sizes = [8, 8], strides = [1, 1]} : vector<8x32xf32> to vector<8x8xf32>
    %45 = vector.extract_strided_slice %39 {offsets = [0, 0], sizes = [16, 8], strides = [1, 1]} : vector<16x32xf32> to vector<16x8xf32>
    %cst_28 = arith.constant dense<0.000000e+00> : vector<8x16xf32>
    %46 = tpu.matmul %44, %45, %cst_28 {dimension_numbers = #tpu.dot_dimension_numbers<[1], [1], [0], [0], [0, 0, 1, 0], [], []>} : vector<8x8xf32>, vector<16x8xf32>, vector<8x16xf32> -> vector<8x16xf32>
    %cst_29 = arith.constant 0.353553385 : f32
    %47 = vector.broadcast %cst_29 : f32 to vector<8x16xf32>
    %48 = arith.mulf %46, %47 : vector<8x16xf32>
    %c0_i32 = arith.constant 0 : i32
    %49 = vector.broadcast %c0_i32 : i32 to vector<1x16xi32>
    %50 = arith.cmpi eq, %42, %49 : vector<1x16xi32>
    %cst_30 = arith.constant -1.000000e+09 : f32
    %51 = vector.shape_cast %50 : vector<1x16xi1> to vector<1x16xi1>
    %52 = vector.broadcast %51 : vector<1x16xi1> to vector<8x16xi1>
    %53 = vector.broadcast %cst_30 : f32 to vector<8x16xf32>
    %54 = arith.select %52, %53, %48 : vector<8x16xi1>, vector<8x16xf32>
    %cst_31 = arith.constant dense<0xFF800000> : vector<8xf32>
    %55 = vector.multi_reduction <maximumf>, %54, %cst_31 [1] : vector<8x16xf32> to vector<8xf32>
    %56 = vector.shape_cast %55 : vector<8xf32> to vector<8x1xf32>
    %57 = vector.broadcast %56 : vector<8x1xf32> to vector<8x16xf32>
    %58 = arith.subf %54, %57 : vector<8x16xf32>
    %59 = math.exp %58 : vector<8x16xf32>
    %cst_32 = arith.constant dense<0.000000e+00> : vector<8xf32>
    %60 = vector.multi_reduction <add>, %59, %cst_32 [1] : vector<8x16xf32> to vector<8xf32>
    %61 = vector.shape_cast %60 : vector<8xf32> to vector<8x1xf32>
    %62 = tpu.reciprocal %61 {approx = true} : vector<8x1xf32> -> vector<8x1xf32>
    %63 = vector.broadcast %62 : vector<8x1xf32> to vector<8x16xf32>
    %64 = arith.mulf %59, %63 : vector<8x16xf32>
    %65 = vector.extract_strided_slice %40 {offsets = [0, 0], sizes = [16, 8], strides = [1, 1]} : vector<16x32xf32> to vector<16x8xf32>
    %cst_33 = arith.constant dense<0.000000e+00> : vector<8x8xf32>
    %66 = tpu.matmul %64, %65, %cst_33 {dimension_numbers = #tpu.dot_dimension_numbers<[1], [0], [0], [1], [0, 0, 1, 1], [], []>} : vector<8x16xf32>, vector<16x8xf32>, vector<8x8xf32> -> vector<8x8xf32>
    %67 = vector.extract_strided_slice %43 {offsets = [0, 0], sizes = [8, 32], strides = [1, 1]} : vector<32x32xf32> to vector<8x32xf32>
    %cst_34 = arith.constant dense<0.000000e+00> : vector<8x32xf32>
    %68 = tpu.matmul %66, %67, %cst_34 {dimension_numbers = #tpu.dot_dimension_numbers<[1], [0], [0], [1], [0, 0, 1, 1], [], []>} : vector<8x8xf32>, vector<8x32xf32>, vector<8x32xf32> -> vector<8x32xf32>
    %69 = vector.extract_strided_slice %31 {offsets = [0, 8], sizes = [8, 8], strides = [1, 1]} : vector<8x32xf32> to vector<8x8xf32>
    %70 = vector.extract_strided_slice %39 {offsets = [0, 8], sizes = [16, 8], strides = [1, 1]} : vector<16x32xf32> to vector<16x8xf32>
    %cst_35 = arith.constant dense<0.000000e+00> : vector<8x16xf32>
    %71 = tpu.matmul %69, %70, %cst_35 {dimension_numbers = #tpu.dot_dimension_numbers<[1], [1], [0], [0], [0, 0, 1, 0], [], []>} : vector<8x8xf32>, vector<16x8xf32>, vector<8x16xf32> -> vector<8x16xf32>
    %cst_36 = arith.constant 0.353553385 : f32
    %72 = vector.broadcast %cst_36 : f32 to vector<8x16xf32>
    %73 = arith.mulf %71, %72 : vector<8x16xf32>
    %c0_i32_37 = arith.constant 0 : i32
    %74 = vector.broadcast %c0_i32_37 : i32 to vector<1x16xi32>
    %75 = arith.cmpi eq, %42, %74 : vector<1x16xi32>
    %cst_38 = arith.constant -1.000000e+09 : f32
    %76 = vector.shape_cast %75 : vector<1x16xi1> to vector<1x16xi1>
    %77 = vector.broadcast %76 : vector<1x16xi1> to vector<8x16xi1>
    %78 = vector.broadcast %cst_38 : f32 to vector<8x16xf32>
    %79 = arith.select %77, %78, %73 : vector<8x16xi1>, vector<8x16xf32>
    %cst_39 = arith.constant dense<0xFF800000> : vector<8xf32>
    %80 = vector.multi_reduction <maximumf>, %79, %cst_39 [1] : vector<8x16xf32> to vector<8xf32>
    %81 = vector.shape_cast %80 : vector<8xf32> to vector<8x1xf32>
    %82 = vector.broadcast %81 : vector<8x1xf32> to vector<8x16xf32>
    %83 = arith.subf %79, %82 : vector<8x16xf32>
    %84 = math.exp %83 : vector<8x16xf32>
    %cst_40 = arith.constant dense<0.000000e+00> : vector<8xf32>
    %85 = vector.multi_reduction <add>, %84, %cst_40 [1] : vector<8x16xf32> to vector<8xf32>
    %86 = vector.shape_cast %85 : vector<8xf32> to vector<8x1xf32>
    %87 = tpu.reciprocal %86 {approx = true} : vector<8x1xf32> -> vector<8x1xf32>
    %88 = vector.broadcast %87 : vector<8x1xf32> to vector<8x16xf32>
    %89 = arith.mulf %84, %88 : vector<8x16xf32>
    %90 = vector.extract_strided_slice %40 {offsets = [0, 8], sizes = [16, 8], strides = [1, 1]} : vector<16x32xf32> to vector<16x8xf32>
    %cst_41 = arith.constant dense<0.000000e+00> : vector<8x8xf32>
    %91 = tpu.matmul %89, %90, %cst_41 {dimension_numbers = #tpu.dot_dimension_numbers<[1], [0], [0], [1], [0, 0, 1, 1], [], []>} : vector<8x16xf32>, vector<16x8xf32>, vector<8x8xf32> -> vector<8x8xf32>
    %92 = vector.extract_strided_slice %43 {offsets = [8, 0], sizes = [8, 32], strides = [1, 1]} : vector<32x32xf32> to vector<8x32xf32>
    %cst_42 = arith.constant dense<0.000000e+00> : vector<8x32xf32>
    %93 = tpu.matmul %91, %92, %cst_42 {dimension_numbers = #tpu.dot_dimension_numbers<[1], [0], [0], [1], [0, 0, 1, 1], [], []>} : vector<8x8xf32>, vector<8x32xf32>, vector<8x32xf32> -> vector<8x32xf32>
    %94 = arith.addf %68, %93 : vector<8x32xf32>
    %95 = vector.extract_strided_slice %31 {offsets = [0, 16], sizes = [8, 8], strides = [1, 1]} : vector<8x32xf32> to vector<8x8xf32>
    %96 = vector.extract_strided_slice %39 {offsets = [0, 16], sizes = [16, 8], strides = [1, 1]} : vector<16x32xf32> to vector<16x8xf32>
    %cst_43 = arith.constant dense<0.000000e+00> : vector<8x16xf32>
    %97 = tpu.matmul %95, %96, %cst_43 {dimension_numbers = #tpu.dot_dimension_numbers<[1], [1], [0], [0], [0, 0, 1, 0], [], []>} : vector<8x8xf32>, vector<16x8xf32>, vector<8x16xf32> -> vector<8x16xf32>
    %cst_44 = arith.constant 0.353553385 : f32
    %98 = vector.broadcast %cst_44 : f32 to vector<8x16xf32>
    %99 = arith.mulf %97, %98 : vector<8x16xf32>
    %c0_i32_45 = arith.constant 0 : i32
    %100 = vector.broadcast %c0_i32_45 : i32 to vector<1x16xi32>
    %101 = arith.cmpi eq, %42, %100 : vector<1x16xi32>
    %cst_46 = arith.constant -1.000000e+09 : f32
    %102 = vector.shape_cast %101 : vector<1x16xi1> to vector<1x16xi1>
    %103 = vector.broadcast %102 : vector<1x16xi1> to vector<8x16xi1>
    %104 = vector.broadcast %cst_46 : f32 to vector<8x16xf32>
    %105 = arith.select %103, %104, %99 : vector<8x16xi1>, vector<8x16xf32>
    %cst_47 = arith.constant dense<0xFF800000> : vector<8xf32>
    %106 = vector.multi_reduction <maximumf>, %105, %cst_47 [1] : vector<8x16xf32> to vector<8xf32>
    %107 = vector.shape_cast %106 : vector<8xf32> to vector<8x1xf32>
    %108 = vector.broadcast %107 : vector<8x1xf32> to vector<8x16xf32>
    %109 = arith.subf %105, %108 : vector<8x16xf32>
    %110 = math.exp %109 : vector<8x16xf32>
    %cst_48 = arith.constant dense<0.000000e+00> : vector<8xf32>
    %111 = vector.multi_reduction <add>, %110, %cst_48 [1] : vector<8x16xf32> to vector<8xf32>
    %112 = vector.shape_cast %111 : vector<8xf32> to vector<8x1xf32>
    %113 = tpu.reciprocal %112 {approx = true} : vector<8x1xf32> -> vector<8x1xf32>
    %114 = vector.broadcast %113 : vector<8x1xf32> to vector<8x16xf32>
    %115 = arith.mulf %110, %114 : vector<8x16xf32>
    %116 = vector.extract_strided_slice %40 {offsets = [0, 16], sizes = [16, 8], strides = [1, 1]} : vector<16x32xf32> to vector<16x8xf32>
    %cst_49 = arith.constant dense<0.000000e+00> : vector<8x8xf32>
    %117 = tpu.matmul %115, %116, %cst_49 {dimension_numbers = #tpu.dot_dimension_numbers<[1], [0], [0], [1], [0, 0, 1, 1], [], []>} : vector<8x16xf32>, vector<16x8xf32>, vector<8x8xf32> -> vector<8x8xf32>
    %118 = vector.extract_strided_slice %43 {offsets = [16, 0], sizes = [8, 32], strides = [1, 1]} : vector<32x32xf32> to vector<8x32xf32>
    %cst_50 = arith.constant dense<0.000000e+00> : vector<8x32xf32>
    %119 = tpu.matmul %117, %118, %cst_50 {dimension_numbers = #tpu.dot_dimension_numbers<[1], [0], [0], [1], [0, 0, 1, 1], [], []>} : vector<8x8xf32>, vector<8x32xf32>, vector<8x32xf32> -> vector<8x32xf32>
    %120 = arith.addf %94, %119 : vector<8x32xf32>
    %121 = vector.extract_strided_slice %31 {offsets = [0, 24], sizes = [8, 8], strides = [1, 1]} : vector<8x32xf32> to vector<8x8xf32>
    %122 = vector.extract_strided_slice %39 {offsets = [0, 24], sizes = [16, 8], strides = [1, 1]} : vector<16x32xf32> to vector<16x8xf32>
    %cst_51 = arith.constant dense<0.000000e+00> : vector<8x16xf32>
    %123 = tpu.matmul %121, %122, %cst_51 {dimension_numbers = #tpu.dot_dimension_numbers<[1], [1], [0], [0], [0, 0, 1, 0], [], []>} : vector<8x8xf32>, vector<16x8xf32>, vector<8x16xf32> -> vector<8x16xf32>
    %cst_52 = arith.constant 0.353553385 : f32
    %124 = vector.broadcast %cst_52 : f32 to vector<8x16xf32>
    %125 = arith.mulf %123, %124 : vector<8x16xf32>
    %c0_i32_53 = arith.constant 0 : i32
    %126 = vector.broadcast %c0_i32_53 : i32 to vector<1x16xi32>
    %127 = arith.cmpi eq, %42, %126 : vector<1x16xi32>
    %cst_54 = arith.constant -1.000000e+09 : f32
    %128 = vector.shape_cast %127 : vector<1x16xi1> to vector<1x16xi1>
    %129 = vector.broadcast %128 : vector<1x16xi1> to vector<8x16xi1>
    %130 = vector.broadcast %cst_54 : f32 to vector<8x16xf32>
    %131 = arith.select %129, %130, %125 : vector<8x16xi1>, vector<8x16xf32>
    %cst_55 = arith.constant dense<0xFF800000> : vector<8xf32>
    %132 = vector.multi_reduction <maximumf>, %131, %cst_55 [1] : vector<8x16xf32> to vector<8xf32>
    %133 = vector.shape_cast %132 : vector<8xf32> to vector<8x1xf32>
    %134 = vector.broadcast %133 : vector<8x1xf32> to vector<8x16xf32>
    %135 = arith.subf %131, %134 : vector<8x16xf32>
    %136 = math.exp %135 : vector<8x16xf32>
    %cst_56 = arith.constant dense<0.000000e+00> : vector<8xf32>
    %137 = vector.multi_reduction <add>, %136, %cst_56 [1] : vector<8x16xf32> to vector<8xf32>
    %138 = vector.shape_cast %137 : vector<8xf32> to vector<8x1xf32>
    %139 = tpu.reciprocal %138 {approx = true} : vector<8x1xf32> -> vector<8x1xf32>
    %140 = vector.broadcast %139 : vector<8x1xf32> to vector<8x16xf32>
    %141 = arith.mulf %136, %140 : vector<8x16xf32>
    %142 = vector.extract_strided_slice %40 {offsets = [0, 24], sizes = [16, 8], strides = [1, 1]} : vector<16x32xf32> to vector<16x8xf32>
    %cst_57 = arith.constant dense<0.000000e+00> : vector<8x8xf32>
    %143 = tpu.matmul %141, %142, %cst_57 {dimension_numbers = #tpu.dot_dimension_numbers<[1], [0], [0], [1], [0, 0, 1, 1], [], []>} : vector<8x16xf32>, vector<16x8xf32>, vector<8x8xf32> -> vector<8x8xf32>
    %144 = vector.extract_strided_slice %43 {offsets = [24, 0], sizes = [8, 32], strides = [1, 1]} : vector<32x32xf32> to vector<8x32xf32>
    %cst_58 = arith.constant dense<0.000000e+00> : vector<8x32xf32>
    %145 = tpu.matmul %143, %144, %cst_58 {dimension_numbers = #tpu.dot_dimension_numbers<[1], [0], [0], [1], [0, 0, 1, 1], [], []>} : vector<8x8xf32>, vector<8x32xf32>, vector<8x32xf32> -> vector<8x32xf32>
    %146 = arith.addf %120, %145 : vector<8x32xf32>
    %147 = arith.addf %1, %146 : vector<8x32xf32>
    %c0_59 = arith.constant 0 : index
    %c0_60 = arith.constant 0 : index
    %148 = vector.load %arg11[%c0_59, %c0_60] : memref<1x32xf32, #tpu.memory_space<vmem>>, vector<1x32xf32>
    %149 = vector.broadcast %148 : vector<1x32xf32> to vector<8x32xf32>
    %150 = arith.addf %147, %149 : vector<8x32xf32>
    %c0_61 = arith.constant 0 : index
    %c0_62 = arith.constant 0 : index
    %c0_63 = arith.constant 0 : index
    %151 = vector.load %arg12[%c0_61, %c0_62, %c0_63] : memref<1x8x32xf32, #tpu.memory_space<vmem>>, vector<1x8x32xf32>
    %152 = vector.shape_cast %151 : vector<1x8x32xf32> to vector<8x32xf32>
    %153 = vector.shape_cast %150 : vector<8x32xf32> to vector<1x8x32xf32>
    tpu.vector_store %arg12[%c0_61, %c0_62, %c0_63], %153 {strides = array<i32>} : memref<1x8x32xf32, #tpu.memory_space<vmem>>, vector<1x8x32xf32>,
    return
  }
  func.func @transform_0(%arg0: i32) -> (i32, i32, i32) {
    %c0_i32 = arith.constant 0 : i32
    %c0_i32_0 = arith.constant 0 : i32
    %c0_i32_1 = arith.constant 0 : i32
    return %arg0, %c0_i32, %c0_i32_0 : i32, i32, i32
  }
  func.func @transform_1(%arg0: i32) -> (i32, i32, i32) {
    %c0_i32 = arith.constant 0 : i32
    %c0_i32_0 = arith.constant 0 : i32
    %c0_i32_1 = arith.constant 0 : i32
    return %arg0, %c0_i32, %c0_i32_0 : i32, i32, i32
  }
  func.func @transform_2(%arg0: i32) -> (i32, i32, i32) {
    %c0_i32 = arith.constant 0 : i32
    %c0_i32_0 = arith.constant 0 : i32
    %c0_i32_1 = arith.constant 0 : i32
    return %arg0, %c0_i32, %c0_i32_0 : i32, i32, i32
  }
  func.func @transform_3(%arg0: i32) -> (i32, i32) {
    %c0_i32 = arith.constant 0 : i32
    %c0_i32_0 = arith.constant 0 : i32
    %c0_i32_1 = arith.constant 0 : i32
    return %c0_i32, %c0_i32_0 : i32, i32
  }
  func.func @transform_4(%arg0: i32) -> (i32, i32) {
    %c0_i32 = arith.constant 0 : i32
    %c0_i32_0 = arith.constant 0 : i32
    %c0_i32_1 = arith.constant 0 : i32
    return %c0_i32, %c0_i32_0 : i32, i32
  }
  func.func @transform_5(%arg0: i32) -> (i32, i32) {
    %c0_i32 = arith.constant 0 : i32
    %c0_i32_0 = arith.constant 0 : i32
    %c0_i32_1 = arith.constant 0 : i32
    return %c0_i32, %c0_i32_0 : i32, i32
  }
  func.func @transform_6(%arg0: i32) -> (i32, i32) {
    %c0_i32 = arith.constant 0 : i32
    %c0_i32_0 = arith.constant 0 : i32
    %c0_i32_1 = arith.constant 0 : i32
    return %c0_i32, %c0_i32_0 : i32, i32
  }
  func.func @transform_7(%arg0: i32) -> (i32, i32) {
    %c0_i32 = arith.constant 0 : i32
    %c0_i32_0 = arith.constant 0 : i32
    %c0_i32_1 = arith.constant 0 : i32
    return %c0_i32, %c0_i32_0 : i32, i32
  }
  func.func @transform_8(%arg0: i32) -> (i32, i32) {
    %c0_i32 = arith.constant 0 : i32
    %c0_i32_0 = arith.constant 0 : i32
    %c0_i32_1 = arith.constant 0 : i32
    return %c0_i32, %c0_i32_0 : i32, i32
  }
  func.func @transform_9(%arg0: i32) -> (i32, i32) {
    %c0_i32 = arith.constant 0 : i32
    %c0_i32_0 = arith.constant 0 : i32
    %c0_i32_1 = arith.constant 0 : i32
    return %c0_i32, %c0_i32_0 : i32, i32
  }
  func.func @transform_10(%arg0: i32) -> (i32, i32) {
    %c0_i32 = arith.constant 0 : i32
    %c0_i32_0 = arith.constant 0 : i32
    %c0_i32_1 = arith.constant 0 : i32
    return %c0_i32, %c0_i32_0 : i32, i32
  }
  func.func @transform_11(%arg0: i32) -> (i32, i32, i32) {
    %c0_i32 = arith.constant 0 : i32
    %c0_i32_0 = arith.constant 0 : i32
    %c0_i32_1 = arith.constant 0 : i32
    return %arg0, %c0_i32, %c0_i32_0 : i32, i32, i32
  }
}

</mosaic_0001>

<llo_original>
// kernel: _lambda_.9
$region0: #{_lambda_.9}
  #allocation0 [shape = 'u32[]', space=smem, size = 0x4, offset = 0x4, fixed_abs, tag = 'smem constant byte address 0x4 - core index']
  #allocation1 [shape = 'u32[72,128]{1,0:T(1,128)}', space=vmem, size = 0x9000, scoped, tag = 'internal scratch']
  %s0 = inlined_call_operand.vmem [shape: f32[2,8,32], index: 0, kind: input, shape index: {}]
  %s1 = inlined_call_operand.vmem [shape: f32[1,32], index: 1, kind: input, shape index: {}]
  %s2 = inlined_call_operand.vmem [shape: f32[1,32], index: 2, kind: input, shape index: {}]
  %s3 = inlined_call_operand.vmem [shape: f32[32,64], index: 3, kind: input, shape index: {}]
  %s4 = inlined_call_operand.hbm [shape: f32[1,64], index: 4, kind: input, shape index: {}]
  %s5 = inlined_call_operand.vmem [shape: f32[64,32], index: 5, kind: input, shape index: {}]
  %s6 = inlined_call_operand.hbm [shape: f32[1,32], index: 6, kind: input, shape index: {}]
  %s7 = inlined_call_operand.vmem [shape: f32[2,8,32], index: 7, kind: output, shape index: {}]
  %s8 = sld [smem:[#allocation0]]
  $region69: #{_lambda_.9} parent=0
    _
  %s10 = ssub.s32 1, %s8
  %s11 = scalar_select 0, %s10, %s8
  $region1: #{_lambda_.9} parent=0
    #allocation2 [shape = 'u8[512]{0}', space=vmem, size = 0x400, scoped, tag = 'input window, operand 4, single buffered']
    #allocation3 [shape = 's32[2]{0}', space=sflag, size = 0x8, scoped, tag = 'scoped memory for _lambda_.9']
    #allocation4 [shape = 'u8[512]{0}', space=vmem, size = 0x400, scoped, tag = 'input window, operand 6, single buffered']
    #allocation5 [shape = 's32[1]{0}', space=sflag, size = 0x4, scoped, tag = 'scoped memory for _lambda_.9']
    %12 = vsyncpa [#allocation3], 0
    %13 = vsyncpa [#allocation5], 0
    loop: start=0, step=1, limit=4
    $region2: #{_lambda_.9} parent=1 // loop_pre_header
      _
    $region3: #{_lambda_.9} parent=1 // loop_header
      %s15 = sphi 0, %s19
      %p16 = scmp.ge.s32.totalorder %s15, 4
      %s25 = sphi 0, %s27
      %s28 = sphi 0, %s25
      %s29 = sphi 0, %s28
      %s45 = sphi 0, %s29
      %s49 = sphi 0, %s49
      %s51 = sphi 0, %s49
      %s52 = sphi 0, %s51
      %s66 = sphi 0, %s52
      %s70 = sphi 0, %s70
      %s72 = sphi 0, %s70
      %s73 = sphi 0, %s72
      %s87 = sphi 0, %s73
      %s91 = sphi 0, %s91
      %s93 = sphi 0, %s91
      %s94 = sphi 0, %s93
      %s108 = sphi 0, %s94
      %s112 = sphi 0, %s112
      %s114 = sphi 0, %s112
      %s115 = sphi 0, %s114
      %s129 = sphi 0, %s115
      %s133 = sphi 0, %s133
      %s135 = sphi 0, %s133
      %s136 = sphi 0, %s135
      %s150 = sphi 0, %s136
      %s154 = sphi 0, %s154
      %s156 = sphi 0, %s154
      %s157 = sphi 0, %s156
      %s171 = sphi 0, %s157
      %s177 = sphi 0, %s179
      %s180 = sphi 0, %s177
      %s181 = sphi 0, %s180
      %s197 = sphi 0, %s181
    $region4: #{_lambda_.9} parent=1 // loop_header_branch
      %18 = sbr.rel (%p16) target = $region8
    $region5: #{_lambda_.9} parent=1 // loop_body
      %s20 = ssub.s32 %s15, 1
      %s21 = ssub.s32 %s15, 2
      %s22 = sadd.s32 %s15, 1
      %s23 = ssub.s32 %s15, %s22
      %p24 = scmp.eq.s32.totalorder %s23, 0
      %s26 = sadd.s32 %s25, 1
      %s27 = scalar_select %p24, %s25, %s26
      %p30 = pneg %p24
      %p31 = scmp.eq.s32.totalorder %s15, 1
      %p32 = por %p30, %p31
      %p33 = scmp.ne.s32.totalorder %s25, %s28
      %p34 = scmp.eq.s32.totalorder %s15, 0
      %p35 = por %p33, %p34
      %p36 = scmp.ne.s32.totalorder %s25, %s28
      %p37 = scmp.eq.s32.totalorder %s20, 1
      %p38 = por %p36, %p37
      %p39 = scmp.ne.s32.totalorder %s28, %s29
      %p40 = scmp.eq.s32.totalorder %s20, 0
      %p41 = por %p39, %p40
      %p42 = scmp.ne.s32.totalorder %s28, %s29
      %p43 = scmp.eq.s32.totalorder %s21, 1
      %p44 = por %p42, %p43
      %p46 = scmp.ne.s32.totalorder %s29, %s45
      %p47 = scmp.eq.s32.totalorder %s21, 0
      %p48 = por %p46, %p47
      %s50 = sadd.s32 %s49, 1
      %p53 = scmp.eq.s32.totalorder %s15, 1
      %p54 = scmp.ne.s32.totalorder %s49, %s51
      %p55 = scmp.eq.s32.totalorder %s15, 0
      %p56 = por %p54, %p55
      %p57 = scmp.ne.s32.totalorder %s49, %s51
      %p58 = scmp.eq.s32.totalorder %s20, 1
      %p59 = por %p57, %p58
      %p60 = scmp.ne.s32.totalorder %s51, %s52
      %p61 = scmp.eq.s32.totalorder %s20, 0
      %p62 = por %p60, %p61
      %p63 = scmp.ne.s32.totalorder %s51, %s52
      %p64 = scmp.eq.s32.totalorder %s21, 1
      %p65 = por %p63, %p64
      %p67 = scmp.ne.s32.totalorder %s52, %s66
      %p68 = scmp.eq.s32.totalorder %s21, 0
      %p69 = por %p67, %p68
      %s71 = sadd.s32 %s70, 1
      %p74 = scmp.eq.s32.totalorder %s15, 1
      %p75 = scmp.ne.s32.totalorder %s70, %s72
      %p76 = scmp.eq.s32.totalorder %s15, 0
      %p77 = por %p75, %p76
      %p78 = scmp.ne.s32.totalorder %s70, %s72
      %p79 = scmp.eq.s32.totalorder %s20, 1
      %p80 = por %p78, %p79
      %p81 = scmp.ne.s32.totalorder %s72, %s73
      %p82 = scmp.eq.s32.totalorder %s20, 0
      %p83 = por %p81, %p82
      %p84 = scmp.ne.s32.totalorder %s72, %s73
      %p85 = scmp.eq.s32.totalorder %s21, 1
      %p86 = por %p84, %p85
      %p88 = scmp.ne.s32.totalorder %s73, %s87
      %p89 = scmp.eq.s32.totalorder %s21, 0
      %p90 = por %p88, %p89
      %s92 = sadd.s32 %s91, 1
      %p95 = scmp.eq.s32.totalorder %s15, 1
      %p96 = scmp.ne.s32.totalorder %s91, %s93
      %p97 = scmp.eq.s32.totalorder %s15, 0
      %p98 = por %p96, %p97
      %p99 = scmp.ne.s32.totalorder %s91, %s93
      %p100 = scmp.eq.s32.totalorder %s20, 1
      %p101 = por %p99, %p100
      %p102 = scmp.ne.s32.totalorder %s93, %s94
      %p103 = scmp.eq.s32.totalorder %s20, 0
      %p104 = por %p102, %p103
      %p105 = scmp.ne.s32.totalorder %s93, %s94
      %p106 = scmp.eq.s32.totalorder %s21, 1
      %p107 = por %p105, %p106
      %p109 = scmp.ne.s32.totalorder %s94, %s108
      %p110 = scmp.eq.s32.totalorder %s21, 0
      %p111 = por %p109, %p110
      %s113 = sadd.s32 %s112, 1
      %p116 = scmp.eq.s32.totalorder %s15, 1
      %p117 = scmp.ne.s32.totalorder %s112, %s114
      %p118 = scmp.eq.s32.totalorder %s15, 0
      %p119 = por %p117, %p118
      %p120 = scmp.ne.s32.totalorder %s112, %s114
      %p121 = scmp.eq.s32.totalorder %s20, 1
      %p122 = por %p120, %p121
      %p123 = scmp.ne.s32.totalorder %s114, %s115
      %p124 = scmp.eq.s32.totalorder %s20, 0
      %p125 = por %p123, %p124
      %p126 = scmp.ne.s32.totalorder %s114, %s115
      %p127 = scmp.eq.s32.totalorder %s21, 1
      %p128 = por %p126, %p127
      %p130 = scmp.ne.s32.totalorder %s115, %s129
      %p131 = scmp.eq.s32.totalorder %s21, 0
      %p132 = por %p130, %p131
      %s134 = sadd.s32 %s133, 1
      %p137 = scmp.eq.s32.totalorder %s15, 1
      %p138 = scmp.ne.s32.totalorder %s133, %s135
      %p139 = scmp.eq.s32.totalorder %s15, 0
      %p140 = por %p138, %p139
      %p141 = scmp.ne.s32.totalorder %s133, %s135
      %p142 = scmp.eq.s32.totalorder %s20, 1
      %p143 = por %p141, %p142
      %p144 = scmp.ne.s32.totalorder %s135, %s136
      %p145 = scmp.eq.s32.totalorder %s20, 0
      %p146 = por %p144, %p145
      %p147 = scmp.ne.s32.totalorder %s135, %s136
      %p148 = scmp.eq.s32.totalorder %s21, 1
      %p149 = por %p147, %p148
      %p151 = scmp.ne.s32.totalorder %s136, %s150
      %p152 = scmp.eq.s32.totalorder %s21, 0
      %p153 = por %p151, %p152
      %s155 = sadd.s32 %s154, 1
      %p158 = scmp.eq.s32.totalorder %s15, 1
      %p159 = scmp.ne.s32.totalorder %s154, %s156
      %p160 = scmp.eq.s32.totalorder %s15, 0
      %p161 = por %p159, %p160
      %p162 = scmp.ne.s32.totalorder %s154, %s156
      %p163 = scmp.eq.s32.totalorder %s20, 1
      %p164 = por %p162, %p163
      %p165 = scmp.ne.s32.totalorder %s156, %s157
      %p166 = scmp.eq.s32.totalorder %s20, 0
      %p167 = por %p165, %p166
      %p168 = scmp.ne.s32.totalorder %s156, %s157
      %p169 = scmp.eq.s32.totalorder %s21, 1
      %p170 = por %p168, %p169
      %p172 = scmp.ne.s32.totalorder %s157, %s171
      %p173 = scmp.eq.s32.totalorder %s21, 0
      %p174 = por %p172, %p173
      %s175 = ssub.s32 %s15, %s22
      %p176 = scmp.eq.s32.totalorder %s175, 0
      %s178 = sadd.s32 %s177, 1
      %s179 = scalar_select %p176, %s177, %s178
      %p182 = pneg %p176
      %p183 = scmp.eq.s32.totalorder %s15, 1
      %p184 = por %p182, %p183
      %p185 = scmp.ne.s32.totalorder %s177, %s180
      %p186 = scmp.eq.s32.totalorder %s15, 0
      %p187 = por %p185, %p186
      %p188 = scmp.ne.s32.totalorder %s177, %s180
      %p189 = scmp.eq.s32.totalorder %s20, 1
      %p190 = por %p188, %p189
      %p191 = scmp.ne.s32.totalorder %s180, %s181
      %p192 = scmp.eq.s32.totalorder %s20, 0
      %p193 = por %p191, %p192
      %p194 = scmp.ne.s32.totalorder %s180, %s181
      %p195 = scmp.eq.s32.totalorder %s21, 1
      %p196 = por %p194, %p195
      %p198 = scmp.ne.s32.totalorder %s181, %s197
      %p199 = scmp.eq.s32.totalorder %s21, 0
      %p200 = por %p198, %p199
      %p201 = scmp.le.s32.totalorder 1, %s15
      %p202 = scmp.lt.s32.totalorder %s15, 3
      %p203 = pnand %p201, %p202
      %p204 = pneg %p203
      // Predicated region
      $region9: #{_lambda_.9} parent=5 // pred_check
        _
      $region10: #{_lambda_.9} parent=5 // pred_check_branch
        %206 = sbr.rel (%p203) target = $region12
      $region11: #{_lambda_.9} parent=5 // pred_region
        %s207 = ssub.s32 %s15, 1
        // Predicated region
        $region13: #{_lambda_.9} parent=11 // pred_check
          %p208 = pneg %p62
        $region14: #{_lambda_.9} parent=11 // pred_check_branch
          %210 = sbr.rel (%p208) target = $region16
        $region15: #{_lambda_.9} parent=11 // pred_region
          _
        $region16: #{_lambda_.9} parent=11 // pred_fallthru
          _
        // Predicated region
        $region17: #{_lambda_.9} parent=11 // pred_check
          %p211 = pneg %p83
        $region18: #{_lambda_.9} parent=11 // pred_check_branch
          %213 = sbr.rel (%p211) target = $region20
        $region19: #{_lambda_.9} parent=11 // pred_region
          _
        $region20: #{_lambda_.9} parent=11 // pred_fallthru
          _
        // Predicated region
        $region21: #{_lambda_.9} parent=11 // pred_check
          %p214 = pneg %p104
        $region22: #{_lambda_.9} parent=11 // pred_check_branch
          %216 = sbr.rel (%p214) target = $region24
        $region23: #{_lambda_.9} parent=11 // pred_region
          _
        $region24: #{_lambda_.9} parent=11 // pred_fallthru
          _
        // Predicated region
        $region25: #{_lambda_.9} parent=11 // pred_check
          %p217 = pneg %p125
        $region26: #{_lambda_.9} parent=11 // pred_check_branch
          %219 = sbr.rel (%p217) target = $region28
        $region27: #{_lambda_.9} parent=11 // pred_region
          %221 = vsyncadd [#allocation3], 0
          %s223 = sshll.u32 %s4, 4
          %s224 = int_to_ptr.hbm [resolvable:$true] %s223
          %s225 = sshll.u32 [#allocation2], 4
          %s226 = int_to_ptr.vmem [resolvable:$true] %s225
          %228 = dma.hbm_to_vmem [thread:$0]  %s224, 16, %s226, [#allocation3]
        $region28: #{_lambda_.9} parent=11 // pred_fallthru
          _
        // Predicated region
        $region29: #{_lambda_.9} parent=11 // pred_check
          %p229 = pneg %p146
        $region30: #{_lambda_.9} parent=11 // pred_check_branch
          %231 = sbr.rel (%p229) target = $region32
        $region31: #{_lambda_.9} parent=11 // pred_region
          _
        $region32: #{_lambda_.9} parent=11 // pred_fallthru
          _
        // Predicated region
        $region33: #{_lambda_.9} parent=11 // pred_check
          %p232 = pneg %p167
        $region34: #{_lambda_.9} parent=11 // pred_check_branch
          %234 = sbr.rel (%p232) target = $region36
        $region35: #{_lambda_.9} parent=11 // pred_region
          %236 = vsyncadd [#allocation5], 0
          %s238 = sshll.u32 %s6, 4
          %s239 = int_to_ptr.hbm [resolvable:$true] %s238
          %s240 = sshll.u32 [#allocation4], 4
          %s241 = int_to_ptr.vmem [resolvable:$true] %s240
          %243 = dma.hbm_to_vmem [thread:$0]  %s239, 16, %s241, [#allocation5]
        $region36: #{_lambda_.9} parent=11 // pred_fallthru
          _
      $region12: #{_lambda_.9} parent=5 // pred_fallthru
        _
      %p244 = scmp.lt.s32.totalorder %s15, 2
      // Predicated region
      $region37: #{_lambda_.9} parent=5 // pred_check
        %p245 = pneg %p244
      $region38: #{_lambda_.9} parent=5 // pred_check_branch
        %247 = sbr.rel (%p245) target = $region40
      $region39: #{_lambda_.9} parent=5 // pred_region
        // Predicated region
        $region41: #{_lambda_.9} parent=39 // pred_check
          %p248 = pneg %p35
        $region42: #{_lambda_.9} parent=39 // pred_check_branch
          %250 = sbr.rel (%p248) target = $region44
        $region43: #{_lambda_.9} parent=39 // pred_region
          %p251 = scmp.lt.s32.totalorder %s15, 1
          %s252 = scalar_select %p251, %s15, 1
          %s253 = smul.addr %s252, 8
          %s254 = scalar_lea.vmem %s0, %s253
        $region44: #{_lambda_.9} parent=39 // pred_fallthru
          _
      $region40: #{_lambda_.9} parent=5 // pred_fallthru
        _
      %p255 = scmp.le.s32.totalorder 1, %s15
      %p256 = scmp.lt.s32.totalorder %s15, 3
      %p257 = pnand %p255, %p256
      %p258 = pneg %p257
      // Predicated region
      $region45: #{_lambda_.9} parent=5 // pred_check
        _
      $region46: #{_lambda_.9} parent=5 // pred_check_branch
        %260 = sbr.rel (%p257) target = $region48
      $region47: #{_lambda_.9} parent=5 // pred_region
        %s261 = ssub.s32 %s15, 1
        // Predicated region
        $region49: #{_lambda_.9} parent=47 // pred_check
          %p262 = pneg %p125
        $region50: #{_lambda_.9} parent=47 // pred_check_branch
          %264 = sbr.rel (%p262) target = $region52
        $region51: #{_lambda_.9} parent=47 // pred_region
          %266 = dma.done [#allocation3], 16
        $region52: #{_lambda_.9} parent=47 // pred_fallthru
          _
        // Predicated region
        $region53: #{_lambda_.9} parent=47 // pred_check
          %p267 = pneg %p167
        $region54: #{_lambda_.9} parent=47 // pred_check_branch
          %269 = sbr.rel (%p267) target = $region56
        $region55: #{_lambda_.9} parent=47 // pred_region
          %271 = dma.done [#allocation5], 16
        $region56: #{_lambda_.9} parent=47 // pred_fallthru
          _
        %p272 = scmp.lt.s32.totalorder %s20, 1
        %s273 = scalar_select %p272, %s20, 1
        %s274 = smul.addr %s273, 8
        %s275 = scalar_lea.vmem %s0, %s274
        %p276 = pneg %p41
        %p277 = pneg %p38
        %p278 = pneg %p62
        %p279 = pneg %p59
        %p280 = pneg %p83
        %p281 = pneg %p80
        %p282 = pneg %p104
        %p283 = pneg %p101
        %p284 = pneg %p125
        %p285 = pneg %p122
        %p286 = pneg %p146
        %p287 = pneg %p143
        %p288 = pneg %p167
        %p289 = pneg %p164
        %p290 = pneg %p193
        %p291 = pneg %p190
        %p292 = scmp.lt.s32.totalorder %s20, 1
        %s293 = scalar_select %p292, %s20, 1
        %s294 = smul.addr %s293, 8
        %s295 = scalar_lea.vmem %s7, %s294
        %p296 = scmp.lt.s32.totalorder %s20, 1
        %s297 = scalar_select %p296, %s20, 1
        %s298 = smul.addr %s297, 8
        %s299 = scalar_lea.vmem %s0, %s298
        %p300 = scmp.lt.s32.totalorder %s20, 1
        %s301 = scalar_select %p300, %s20, 1
        %s302 = smul.addr %s301, 8
        %s303 = scalar_lea.vmem %s7, %s302
        %v304 = vld [vmem:[%s299] sm:$0xff]
        %v305 = vld [vmem:[%s1] sm:$0x1]
        %v306 = vld [vmem:[%s2] sm:$0x1]
        %vm307 = vcmask 261120
        %v308 = vsel %vm307, %v304, 0.0
        %309 = vadd.xlane.f32.xlu0 %v308
        %v310 = vpop.xlane.xlu0 %309
        %v311 = vrcp.pop 32.0
        %v312 = vmul.f32 32.0, %v311
        %v313 = vsub.f32 1.0, %v312
        %v314 = vmul.f32 %v311, %v313
        %v315 = vadd.f32 %v311, %v314
        %vm316 = vweird.f32 %v311
        %v317 = vsel %vm316, %v311, %v315
        %v318 = vmul.f32 %v310, %v317
        %v319 = vsub.f32 %v304, %v318
        %v320 = vmul.f32 %v319, %v319
        %v321 = vsel %vm307, %v320, 0.0
        %322 = vadd.xlane.f32.xlu0 %v321
        %v323 = vpop.xlane.xlu0 %322
        %v324 = vmul.f32 %v323, 0.032258064
        %v325 = vrsqrt.pop %v324
        %v326 = vmul.f32 %v325, %v324
        %v327 = vmul.f32 %v326, %v325
        %v328 = vmul.f32 0.5, %v327
        %v329 = vsub.f32 1.5, %v328
        %v330 = vmul.f32 %v325, %v329
        %v331 = vmul.f32 %v324, %v330
        %vm332 = vcmp.eq.f32.partialorder %v324, inf
        %v333 = vsel %vm332, %v324, %v331
        %vm334 = vcmp.eq.f32.partialorder %v324, 0.0
        %v335 = vand.u32 %v324, 2147483648
        %v336 = vsel %vm334, %v335, %v333
        %v337 = vadd.f32 %v336, 1e-06
        %v338 = vrcp.pop %v337
        %v339 = vmul.f32 %v337, %v338
        %v340 = vsub.f32 1.0, %v339
        %v341 = vmul.f32 %v338, %v340
        %v342 = vadd.f32 %v338, %v341
        %vm343 = vweird.f32 %v337
        %vm344 = vweird.f32 %v338
        %vm345 = vmor %vm343, %vm344
        %v346 = vsel %vm345, %v338, %v342
        %v347 = vand.u32 2147483647, %v337
        %vm348 = vcmp.eq.f32.partialorder %v347, 8.507059e+37
        %v349 = vand.u32 %v337, 2147483648
        %v350 = vor.u32 1.1754944e-38, %v349
        %v351 = vsel %vm348, %v350, %v346
        %v353 = vperm.slane %v305, 0
        %v355 = vmul.f32 %v353, %v319
        %v356 = vmul.f32 %v355, %v351
        %v358 = vperm.slane %v306, 0
        %v360 = vadd.f32 %v356, %v358
        %v361 = vld [vmem:[%s3] sm:$0xff]
        %v362 = vld [vmem:[%s3 + $0x8] sm:$0xff]
        %v363 = vld [vmem:[%s3 + $0x10] sm:$0xff]
        %v364 = vld [vmem:[%s3 + $0x18] sm:$0xff]
        %v365 = vld [vmem:[#allocation2] sm:$0x1]
        %v367 = vperm.slane %v365, 0
        %v370 = vsel %vm307, %v360, 0
        %372 = vmatpush.msra.mxu0 0.0
        %373 = vmatpush.msra.mxu0 0.0
        %374 = vmatpush.msra.mxu0 0.0
        %375 = vmatpush.msra.mxu0 0.0
        %376 = vmatpush.msra.mxu0 0.0
        %377 = vmatpush.msra.mxu0 0.0
        %378 = vmatpush.msra.mxu0 0.0
        %379 = vmatpush.msra.mxu0 0.0
        %380 = vmatpush.msra.mxu0 0.0
        %381 = vmatpush.msra.mxu0 0.0
        %382 = vmatpush.msra.mxu0 0.0
        %383 = vmatpush.msra.mxu0 0.0
        %384 = vmatpush.msra.mxu0 %v364
        %385 = vmatpush.msra.mxu0 %v363
        %386 = vmatpush.msra.mxu0 %v362
        %387 = vmatpush.msra.mxu0 %v361
        %388 = vmatmul.f32.gmra.mxu0 %v370
        %v389 = vpop.f32.mrf.mxu0
        %v390 = vadd.f32 %v367, %v389
        %391 = vdwg.mxu0
        %v392 = vmax.f32 %v390, 0.0
        %v393 = vld [vmem:[%s5] sm:$0xff]
        %v394 = vld [vmem:[%s5 + $0x8] sm:$0xff]
        %v395 = vld [vmem:[%s5 + $0x10] sm:$0xff]
        %v396 = vld [vmem:[%s5 + $0x18] sm:$0xff]
        %v397 = vld [vmem:[%s5 + $0x20] sm:$0xff]
        %v398 = vld [vmem:[%s5 + $0x28] sm:$0xff]
        %v399 = vld [vmem:[%s5 + $0x30] sm:$0xff]
        %v400 = vld [vmem:[%s5 + $0x38] sm:$0xff]
        %v401 = vld [vmem:[#allocation4] sm:$0x1]
        %v403 = vperm.slane %v401, 0
        %vm405 = vcmask 523264
        %v407 = vsel %vm405, %v392, 0
        %409 = vmatpush.msra.mxu0 0.0
        %410 = vmatpush.msra.mxu0 0.0
        %411 = vmatpush.msra.mxu0 0.0
        %412 = vmatpush.msra.mxu0 0.0
        %413 = vmatpush.msra.mxu0 0.0
        %414 = vmatpush.msra.mxu0 0.0
        %415 = vmatpush.msra.mxu0 0.0
        %416 = vmatpush.msra.mxu0 0.0
        %417 = vmatpush.msra.mxu0 %v400
        %418 = vmatpush.msra.mxu0 %v399
        %419 = vmatpush.msra.mxu0 %v398
        %420 = vmatpush.msra.mxu0 %v397
        %421 = vmatpush.msra.mxu0 %v396
        %422 = vmatpush.msra.mxu0 %v395
        %423 = vmatpush.msra.mxu0 %v394
        %424 = vmatpush.msra.mxu0 %v393
        %425 = vmatmul.f32.gmra.mxu0 %v407
        %v426 = vpop.f32.mrf.mxu0
        %v427 = vadd.f32 %v403, %v426
        %428 = vdwg.mxu0
        %v429 = vadd.f32 %v304, %v427
        %430 = vst.msk [vmem:[%s303] sm:$0xff] %vm307, %v429
        %p431 = scmp.lt.s32.totalorder %s20, 1
        %s432 = scalar_select %p431, %s20, 1
        %s433 = smul.addr %s432, 8
        %s434 = scalar_lea.vmem %s7, %s433
        // Predicated region
        $region57: #{_lambda_.9} parent=47 // pred_check
          %p435 = pneg %p190
        $region58: #{_lambda_.9} parent=47 // pred_check_branch
          %437 = sbr.rel (%p435) target = $region60
        $region59: #{_lambda_.9} parent=47 // pred_region
          _
        $region60: #{_lambda_.9} parent=47 // pred_fallthru
          _
      $region48: #{_lambda_.9} parent=5 // pred_fallthru
        _
      %p438 = scmp.le.s32.totalorder 2, %s15
      // Predicated region
      $region61: #{_lambda_.9} parent=5 // pred_check
        %p439 = pneg %p438
      $region62: #{_lambda_.9} parent=5 // pred_check_branch
        %441 = sbr.rel (%p439) target = $region64
      $region63: #{_lambda_.9} parent=5 // pred_region
        %s442 = ssub.s32 %s15, 2
        // Predicated region
        $region65: #{_lambda_.9} parent=63 // pred_check
          %p443 = pneg %p196
        $region66: #{_lambda_.9} parent=63 // pred_check_branch
          %445 = sbr.rel (%p443) target = $region68
        $region67: #{_lambda_.9} parent=63 // pred_region
          %p446 = scmp.lt.s32.totalorder %s21, 1
          %s447 = scalar_select %p446, %s21, 1
          %s448 = smul.addr %s447, 8
          %s449 = scalar_lea.vmem %s7, %s448
        $region68: #{_lambda_.9} parent=63 // pred_fallthru
          _
      $region64: #{_lambda_.9} parent=5 // pred_fallthru
        _
    $region6: #{_lambda_.9} parent=1 // loop_footer
      %s19 = sadd.s32 1, %s15
    $region7: #{_lambda_.9} parent=1 // loop_footer_branch
      %14 = sbr.rel target = $region3
    $region8: #{_lambda_.9} parent=1 // loop_exit
      _
    %450 = vsyncpa [#allocation3], 1
    %s451 = scalar_lea.sflag [#allocation3], 1
    %452 = vsyncpa %s451, 1
    %453 = vsyncpa [#allocation5], 1

// kernel: _lambda_.7
$region0: #{_lambda_.7}
  #allocation0 [shape = 'u32[]', space=smem, size = 0x4, offset = 0x4, fixed_abs, tag = 'smem constant byte address 0x4 - core index']
  #allocation1 [shape = 'u32[72,128]{1,0:T(1,128)}', space=vmem, size = 0x9000, scoped, tag = 'internal scratch']
  %s0 = inlined_call_operand.hbm [shape: f32[2,8,32], index: 0, kind: input, shape index: {}]
  %s1 = inlined_call_operand.vmem [shape: s32[2,8,8], index: 1, kind: input, shape index: {}]
  %s2 = inlined_call_operand.vmem [shape: f32[1,32], index: 2, kind: input, shape index: {}]
  %s3 = inlined_call_operand.vmem [shape: f32[1,32], index: 3, kind: input, shape index: {}]
  %s4 = inlined_call_operand.hbm [shape: f32[32,96], index: 4, kind: input, shape index: {}]
  %s5 = inlined_call_operand.vmem [shape: f32[1,96], index: 5, kind: input, shape index: {}]
  %s6 = inlined_call_operand.hbm [shape: f32[32,32], index: 6, kind: input, shape index: {}]
  %s7 = inlined_call_operand.vmem [shape: f32[1,32], index: 7, kind: input, shape index: {}]
  %s8 = inlined_call_operand.vmem [shape: f32[2,8,32], index: 8, kind: output, shape index: {}]
  %s9 = sld [smem:[#allocation0]]
  $region77: #{_lambda_.7} parent=0
    _
  %s11 = ssub.s32 1, %s9
  %s12 = scalar_select 0, %s11, %s9
  $region1: #{_lambda_.7} parent=0
    #allocation2 [shape = 'u8[8192]{0}', space=vmem, size = 0x2000, scoped, tag = 'input window, operand 0']
    #allocation3 [shape = 's32[2]{0}', space=sflag, size = 0x8, scoped, tag = 'scoped memory for _lambda_.7']
    #allocation4 [shape = 'u8[16384]{0}', space=vmem, size = 0x4000, scoped, tag = 'input window, operand 4, single buffered']
    #allocation5 [shape = 's32[1]{0}', space=sflag, size = 0x4, scoped, tag = 'scoped memory for _lambda_.7']
    #allocation6 [shape = 'u8[16384]{0}', space=vmem, size = 0x4000, scoped, tag = 'input window, operand 6, single buffered']
    %13 = vsyncpa [#allocation3], 0
    %s14 = scalar_lea.sflag [#allocation3], 1
    %15 = vsyncpa %s14, 0
    %16 = vsyncpa [#allocation5], 0
    loop: start=0, step=1, limit=4
    $region2: #{_lambda_.7} parent=1 // loop_pre_header
      _
    $region3: #{_lambda_.7} parent=1 // loop_header
      %s18 = sphi 0, %s22
      %p19 = scmp.ge.s32.totalorder %s18, 4
      %s28 = sphi 0, %s30
      %s31 = sphi 0, %s28
      %s32 = sphi 0, %s31
      %s48 = sphi 0, %s32
      %s54 = sphi 0, %s56
      %s57 = sphi 0, %s54
      %s58 = sphi 0, %s57
      %s74 = sphi 0, %s58
      %s78 = sphi 0, %s78
      %s80 = sphi 0, %s78
      %s81 = sphi 0, %s80
      %s95 = sphi 0, %s81
      %s99 = sphi 0, %s99
      %s101 = sphi 0, %s99
      %s102 = sphi 0, %s101
      %s116 = sphi 0, %s102
      %s120 = sphi 0, %s120
      %s122 = sphi 0, %s120
      %s123 = sphi 0, %s122
      %s137 = sphi 0, %s123
      %s141 = sphi 0, %s141
      %s143 = sphi 0, %s141
      %s144 = sphi 0, %s143
      %s158 = sphi 0, %s144
      %s162 = sphi 0, %s162
      %s164 = sphi 0, %s162
      %s165 = sphi 0, %s164
      %s179 = sphi 0, %s165
      %s183 = sphi 0, %s183
      %s185 = sphi 0, %s183
      %s186 = sphi 0, %s185
      %s200 = sphi 0, %s186
      %s206 = sphi 0, %s208
      %s209 = sphi 0, %s206
      %s210 = sphi 0, %s209
      %s226 = sphi 0, %s210
    $region4: #{_lambda_.7} parent=1 // loop_header_branch
      %21 = sbr.rel (%p19) target = $region8
    $region5: #{_lambda_.7} parent=1 // loop_body
      %s23 = ssub.s32 %s18, 1
      %s24 = ssub.s32 %s18, 2
      %s25 = sadd.s32 %s18, 1
      %s26 = ssub.s32 %s18, %s25
      %p27 = scmp.eq.s32.totalorder %s26, 0
      %s29 = sadd.s32 %s28, 1
      %s30 = scalar_select %p27, %s28, %s29
      %p33 = pneg %p27
      %p34 = scmp.eq.s32.totalorder %s18, 1
      %p35 = por %p33, %p34
      %p36 = scmp.ne.s32.totalorder %s28, %s31
      %p37 = scmp.eq.s32.totalorder %s18, 0
      %p38 = por %p36, %p37
      %p39 = scmp.ne.s32.totalorder %s28, %s31
      %p40 = scmp.eq.s32.totalorder %s23, 1
      %p41 = por %p39, %p40
      %p42 = scmp.ne.s32.totalorder %s31, %s32
      %p43 = scmp.eq.s32.totalorder %s23, 0
      %p44 = por %p42, %p43
      %p45 = scmp.ne.s32.totalorder %s31, %s32
      %p46 = scmp.eq.s32.totalorder %s24, 1
      %p47 = por %p45, %p46
      %p49 = scmp.ne.s32.totalorder %s32, %s48
      %p50 = scmp.eq.s32.totalorder %s24, 0
      %p51 = por %p49, %p50
      %s52 = ssub.s32 %s18, %s25
      %p53 = scmp.eq.s32.totalorder %s52, 0
      %s55 = sadd.s32 %s54, 1
      %s56 = scalar_select %p53, %s54, %s55
      %p59 = pneg %p53
      %p60 = scmp.eq.s32.totalorder %s18, 1
      %p61 = por %p59, %p60
      %p62 = scmp.ne.s32.totalorder %s54, %s57
      %p63 = scmp.eq.s32.totalorder %s18, 0
      %p64 = por %p62, %p63
      %p65 = scmp.ne.s32.totalorder %s54, %s57
      %p66 = scmp.eq.s32.totalorder %s23, 1
      %p67 = por %p65, %p66
      %p68 = scmp.ne.s32.totalorder %s57, %s58
      %p69 = scmp.eq.s32.totalorder %s23, 0
      %p70 = por %p68, %p69
      %p71 = scmp.ne.s32.totalorder %s57, %s58
      %p72 = scmp.eq.s32.totalorder %s24, 1
      %p73 = por %p71, %p72
      %p75 = scmp.ne.s32.totalorder %s58, %s74
      %p76 = scmp.eq.s32.totalorder %s24, 0
      %p77 = por %p75, %p76
      %s79 = sadd.s32 %s78, 1
      %p82 = scmp.eq.s32.totalorder %s18, 1
      %p83 = scmp.ne.s32.totalorder %s78, %s80
      %p84 = scmp.eq.s32.totalorder %s18, 0
      %p85 = por %p83, %p84
      %p86 = scmp.ne.s32.totalorder %s78, %s80
      %p87 = scmp.eq.s32.totalorder %s23, 1
      %p88 = por %p86, %p87
      %p89 = scmp.ne.s32.totalorder %s80, %s81
      %p90 = scmp.eq.s32.totalorder %s23, 0
      %p91 = por %p89, %p90
      %p92 = scmp.ne.s32.totalorder %s80, %s81
      %p93 = scmp.eq.s32.totalorder %s24, 1
      %p94 = por %p92, %p93
      %p96 = scmp.ne.s32.totalorder %s81, %s95
      %p97 = scmp.eq.s32.totalorder %s24, 0
      %p98 = por %p96, %p97
      %s100 = sadd.s32 %s99, 1
      %p103 = scmp.eq.s32.totalorder %s18, 1
      %p104 = scmp.ne.s32.totalorder %s99, %s101
      %p105 = scmp.eq.s32.totalorder %s18, 0
      %p106 = por %p104, %p105
      %p107 = scmp.ne.s32.totalorder %s99, %s101
      %p108 = scmp.eq.s32.totalorder %s23, 1
      %p109 = por %p107, %p108
      %p110 = scmp.ne.s32.totalorder %s101, %s102
      %p111 = scmp.eq.s32.totalorder %s23, 0
      %p112 = por %p110, %p111
      %p113 = scmp.ne.s32.totalorder %s101, %s102
      %p114 = scmp.eq.s32.totalorder %s24, 1
      %p115 = por %p113, %p114
      %p117 = scmp.ne.s32.totalorder %s102, %s116
      %p118 = scmp.eq.s32.totalorder %s24, 0
      %p119 = por %p117, %p118
      %s121 = sadd.s32 %s120, 1
      %p124 = scmp.eq.s32.totalorder %s18, 1
      %p125 = scmp.ne.s32.totalorder %s120, %s122
      %p126 = scmp.eq.s32.totalorder %s18, 0
      %p127 = por %p125, %p126
      %p128 = scmp.ne.s32.totalorder %s120, %s122
      %p129 = scmp.eq.s32.totalorder %s23, 1
      %p130 = por %p128, %p129
      %p131 = scmp.ne.s32.totalorder %s122, %s123
      %p132 = scmp.eq.s32.totalorder %s23, 0
      %p133 = por %p131, %p132
      %p134 = scmp.ne.s32.totalorder %s122, %s123
      %p135 = scmp.eq.s32.totalorder %s24, 1
      %p136 = por %p134, %p135
      %p138 = scmp.ne.s32.totalorder %s123, %s137
      %p139 = scmp.eq.s32.totalorder %s24, 0
      %p140 = por %p138, %p139
      %s142 = sadd.s32 %s141, 1
      %p145 = scmp.eq.s32.totalorder %s18, 1
      %p146 = scmp.ne.s32.totalorder %s141, %s143
      %p147 = scmp.eq.s32.totalorder %s18, 0
      %p148 = por %p146, %p147
      %p149 = scmp.ne.s32.totalorder %s141, %s143
      %p150 = scmp.eq.s32.totalorder %s23, 1
      %p151 = por %p149, %p150
      %p152 = scmp.ne.s32.totalorder %s143, %s144
      %p153 = scmp.eq.s32.totalorder %s23, 0
      %p154 = por %p152, %p153
      %p155 = scmp.ne.s32.totalorder %s143, %s144
      %p156 = scmp.eq.s32.totalorder %s24, 1
      %p157 = por %p155, %p156
      %p159 = scmp.ne.s32.totalorder %s144, %s158
      %p160 = scmp.eq.s32.totalorder %s24, 0
      %p161 = por %p159, %p160
      %s163 = sadd.s32 %s162, 1
      %p166 = scmp.eq.s32.totalorder %s18, 1
      %p167 = scmp.ne.s32.totalorder %s162, %s164
      %p168 = scmp.eq.s32.totalorder %s18, 0
      %p169 = por %p167, %p168
      %p170 = scmp.ne.s32.totalorder %s162, %s164
      %p171 = scmp.eq.s32.totalorder %s23, 1
      %p172 = por %p170, %p171
      %p173 = scmp.ne.s32.totalorder %s164, %s165
      %p174 = scmp.eq.s32.totalorder %s23, 0
      %p175 = por %p173, %p174
      %p176 = scmp.ne.s32.totalorder %s164, %s165
      %p177 = scmp.eq.s32.totalorder %s24, 1
      %p178 = por %p176, %p177
      %p180 = scmp.ne.s32.totalorder %s165, %s179
      %p181 = scmp.eq.s32.totalorder %s24, 0
      %p182 = por %p180, %p181
      %s184 = sadd.s32 %s183, 1
      %p187 = scmp.eq.s32.totalorder %s18, 1
      %p188 = scmp.ne.s32.totalorder %s183, %s185
      %p189 = scmp.eq.s32.totalorder %s18, 0
      %p190 = por %p188, %p189
      %p191 = scmp.ne.s32.totalorder %s183, %s185
      %p192 = scmp.eq.s32.totalorder %s23, 1
      %p193 = por %p191, %p192
      %p194 = scmp.ne.s32.totalorder %s185, %s186
      %p195 = scmp.eq.s32.totalorder %s23, 0
      %p196 = por %p194, %p195
      %p197 = scmp.ne.s32.totalorder %s185, %s186
      %p198 = scmp.eq.s32.totalorder %s24, 1
      %p199 = por %p197, %p198
      %p201 = scmp.ne.s32.totalorder %s186, %s200
      %p202 = scmp.eq.s32.totalorder %s24, 0
      %p203 = por %p201, %p202
      %s204 = ssub.s32 %s18, %s25
      %p205 = scmp.eq.s32.totalorder %s204, 0
      %s207 = sadd.s32 %s206, 1
      %s208 = scalar_select %p205, %s206, %s207
      %p211 = pneg %p205
      %p212 = scmp.eq.s32.totalorder %s18, 1
      %p213 = por %p211, %p212
      %p214 = scmp.ne.s32.totalorder %s206, %s209
      %p215 = scmp.eq.s32.totalorder %s18, 0
      %p216 = por %p214, %p215
      %p217 = scmp.ne.s32.totalorder %s206, %s209
      %p218 = scmp.eq.s32.totalorder %s23, 1
      %p219 = por %p217, %p218
      %p220 = scmp.ne.s32.totalorder %s209, %s210
      %p221 = scmp.eq.s32.totalorder %s23, 0
      %p222 = por %p220, %p221
      %p223 = scmp.ne.s32.totalorder %s209, %s210
      %p224 = scmp.eq.s32.totalorder %s24, 1
      %p225 = por %p223, %p224
      %p227 = scmp.ne.s32.totalorder %s210, %s226
      %p228 = scmp.eq.s32.totalorder %s24, 0
      %p229 = por %p227, %p228
      %p230 = scmp.le.s32.totalorder 1, %s18
      %p231 = scmp.lt.s32.totalorder %s18, 3
      %p232 = pnand %p230, %p231
      %p233 = pneg %p232
      // Predicated region
      $region9: #{_lambda_.7} parent=5 // pred_check
        _
      $region10: #{_lambda_.7} parent=5 // pred_check_branch
        %235 = sbr.rel (%p232) target = $region12
      $region11: #{_lambda_.7} parent=5 // pred_region
        %s236 = ssub.s32 %s18, 1
        // Predicated region
        $region13: #{_lambda_.7} parent=11 // pred_check
          %p237 = pneg %p91
        $region14: #{_lambda_.7} parent=11 // pred_check_branch
          %239 = sbr.rel (%p237) target = $region16
        $region15: #{_lambda_.7} parent=11 // pred_region
          _
        $region16: #{_lambda_.7} parent=11 // pred_fallthru
          _
        // Predicated region
        $region17: #{_lambda_.7} parent=11 // pred_check
          %p240 = pneg %p112
        $region18: #{_lambda_.7} parent=11 // pred_check_branch
          %242 = sbr.rel (%p240) target = $region20
        $region19: #{_lambda_.7} parent=11 // pred_region
          _
        $region20: #{_lambda_.7} parent=11 // pred_fallthru
          _
        // Predicated region
        $region21: #{_lambda_.7} parent=11 // pred_check
          %p243 = pneg %p133
        $region22: #{_lambda_.7} parent=11 // pred_check_branch
          %245 = sbr.rel (%p243) target = $region24
        $region23: #{_lambda_.7} parent=11 // pred_region
          %247 = vsyncadd [#allocation5], 0
          %s248 = sshll.u32 %s4, 4
          %s249 = int_to_ptr.hbm [resolvable:$true] %s248
          %s250 = sshll.u32 [#allocation4], 4
          %s251 = int_to_ptr.vmem [resolvable:$true] %s250
          %256 = dma.hbm_to_vmem [thread:$0]  %s249, 512, %s251, [#allocation5], 128, 128, 8
        $region24: #{_lambda_.7} parent=11 // pred_fallthru
          _
        // Predicated region
        $region25: #{_lambda_.7} parent=11 // pred_check
          %p257 = pneg %p154
        $region26: #{_lambda_.7} parent=11 // pred_check_branch
          %259 = sbr.rel (%p257) target = $region28
        $region27: #{_lambda_.7} parent=11 // pred_region
          _
        $region28: #{_lambda_.7} parent=11 // pred_fallthru
          _
        // Predicated region
        $region29: #{_lambda_.7} parent=11 // pred_check
          %p260 = pneg %p175
        $region30: #{_lambda_.7} parent=11 // pred_check_branch
          %262 = sbr.rel (%p260) target = $region32
        $region31: #{_lambda_.7} parent=11 // pred_region
          %264 = vsyncadd [#allocation5], 0
          %s265 = sshll.u32 %s6, 4
          %s266 = int_to_ptr.hbm [resolvable:$true] %s265
          %s267 = sshll.u32 [#allocation6], 4
          %s268 = int_to_ptr.vmem [resolvable:$true] %s267
          %273 = dma.hbm_to_vmem [thread:$0]  %s266, 512, %s268, [#allocation5], 128, 128, 8
        $region32: #{_lambda_.7} parent=11 // pred_fallthru
          _
        // Predicated region
        $region33: #{_lambda_.7} parent=11 // pred_check
          %p274 = pneg %p196
        $region34: #{_lambda_.7} parent=11 // pred_check_branch
          %276 = sbr.rel (%p274) target = $region36
        $region35: #{_lambda_.7} parent=11 // pred_region
          _
        $region36: #{_lambda_.7} parent=11 // pred_fallthru
          _
      $region12: #{_lambda_.7} parent=5 // pred_fallthru
        _
      %p277 = scmp.lt.s32.totalorder %s18, 2
      // Predicated region
      $region37: #{_lambda_.7} parent=5 // pred_check
        %p278 = pneg %p277
      $region38: #{_lambda_.7} parent=5 // pred_check_branch
        %280 = sbr.rel (%p278) target = $region40
      $region39: #{_lambda_.7} parent=5 // pred_region
        // Predicated region
        $region41: #{_lambda_.7} parent=39 // pred_check
          %p281 = pneg %p38
        $region42: #{_lambda_.7} parent=39 // pred_check_branch
          %283 = sbr.rel (%p281) target = $region44
        $region43: #{_lambda_.7} parent=39 // pred_region
          %s284 = sand.u32 %s28, 1
          %s285 = scalar_lea.sflag [#allocation3], %s284
          %s286 = sand.u32 %s28, 1
          %s287 = smul.addr %s286, 8
          %s288 = scalar_lea.vmem [#allocation2], %s287
          %290 = vsyncadd %s285, 0
          %s291 = smul.addr %s18, 8
          %s292 = scalar_lea.hbm %s0, %s291
          %s294 = sshll.u32 %s292, 4
          %s295 = int_to_ptr.hbm [resolvable:$true] %s294
          %s296 = sshll.u32 %s288, 4
          %s297 = int_to_ptr.vmem [resolvable:$true] %s296
          %299 = dma.hbm_to_vmem [thread:$0]  %s295, 128, %s297, %s285
        $region44: #{_lambda_.7} parent=39 // pred_fallthru
          _
        // Predicated region
        $region45: #{_lambda_.7} parent=39 // pred_check
          %p300 = pneg %p64
        $region46: #{_lambda_.7} parent=39 // pred_check_branch
          %302 = sbr.rel (%p300) target = $region48
        $region47: #{_lambda_.7} parent=39 // pred_region
          %p303 = scmp.lt.s32.totalorder %s18, 1
          %s304 = scalar_select %p303, %s18, 1
          %s305 = smul.addr %s304, 8
          %s306 = scalar_lea.vmem %s1, %s305
        $region48: #{_lambda_.7} parent=39 // pred_fallthru
          _
      $region40: #{_lambda_.7} parent=5 // pred_fallthru
        _
      %p307 = scmp.le.s32.totalorder 1, %s18
      %p308 = scmp.lt.s32.totalorder %s18, 3
      %p309 = pnand %p307, %p308
      %p310 = pneg %p309
      // Predicated region
      $region49: #{_lambda_.7} parent=5 // pred_check
        _
      $region50: #{_lambda_.7} parent=5 // pred_check_branch
        %312 = sbr.rel (%p309) target = $region52
      $region51: #{_lambda_.7} parent=5 // pred_region
        %s313 = ssub.s32 %s18, 1
        %s314 = sand.u32 %s31, 1
        %s315 = scalar_lea.sflag [#allocation3], %s314
        %s316 = sand.u32 %s31, 1
        %s317 = smul.addr %s316, 8
        %s318 = scalar_lea.vmem [#allocation2], %s317
        // Predicated region
        $region53: #{_lambda_.7} parent=51 // pred_check
          %p319 = pneg %p44
        $region54: #{_lambda_.7} parent=51 // pred_check_branch
          %321 = sbr.rel (%p319) target = $region56
        $region55: #{_lambda_.7} parent=51 // pred_region
          %323 = dma.done %s315, 128
        $region56: #{_lambda_.7} parent=51 // pred_fallthru
          _
        // Predicated region
        $region57: #{_lambda_.7} parent=51 // pred_check
          %p324 = pneg %p133
        $region58: #{_lambda_.7} parent=51 // pred_check_branch
          %326 = sbr.rel (%p324) target = $region60
        $region59: #{_lambda_.7} parent=51 // pred_region
          %328 = dma.done [#allocation5], 512
        $region60: #{_lambda_.7} parent=51 // pred_fallthru
          _
        // Predicated region
        $region61: #{_lambda_.7} parent=51 // pred_check
          %p329 = pneg %p175
        $region62: #{_lambda_.7} parent=51 // pred_check_branch
          %331 = sbr.rel (%p329) target = $region64
        $region63: #{_lambda_.7} parent=51 // pred_region
          %333 = dma.done [#allocation5], 512
        $region64: #{_lambda_.7} parent=51 // pred_fallthru
          _
        %s334 = sand.u32 %s31, 1
        %s335 = scalar_lea.sflag [#allocation3], %s334
        %s336 = sand.u32 %s31, 1
        %s337 = smul.addr %s336, 8
        %s338 = scalar_lea.vmem [#allocation2], %s337
        %p339 = pneg %p44
        %p340 = pneg %p41
        %p341 = scmp.lt.s32.totalorder %s23, 1
        %s342 = scalar_select %p341, %s23, 1
        %s343 = smul.addr %s342, 8
        %s344 = scalar_lea.vmem %s1, %s343
        %p345 = pneg %p70
        %p346 = pneg %p67
        %p347 = pneg %p91
        %p348 = pneg %p88
        %p349 = pneg %p112
        %p350 = pneg %p109
        %p351 = pneg %p133
        %p352 = pneg %p130
        %p353 = pneg %p154
        %p354 = pneg %p151
        %p355 = pneg %p175
        %p356 = pneg %p172
        %p357 = pneg %p196
        %p358 = pneg %p193
        %p359 = pneg %p222
        %p360 = pneg %p219
        %p361 = scmp.lt.s32.totalorder %s23, 1
        %s362 = scalar_select %p361, %s23, 1
        %s363 = smul.addr %s362, 8
        %s364 = scalar_lea.vmem %s8, %s363
        %p365 = scmp.lt.s32.totalorder %s23, 1
        %s366 = scalar_select %p365, %s23, 1
        %s367 = smul.addr %s366, 8
        %s368 = scalar_lea.vmem %s1, %s367
        %p369 = scmp.lt.s32.totalorder %s23, 1
        %s370 = scalar_select %p369, %s23, 1
        %s371 = smul.addr %s370, 8
        %s372 = scalar_lea.vmem %s8, %s371
        %v373 = vld [vmem:[%s318] sm:$0xff]
        %v374 = vld [vmem:[%s2] sm:$0x1]
        %v375 = vld [vmem:[%s3] sm:$0x1]
        %vm376 = vcmask 261120
        %v377 = vsel %vm376, %v373, 0.0
        %378 = vadd.xlane.f32.xlu0 %v377
        %v379 = vpop.xlane.xlu0 %378
        %v380 = vrcp.pop 32.0
        %v381 = vmul.f32 32.0, %v380
        %v382 = vsub.f32 1.0, %v381
        %v383 = vmul.f32 %v380, %v382
        %v384 = vadd.f32 %v380, %v383
        %vm385 = vweird.f32 %v380
        %v386 = vsel %vm385, %v380, %v384
        %v387 = vmul.f32 %v379, %v386
        %v388 = vsub.f32 %v373, %v387
        %v389 = vmul.f32 %v388, %v388
        %v390 = vsel %vm376, %v389, 0.0
        %391 = vadd.xlane.f32.xlu0 %v390
        %v392 = vpop.xlane.xlu0 %391
        %v393 = vmul.f32 %v392, 0.032258064
        %v394 = vrsqrt.pop %v393
        %v395 = vmul.f32 %v394, %v393
        %v396 = vmul.f32 %v395, %v394
        %v397 = vmul.f32 0.5, %v396
        %v398 = vsub.f32 1.5, %v397
        %v399 = vmul.f32 %v394, %v398
        %v400 = vmul.f32 %v393, %v399
        %vm401 = vcmp.eq.f32.partialorder %v393, inf
        %v402 = vsel %vm401, %v393, %v400
        %vm403 = vcmp.eq.f32.partialorder %v393, 0.0
        %v404 = vand.u32 %v393, 2147483648
        %v405 = vsel %vm403, %v404, %v402
        %v406 = vadd.f32 %v405, 1e-06
        %v407 = vrcp.pop %v406
        %v408 = vmul.f32 %v406, %v407
        %v409 = vsub.f32 1.0, %v408
        %v410 = vmul.f32 %v407, %v409
        %v411 = vadd.f32 %v407, %v410
        %vm412 = vweird.f32 %v406
        %vm413 = vweird.f32 %v407
        %vm414 = vmor %vm412, %vm413
        %v415 = vsel %vm414, %v407, %v411
        %v416 = vand.u32 2147483647, %v406
        %vm417 = vcmp.eq.f32.partialorder %v416, 8.507059e+37
        %v418 = vand.u32 %v406, 2147483648
        %v419 = vor.u32 1.1754944e-38, %v418
        %v420 = vsel %vm417, %v419, %v415
        %v422 = vperm.slane %v374, 0
        %v424 = vmul.f32 %v422, %v388
        %v425 = vmul.f32 %v424, %v420
        %v427 = vperm.slane %v375, 0
        %v429 = vadd.f32 %v425, %v427
        %v430 = vld [vmem:[#allocation4] sm:$0xff]
        %v431 = vld [vmem:[#allocation4 + $0x8] sm:$0xff]
        %v432 = vld [vmem:[#allocation4 + $0x10] sm:$0xff]
        %v433 = vld [vmem:[#allocation4 + $0x18] sm:$0xff]
        %v434 = vld [vmem:[%s5] sm:$0x1]
        %v436 = vperm.slane %v434, 0
        %v439 = vsel %vm376, %v429, 0
        %441 = vmatpush.msra.mxu0 0.0
        %442 = vmatpush.msra.mxu0 0.0
        %443 = vmatpush.msra.mxu0 0.0
        %444 = vmatpush.msra.mxu0 0.0
        %445 = vmatpush.msra.mxu0 0.0
        %446 = vmatpush.msra.mxu0 0.0
        %447 = vmatpush.msra.mxu0 0.0
        %448 = vmatpush.msra.mxu0 0.0
        %449 = vmatpush.msra.mxu0 0.0
        %450 = vmatpush.msra.mxu0 0.0
        %451 = vmatpush.msra.mxu0 0.0
        %452 = vmatpush.msra.mxu0 0.0
        %453 = vmatpush.msra.mxu0 %v433
        %454 = vmatpush.msra.mxu0 %v432
        %455 = vmatpush.msra.mxu0 %v431
        %456 = vmatpush.msra.mxu0 %v430
        %457 = vmatmul.f32.gmra.mxu0 %v439
        %v458 = vpop.f32.mrf.mxu0
        %v459 = vadd.f32 %v436, %v458
        %460 = vdwg.mxu0
        %v461 = vld [vmem:[%s368] sm:$0xff]
        %v462 = vld [vmem:[#allocation6] sm:$0xff]
        %v463 = vld [vmem:[#allocation6 + $0x8] sm:$0xff]
        %v464 = vld [vmem:[#allocation6 + $0x10] sm:$0xff]
        %v465 = vld [vmem:[#allocation6 + $0x18] sm:$0xff]
        %467 = vrot.lane.b32.xlu0 %v459, 96
        %v468 = vpop.permute.xlu0 %467
        %vm469 = vcmask 64512
        %v470 = vsel %vm469, %v459, 0
        %v472 = vsel %vm469, %v468, 0
        %474 = vmatpush.xpose.msra.mxu0 0.0
        %475 = vmatpush.xpose.msra.mxu0 0.0
        %476 = vmatpush.xpose.msra.mxu0 0.0
        %477 = vmatpush.xpose.msra.mxu0 0.0
        %478 = vmatpush.xpose.msra.mxu0 0.0
        %479 = vmatpush.xpose.msra.mxu0 0.0
        %480 = vmatpush.xpose.msra.mxu0 0.0
        %481 = vmatpush.xpose.msra.mxu0 0.0
        %482 = vmatpush.xpose.msra.mxu0 0.0
        %483 = vmatpush.xpose.msra.mxu0 0.0
        %484 = vmatpush.xpose.msra.mxu0 0.0
        %485 = vmatpush.xpose.msra.mxu0 0.0
        %486 = vmatpush.xpose.msra.mxu0 0.0
        %487 = vmatpush.xpose.msra.mxu0 0.0
        %488 = vmatpush.xpose.msra.mxu0 0.0
        %489 = vmatpush.xpose.msra.mxu0 %v472
        %490 = vmatmul.f32.gmra.mxu0 %v470
        %v491 = vpop.f32.mrf.mxu0
        %v492 = vadd.f32 0.0, %v491
        %493 = vdwg.mxu0
        %v494 = vmul.f32 %v492, 0.35355338
        %vm495 = vcmp.eq.s32.totalorder %v461, 0
        %v496 = vsel %vm495, -1e+09, %v494
        %v497 = vsel %vm469, %v496, -inf
        %498 = vmax.xlane.f32.xlu0 %v497
        %v499 = vpop.xlane.xlu0 %498
        %v500 = vsub.f32 %v496, %v499
        %v501 = vmul.f32 %v500, 1.442695
        %v502 = vpow.pop %v501
        %v503 = vsel %vm469, %v502, 0.0
        %504 = vadd.xlane.f32.xlu0 %v503
        %v505 = vpop.xlane.xlu0 %504
        %v506 = vrcp.pop %v505
        %v507 = vmul.f32 %v502, %v506
        %508 = vrot.lane.b32.xlu0 %v459, 64
        %v509 = vpop.permute.xlu0 %508
        %v512 = vsel %vm469, %v507, 0
        %514 = vmatpush.msra.mxu0 0.0
        %515 = vmatpush.msra.mxu0 0.0
        %516 = vmatpush.msra.mxu0 0.0
        %517 = vmatpush.msra.mxu0 0.0
        %518 = vmatpush.msra.mxu0 0.0
        %519 = vmatpush.msra.mxu0 0.0
        %520 = vmatpush.msra.mxu0 0.0
        %521 = vmatpush.msra.mxu0 0.0
        %522 = vmatpush.msra.mxu0 0.0
        %523 = vmatpush.msra.mxu0 0.0
        %524 = vmatpush.msra.mxu0 0.0
        %525 = vmatpush.msra.mxu0 0.0
        %526 = vmatpush.msra.mxu0 0.0
        %527 = vmatpush.msra.mxu0 0.0
        %528 = vmatpush.msra.mxu0 0.0
        %529 = vmatpush.msra.mxu0 %v509
        %530 = vmatmul.f32.gmra.mxu0 %v512
        %v531 = vpop.f32.mrf.mxu0
        %v532 = vadd.f32 0.0, %v531
        %533 = vdwg.mxu0
        %534 = vrot.lane.b32.xlu0 %v459, 120
        %v535 = vpop.permute.xlu0 %534
        %536 = vrot.lane.b32.xlu0 %v459, 88
        %v537 = vpop.permute.xlu0 %536
        %v538 = vsel %vm469, %v535, 0
        %v540 = vsel %vm469, %v537, 0
        %542 = vmatpush.xpose.msra.mxu0 0.0
        %543 = vmatpush.xpose.msra.mxu0 0.0
        %544 = vmatpush.xpose.msra.mxu0 0.0
        %545 = vmatpush.xpose.msra.mxu0 0.0
        %546 = vmatpush.xpose.msra.mxu0 0.0
        %547 = vmatpush.xpose.msra.mxu0 0.0
        %548 = vmatpush.xpose.msra.mxu0 0.0
        %549 = vmatpush.xpose.msra.mxu0 0.0
        %550 = vmatpush.xpose.msra.mxu0 0.0
        %551 = vmatpush.xpose.msra.mxu0 0.0
        %552 = vmatpush.xpose.msra.mxu0 0.0
        %553 = vmatpush.xpose.msra.mxu0 0.0
        %554 = vmatpush.xpose.msra.mxu0 0.0
        %555 = vmatpush.xpose.msra.mxu0 0.0
        %556 = vmatpush.xpose.msra.mxu0 0.0
        %557 = vmatpush.xpose.msra.mxu0 %v540
        %558 = vmatmul.f32.gmra.mxu0 %v538
        %v559 = vpop.f32.mrf.mxu0
        %v560 = vadd.f32 0.0, %v559
        %561 = vdwg.mxu0
        %v562 = vmul.f32 %v560, 0.35355338
        %v563 = vsel %vm495, -1e+09, %v562
        %v564 = vsel %vm469, %v563, -inf
        %565 = vmax.xlane.f32.xlu0 %v564
        %v566 = vpop.xlane.xlu0 %565
        %v567 = vsub.f32 %v563, %v566
        %v568 = vmul.f32 %v567, 1.442695
        %v569 = vpow.pop %v568
        %v570 = vsel %vm469, %v569, 0.0
        %571 = vadd.xlane.f32.xlu0 %v570
        %v572 = vpop.xlane.xlu0 %571
        %v573 = vrcp.pop %v572
        %v574 = vmul.f32 %v569, %v573
        %575 = vrot.lane.b32.xlu0 %v459, 56
        %v576 = vpop.permute.xlu0 %575
        %v579 = vsel %vm469, %v574, 0
        %581 = vmatpush.msra.mxu0 0.0
        %582 = vmatpush.msra.mxu0 0.0
        %583 = vmatpush.msra.mxu0 0.0
        %584 = vmatpush.msra.mxu0 0.0
        %585 = vmatpush.msra.mxu0 0.0
        %586 = vmatpush.msra.mxu0 0.0
        %587 = vmatpush.msra.mxu0 0.0
        %588 = vmatpush.msra.mxu0 0.0
        %589 = vmatpush.msra.mxu0 0.0
        %590 = vmatpush.msra.mxu0 0.0
        %591 = vmatpush.msra.mxu0 0.0
        %592 = vmatpush.msra.mxu0 0.0
        %593 = vmatpush.msra.mxu0 0.0
        %594 = vmatpush.msra.mxu0 0.0
        %595 = vmatpush.msra.mxu0 0.0
        %596 = vmatpush.msra.mxu0 %v576
        %597 = vmatmul.f32.gmra.mxu0 %v579
        %v598 = vpop.f32.mrf.mxu0
        %v599 = vadd.f32 0.0, %v598
        %600 = vdwg.mxu0
        %v602 = vsel %vm469, %v599, 0
        %604 = vmatpush.msra.mxu0 0.0
        %605 = vmatpush.msra.mxu0 0.0
        %606 = vmatpush.msra.mxu0 0.0
        %607 = vmatpush.msra.mxu0 0.0
        %608 = vmatpush.msra.mxu0 0.0
        %609 = vmatpush.msra.mxu0 0.0
        %610 = vmatpush.msra.mxu0 0.0
        %611 = vmatpush.msra.mxu0 0.0
        %612 = vmatpush.msra.mxu0 0.0
        %613 = vmatpush.msra.mxu0 0.0
        %614 = vmatpush.msra.mxu0 0.0
        %615 = vmatpush.msra.mxu0 0.0
        %616 = vmatpush.msra.mxu0 0.0
        %617 = vmatpush.msra.mxu0 0.0
        %618 = vmatpush.msra.mxu0 0.0
        %619 = vmatpush.msra.mxu0 %v463
        %620 = vmatmul.f32.gmra.mxu0 %v602
        %v621 = vpop.f32.mrf.mxu0
        %v622 = vadd.f32 0.0, %v621
        %623 = vdwg.mxu0
        %v625 = vsel %vm469, %v532, 0
        %627 = vmatpush.msra.mxu0 0.0
        %628 = vmatpush.msra.mxu0 0.0
        %629 = vmatpush.msra.mxu0 0.0
        %630 = vmatpush.msra.mxu0 0.0
        %631 = vmatpush.msra.mxu0 0.0
        %632 = vmatpush.msra.mxu0 0.0
        %633 = vmatpush.msra.mxu0 0.0
        %634 = vmatpush.msra.mxu0 0.0
        %635 = vmatpush.msra.mxu0 0.0
        %636 = vmatpush.msra.mxu0 0.0
        %637 = vmatpush.msra.mxu0 0.0
        %638 = vmatpush.msra.mxu0 0.0
        %639 = vmatpush.msra.mxu0 0.0
        %640 = vmatpush.msra.mxu0 0.0
        %641 = vmatpush.msra.mxu0 0.0
        %642 = vmatpush.msra.mxu0 %v462
        %643 = vmatmul.f32.gmra.mxu0 %v625
        %v644 = vpop.f32.mrf.mxu0
        %v645 = vadd.f32 %v622, %v644
        %646 = vdwg.mxu0
        %647 = vrot.lane.b32.xlu0 %v459, 112
        %v648 = vpop.permute.xlu0 %647
        %649 = vrot.lane.b32.xlu0 %v459, 80
        %v650 = vpop.permute.xlu0 %649
        %v651 = vsel %vm469, %v648, 0
        %v653 = vsel %vm469, %v650, 0
        %655 = vmatpush.xpose.msra.mxu0 0.0
        %656 = vmatpush.xpose.msra.mxu0 0.0
        %657 = vmatpush.xpose.msra.mxu0 0.0
        %658 = vmatpush.xpose.msra.mxu0 0.0
        %659 = vmatpush.xpose.msra.mxu0 0.0
        %660 = vmatpush.xpose.msra.mxu0 0.0
        %661 = vmatpush.xpose.msra.mxu0 0.0
        %662 = vmatpush.xpose.msra.mxu0 0.0
        %663 = vmatpush.xpose.msra.mxu0 0.0
        %664 = vmatpush.xpose.msra.mxu0 0.0
        %665 = vmatpush.xpose.msra.mxu0 0.0
        %666 = vmatpush.xpose.msra.mxu0 0.0
        %667 = vmatpush.xpose.msra.mxu0 0.0
        %668 = vmatpush.xpose.msra.mxu0 0.0
        %669 = vmatpush.xpose.msra.mxu0 0.0
        %670 = vmatpush.xpose.msra.mxu0 %v653
        %671 = vmatmul.f32.gmra.mxu0 %v651
        %v672 = vpop.f32.mrf.mxu0
        %v673 = vadd.f32 0.0, %v672
        %674 = vdwg.mxu0
        %v675 = vmul.f32 %v673, 0.35355338
        %v676 = vsel %vm495, -1e+09, %v675
        %v677 = vsel %vm469, %v676, -inf
        %678 = vmax.xlane.f32.xlu0 %v677
        %v679 = vpop.xlane.xlu0 %678
        %v680 = vsub.f32 %v676, %v679
        %v681 = vmul.f32 %v680, 1.442695
        %v682 = vpow.pop %v681
        %v683 = vsel %vm469, %v682, 0.0
        %684 = vadd.xlane.f32.xlu0 %v683
        %v685 = vpop.xlane.xlu0 %684
        %v686 = vrcp.pop %v685
        %v687 = vmul.f32 %v682, %v686
        %688 = vrot.lane.b32.xlu0 %v459, 48
        %v689 = vpop.permute.xlu0 %688
        %v692 = vsel %vm469, %v687, 0
        %694 = vmatpush.msra.mxu0 0.0
        %695 = vmatpush.msra.mxu0 0.0
        %696 = vmatpush.msra.mxu0 0.0
        %697 = vmatpush.msra.mxu0 0.0
        %698 = vmatpush.msra.mxu0 0.0
        %699 = vmatpush.msra.mxu0 0.0
        %700 = vmatpush.msra.mxu0 0.0
        %701 = vmatpush.msra.mxu0 0.0
        %702 = vmatpush.msra.mxu0 0.0
        %703 = vmatpush.msra.mxu0 0.0
        %704 = vmatpush.msra.mxu0 0.0
        %705 = vmatpush.msra.mxu0 0.0
        %706 = vmatpush.msra.mxu0 0.0
        %707 = vmatpush.msra.mxu0 0.0
        %708 = vmatpush.msra.mxu0 0.0
        %709 = vmatpush.msra.mxu0 %v689
        %710 = vmatmul.f32.gmra.mxu0 %v692
        %v711 = vpop.f32.mrf.mxu0
        %v712 = vadd.f32 0.0, %v711
        %713 = vdwg.mxu0
        %v715 = vsel %vm469, %v712, 0
        %717 = vmatpush.msra.mxu0 0.0
        %718 = vmatpush.msra.mxu0 0.0
        %719 = vmatpush.msra.mxu0 0.0
        %720 = vmatpush.msra.mxu0 0.0
        %721 = vmatpush.msra.mxu0 0.0
        %722 = vmatpush.msra.mxu0 0.0
        %723 = vmatpush.msra.mxu0 0.0
        %724 = vmatpush.msra.mxu0 0.0
        %725 = vmatpush.msra.mxu0 0.0
        %726 = vmatpush.msra.mxu0 0.0
        %727 = vmatpush.msra.mxu0 0.0
        %728 = vmatpush.msra.mxu0 0.0
        %729 = vmatpush.msra.mxu0 0.0
        %730 = vmatpush.msra.mxu0 0.0
        %731 = vmatpush.msra.mxu0 0.0
        %732 = vmatpush.msra.mxu0 %v464
        %733 = vmatmul.f32.gmra.mxu0 %v715
        %v734 = vpop.f32.mrf.mxu0
        %v735 = vadd.f32 0.0, %v734
        %736 = vdwg.mxu0
        %v737 = vadd.f32 %v645, %v735
        %738 = vrot.lane.b32.xlu0 %v459, 104
        %v739 = vpop.permute.xlu0 %738
        %740 = vrot.lane.b32.xlu0 %v459, 72
        %v741 = vpop.permute.xlu0 %740
        %v742 = vsel %vm469, %v739, 0
        %v744 = vsel %vm469, %v741, 0
        %746 = vmatpush.xpose.msra.mxu0 0.0
        %747 = vmatpush.xpose.msra.mxu0 0.0
        %748 = vmatpush.xpose.msra.mxu0 0.0
        %749 = vmatpush.xpose.msra.mxu0 0.0
        %750 = vmatpush.xpose.msra.mxu0 0.0
        %751 = vmatpush.xpose.msra.mxu0 0.0
        %752 = vmatpush.xpose.msra.mxu0 0.0
        %753 = vmatpush.xpose.msra.mxu0 0.0
        %754 = vmatpush.xpose.msra.mxu0 0.0
        %755 = vmatpush.xpose.msra.mxu0 0.0
        %756 = vmatpush.xpose.msra.mxu0 0.0
        %757 = vmatpush.xpose.msra.mxu0 0.0
        %758 = vmatpush.xpose.msra.mxu0 0.0
        %759 = vmatpush.xpose.msra.mxu0 0.0
        %760 = vmatpush.xpose.msra.mxu0 0.0
        %761 = vmatpush.xpose.msra.mxu0 %v744
        %762 = vmatmul.f32.gmra.mxu0 %v742
        %v763 = vpop.f32.mrf.mxu0
        %v764 = vadd.f32 0.0, %v763
        %765 = vdwg.mxu0
        %v766 = vmul.f32 %v764, 0.35355338
        %v767 = vsel %vm495, -1e+09, %v766
        %v768 = vsel %vm469, %v767, -inf
        %769 = vmax.xlane.f32.xlu0 %v768
        %v770 = vpop.xlane.xlu0 %769
        %v771 = vsub.f32 %v767, %v770
        %v772 = vmul.f32 %v771, 1.442695
        %v773 = vpow.pop %v772
        %v774 = vsel %vm469, %v773, 0.0
        %775 = vadd.xlane.f32.xlu0 %v774
        %v776 = vpop.xlane.xlu0 %775
        %v777 = vrcp.pop %v776
        %v778 = vmul.f32 %v773, %v777
        %779 = vrot.lane.b32.xlu0 %v459, 40
        %v780 = vpop.permute.xlu0 %779
        %v783 = vsel %vm469, %v778, 0
        %785 = vmatpush.msra.mxu0 0.0
        %786 = vmatpush.msra.mxu0 0.0
        %787 = vmatpush.msra.mxu0 0.0
        %788 = vmatpush.msra.mxu0 0.0
        %789 = vmatpush.msra.mxu0 0.0
        %790 = vmatpush.msra.mxu0 0.0
        %791 = vmatpush.msra.mxu0 0.0
        %792 = vmatpush.msra.mxu0 0.0
        %793 = vmatpush.msra.mxu0 0.0
        %794 = vmatpush.msra.mxu0 0.0
        %795 = vmatpush.msra.mxu0 0.0
        %796 = vmatpush.msra.mxu0 0.0
        %797 = vmatpush.msra.mxu0 0.0
        %798 = vmatpush.msra.mxu0 0.0
        %799 = vmatpush.msra.mxu0 0.0
        %800 = vmatpush.msra.mxu0 %v780
        %801 = vmatmul.f32.gmra.mxu0 %v783
        %v802 = vpop.f32.mrf.mxu0
        %v803 = vadd.f32 0.0, %v802
        %804 = vdwg.mxu0
        %v806 = vsel %vm469, %v803, 0
        %808 = vmatpush.msra.mxu0 0.0
        %809 = vmatpush.msra.mxu0 0.0
        %810 = vmatpush.msra.mxu0 0.0
        %811 = vmatpush.msra.mxu0 0.0
        %812 = vmatpush.msra.mxu0 0.0
        %813 = vmatpush.msra.mxu0 0.0
        %814 = vmatpush.msra.mxu0 0.0
        %815 = vmatpush.msra.mxu0 0.0
        %816 = vmatpush.msra.mxu0 0.0
        %817 = vmatpush.msra.mxu0 0.0
        %818 = vmatpush.msra.mxu0 0.0
        %819 = vmatpush.msra.mxu0 0.0
        %820 = vmatpush.msra.mxu0 0.0
        %821 = vmatpush.msra.mxu0 0.0
        %822 = vmatpush.msra.mxu0 0.0
        %823 = vmatpush.msra.mxu0 %v465
        %824 = vmatmul.f32.gmra.mxu0 %v806
        %v825 = vpop.f32.mrf.mxu0
        %v826 = vadd.f32 0.0, %v825
        %827 = vdwg.mxu0
        %v828 = vadd.f32 %v737, %v826
        %v829 = vadd.f32 %v373, %v828
        %v830 = vld [vmem:[%s7] sm:$0x1]
        %v832 = vperm.slane %v830, 0
        %v834 = vadd.f32 %v829, %v832
        %835 = vst.msk [vmem:[%s372] sm:$0xff] %vm376, %v834
        %p836 = scmp.lt.s32.totalorder %s23, 1
        %s837 = scalar_select %p836, %s23, 1
        %s838 = smul.addr %s837, 8
        %s839 = scalar_lea.vmem %s8, %s838
        // Predicated region
        $region65: #{_lambda_.7} parent=51 // pred_check
          %p840 = pneg %p219
        $region66: #{_lambda_.7} parent=51 // pred_check_branch
          %842 = sbr.rel (%p840) target = $region68
        $region67: #{_lambda_.7} parent=51 // pred_region
          _
        $region68: #{_lambda_.7} parent=51 // pred_fallthru
          _
      $region52: #{_lambda_.7} parent=5 // pred_fallthru
        _
      %p843 = scmp.le.s32.totalorder 2, %s18
      // Predicated region
      $region69: #{_lambda_.7} parent=5 // pred_check
        %p844 = pneg %p843
      $region70: #{_lambda_.7} parent=5 // pred_check_branch
        %846 = sbr.rel (%p844) target = $region72
      $region71: #{_lambda_.7} parent=5 // pred_region
        %s847 = ssub.s32 %s18, 2
        // Predicated region
        $region73: #{_lambda_.7} parent=71 // pred_check
          %p848 = pneg %p225
        $region74: #{_lambda_.7} parent=71 // pred_check_branch
          %850 = sbr.rel (%p848) target = $region76
        $region75: #{_lambda_.7} parent=71 // pred_region
          %p851 = scmp.lt.s32.totalorder %s24, 1
          %s852 = scalar_select %p851, %s24, 1
          %s853 = smul.addr %s852, 8
          %s854 = scalar_lea.vmem %s8, %s853
        $region76: #{_lambda_.7} parent=71 // pred_fallthru
          _
      $region72: #{_lambda_.7} parent=5 // pred_fallthru
        _
    $region6: #{_lambda_.7} parent=1 // loop_footer
      %s22 = sadd.s32 1, %s18
    $region7: #{_lambda_.7} parent=1 // loop_footer_branch
      %17 = sbr.rel target = $region3
    $region8: #{_lambda_.7} parent=1 // loop_exit
      _
    %855 = vsyncpa [#allocation3], 1
    %s856 = scalar_lea.sflag [#allocation3], 1
    %857 = vsyncpa %s856, 1
    %858 = vsyncpa [#allocation5], 1

// kernel: _lambda_.8
$region0: #{_lambda_.8}
  #allocation0 [shape = 'u32[]', space=smem, size = 0x4, offset = 0x4, fixed_abs, tag = 'smem constant byte address 0x4 - core index']
  #allocation1 [shape = 'u32[72,128]{1,0:T(1,128)}', space=vmem, size = 0x9000, scoped, tag = 'internal scratch']
  %s0 = inlined_call_operand.vmem [shape: f32[2,8,32], index: 0, kind: input, shape index: {}]
  %s1 = inlined_call_operand.hbm [shape: f32[2,16,32], index: 1, kind: input, shape index: {}]
  %s2 = inlined_call_operand.vmem [shape: s32[2,1,16], index: 2, kind: input, shape index: {}]
  %s3 = inlined_call_operand.vmem [shape: f32[1,32], index: 3, kind: input, shape index: {}]
  %s4 = inlined_call_operand.vmem [shape: f32[1,32], index: 4, kind: input, shape index: {}]
  %s5 = inlined_call_operand.hbm [shape: f32[32,32], index: 5, kind: input, shape index: {}]
  %s6 = inlined_call_operand.hbm [shape: f32[1,32], index: 6, kind: input, shape index: {}]
  %s7 = inlined_call_operand.hbm [shape: f32[32,64], index: 7, kind: input, shape index: {}]
  %s8 = inlined_call_operand.hbm [shape: f32[1,64], index: 8, kind: input, shape index: {}]
  %s9 = inlined_call_operand.hbm [shape: f32[32,32], index: 9, kind: input, shape index: {}]
  %s10 = inlined_call_operand.hbm [shape: f32[1,32], index: 10, kind: input, shape index: {}]
  %s11 = inlined_call_operand.vmem [shape: f32[2,8,32], index: 11, kind: output, shape index: {}]
  %s12 = sld [smem:[#allocation0]]
  $region105: #{_lambda_.8} parent=0
    _
  %s14 = ssub.s32 1, %s12
  %s15 = scalar_select 0, %s14, %s12
  $region1: #{_lambda_.8} parent=0
    #allocation2 [shape = 'u8[16384]{0}', space=vmem, size = 0x4000, scoped, tag = 'input window, operand 1']
    #allocation3 [shape = 's32[2]{0}', space=sflag, size = 0x8, scoped, tag = 'scoped memory for _lambda_.8']
    #allocation4 [shape = 'u8[16384]{0}', space=vmem, size = 0x4000, scoped, tag = 'input window, operand 5, single buffered']
    #allocation5 [shape = 's32[1]{0}', space=sflag, size = 0x4, scoped, tag = 'scoped memory for _lambda_.8']
    #allocation6 [shape = 'u8[512]{0}', space=vmem, size = 0x400, scoped, tag = 'input window, operand 6, single buffered']
    #allocation7 [shape = 'u8[16384]{0}', space=vmem, size = 0x4000, scoped, tag = 'input window, operand 7, single buffered']
    #allocation8 [shape = 's32[1]{0}', space=sflag, size = 0x4, scoped, tag = 'scoped memory for _lambda_.8']
    #allocation9 [shape = 'u8[512]{0}', space=vmem, size = 0x400, scoped, tag = 'input window, operand 8, single buffered']
    #allocation10 [shape = 'u8[16384]{0}', space=vmem, size = 0x4000, scoped, tag = 'input window, operand 9, single buffered']
    #allocation11 [shape = 's32[1]{0}', space=sflag, size = 0x4, scoped, tag = 'scoped memory for _lambda_.8']
    #allocation12 [shape = 'u8[512]{0}', space=vmem, size = 0x400, scoped, tag = 'input window, operand 10, single buffered']
    %16 = vsyncpa [#allocation3], 0
    %s17 = scalar_lea.sflag [#allocation3], 1
    %18 = vsyncpa %s17, 0
    %19 = vsyncpa [#allocation5], 0
    %20 = vsyncpa [#allocation8], 0
    %21 = vsyncpa [#allocation11], 0
    loop: start=0, step=1, limit=4
    $region2: #{_lambda_.8} parent=1 // loop_pre_header
      _
    $region3: #{_lambda_.8} parent=1 // loop_header
      %s23 = sphi 0, %s27
      %p24 = scmp.ge.s32.totalorder %s23, 4
      %s33 = sphi 0, %s35
      %s36 = sphi 0, %s33
      %s37 = sphi 0, %s36
      %s53 = sphi 0, %s37
      %s59 = sphi 0, %s61
      %s62 = sphi 0, %s59
      %s63 = sphi 0, %s62
      %s79 = sphi 0, %s63
      %s85 = sphi 0, %s87
      %s88 = sphi 0, %s85
      %s89 = sphi 0, %s88
      %s105 = sphi 0, %s89
      %s109 = sphi 0, %s109
      %s111 = sphi 0, %s109
      %s112 = sphi 0, %s111
      %s126 = sphi 0, %s112
      %s130 = sphi 0, %s130
      %s132 = sphi 0, %s130
      %s133 = sphi 0, %s132
      %s147 = sphi 0, %s133
      %s151 = sphi 0, %s151
      %s153 = sphi 0, %s151
      %s154 = sphi 0, %s153
      %s168 = sphi 0, %s154
      %s172 = sphi 0, %s172
      %s174 = sphi 0, %s172
      %s175 = sphi 0, %s174
      %s189 = sphi 0, %s175
      %s193 = sphi 0, %s193
      %s195 = sphi 0, %s193
      %s196 = sphi 0, %s195
      %s210 = sphi 0, %s196
      %s214 = sphi 0, %s214
      %s216 = sphi 0, %s214
      %s217 = sphi 0, %s216
      %s231 = sphi 0, %s217
      %s235 = sphi 0, %s235
      %s237 = sphi 0, %s235
      %s238 = sphi 0, %s237
      %s252 = sphi 0, %s238
      %s256 = sphi 0, %s256
      %s258 = sphi 0, %s256
      %s259 = sphi 0, %s258
      %s273 = sphi 0, %s259
      %s279 = sphi 0, %s281
      %s282 = sphi 0, %s279
      %s283 = sphi 0, %s282
      %s299 = sphi 0, %s283
    $region4: #{_lambda_.8} parent=1 // loop_header_branch
      %26 = sbr.rel (%p24) target = $region8
    $region5: #{_lambda_.8} parent=1 // loop_body
      %s28 = ssub.s32 %s23, 1
      %s29 = ssub.s32 %s23, 2
      %s30 = sadd.s32 %s23, 1
      %s31 = ssub.s32 %s23, %s30
      %p32 = scmp.eq.s32.totalorder %s31, 0
      %s34 = sadd.s32 %s33, 1
      %s35 = scalar_select %p32, %s33, %s34
      %p38 = pneg %p32
      %p39 = scmp.eq.s32.totalorder %s23, 1
      %p40 = por %p38, %p39
      %p41 = scmp.ne.s32.totalorder %s33, %s36
      %p42 = scmp.eq.s32.totalorder %s23, 0
      %p43 = por %p41, %p42
      %p44 = scmp.ne.s32.totalorder %s33, %s36
      %p45 = scmp.eq.s32.totalorder %s28, 1
      %p46 = por %p44, %p45
      %p47 = scmp.ne.s32.totalorder %s36, %s37
      %p48 = scmp.eq.s32.totalorder %s28, 0
      %p49 = por %p47, %p48
      %p50 = scmp.ne.s32.totalorder %s36, %s37
      %p51 = scmp.eq.s32.totalorder %s29, 1
      %p52 = por %p50, %p51
      %p54 = scmp.ne.s32.totalorder %s37, %s53
      %p55 = scmp.eq.s32.totalorder %s29, 0
      %p56 = por %p54, %p55
      %s57 = ssub.s32 %s23, %s30
      %p58 = scmp.eq.s32.totalorder %s57, 0
      %s60 = sadd.s32 %s59, 1
      %s61 = scalar_select %p58, %s59, %s60
      %p64 = pneg %p58
      %p65 = scmp.eq.s32.totalorder %s23, 1
      %p66 = por %p64, %p65
      %p67 = scmp.ne.s32.totalorder %s59, %s62
      %p68 = scmp.eq.s32.totalorder %s23, 0
      %p69 = por %p67, %p68
      %p70 = scmp.ne.s32.totalorder %s59, %s62
      %p71 = scmp.eq.s32.totalorder %s28, 1
      %p72 = por %p70, %p71
      %p73 = scmp.ne.s32.totalorder %s62, %s63
      %p74 = scmp.eq.s32.totalorder %s28, 0
      %p75 = por %p73, %p74
      %p76 = scmp.ne.s32.totalorder %s62, %s63
      %p77 = scmp.eq.s32.totalorder %s29, 1
      %p78 = por %p76, %p77
      %p80 = scmp.ne.s32.totalorder %s63, %s79
      %p81 = scmp.eq.s32.totalorder %s29, 0
      %p82 = por %p80, %p81
      %s83 = ssub.s32 %s23, %s30
      %p84 = scmp.eq.s32.totalorder %s83, 0
      %s86 = sadd.s32 %s85, 1
      %s87 = scalar_select %p84, %s85, %s86
      %p90 = pneg %p84
      %p91 = scmp.eq.s32.totalorder %s23, 1
      %p92 = por %p90, %p91
      %p93 = scmp.ne.s32.totalorder %s85, %s88
      %p94 = scmp.eq.s32.totalorder %s23, 0
      %p95 = por %p93, %p94
      %p96 = scmp.ne.s32.totalorder %s85, %s88
      %p97 = scmp.eq.s32.totalorder %s28, 1
      %p98 = por %p96, %p97
      %p99 = scmp.ne.s32.totalorder %s88, %s89
      %p100 = scmp.eq.s32.totalorder %s28, 0
      %p101 = por %p99, %p100
      %p102 = scmp.ne.s32.totalorder %s88, %s89
      %p103 = scmp.eq.s32.totalorder %s29, 1
      %p104 = por %p102, %p103
      %p106 = scmp.ne.s32.totalorder %s89, %s105
      %p107 = scmp.eq.s32.totalorder %s29, 0
      %p108 = por %p106, %p107
      %s110 = sadd.s32 %s109, 1
      %p113 = scmp.eq.s32.totalorder %s23, 1
      %p114 = scmp.ne.s32.totalorder %s109, %s111
      %p115 = scmp.eq.s32.totalorder %s23, 0
      %p116 = por %p114, %p115
      %p117 = scmp.ne.s32.totalorder %s109, %s111
      %p118 = scmp.eq.s32.totalorder %s28, 1
      %p119 = por %p117, %p118
      %p120 = scmp.ne.s32.totalorder %s111, %s112
      %p121 = scmp.eq.s32.totalorder %s28, 0
      %p122 = por %p120, %p121
      %p123 = scmp.ne.s32.totalorder %s111, %s112
      %p124 = scmp.eq.s32.totalorder %s29, 1
      %p125 = por %p123, %p124
      %p127 = scmp.ne.s32.totalorder %s112, %s126
      %p128 = scmp.eq.s32.totalorder %s29, 0
      %p129 = por %p127, %p128
      %s131 = sadd.s32 %s130, 1
      %p134 = scmp.eq.s32.totalorder %s23, 1
      %p135 = scmp.ne.s32.totalorder %s130, %s132
      %p136 = scmp.eq.s32.totalorder %s23, 0
      %p137 = por %p135, %p136
      %p138 = scmp.ne.s32.totalorder %s130, %s132
      %p139 = scmp.eq.s32.totalorder %s28, 1
      %p140 = por %p138, %p139
      %p141 = scmp.ne.s32.totalorder %s132, %s133
      %p142 = scmp.eq.s32.totalorder %s28, 0
      %p143 = por %p141, %p142
      %p144 = scmp.ne.s32.totalorder %s132, %s133
      %p145 = scmp.eq.s32.totalorder %s29, 1
      %p146 = por %p144, %p145
      %p148 = scmp.ne.s32.totalorder %s133, %s147
      %p149 = scmp.eq.s32.totalorder %s29, 0
      %p150 = por %p148, %p149
      %s152 = sadd.s32 %s151, 1
      %p155 = scmp.eq.s32.totalorder %s23, 1
      %p156 = scmp.ne.s32.totalorder %s151, %s153
      %p157 = scmp.eq.s32.totalorder %s23, 0
      %p158 = por %p156, %p157
      %p159 = scmp.ne.s32.totalorder %s151, %s153
      %p160 = scmp.eq.s32.totalorder %s28, 1
      %p161 = por %p159, %p160
      %p162 = scmp.ne.s32.totalorder %s153, %s154
      %p163 = scmp.eq.s32.totalorder %s28, 0
      %p164 = por %p162, %p163
      %p165 = scmp.ne.s32.totalorder %s153, %s154
      %p166 = scmp.eq.s32.totalorder %s29, 1
      %p167 = por %p165, %p166
      %p169 = scmp.ne.s32.totalorder %s154, %s168
      %p170 = scmp.eq.s32.totalorder %s29, 0
      %p171 = por %p169, %p170
      %s173 = sadd.s32 %s172, 1
      %p176 = scmp.eq.s32.totalorder %s23, 1
      %p177 = scmp.ne.s32.totalorder %s172, %s174
      %p178 = scmp.eq.s32.totalorder %s23, 0
      %p179 = por %p177, %p178
      %p180 = scmp.ne.s32.totalorder %s172, %s174
      %p181 = scmp.eq.s32.totalorder %s28, 1
      %p182 = por %p180, %p181
      %p183 = scmp.ne.s32.totalorder %s174, %s175
      %p184 = scmp.eq.s32.totalorder %s28, 0
      %p185 = por %p183, %p184
      %p186 = scmp.ne.s32.totalorder %s174, %s175
      %p187 = scmp.eq.s32.totalorder %s29, 1
      %p188 = por %p186, %p187
      %p190 = scmp.ne.s32.totalorder %s175, %s189
      %p191 = scmp.eq.s32.totalorder %s29, 0
      %p192 = por %p190, %p191
      %s194 = sadd.s32 %s193, 1
      %p197 = scmp.eq.s32.totalorder %s23, 1
      %p198 = scmp.ne.s32.totalorder %s193, %s195
      %p199 = scmp.eq.s32.totalorder %s23, 0
      %p200 = por %p198, %p199
      %p201 = scmp.ne.s32.totalorder %s193, %s195
      %p202 = scmp.eq.s32.totalorder %s28, 1
      %p203 = por %p201, %p202
      %p204 = scmp.ne.s32.totalorder %s195, %s196
      %p205 = scmp.eq.s32.totalorder %s28, 0
      %p206 = por %p204, %p205
      %p207 = scmp.ne.s32.totalorder %s195, %s196
      %p208 = scmp.eq.s32.totalorder %s29, 1
      %p209 = por %p207, %p208
      %p211 = scmp.ne.s32.totalorder %s196, %s210
      %p212 = scmp.eq.s32.totalorder %s29, 0
      %p213 = por %p211, %p212
      %s215 = sadd.s32 %s214, 1
      %p218 = scmp.eq.s32.totalorder %s23, 1
      %p219 = scmp.ne.s32.totalorder %s214, %s216
      %p220 = scmp.eq.s32.totalorder %s23, 0
      %p221 = por %p219, %p220
      %p222 = scmp.ne.s32.totalorder %s214, %s216
      %p223 = scmp.eq.s32.totalorder %s28, 1
      %p224 = por %p222, %p223
      %p225 = scmp.ne.s32.totalorder %s216, %s217
      %p226 = scmp.eq.s32.totalorder %s28, 0
      %p227 = por %p225, %p226
      %p228 = scmp.ne.s32.totalorder %s216, %s217
      %p229 = scmp.eq.s32.totalorder %s29, 1
      %p230 = por %p228, %p229
      %p232 = scmp.ne.s32.totalorder %s217, %s231
      %p233 = scmp.eq.s32.totalorder %s29, 0
      %p234 = por %p232, %p233
      %s236 = sadd.s32 %s235, 1
      %p239 = scmp.eq.s32.totalorder %s23, 1
      %p240 = scmp.ne.s32.totalorder %s235, %s237
      %p241 = scmp.eq.s32.totalorder %s23, 0
      %p242 = por %p240, %p241
      %p243 = scmp.ne.s32.totalorder %s235, %s237
      %p244 = scmp.eq.s32.totalorder %s28, 1
      %p245 = por %p243, %p244
      %p246 = scmp.ne.s32.totalorder %s237, %s238
      %p247 = scmp.eq.s32.totalorder %s28, 0
      %p248 = por %p246, %p247
      %p249 = scmp.ne.s32.totalorder %s237, %s238
      %p250 = scmp.eq.s32.totalorder %s29, 1
      %p251 = por %p249, %p250
      %p253 = scmp.ne.s32.totalorder %s238, %s252
      %p254 = scmp.eq.s32.totalorder %s29, 0
      %p255 = por %p253, %p254
      %s257 = sadd.s32 %s256, 1
      %p260 = scmp.eq.s32.totalorder %s23, 1
      %p261 = scmp.ne.s32.totalorder %s256, %s258
      %p262 = scmp.eq.s32.totalorder %s23, 0
      %p263 = por %p261, %p262
      %p264 = scmp.ne.s32.totalorder %s256, %s258
      %p265 = scmp.eq.s32.totalorder %s28, 1
      %p266 = por %p264, %p265
      %p267 = scmp.ne.s32.totalorder %s258, %s259
      %p268 = scmp.eq.s32.totalorder %s28, 0
      %p269 = por %p267, %p268
      %p270 = scmp.ne.s32.totalorder %s258, %s259
      %p271 = scmp.eq.s32.totalorder %s29, 1
      %p272 = por %p270, %p271
      %p274 = scmp.ne.s32.totalorder %s259, %s273
      %p275 = scmp.eq.s32.totalorder %s29, 0
      %p276 = por %p274, %p275
      %s277 = ssub.s32 %s23, %s30
      %p278 = scmp.eq.s32.totalorder %s277, 0
      %s280 = sadd.s32 %s279, 1
      %s281 = scalar_select %p278, %s279, %s280
      %p284 = pneg %p278
      %p285 = scmp.eq.s32.totalorder %s23, 1
      %p286 = por %p284, %p285
      %p287 = scmp.ne.s32.totalorder %s279, %s282
      %p288 = scmp.eq.s32.totalorder %s23, 0
      %p289 = por %p287, %p288
      %p290 = scmp.ne.s32.totalorder %s279, %s282
      %p291 = scmp.eq.s32.totalorder %s28, 1
      %p292 = por %p290, %p291
      %p293 = scmp.ne.s32.totalorder %s282, %s283
      %p294 = scmp.eq.s32.totalorder %s28, 0
      %p295 = por %p293, %p294
      %p296 = scmp.ne.s32.totalorder %s282, %s283
      %p297 = scmp.eq.s32.totalorder %s29, 1
      %p298 = por %p296, %p297
      %p300 = scmp.ne.s32.totalorder %s283, %s299
      %p301 = scmp.eq.s32.totalorder %s29, 0
      %p302 = por %p300, %p301
      %p303 = scmp.le.s32.totalorder 1, %s23
      %p304 = scmp.lt.s32.totalorder %s23, 3
      %p305 = pnand %p303, %p304
      %p306 = pneg %p305
      // Predicated region
      $region9: #{_lambda_.8} parent=5 // pred_check
        _
      $region10: #{_lambda_.8} parent=5 // pred_check_branch
        %308 = sbr.rel (%p305) target = $region12
      $region11: #{_lambda_.8} parent=5 // pred_region
        %s309 = ssub.s32 %s23, 1
        // Predicated region
        $region13: #{_lambda_.8} parent=11 // pred_check
          %p310 = pneg %p122
        $region14: #{_lambda_.8} parent=11 // pred_check_branch
          %312 = sbr.rel (%p310) target = $region16
        $region15: #{_lambda_.8} parent=11 // pred_region
          _
        $region16: #{_lambda_.8} parent=11 // pred_fallthru
          _
        // Predicated region
        $region17: #{_lambda_.8} parent=11 // pred_check
          %p313 = pneg %p143
        $region18: #{_lambda_.8} parent=11 // pred_check_branch
          %315 = sbr.rel (%p313) target = $region20
        $region19: #{_lambda_.8} parent=11 // pred_region
          _
        $region20: #{_lambda_.8} parent=11 // pred_fallthru
          _
        // Predicated region
        $region21: #{_lambda_.8} parent=11 // pred_check
          %p316 = pneg %p164
        $region22: #{_lambda_.8} parent=11 // pred_check_branch
          %318 = sbr.rel (%p316) target = $region24
        $region23: #{_lambda_.8} parent=11 // pred_region
          %320 = vsyncadd [#allocation5], 0
          %s321 = sshll.u32 %s5, 4
          %s322 = int_to_ptr.hbm [resolvable:$true] %s321
          %s323 = sshll.u32 [#allocation4], 4
          %s324 = int_to_ptr.vmem [resolvable:$true] %s323
          %329 = dma.hbm_to_vmem [thread:$0]  %s322, 512, %s324, [#allocation5], 128, 128, 8
        $region24: #{_lambda_.8} parent=11 // pred_fallthru
          _
        // Predicated region
        $region25: #{_lambda_.8} parent=11 // pred_check
          %p330 = pneg %p185
        $region26: #{_lambda_.8} parent=11 // pred_check_branch
          %332 = sbr.rel (%p330) target = $region28
        $region27: #{_lambda_.8} parent=11 // pred_region
          %334 = vsyncadd [#allocation5], 0
          %s336 = sshll.u32 %s6, 4
          %s337 = int_to_ptr.hbm [resolvable:$true] %s336
          %s338 = sshll.u32 [#allocation6], 4
          %s339 = int_to_ptr.vmem [resolvable:$true] %s338
          %341 = dma.hbm_to_vmem [thread:$0]  %s337, 16, %s339, [#allocation5]
        $region28: #{_lambda_.8} parent=11 // pred_fallthru
          _
        // Predicated region
        $region29: #{_lambda_.8} parent=11 // pred_check
          %p342 = pneg %p206
        $region30: #{_lambda_.8} parent=11 // pred_check_branch
          %344 = sbr.rel (%p342) target = $region32
        $region31: #{_lambda_.8} parent=11 // pred_region
          %346 = vsyncadd [#allocation8], 0
          %s347 = sshll.u32 %s7, 4
          %s348 = int_to_ptr.hbm [resolvable:$true] %s347
          %s349 = sshll.u32 [#allocation7], 4
          %s350 = int_to_ptr.vmem [resolvable:$true] %s349
          %355 = dma.hbm_to_vmem [thread:$0]  %s348, 512, %s350, [#allocation8], 128, 128, 8
        $region32: #{_lambda_.8} parent=11 // pred_fallthru
          _
        // Predicated region
        $region33: #{_lambda_.8} parent=11 // pred_check
          %p356 = pneg %p227
        $region34: #{_lambda_.8} parent=11 // pred_check_branch
          %358 = sbr.rel (%p356) target = $region36
        $region35: #{_lambda_.8} parent=11 // pred_region
          %360 = vsyncadd [#allocation8], 0
          %s362 = sshll.u32 %s8, 4
          %s363 = int_to_ptr.hbm [resolvable:$true] %s362
          %s364 = sshll.u32 [#allocation9], 4
          %s365 = int_to_ptr.vmem [resolvable:$true] %s364
          %367 = dma.hbm_to_vmem [thread:$0]  %s363, 16, %s365, [#allocation8]
        $region36: #{_lambda_.8} parent=11 // pred_fallthru
          _
        // Predicated region
        $region37: #{_lambda_.8} parent=11 // pred_check
          %p368 = pneg %p248
        $region38: #{_lambda_.8} parent=11 // pred_check_branch
          %370 = sbr.rel (%p368) target = $region40
        $region39: #{_lambda_.8} parent=11 // pred_region
          %372 = vsyncadd [#allocation11], 0
          %s373 = sshll.u32 %s9, 4
          %s374 = int_to_ptr.hbm [resolvable:$true] %s373
          %s375 = sshll.u32 [#allocation10], 4
          %s376 = int_to_ptr.vmem [resolvable:$true] %s375
          %381 = dma.hbm_to_vmem [thread:$0]  %s374, 512, %s376, [#allocation11], 128, 128, 8
        $region40: #{_lambda_.8} parent=11 // pred_fallthru
          _
        // Predicated region
        $region41: #{_lambda_.8} parent=11 // pred_check
          %p382 = pneg %p269
        $region42: #{_lambda_.8} parent=11 // pred_check_branch
          %384 = sbr.rel (%p382) target = $region44
        $region43: #{_lambda_.8} parent=11 // pred_region
          %386 = vsyncadd [#allocation11], 0
          %s388 = sshll.u32 %s10, 4
          %s389 = int_to_ptr.hbm [resolvable:$true] %s388
          %s390 = sshll.u32 [#allocation12], 4
          %s391 = int_to_ptr.vmem [resolvable:$true] %s390
          %393 = dma.hbm_to_vmem [thread:$0]  %s389, 16, %s391, [#allocation11]
        $region44: #{_lambda_.8} parent=11 // pred_fallthru
          _
      $region12: #{_lambda_.8} parent=5 // pred_fallthru
        _
      %p394 = scmp.lt.s32.totalorder %s23, 2
      // Predicated region
      $region45: #{_lambda_.8} parent=5 // pred_check
        %p395 = pneg %p394
      $region46: #{_lambda_.8} parent=5 // pred_check_branch
        %397 = sbr.rel (%p395) target = $region48
      $region47: #{_lambda_.8} parent=5 // pred_region
        // Predicated region
        $region49: #{_lambda_.8} parent=47 // pred_check
          %p398 = pneg %p43
        $region50: #{_lambda_.8} parent=47 // pred_check_branch
          %400 = sbr.rel (%p398) target = $region52
        $region51: #{_lambda_.8} parent=47 // pred_region
          %p401 = scmp.lt.s32.totalorder %s23, 1
          %s402 = scalar_select %p401, %s23, 1
          %s403 = smul.addr %s402, 8
          %s404 = scalar_lea.vmem %s0, %s403
        $region52: #{_lambda_.8} parent=47 // pred_fallthru
          _
        // Predicated region
        $region53: #{_lambda_.8} parent=47 // pred_check
          %p405 = pneg %p69
        $region54: #{_lambda_.8} parent=47 // pred_check_branch
          %407 = sbr.rel (%p405) target = $region56
        $region55: #{_lambda_.8} parent=47 // pred_region
          %s408 = sand.u32 %s59, 1
          %s409 = scalar_lea.sflag [#allocation3], %s408
          %s410 = sand.u32 %s59, 1
          %s411 = smul.addr %s410, 16
          %s412 = scalar_lea.vmem [#allocation2], %s411
          %414 = vsyncadd %s409, 0
          %s415 = smul.addr %s23, 2
          %s416 = smul.addr %s415, 8
          %s417 = scalar_lea.hbm %s1, %s416
          %s418 = sshll.u32 %s417, 4
          %s419 = int_to_ptr.hbm [resolvable:$true] %s418
          %s420 = sshll.u32 %s412, 4
          %s421 = int_to_ptr.vmem [resolvable:$true] %s420
          %426 = dma.hbm_to_vmem [thread:$0]  %s419, 256, %s421, %s409, 128, 128, 8
        $region56: #{_lambda_.8} parent=47 // pred_fallthru
          _
        // Predicated region
        $region57: #{_lambda_.8} parent=47 // pred_check
          %p427 = pneg %p95
        $region58: #{_lambda_.8} parent=47 // pred_check_branch
          %429 = sbr.rel (%p427) target = $region60
        $region59: #{_lambda_.8} parent=47 // pred_region
          %p430 = scmp.lt.s32.totalorder %s23, 1
          %s431 = scalar_select %p430, %s23, 1
          %s432 = scalar_lea.vmem %s2, %s431
        $region60: #{_lambda_.8} parent=47 // pred_fallthru
          _
      $region48: #{_lambda_.8} parent=5 // pred_fallthru
        _
      %p433 = scmp.le.s32.totalorder 1, %s23
      %p434 = scmp.lt.s32.totalorder %s23, 3
      %p435 = pnand %p433, %p434
      %p436 = pneg %p435
      // Predicated region
      $region61: #{_lambda_.8} parent=5 // pred_check
        _
      $region62: #{_lambda_.8} parent=5 // pred_check_branch
        %438 = sbr.rel (%p435) target = $region64
      $region63: #{_lambda_.8} parent=5 // pred_region
        %s439 = ssub.s32 %s23, 1
        %s440 = sand.u32 %s62, 1
        %s441 = scalar_lea.sflag [#allocation3], %s440
        %s442 = sand.u32 %s62, 1
        %s443 = smul.addr %s442, 16
        %s444 = scalar_lea.vmem [#allocation2], %s443
        // Predicated region
        $region65: #{_lambda_.8} parent=63 // pred_check
          %p445 = pneg %p75
        $region66: #{_lambda_.8} parent=63 // pred_check_branch
          %447 = sbr.rel (%p445) target = $region68
        $region67: #{_lambda_.8} parent=63 // pred_region
          %449 = dma.done %s441, 256
        $region68: #{_lambda_.8} parent=63 // pred_fallthru
          _
        // Predicated region
        $region69: #{_lambda_.8} parent=63 // pred_check
          %p450 = pneg %p164
        $region70: #{_lambda_.8} parent=63 // pred_check_branch
          %452 = sbr.rel (%p450) target = $region72
        $region71: #{_lambda_.8} parent=63 // pred_region
          %454 = dma.done [#allocation5], 512
        $region72: #{_lambda_.8} parent=63 // pred_fallthru
          _
        // Predicated region
        $region73: #{_lambda_.8} parent=63 // pred_check
          %p455 = pneg %p185
        $region74: #{_lambda_.8} parent=63 // pred_check_branch
          %457 = sbr.rel (%p455) target = $region76
        $region75: #{_lambda_.8} parent=63 // pred_region
          %459 = dma.done [#allocation5], 16
        $region76: #{_lambda_.8} parent=63 // pred_fallthru
          _
        // Predicated region
        $region77: #{_lambda_.8} parent=63 // pred_check
          %p460 = pneg %p206
        $region78: #{_lambda_.8} parent=63 // pred_check_branch
          %462 = sbr.rel (%p460) target = $region80
        $region79: #{_lambda_.8} parent=63 // pred_region
          %464 = dma.done [#allocation8], 512
        $region80: #{_lambda_.8} parent=63 // pred_fallthru
          _
        // Predicated region
        $region81: #{_lambda_.8} parent=63 // pred_check
          %p465 = pneg %p227
        $region82: #{_lambda_.8} parent=63 // pred_check_branch
          %467 = sbr.rel (%p465) target = $region84
        $region83: #{_lambda_.8} parent=63 // pred_region
          %469 = dma.done [#allocation8], 16
        $region84: #{_lambda_.8} parent=63 // pred_fallthru
          _
        // Predicated region
        $region85: #{_lambda_.8} parent=63 // pred_check
          %p470 = pneg %p248
        $region86: #{_lambda_.8} parent=63 // pred_check_branch
          %472 = sbr.rel (%p470) target = $region88
        $region87: #{_lambda_.8} parent=63 // pred_region
          %474 = dma.done [#allocation11], 512
        $region88: #{_lambda_.8} parent=63 // pred_fallthru
          _
        // Predicated region
        $region89: #{_lambda_.8} parent=63 // pred_check
          %p475 = pneg %p269
        $region90: #{_lambda_.8} parent=63 // pred_check_branch
          %477 = sbr.rel (%p475) target = $region92
        $region91: #{_lambda_.8} parent=63 // pred_region
          %479 = dma.done [#allocation11], 16
        $region92: #{_lambda_.8} parent=63 // pred_fallthru
          _
        %p480 = scmp.lt.s32.totalorder %s28, 1
        %s481 = scalar_select %p480, %s28, 1
        %s482 = smul.addr %s481, 8
        %s483 = scalar_lea.vmem %s0, %s482
        %p484 = pneg %p49
        %p485 = pneg %p46
        %s486 = sand.u32 %s62, 1
        %s487 = scalar_lea.sflag [#allocation3], %s486
        %s488 = sand.u32 %s62, 1
        %s489 = smul.addr %s488, 16
        %s490 = scalar_lea.vmem [#allocation2], %s489
        %p491 = pneg %p75
        %p492 = pneg %p72
        %p493 = scmp.lt.s32.totalorder %s28, 1
        %s494 = scalar_select %p493, %s28, 1
        %s495 = scalar_lea.vmem %s2, %s494
        %p496 = pneg %p101
        %p497 = pneg %p98
        %p498 = pneg %p122
        %p499 = pneg %p119
        %p500 = pneg %p143
        %p501 = pneg %p140
        %p502 = pneg %p164
        %p503 = pneg %p161
        %p504 = pneg %p185
        %p505 = pneg %p182
        %p506 = pneg %p206
        %p507 = pneg %p203
        %p508 = pneg %p227
        %p509 = pneg %p224
        %p510 = pneg %p248
        %p511 = pneg %p245
        %p512 = pneg %p269
        %p513 = pneg %p266
        %p514 = pneg %p295
        %p515 = pneg %p292
        %p516 = scmp.lt.s32.totalorder %s28, 1
        %s517 = scalar_select %p516, %s28, 1
        %s518 = smul.addr %s517, 8
        %s519 = scalar_lea.vmem %s11, %s518
        %p520 = scmp.lt.s32.totalorder %s28, 1
        %s521 = scalar_select %p520, %s28, 1
        %s522 = smul.addr %s521, 8
        %s523 = scalar_lea.vmem %s0, %s522
        %p524 = scmp.lt.s32.totalorder %s28, 1
        %s525 = scalar_select %p524, %s28, 1
        %s526 = scalar_lea.vmem %s2, %s525
        %p527 = scmp.lt.s32.totalorder %s28, 1
        %s528 = scalar_select %p527, %s28, 1
        %s529 = smul.addr %s528, 8
        %s530 = scalar_lea.vmem %s11, %s529
        %v531 = vld [vmem:[%s523] sm:$0xff]
        %v532 = vld [vmem:[%s3] sm:$0x1]
        %v533 = vld [vmem:[%s4] sm:$0x1]
        %vm534 = vcmask 261120
        %v535 = vsel %vm534, %v531, 0.0
        %536 = vadd.xlane.f32.xlu0 %v535
        %v537 = vpop.xlane.xlu0 %536
        %v538 = vrcp.pop 32.0
        %v539 = vmul.f32 32.0, %v538
        %v540 = vsub.f32 1.0, %v539
        %v541 = vmul.f32 %v538, %v540
        %v542 = vadd.f32 %v538, %v541
        %vm543 = vweird.f32 %v538
        %v544 = vsel %vm543, %v538, %v542
        %v545 = vmul.f32 %v537, %v544
        %v546 = vsub.f32 %v531, %v545
        %v547 = vmul.f32 %v546, %v546
        %v548 = vsel %vm534, %v547, 0.0
        %549 = vadd.xlane.f32.xlu0 %v548
        %v550 = vpop.xlane.xlu0 %549
        %v551 = vmul.f32 %v550, 0.032258064
        %v552 = vrsqrt.pop %v551
        %v553 = vmul.f32 %v552, %v551
        %v554 = vmul.f32 %v553, %v552
        %v555 = vmul.f32 0.5, %v554
        %v556 = vsub.f32 1.5, %v555
        %v557 = vmul.f32 %v552, %v556
        %v558 = vmul.f32 %v551, %v557
        %vm559 = vcmp.eq.f32.partialorder %v551, inf
        %v560 = vsel %vm559, %v551, %v558
        %vm561 = vcmp.eq.f32.partialorder %v551, 0.0
        %v562 = vand.u32 %v551, 2147483648
        %v563 = vsel %vm561, %v562, %v560
        %v564 = vadd.f32 %v563, 1e-06
        %v565 = vrcp.pop %v564
        %v566 = vmul.f32 %v564, %v565
        %v567 = vsub.f32 1.0, %v566
        %v568 = vmul.f32 %v565, %v567
        %v569 = vadd.f32 %v565, %v568
        %vm570 = vweird.f32 %v564
        %vm571 = vweird.f32 %v565
        %vm572 = vmor %vm570, %vm571
        %v573 = vsel %vm572, %v565, %v569
        %v574 = vand.u32 2147483647, %v564
        %vm575 = vcmp.eq.f32.partialorder %v574, 8.507059e+37
        %v576 = vand.u32 %v564, 2147483648
        %v577 = vor.u32 1.1754944e-38, %v576
        %v578 = vsel %vm575, %v577, %v573
        %v580 = vperm.slane %v532, 0
        %v582 = vmul.f32 %v580, %v546
        %v583 = vmul.f32 %v582, %v578
        %v585 = vperm.slane %v533, 0
        %v587 = vadd.f32 %v583, %v585
        %v588 = vld [vmem:[#allocation4] sm:$0xff]
        %v589 = vld [vmem:[#allocation4 + $0x8] sm:$0xff]
        %v590 = vld [vmem:[#allocation4 + $0x10] sm:$0xff]
        %v591 = vld [vmem:[#allocation4 + $0x18] sm:$0xff]
        %v592 = vld [vmem:[#allocation6] sm:$0x1]
        %v594 = vperm.slane %v592, 0
        %v597 = vsel %vm534, %v587, 0
        %599 = vmatpush.msra.mxu0 0.0
        %600 = vmatpush.msra.mxu0 0.0
        %601 = vmatpush.msra.mxu0 0.0
        %602 = vmatpush.msra.mxu0 0.0
        %603 = vmatpush.msra.mxu0 0.0
        %604 = vmatpush.msra.mxu0 0.0
        %605 = vmatpush.msra.mxu0 0.0
        %606 = vmatpush.msra.mxu0 0.0
        %607 = vmatpush.msra.mxu0 0.0
        %608 = vmatpush.msra.mxu0 0.0
        %609 = vmatpush.msra.mxu0 0.0
        %610 = vmatpush.msra.mxu0 0.0
        %611 = vmatpush.msra.mxu0 %v591
        %612 = vmatpush.msra.mxu0 %v590
        %613 = vmatpush.msra.mxu0 %v589
        %614 = vmatpush.msra.mxu0 %v588
        %615 = vmatmul.f32.gmra.mxu0 %v597
        %v616 = vpop.f32.mrf.mxu0
        %v617 = vadd.f32 %v594, %v616
        %618 = vdwg.mxu0
        %v619 = vld [vmem:[%s444] sm:$0xff]
        %v620 = vld [vmem:[%s444 + $0x8] sm:$0xff]
        %v621 = vld [vmem:[#allocation7] sm:$0xff]
        %v622 = vld [vmem:[#allocation7 + $0x8] sm:$0xff]
        %v623 = vld [vmem:[#allocation7 + $0x10] sm:$0xff]
        %v624 = vld [vmem:[#allocation7 + $0x18] sm:$0xff]
        %v625 = vld [vmem:[#allocation9] sm:$0x1]
        %v627 = vperm.slane %v625, 0
        %v630 = vsel %vm534, %v619, 0
        %v633 = vsel %vm534, %v620, 0
        %635 = vmatpush.msra.mxu0 0.0
        %636 = vmatpush.msra.mxu0 0.0
        %637 = vmatpush.msra.mxu0 0.0
        %638 = vmatpush.msra.mxu0 0.0
        %639 = vmatpush.msra.mxu0 0.0
        %640 = vmatpush.msra.mxu0 0.0
        %641 = vmatpush.msra.mxu0 0.0
        %642 = vmatpush.msra.mxu0 0.0
        %643 = vmatpush.msra.mxu0 0.0
        %644 = vmatpush.msra.mxu0 0.0
        %645 = vmatpush.msra.mxu0 0.0
        %646 = vmatpush.msra.mxu0 0.0
        %647 = vmatpush.msra.mxu0 %v624
        %648 = vmatpush.msra.mxu0 %v623
        %649 = vmatpush.msra.mxu0 %v622
        %650 = vmatpush.msra.mxu0 %v621
        %651 = vmatmul.f32.gmra.mxu0 %v630
        %v652 = vpop.f32.mrf.mxu0
        %v653 = vadd.f32 %v627, %v652
        %654 = vmatmul.f32.gmra.mxu0 %v633
        %v655 = vpop.f32.mrf.mxu0
        %v656 = vadd.f32 %v627, %v655
        %657 = vdwg.mxu0
        %v658 = vld [vmem:[%s526] sm:$0x1]
        %v659 = vld [vmem:[#allocation10] sm:$0xff]
        %v660 = vld [vmem:[#allocation10 + $0x8] sm:$0xff]
        %v661 = vld [vmem:[#allocation10 + $0x10] sm:$0xff]
        %v662 = vld [vmem:[#allocation10 + $0x18] sm:$0xff]
        %vm663 = vcmask 64512
        %v665 = vsel %vm663, %v617, 0
        %v668 = vsel %vm663, %v653, 0
        %v671 = vsel %vm663, %v656, 0
        %673 = vmatpush.xpose.msra.mxu0 0.0
        %674 = vmatpush.xpose.msra.mxu0 0.0
        %675 = vmatpush.xpose.msra.mxu0 0.0
        %676 = vmatpush.xpose.msra.mxu0 0.0
        %677 = vmatpush.xpose.msra.mxu0 0.0
        %678 = vmatpush.xpose.msra.mxu0 0.0
        %679 = vmatpush.xpose.msra.mxu0 0.0
        %680 = vmatpush.xpose.msra.mxu0 0.0
        %681 = vmatpush.xpose.msra.mxu0 0.0
        %682 = vmatpush.xpose.msra.mxu0 0.0
        %683 = vmatpush.xpose.msra.mxu0 0.0
        %684 = vmatpush.xpose.msra.mxu0 0.0
        %685 = vmatpush.xpose.msra.mxu0 0.0
        %686 = vmatpush.xpose.msra.mxu0 0.0
        %687 = vmatpush.xpose.msra.mxu0 %v671
        %688 = vmatpush.xpose.msra.mxu0 %v668
        %689 = vmatmul.f32.gmra.mxu0 %v665
        %v690 = vpop.f32.mrf.mxu0
        %v691 = vadd.f32 0.0, %v690
        %692 = vdwg.mxu0
        %v693 = vmul.f32 %v691, 0.35355338
        %vm694 = vcmp.eq.s32.totalorder %v658, 0
        %v695 = vsel %vm694, 1, 0
        %v696 = vperm.slane %v695, 0
        %vm697 = vcmp.eq.s32.totalorder %v696, 1
        %v698 = vsel %vm697, -1e+09, %v693
        %vm699 = vcmask 130048
        %v700 = vsel %vm699, %v698, -inf
        %701 = vmax.xlane.f32.xlu0 %v700
        %v702 = vpop.xlane.xlu0 %701
        %v703 = vsub.f32 %v698, %v702
        %v704 = vmul.f32 %v703, 1.442695
        %v705 = vpow.pop %v704
        %v706 = vsel %vm699, %v705, 0.0
        %707 = vadd.xlane.f32.xlu0 %v706
        %v708 = vpop.xlane.xlu0 %707
        %v709 = vrcp.pop %v708
        %v710 = vmul.f32 %v705, %v709
        %711 = vrot.lane.b32.xlu0 %v653, 96
        %v712 = vpop.permute.xlu0 %711
        %713 = vrot.lane.b32.xlu0 %v656, 96
        %v714 = vpop.permute.xlu0 %713
        %v718 = vsel %vm699, %v710, 0
        %720 = vmatpush.msra.mxu0 0.0
        %721 = vmatpush.msra.mxu0 0.0
        %722 = vmatpush.msra.mxu0 0.0
        %723 = vmatpush.msra.mxu0 0.0
        %724 = vmatpush.msra.mxu0 0.0
        %725 = vmatpush.msra.mxu0 0.0
        %726 = vmatpush.msra.mxu0 0.0
        %727 = vmatpush.msra.mxu0 0.0
        %728 = vmatpush.msra.mxu0 0.0
        %729 = vmatpush.msra.mxu0 0.0
        %730 = vmatpush.msra.mxu0 0.0
        %731 = vmatpush.msra.mxu0 0.0
        %732 = vmatpush.msra.mxu0 0.0
        %733 = vmatpush.msra.mxu0 0.0
        %734 = vmatpush.msra.mxu0 %v714
        %735 = vmatpush.msra.mxu0 %v712
        %736 = vmatmul.f32.gmra.mxu0 %v718
        %v737 = vpop.f32.mrf.mxu0
        %v738 = vadd.f32 0.0, %v737
        %739 = vdwg.mxu0
        %740 = vrot.lane.b32.xlu0 %v617, 120
        %v741 = vpop.permute.xlu0 %740
        %742 = vrot.lane.b32.xlu0 %v653, 120
        %v743 = vpop.permute.xlu0 %742
        %744 = vrot.lane.b32.xlu0 %v656, 120
        %v745 = vpop.permute.xlu0 %744
        %v746 = vsel %vm663, %v741, 0
        %v748 = vsel %vm663, %v743, 0
        %v750 = vsel %vm663, %v745, 0
        %752 = vmatpush.xpose.msra.mxu0 0.0
        %753 = vmatpush.xpose.msra.mxu0 0.0
        %754 = vmatpush.xpose.msra.mxu0 0.0
        %755 = vmatpush.xpose.msra.mxu0 0.0
        %756 = vmatpush.xpose.msra.mxu0 0.0
        %757 = vmatpush.xpose.msra.mxu0 0.0
        %758 = vmatpush.xpose.msra.mxu0 0.0
        %759 = vmatpush.xpose.msra.mxu0 0.0
        %760 = vmatpush.xpose.msra.mxu0 0.0
        %761 = vmatpush.xpose.msra.mxu0 0.0
        %762 = vmatpush.xpose.msra.mxu0 0.0
        %763 = vmatpush.xpose.msra.mxu0 0.0
        %764 = vmatpush.xpose.msra.mxu0 0.0
        %765 = vmatpush.xpose.msra.mxu0 0.0
        %766 = vmatpush.xpose.msra.mxu0 %v750
        %767 = vmatpush.xpose.msra.mxu0 %v748
        %768 = vmatmul.f32.gmra.mxu0 %v746
        %v769 = vpop.f32.mrf.mxu0
        %v770 = vadd.f32 0.0, %v769
        %771 = vdwg.mxu0
        %v772 = vmul.f32 %v770, 0.35355338
        %v773 = vsel %vm697, -1e+09, %v772
        %v774 = vsel %vm699, %v773, -inf
        %775 = vmax.xlane.f32.xlu0 %v774
        %v776 = vpop.xlane.xlu0 %775
        %v777 = vsub.f32 %v773, %v776
        %v778 = vmul.f32 %v777, 1.442695
        %v779 = vpow.pop %v778
        %v780 = vsel %vm699, %v779, 0.0
        %781 = vadd.xlane.f32.xlu0 %v780
        %v782 = vpop.xlane.xlu0 %781
        %v783 = vrcp.pop %v782
        %v784 = vmul.f32 %v779, %v783
        %785 = vrot.lane.b32.xlu0 %v653, 88
        %v786 = vpop.permute.xlu0 %785
        %787 = vrot.lane.b32.xlu0 %v656, 88
        %v788 = vpop.permute.xlu0 %787
        %v792 = vsel %vm699, %v784, 0
        %794 = vmatpush.msra.mxu0 0.0
        %795 = vmatpush.msra.mxu0 0.0
        %796 = vmatpush.msra.mxu0 0.0
        %797 = vmatpush.msra.mxu0 0.0
        %798 = vmatpush.msra.mxu0 0.0
        %799 = vmatpush.msra.mxu0 0.0
        %800 = vmatpush.msra.mxu0 0.0
        %801 = vmatpush.msra.mxu0 0.0
        %802 = vmatpush.msra.mxu0 0.0
        %803 = vmatpush.msra.mxu0 0.0
        %804 = vmatpush.msra.mxu0 0.0
        %805 = vmatpush.msra.mxu0 0.0
        %806 = vmatpush.msra.mxu0 0.0
        %807 = vmatpush.msra.mxu0 0.0
        %808 = vmatpush.msra.mxu0 %v788
        %809 = vmatpush.msra.mxu0 %v786
        %810 = vmatmul.f32.gmra.mxu0 %v792
        %v811 = vpop.f32.mrf.mxu0
        %v812 = vadd.f32 0.0, %v811
        %813 = vdwg.mxu0
        %v815 = vsel %vm663, %v812, 0
        %817 = vmatpush.msra.mxu0 0.0
        %818 = vmatpush.msra.mxu0 0.0
        %819 = vmatpush.msra.mxu0 0.0
        %820 = vmatpush.msra.mxu0 0.0
        %821 = vmatpush.msra.mxu0 0.0
        %822 = vmatpush.msra.mxu0 0.0
        %823 = vmatpush.msra.mxu0 0.0
        %824 = vmatpush.msra.mxu0 0.0
        %825 = vmatpush.msra.mxu0 0.0
        %826 = vmatpush.msra.mxu0 0.0
        %827 = vmatpush.msra.mxu0 0.0
        %828 = vmatpush.msra.mxu0 0.0
        %829 = vmatpush.msra.mxu0 0.0
        %830 = vmatpush.msra.mxu0 0.0
        %831 = vmatpush.msra.mxu0 0.0
        %832 = vmatpush.msra.mxu0 %v660
        %833 = vmatmul.f32.gmra.mxu0 %v815
        %v834 = vpop.f32.mrf.mxu0
        %v835 = vadd.f32 0.0, %v834
        %836 = vdwg.mxu0
        %v838 = vsel %vm663, %v738, 0
        %840 = vmatpush.msra.mxu0 0.0
        %841 = vmatpush.msra.mxu0 0.0
        %842 = vmatpush.msra.mxu0 0.0
        %843 = vmatpush.msra.mxu0 0.0
        %844 = vmatpush.msra.mxu0 0.0
        %845 = vmatpush.msra.mxu0 0.0
        %846 = vmatpush.msra.mxu0 0.0
        %847 = vmatpush.msra.mxu0 0.0
        %848 = vmatpush.msra.mxu0 0.0
        %849 = vmatpush.msra.mxu0 0.0
        %850 = vmatpush.msra.mxu0 0.0
        %851 = vmatpush.msra.mxu0 0.0
        %852 = vmatpush.msra.mxu0 0.0
        %853 = vmatpush.msra.mxu0 0.0
        %854 = vmatpush.msra.mxu0 0.0
        %855 = vmatpush.msra.mxu0 %v659
        %856 = vmatmul.f32.gmra.mxu0 %v838
        %v857 = vpop.f32.mrf.mxu0
        %v858 = vadd.f32 %v835, %v857
        %859 = vdwg.mxu0
        %860 = vrot.lane.b32.xlu0 %v617, 112
        %v861 = vpop.permute.xlu0 %860
        %862 = vrot.lane.b32.xlu0 %v653, 112
        %v863 = vpop.permute.xlu0 %862
        %864 = vrot.lane.b32.xlu0 %v656, 112
        %v865 = vpop.permute.xlu0 %864
        %v866 = vsel %vm663, %v861, 0
        %v868 = vsel %vm663, %v863, 0
        %v870 = vsel %vm663, %v865, 0
        %872 = vmatpush.xpose.msra.mxu0 0.0
        %873 = vmatpush.xpose.msra.mxu0 0.0
        %874 = vmatpush.xpose.msra.mxu0 0.0
        %875 = vmatpush.xpose.msra.mxu0 0.0
        %876 = vmatpush.xpose.msra.mxu0 0.0
        %877 = vmatpush.xpose.msra.mxu0 0.0
        %878 = vmatpush.xpose.msra.mxu0 0.0
        %879 = vmatpush.xpose.msra.mxu0 0.0
        %880 = vmatpush.xpose.msra.mxu0 0.0
        %881 = vmatpush.xpose.msra.mxu0 0.0
        %882 = vmatpush.xpose.msra.mxu0 0.0
        %883 = vmatpush.xpose.msra.mxu0 0.0
        %884 = vmatpush.xpose.msra.mxu0 0.0
        %885 = vmatpush.xpose.msra.mxu0 0.0
        %886 = vmatpush.xpose.msra.mxu0 %v870
        %887 = vmatpush.xpose.msra.mxu0 %v868
        %888 = vmatmul.f32.gmra.mxu0 %v866
        %v889 = vpop.f32.mrf.mxu0
        %v890 = vadd.f32 0.0, %v889
        %891 = vdwg.mxu0
        %v892 = vmul.f32 %v890, 0.35355338
        %v893 = vsel %vm697, -1e+09, %v892
        %v894 = vsel %vm699, %v893, -inf
        %895 = vmax.xlane.f32.xlu0 %v894
        %v896 = vpop.xlane.xlu0 %895
        %v897 = vsub.f32 %v893, %v896
        %v898 = vmul.f32 %v897, 1.442695
        %v899 = vpow.pop %v898
        %v900 = vsel %vm699, %v899, 0.0
        %901 = vadd.xlane.f32.xlu0 %v900
        %v902 = vpop.xlane.xlu0 %901
        %v903 = vrcp.pop %v902
        %v904 = vmul.f32 %v899, %v903
        %905 = vrot.lane.b32.xlu0 %v653, 80
        %v906 = vpop.permute.xlu0 %905
        %907 = vrot.lane.b32.xlu0 %v656, 80
        %v908 = vpop.permute.xlu0 %907
        %v912 = vsel %vm699, %v904, 0
        %914 = vmatpush.msra.mxu0 0.0
        %915 = vmatpush.msra.mxu0 0.0
        %916 = vmatpush.msra.mxu0 0.0
        %917 = vmatpush.msra.mxu0 0.0
        %918 = vmatpush.msra.mxu0 0.0
        %919 = vmatpush.msra.mxu0 0.0
        %920 = vmatpush.msra.mxu0 0.0
        %921 = vmatpush.msra.mxu0 0.0
        %922 = vmatpush.msra.mxu0 0.0
        %923 = vmatpush.msra.mxu0 0.0
        %924 = vmatpush.msra.mxu0 0.0
        %925 = vmatpush.msra.mxu0 0.0
        %926 = vmatpush.msra.mxu0 0.0
        %927 = vmatpush.msra.mxu0 0.0
        %928 = vmatpush.msra.mxu0 %v908
        %929 = vmatpush.msra.mxu0 %v906
        %930 = vmatmul.f32.gmra.mxu0 %v912
        %v931 = vpop.f32.mrf.mxu0
        %v932 = vadd.f32 0.0, %v931
        %933 = vdwg.mxu0
        %v935 = vsel %vm663, %v932, 0
        %937 = vmatpush.msra.mxu0 0.0
        %938 = vmatpush.msra.mxu0 0.0
        %939 = vmatpush.msra.mxu0 0.0
        %940 = vmatpush.msra.mxu0 0.0
        %941 = vmatpush.msra.mxu0 0.0
        %942 = vmatpush.msra.mxu0 0.0
        %943 = vmatpush.msra.mxu0 0.0
        %944 = vmatpush.msra.mxu0 0.0
        %945 = vmatpush.msra.mxu0 0.0
        %946 = vmatpush.msra.mxu0 0.0
        %947 = vmatpush.msra.mxu0 0.0
        %948 = vmatpush.msra.mxu0 0.0
        %949 = vmatpush.msra.mxu0 0.0
        %950 = vmatpush.msra.mxu0 0.0
        %951 = vmatpush.msra.mxu0 0.0
        %952 = vmatpush.msra.mxu0 %v661
        %953 = vmatmul.f32.gmra.mxu0 %v935
        %v954 = vpop.f32.mrf.mxu0
        %v955 = vadd.f32 0.0, %v954
        %956 = vdwg.mxu0
        %v957 = vadd.f32 %v858, %v955
        %958 = vrot.lane.b32.xlu0 %v617, 104
        %v959 = vpop.permute.xlu0 %958
        %960 = vrot.lane.b32.xlu0 %v653, 104
        %v961 = vpop.permute.xlu0 %960
        %962 = vrot.lane.b32.xlu0 %v656, 104
        %v963 = vpop.permute.xlu0 %962
        %v964 = vsel %vm663, %v959, 0
        %v966 = vsel %vm663, %v961, 0
        %v968 = vsel %vm663, %v963, 0
        %970 = vmatpush.xpose.msra.mxu0 0.0
        %971 = vmatpush.xpose.msra.mxu0 0.0
        %972 = vmatpush.xpose.msra.mxu0 0.0
        %973 = vmatpush.xpose.msra.mxu0 0.0
        %974 = vmatpush.xpose.msra.mxu0 0.0
        %975 = vmatpush.xpose.msra.mxu0 0.0
        %976 = vmatpush.xpose.msra.mxu0 0.0
        %977 = vmatpush.xpose.msra.mxu0 0.0
        %978 = vmatpush.xpose.msra.mxu0 0.0
        %979 = vmatpush.xpose.msra.mxu0 0.0
        %980 = vmatpush.xpose.msra.mxu0 0.0
        %981 = vmatpush.xpose.msra.mxu0 0.0
        %982 = vmatpush.xpose.msra.mxu0 0.0
        %983 = vmatpush.xpose.msra.mxu0 0.0
        %984 = vmatpush.xpose.msra.mxu0 %v968
        %985 = vmatpush.xpose.msra.mxu0 %v966
        %986 = vmatmul.f32.gmra.mxu0 %v964
        %v987 = vpop.f32.mrf.mxu0
        %v988 = vadd.f32 0.0, %v987
        %989 = vdwg.mxu0
        %v990 = vmul.f32 %v988, 0.35355338
        %v991 = vsel %vm697, -1e+09, %v990
        %v992 = vsel %vm699, %v991, -inf
        %993 = vmax.xlane.f32.xlu0 %v992
        %v994 = vpop.xlane.xlu0 %993
        %v995 = vsub.f32 %v991, %v994
        %v996 = vmul.f32 %v995, 1.442695
        %v997 = vpow.pop %v996
        %v998 = vsel %vm699, %v997, 0.0
        %999 = vadd.xlane.f32.xlu0 %v998
        %v1000 = vpop.xlane.xlu0 %999
        %v1001 = vrcp.pop %v1000
        %v1002 = vmul.f32 %v997, %v1001
        %1003 = vrot.lane.b32.xlu0 %v653, 72
        %v1004 = vpop.permute.xlu0 %1003
        %1005 = vrot.lane.b32.xlu0 %v656, 72
        %v1006 = vpop.permute.xlu0 %1005
        %v1010 = vsel %vm699, %v1002, 0
        %1012 = vmatpush.msra.mxu0 0.0
        %1013 = vmatpush.msra.mxu0 0.0
        %1014 = vmatpush.msra.mxu0 0.0
        %1015 = vmatpush.msra.mxu0 0.0
        %1016 = vmatpush.msra.mxu0 0.0
        %1017 = vmatpush.msra.mxu0 0.0
        %1018 = vmatpush.msra.mxu0 0.0
        %1019 = vmatpush.msra.mxu0 0.0
        %1020 = vmatpush.msra.mxu0 0.0
        %1021 = vmatpush.msra.mxu0 0.0
        %1022 = vmatpush.msra.mxu0 0.0
        %1023 = vmatpush.msra.mxu0 0.0
        %1024 = vmatpush.msra.mxu0 0.0
        %1025 = vmatpush.msra.mxu0 0.0
        %1026 = vmatpush.msra.mxu0 %v1006
        %1027 = vmatpush.msra.mxu0 %v1004
        %1028 = vmatmul.f32.gmra.mxu0 %v1010
        %v1029 = vpop.f32.mrf.mxu0
        %v1030 = vadd.f32 0.0, %v1029
        %1031 = vdwg.mxu0
        %v1033 = vsel %vm663, %v1030, 0
        %1035 = vmatpush.msra.mxu0 0.0
        %1036 = vmatpush.msra.mxu0 0.0
        %1037 = vmatpush.msra.mxu0 0.0
        %1038 = vmatpush.msra.mxu0 0.0
        %1039 = vmatpush.msra.mxu0 0.0
        %1040 = vmatpush.msra.mxu0 0.0
        %1041 = vmatpush.msra.mxu0 0.0
        %1042 = vmatpush.msra.mxu0 0.0
        %1043 = vmatpush.msra.mxu0 0.0
        %1044 = vmatpush.msra.mxu0 0.0
        %1045 = vmatpush.msra.mxu0 0.0
        %1046 = vmatpush.msra.mxu0 0.0
        %1047 = vmatpush.msra.mxu0 0.0
        %1048 = vmatpush.msra.mxu0 0.0
        %1049 = vmatpush.msra.mxu0 0.0
        %1050 = vmatpush.msra.mxu0 %v662
        %1051 = vmatmul.f32.gmra.mxu0 %v1033
        %v1052 = vpop.f32.mrf.mxu0
        %v1053 = vadd.f32 0.0, %v1052
        %1054 = vdwg.mxu0
        %v1055 = vadd.f32 %v957, %v1053
        %v1056 = vadd.f32 %v531, %v1055
        %v1057 = vld [vmem:[#allocation12] sm:$0x1]
        %v1059 = vperm.slane %v1057, 0
        %v1061 = vadd.f32 %v1056, %v1059
        %1062 = vst.msk [vmem:[%s530] sm:$0xff] %vm534, %v1061
        %p1063 = scmp.lt.s32.totalorder %s28, 1
        %s1064 = scalar_select %p1063, %s28, 1
        %s1065 = smul.addr %s1064, 8
        %s1066 = scalar_lea.vmem %s11, %s1065
        // Predicated region
        $region93: #{_lambda_.8} parent=63 // pred_check
          %p1067 = pneg %p292
        $region94: #{_lambda_.8} parent=63 // pred_check_branch
          %1069 = sbr.rel (%p1067) target = $region96
        $region95: #{_lambda_.8} parent=63 // pred_region
          _
        $region96: #{_lambda_.8} parent=63 // pred_fallthru
          _
      $region64: #{_lambda_.8} parent=5 // pred_fallthru
        _
      %p1070 = scmp.le.s32.totalorder 2, %s23
      // Predicated region
      $region97: #{_lambda_.8} parent=5 // pred_check
        %p1071 = pneg %p1070
      $region98: #{_lambda_.8} parent=5 // pred_check_branch
        %1073 = sbr.rel (%p1071) target = $region100
      $region99: #{_lambda_.8} parent=5 // pred_region
        %s1074 = ssub.s32 %s23, 2
        // Predicated region
        $region101: #{_lambda_.8} parent=99 // pred_check
          %p1075 = pneg %p298
        $region102: #{_lambda_.8} parent=99 // pred_check_branch
          %1077 = sbr.rel (%p1075) target = $region104
        $region103: #{_lambda_.8} parent=99 // pred_region
          %p1078 = scmp.lt.s32.totalorder %s29, 1
          %s1079 = scalar_select %p1078, %s29, 1
          %s1080 = smul.addr %s1079, 8
          %s1081 = scalar_lea.vmem %s11, %s1080
        $region104: #{_lambda_.8} parent=99 // pred_fallthru
          _
      $region100: #{_lambda_.8} parent=5 // pred_fallthru
        _
    $region6: #{_lambda_.8} parent=1 // loop_footer
      %s27 = sadd.s32 1, %s23
    $region7: #{_lambda_.8} parent=1 // loop_footer_branch
      %22 = sbr.rel target = $region3
    $region8: #{_lambda_.8} parent=1 // loop_exit
      _
    %1082 = vsyncpa [#allocation3], 1
    %s1083 = scalar_lea.sflag [#allocation3], 1
    %1084 = vsyncpa %s1083, 1
    %1085 = vsyncpa [#allocation5], 1
    %1086 = vsyncpa [#allocation8], 1
    %1087 = vsyncpa [#allocation11], 1

// kernel: _lambda_.10
$region0: #{_lambda_.10}
  #allocation0 [shape = 'u32[]', space=smem, size = 0x4, offset = 0x4, fixed_abs, tag = 'smem constant byte address 0x4 - core index']
  #allocation1 [shape = 'u32[72,128]{1,0:T(1,128)}', space=vmem, size = 0x9000, scoped, tag = 'internal scratch']
  %s0 = inlined_call_operand.vmem [shape: f32[2,8,32], index: 0, kind: input, shape index: {}]
  %s1 = inlined_call_operand.vmem [shape: s32[2,8,8], index: 1, kind: input, shape index: {}]
  %s2 = inlined_call_operand.hbm [shape: f32[1,32], index: 2, kind: input, shape index: {}]
  %s3 = inlined_call_operand.hbm [shape: f32[1,32], index: 3, kind: input, shape index: {}]
  %s4 = inlined_call_operand.vmem [shape: f32[32,96], index: 4, kind: input, shape index: {}]
  %s5 = inlined_call_operand.vmem [shape: f32[1,96], index: 5, kind: input, shape index: {}]
  %s6 = inlined_call_operand.vmem [shape: f32[32,32], index: 6, kind: input, shape index: {}]
  %s7 = inlined_call_operand.vmem [shape: f32[1,32], index: 7, kind: input, shape index: {}]
  %s8 = inlined_call_operand.vmem [shape: f32[2,8,32], index: 8, kind: output, shape index: {}]
  %s9 = sld [smem:[#allocation0]]
  $region73: #{_lambda_.10} parent=0
    _
  %s11 = ssub.s32 1, %s9
  %s12 = scalar_select 0, %s11, %s9
  $region1: #{_lambda_.10} parent=0
    #allocation2 [shape = 'u8[512]{0}', space=vmem, size = 0x400, scoped, tag = 'input window, operand 2, single buffered']
    #allocation3 [shape = 's32[2]{0}', space=sflag, size = 0x8, scoped, tag = 'scoped memory for _lambda_.10']
    #allocation4 [shape = 'u8[512]{0}', space=vmem, size = 0x400, scoped, tag = 'input window, operand 3, single buffered']
    #allocation5 [shape = 's32[1]{0}', space=sflag, size = 0x4, scoped, tag = 'scoped memory for _lambda_.10']
    %13 = vsyncpa [#allocation3], 0
    %14 = vsyncpa [#allocation5], 0
    loop: start=0, step=1, limit=4
    $region2: #{_lambda_.10} parent=1 // loop_pre_header
      _
    $region3: #{_lambda_.10} parent=1 // loop_header
      %s16 = sphi 0, %s20
      %p17 = scmp.ge.s32.totalorder %s16, 4
      %s26 = sphi 0, %s28
      %s29 = sphi 0, %s26
      %s30 = sphi 0, %s29
      %s46 = sphi 0, %s30
      %s52 = sphi 0, %s54
      %s55 = sphi 0, %s52
      %s56 = sphi 0, %s55
      %s72 = sphi 0, %s56
      %s76 = sphi 0, %s76
      %s78 = sphi 0, %s76
      %s79 = sphi 0, %s78
      %s93 = sphi 0, %s79
      %s97 = sphi 0, %s97
      %s99 = sphi 0, %s97
      %s100 = sphi 0, %s99
      %s114 = sphi 0, %s100
      %s118 = sphi 0, %s118
      %s120 = sphi 0, %s118
      %s121 = sphi 0, %s120
      %s135 = sphi 0, %s121
      %s139 = sphi 0, %s139
      %s141 = sphi 0, %s139
      %s142 = sphi 0, %s141
      %s156 = sphi 0, %s142
      %s160 = sphi 0, %s160
      %s162 = sphi 0, %s160
      %s163 = sphi 0, %s162
      %s177 = sphi 0, %s163
      %s181 = sphi 0, %s181
      %s183 = sphi 0, %s181
      %s184 = sphi 0, %s183
      %s198 = sphi 0, %s184
      %s204 = sphi 0, %s206
      %s207 = sphi 0, %s204
      %s208 = sphi 0, %s207
      %s224 = sphi 0, %s208
    $region4: #{_lambda_.10} parent=1 // loop_header_branch
      %19 = sbr.rel (%p17) target = $region8
    $region5: #{_lambda_.10} parent=1 // loop_body
      %s21 = ssub.s32 %s16, 1
      %s22 = ssub.s32 %s16, 2
      %s23 = sadd.s32 %s16, 1
      %s24 = ssub.s32 %s16, %s23
      %p25 = scmp.eq.s32.totalorder %s24, 0
      %s27 = sadd.s32 %s26, 1
      %s28 = scalar_select %p25, %s26, %s27
      %p31 = pneg %p25
      %p32 = scmp.eq.s32.totalorder %s16, 1
      %p33 = por %p31, %p32
      %p34 = scmp.ne.s32.totalorder %s26, %s29
      %p35 = scmp.eq.s32.totalorder %s16, 0
      %p36 = por %p34, %p35
      %p37 = scmp.ne.s32.totalorder %s26, %s29
      %p38 = scmp.eq.s32.totalorder %s21, 1
      %p39 = por %p37, %p38
      %p40 = scmp.ne.s32.totalorder %s29, %s30
      %p41 = scmp.eq.s32.totalorder %s21, 0
      %p42 = por %p40, %p41
      %p43 = scmp.ne.s32.totalorder %s29, %s30
      %p44 = scmp.eq.s32.totalorder %s22, 1
      %p45 = por %p43, %p44
      %p47 = scmp.ne.s32.totalorder %s30, %s46
      %p48 = scmp.eq.s32.totalorder %s22, 0
      %p49 = por %p47, %p48
      %s50 = ssub.s32 %s16, %s23
      %p51 = scmp.eq.s32.totalorder %s50, 0
      %s53 = sadd.s32 %s52, 1
      %s54 = scalar_select %p51, %s52, %s53
      %p57 = pneg %p51
      %p58 = scmp.eq.s32.totalorder %s16, 1
      %p59 = por %p57, %p58
      %p60 = scmp.ne.s32.totalorder %s52, %s55
      %p61 = scmp.eq.s32.totalorder %s16, 0
      %p62 = por %p60, %p61
      %p63 = scmp.ne.s32.totalorder %s52, %s55
      %p64 = scmp.eq.s32.totalorder %s21, 1
      %p65 = por %p63, %p64
      %p66 = scmp.ne.s32.totalorder %s55, %s56
      %p67 = scmp.eq.s32.totalorder %s21, 0
      %p68 = por %p66, %p67
      %p69 = scmp.ne.s32.totalorder %s55, %s56
      %p70 = scmp.eq.s32.totalorder %s22, 1
      %p71 = por %p69, %p70
      %p73 = scmp.ne.s32.totalorder %s56, %s72
      %p74 = scmp.eq.s32.totalorder %s22, 0
      %p75 = por %p73, %p74
      %s77 = sadd.s32 %s76, 1
      %p80 = scmp.eq.s32.totalorder %s16, 1
      %p81 = scmp.ne.s32.totalorder %s76, %s78
      %p82 = scmp.eq.s32.totalorder %s16, 0
      %p83 = por %p81, %p82
      %p84 = scmp.ne.s32.totalorder %s76, %s78
      %p85 = scmp.eq.s32.totalorder %s21, 1
      %p86 = por %p84, %p85
      %p87 = scmp.ne.s32.totalorder %s78, %s79
      %p88 = scmp.eq.s32.totalorder %s21, 0
      %p89 = por %p87, %p88
      %p90 = scmp.ne.s32.totalorder %s78, %s79
      %p91 = scmp.eq.s32.totalorder %s22, 1
      %p92 = por %p90, %p91
      %p94 = scmp.ne.s32.totalorder %s79, %s93
      %p95 = scmp.eq.s32.totalorder %s22, 0
      %p96 = por %p94, %p95
      %s98 = sadd.s32 %s97, 1
      %p101 = scmp.eq.s32.totalorder %s16, 1
      %p102 = scmp.ne.s32.totalorder %s97, %s99
      %p103 = scmp.eq.s32.totalorder %s16, 0
      %p104 = por %p102, %p103
      %p105 = scmp.ne.s32.totalorder %s97, %s99
      %p106 = scmp.eq.s32.totalorder %s21, 1
      %p107 = por %p105, %p106
      %p108 = scmp.ne.s32.totalorder %s99, %s100
      %p109 = scmp.eq.s32.totalorder %s21, 0
      %p110 = por %p108, %p109
      %p111 = scmp.ne.s32.totalorder %s99, %s100
      %p112 = scmp.eq.s32.totalorder %s22, 1
      %p113 = por %p111, %p112
      %p115 = scmp.ne.s32.totalorder %s100, %s114
      %p116 = scmp.eq.s32.totalorder %s22, 0
      %p117 = por %p115, %p116
      %s119 = sadd.s32 %s118, 1
      %p122 = scmp.eq.s32.totalorder %s16, 1
      %p123 = scmp.ne.s32.totalorder %s118, %s120
      %p124 = scmp.eq.s32.totalorder %s16, 0
      %p125 = por %p123, %p124
      %p126 = scmp.ne.s32.totalorder %s118, %s120
      %p127 = scmp.eq.s32.totalorder %s21, 1
      %p128 = por %p126, %p127
      %p129 = scmp.ne.s32.totalorder %s120, %s121
      %p130 = scmp.eq.s32.totalorder %s21, 0
      %p131 = por %p129, %p130
      %p132 = scmp.ne.s32.totalorder %s120, %s121
      %p133 = scmp.eq.s32.totalorder %s22, 1
      %p134 = por %p132, %p133
      %p136 = scmp.ne.s32.totalorder %s121, %s135
      %p137 = scmp.eq.s32.totalorder %s22, 0
      %p138 = por %p136, %p137
      %s140 = sadd.s32 %s139, 1
      %p143 = scmp.eq.s32.totalorder %s16, 1
      %p144 = scmp.ne.s32.totalorder %s139, %s141
      %p145 = scmp.eq.s32.totalorder %s16, 0
      %p146 = por %p144, %p145
      %p147 = scmp.ne.s32.totalorder %s139, %s141
      %p148 = scmp.eq.s32.totalorder %s21, 1
      %p149 = por %p147, %p148
      %p150 = scmp.ne.s32.totalorder %s141, %s142
      %p151 = scmp.eq.s32.totalorder %s21, 0
      %p152 = por %p150, %p151
      %p153 = scmp.ne.s32.totalorder %s141, %s142
      %p154 = scmp.eq.s32.totalorder %s22, 1
      %p155 = por %p153, %p154
      %p157 = scmp.ne.s32.totalorder %s142, %s156
      %p158 = scmp.eq.s32.totalorder %s22, 0
      %p159 = por %p157, %p158
      %s161 = sadd.s32 %s160, 1
      %p164 = scmp.eq.s32.totalorder %s16, 1
      %p165 = scmp.ne.s32.totalorder %s160, %s162
      %p166 = scmp.eq.s32.totalorder %s16, 0
      %p167 = por %p165, %p166
      %p168 = scmp.ne.s32.totalorder %s160, %s162
      %p169 = scmp.eq.s32.totalorder %s21, 1
      %p170 = por %p168, %p169
      %p171 = scmp.ne.s32.totalorder %s162, %s163
      %p172 = scmp.eq.s32.totalorder %s21, 0
      %p173 = por %p171, %p172
      %p174 = scmp.ne.s32.totalorder %s162, %s163
      %p175 = scmp.eq.s32.totalorder %s22, 1
      %p176 = por %p174, %p175
      %p178 = scmp.ne.s32.totalorder %s163, %s177
      %p179 = scmp.eq.s32.totalorder %s22, 0
      %p180 = por %p178, %p179
      %s182 = sadd.s32 %s181, 1
      %p185 = scmp.eq.s32.totalorder %s16, 1
      %p186 = scmp.ne.s32.totalorder %s181, %s183
      %p187 = scmp.eq.s32.totalorder %s16, 0
      %p188 = por %p186, %p187
      %p189 = scmp.ne.s32.totalorder %s181, %s183
      %p190 = scmp.eq.s32.totalorder %s21, 1
      %p191 = por %p189, %p190
      %p192 = scmp.ne.s32.totalorder %s183, %s184
      %p193 = scmp.eq.s32.totalorder %s21, 0
      %p194 = por %p192, %p193
      %p195 = scmp.ne.s32.totalorder %s183, %s184
      %p196 = scmp.eq.s32.totalorder %s22, 1
      %p197 = por %p195, %p196
      %p199 = scmp.ne.s32.totalorder %s184, %s198
      %p200 = scmp.eq.s32.totalorder %s22, 0
      %p201 = por %p199, %p200
      %s202 = ssub.s32 %s16, %s23
      %p203 = scmp.eq.s32.totalorder %s202, 0
      %s205 = sadd.s32 %s204, 1
      %s206 = scalar_select %p203, %s204, %s205
      %p209 = pneg %p203
      %p210 = scmp.eq.s32.totalorder %s16, 1
      %p211 = por %p209, %p210
      %p212 = scmp.ne.s32.totalorder %s204, %s207
      %p213 = scmp.eq.s32.totalorder %s16, 0
      %p214 = por %p212, %p213
      %p215 = scmp.ne.s32.totalorder %s204, %s207
      %p216 = scmp.eq.s32.totalorder %s21, 1
      %p217 = por %p215, %p216
      %p218 = scmp.ne.s32.totalorder %s207, %s208
      %p219 = scmp.eq.s32.totalorder %s21, 0
      %p220 = por %p218, %p219
      %p221 = scmp.ne.s32.totalorder %s207, %s208
      %p222 = scmp.eq.s32.totalorder %s22, 1
      %p223 = por %p221, %p222
      %p225 = scmp.ne.s32.totalorder %s208, %s224
      %p226 = scmp.eq.s32.totalorder %s22, 0
      %p227 = por %p225, %p226
      %p228 = scmp.le.s32.totalorder 1, %s16
      %p229 = scmp.lt.s32.totalorder %s16, 3
      %p230 = pnand %p228, %p229
      %p231 = pneg %p230
      // Predicated region
      $region9: #{_lambda_.10} parent=5 // pred_check
        _
      $region10: #{_lambda_.10} parent=5 // pred_check_branch
        %233 = sbr.rel (%p230) target = $region12
      $region11: #{_lambda_.10} parent=5 // pred_region
        %s234 = ssub.s32 %s16, 1
        // Predicated region
        $region13: #{_lambda_.10} parent=11 // pred_check
          %p235 = pneg %p89
        $region14: #{_lambda_.10} parent=11 // pred_check_branch
          %237 = sbr.rel (%p235) target = $region16
        $region15: #{_lambda_.10} parent=11 // pred_region
          %239 = vsyncadd [#allocation3], 0
          %s241 = sshll.u32 %s2, 4
          %s242 = int_to_ptr.hbm [resolvable:$true] %s241
          %s243 = sshll.u32 [#allocation2], 4
          %s244 = int_to_ptr.vmem [resolvable:$true] %s243
          %246 = dma.hbm_to_vmem [thread:$0]  %s242, 16, %s244, [#allocation3]
        $region16: #{_lambda_.10} parent=11 // pred_fallthru
          _
        // Predicated region
        $region17: #{_lambda_.10} parent=11 // pred_check
          %p247 = pneg %p110
        $region18: #{_lambda_.10} parent=11 // pred_check_branch
          %249 = sbr.rel (%p247) target = $region20
        $region19: #{_lambda_.10} parent=11 // pred_region
          %251 = vsyncadd [#allocation5], 0
          %s253 = sshll.u32 %s3, 4
          %s254 = int_to_ptr.hbm [resolvable:$true] %s253
          %s255 = sshll.u32 [#allocation4], 4
          %s256 = int_to_ptr.vmem [resolvable:$true] %s255
          %258 = dma.hbm_to_vmem [thread:$0]  %s254, 16, %s256, [#allocation5]
        $region20: #{_lambda_.10} parent=11 // pred_fallthru
          _
        // Predicated region
        $region21: #{_lambda_.10} parent=11 // pred_check
          %p259 = pneg %p131
        $region22: #{_lambda_.10} parent=11 // pred_check_branch
          %261 = sbr.rel (%p259) target = $region24
        $region23: #{_lambda_.10} parent=11 // pred_region
          _
        $region24: #{_lambda_.10} parent=11 // pred_fallthru
          _
        // Predicated region
        $region25: #{_lambda_.10} parent=11 // pred_check
          %p262 = pneg %p152
        $region26: #{_lambda_.10} parent=11 // pred_check_branch
          %264 = sbr.rel (%p262) target = $region28
        $region27: #{_lambda_.10} parent=11 // pred_region
          _
        $region28: #{_lambda_.10} parent=11 // pred_fallthru
          _
        // Predicated region
        $region29: #{_lambda_.10} parent=11 // pred_check
          %p265 = pneg %p173
        $region30: #{_lambda_.10} parent=11 // pred_check_branch
          %267 = sbr.rel (%p265) target = $region32
        $region31: #{_lambda_.10} parent=11 // pred_region
          _
        $region32: #{_lambda_.10} parent=11 // pred_fallthru
          _
        // Predicated region
        $region33: #{_lambda_.10} parent=11 // pred_check
          %p268 = pneg %p194
        $region34: #{_lambda_.10} parent=11 // pred_check_branch
          %270 = sbr.rel (%p268) target = $region36
        $region35: #{_lambda_.10} parent=11 // pred_region
          _
        $region36: #{_lambda_.10} parent=11 // pred_fallthru
          _
      $region12: #{_lambda_.10} parent=5 // pred_fallthru
        _
      %p271 = scmp.lt.s32.totalorder %s16, 2
      // Predicated region
      $region37: #{_lambda_.10} parent=5 // pred_check
        %p272 = pneg %p271
      $region38: #{_lambda_.10} parent=5 // pred_check_branch
        %274 = sbr.rel (%p272) target = $region40
      $region39: #{_lambda_.10} parent=5 // pred_region
        // Predicated region
        $region41: #{_lambda_.10} parent=39 // pred_check
          %p275 = pneg %p36
        $region42: #{_lambda_.10} parent=39 // pred_check_branch
          %277 = sbr.rel (%p275) target = $region44
        $region43: #{_lambda_.10} parent=39 // pred_region
          %p278 = scmp.lt.s32.totalorder %s16, 1
          %s279 = scalar_select %p278, %s16, 1
          %s280 = smul.addr %s279, 8
          %s281 = scalar_lea.vmem %s0, %s280
        $region44: #{_lambda_.10} parent=39 // pred_fallthru
          _
        // Predicated region
        $region45: #{_lambda_.10} parent=39 // pred_check
          %p282 = pneg %p62
        $region46: #{_lambda_.10} parent=39 // pred_check_branch
          %284 = sbr.rel (%p282) target = $region48
        $region47: #{_lambda_.10} parent=39 // pred_region
          %p285 = scmp.lt.s32.totalorder %s16, 1
          %s286 = scalar_select %p285, %s16, 1
          %s287 = smul.addr %s286, 8
          %s288 = scalar_lea.vmem %s1, %s287
        $region48: #{_lambda_.10} parent=39 // pred_fallthru
          _
      $region40: #{_lambda_.10} parent=5 // pred_fallthru
        _
      %p289 = scmp.le.s32.totalorder 1, %s16
      %p290 = scmp.lt.s32.totalorder %s16, 3
      %p291 = pnand %p289, %p290
      %p292 = pneg %p291
      // Predicated region
      $region49: #{_lambda_.10} parent=5 // pred_check
        _
      $region50: #{_lambda_.10} parent=5 // pred_check_branch
        %294 = sbr.rel (%p291) target = $region52
      $region51: #{_lambda_.10} parent=5 // pred_region
        %s295 = ssub.s32 %s16, 1
        // Predicated region
        $region53: #{_lambda_.10} parent=51 // pred_check
          %p296 = pneg %p89
        $region54: #{_lambda_.10} parent=51 // pred_check_branch
          %298 = sbr.rel (%p296) target = $region56
        $region55: #{_lambda_.10} parent=51 // pred_region
          %300 = dma.done [#allocation3], 16
        $region56: #{_lambda_.10} parent=51 // pred_fallthru
          _
        // Predicated region
        $region57: #{_lambda_.10} parent=51 // pred_check
          %p301 = pneg %p110
        $region58: #{_lambda_.10} parent=51 // pred_check_branch
          %303 = sbr.rel (%p301) target = $region60
        $region59: #{_lambda_.10} parent=51 // pred_region
          %305 = dma.done [#allocation5], 16
        $region60: #{_lambda_.10} parent=51 // pred_fallthru
          _
        %p306 = scmp.lt.s32.totalorder %s21, 1
        %s307 = scalar_select %p306, %s21, 1
        %s308 = smul.addr %s307, 8
        %s309 = scalar_lea.vmem %s0, %s308
        %p310 = pneg %p42
        %p311 = pneg %p39
        %p312 = scmp.lt.s32.totalorder %s21, 1
        %s313 = scalar_select %p312, %s21, 1
        %s314 = smul.addr %s313, 8
        %s315 = scalar_lea.vmem %s1, %s314
        %p316 = pneg %p68
        %p317 = pneg %p65
        %p318 = pneg %p89
        %p319 = pneg %p86
        %p320 = pneg %p110
        %p321 = pneg %p107
        %p322 = pneg %p131
        %p323 = pneg %p128
        %p324 = pneg %p152
        %p325 = pneg %p149
        %p326 = pneg %p173
        %p327 = pneg %p170
        %p328 = pneg %p194
        %p329 = pneg %p191
        %p330 = pneg %p220
        %p331 = pneg %p217
        %p332 = scmp.lt.s32.totalorder %s21, 1
        %s333 = scalar_select %p332, %s21, 1
        %s334 = smul.addr %s333, 8
        %s335 = scalar_lea.vmem %s8, %s334
        %p336 = scmp.lt.s32.totalorder %s21, 1
        %s337 = scalar_select %p336, %s21, 1
        %s338 = smul.addr %s337, 8
        %s339 = scalar_lea.vmem %s0, %s338
        %p340 = scmp.lt.s32.totalorder %s21, 1
        %s341 = scalar_select %p340, %s21, 1
        %s342 = smul.addr %s341, 8
        %s343 = scalar_lea.vmem %s1, %s342
        %p344 = scmp.lt.s32.totalorder %s21, 1
        %s345 = scalar_select %p344, %s21, 1
        %s346 = smul.addr %s345, 8
        %s347 = scalar_lea.vmem %s8, %s346
        %v348 = vld [vmem:[%s339] sm:$0xff]
        %v349 = vld [vmem:[#allocation2] sm:$0x1]
        %v350 = vld [vmem:[#allocation4] sm:$0x1]
        %vm351 = vcmask 261120
        %v352 = vsel %vm351, %v348, 0.0
        %353 = vadd.xlane.f32.xlu0 %v352
        %v354 = vpop.xlane.xlu0 %353
        %v355 = vrcp.pop 32.0
        %v356 = vmul.f32 32.0, %v355
        %v357 = vsub.f32 1.0, %v356
        %v358 = vmul.f32 %v355, %v357
        %v359 = vadd.f32 %v355, %v358
        %vm360 = vweird.f32 %v355
        %v361 = vsel %vm360, %v355, %v359
        %v362 = vmul.f32 %v354, %v361
        %v363 = vsub.f32 %v348, %v362
        %v364 = vmul.f32 %v363, %v363
        %v365 = vsel %vm351, %v364, 0.0
        %366 = vadd.xlane.f32.xlu0 %v365
        %v367 = vpop.xlane.xlu0 %366
        %v368 = vmul.f32 %v367, 0.032258064
        %v369 = vrsqrt.pop %v368
        %v370 = vmul.f32 %v369, %v368
        %v371 = vmul.f32 %v370, %v369
        %v372 = vmul.f32 0.5, %v371
        %v373 = vsub.f32 1.5, %v372
        %v374 = vmul.f32 %v369, %v373
        %v375 = vmul.f32 %v368, %v374
        %vm376 = vcmp.eq.f32.partialorder %v368, inf
        %v377 = vsel %vm376, %v368, %v375
        %vm378 = vcmp.eq.f32.partialorder %v368, 0.0
        %v379 = vand.u32 %v368, 2147483648
        %v380 = vsel %vm378, %v379, %v377
        %v381 = vadd.f32 %v380, 1e-06
        %v382 = vrcp.pop %v381
        %v383 = vmul.f32 %v381, %v382
        %v384 = vsub.f32 1.0, %v383
        %v385 = vmul.f32 %v382, %v384
        %v386 = vadd.f32 %v382, %v385
        %vm387 = vweird.f32 %v381
        %vm388 = vweird.f32 %v382
        %vm389 = vmor %vm387, %vm388
        %v390 = vsel %vm389, %v382, %v386
        %v391 = vand.u32 2147483647, %v381
        %vm392 = vcmp.eq.f32.partialorder %v391, 8.507059e+37
        %v393 = vand.u32 %v381, 2147483648
        %v394 = vor.u32 1.1754944e-38, %v393
        %v395 = vsel %vm392, %v394, %v390
        %v397 = vperm.slane %v349, 0
        %v399 = vmul.f32 %v397, %v363
        %v400 = vmul.f32 %v399, %v395
        %v402 = vperm.slane %v350, 0
        %v404 = vadd.f32 %v400, %v402
        %v405 = vld [vmem:[%s4] sm:$0xff]
        %v406 = vld [vmem:[%s4 + $0x8] sm:$0xff]
        %v407 = vld [vmem:[%s4 + $0x10] sm:$0xff]
        %v408 = vld [vmem:[%s4 + $0x18] sm:$0xff]
        %v409 = vld [vmem:[%s5] sm:$0x1]
        %v411 = vperm.slane %v409, 0
        %v414 = vsel %vm351, %v404, 0
        %416 = vmatpush.msra.mxu0 0.0
        %417 = vmatpush.msra.mxu0 0.0
        %418 = vmatpush.msra.mxu0 0.0
        %419 = vmatpush.msra.mxu0 0.0
        %420 = vmatpush.msra.mxu0 0.0
        %421 = vmatpush.msra.mxu0 0.0
        %422 = vmatpush.msra.mxu0 0.0
        %423 = vmatpush.msra.mxu0 0.0
        %424 = vmatpush.msra.mxu0 0.0
        %425 = vmatpush.msra.mxu0 0.0
        %426 = vmatpush.msra.mxu0 0.0
        %427 = vmatpush.msra.mxu0 0.0
        %428 = vmatpush.msra.mxu0 %v408
        %429 = vmatpush.msra.mxu0 %v407
        %430 = vmatpush.msra.mxu0 %v406
        %431 = vmatpush.msra.mxu0 %v405
        %432 = vmatmul.f32.gmra.mxu0 %v414
        %v433 = vpop.f32.mrf.mxu0
        %v434 = vadd.f32 %v411, %v433
        %435 = vdwg.mxu0
        %v436 = vld [vmem:[%s343] sm:$0xff]
        %v437 = vld [vmem:[%s6] sm:$0xff]
        %v438 = vld [vmem:[%s6 + $0x8] sm:$0xff]
        %v439 = vld [vmem:[%s6 + $0x10] sm:$0xff]
        %v440 = vld [vmem:[%s6 + $0x18] sm:$0xff]
        %442 = vrot.lane.b32.xlu0 %v434, 96
        %v443 = vpop.permute.xlu0 %442
        %vm444 = vcmask 64512
        %v445 = vsel %vm444, %v434, 0
        %v447 = vsel %vm444, %v443, 0
        %449 = vmatpush.xpose.msra.mxu0 0.0
        %450 = vmatpush.xpose.msra.mxu0 0.0
        %451 = vmatpush.xpose.msra.mxu0 0.0
        %452 = vmatpush.xpose.msra.mxu0 0.0
        %453 = vmatpush.xpose.msra.mxu0 0.0
        %454 = vmatpush.xpose.msra.mxu0 0.0
        %455 = vmatpush.xpose.msra.mxu0 0.0
        %456 = vmatpush.xpose.msra.mxu0 0.0
        %457 = vmatpush.xpose.msra.mxu0 0.0
        %458 = vmatpush.xpose.msra.mxu0 0.0
        %459 = vmatpush.xpose.msra.mxu0 0.0
        %460 = vmatpush.xpose.msra.mxu0 0.0
        %461 = vmatpush.xpose.msra.mxu0 0.0
        %462 = vmatpush.xpose.msra.mxu0 0.0
        %463 = vmatpush.xpose.msra.mxu0 0.0
        %464 = vmatpush.xpose.msra.mxu0 %v447
        %465 = vmatmul.f32.gmra.mxu0 %v445
        %v466 = vpop.f32.mrf.mxu0
        %v467 = vadd.f32 0.0, %v466
        %468 = vdwg.mxu0
        %v469 = vmul.f32 %v467, 0.35355338
        %vm470 = vcmp.eq.s32.totalorder %v436, 0
        %v471 = vsel %vm470, -1e+09, %v469
        %v472 = vsel %vm444, %v471, -inf
        %473 = vmax.xlane.f32.xlu0 %v472
        %v474 = vpop.xlane.xlu0 %473
        %v475 = vsub.f32 %v471, %v474
        %v476 = vmul.f32 %v475, 1.442695
        %v477 = vpow.pop %v476
        %v478 = vsel %vm444, %v477, 0.0
        %479 = vadd.xlane.f32.xlu0 %v478
        %v480 = vpop.xlane.xlu0 %479
        %v481 = vrcp.pop %v480
        %v482 = vmul.f32 %v477, %v481
        %483 = vrot.lane.b32.xlu0 %v434, 64
        %v484 = vpop.permute.xlu0 %483
        %v487 = vsel %vm444, %v482, 0
        %489 = vmatpush.msra.mxu0 0.0
        %490 = vmatpush.msra.mxu0 0.0
        %491 = vmatpush.msra.mxu0 0.0
        %492 = vmatpush.msra.mxu0 0.0
        %493 = vmatpush.msra.mxu0 0.0
        %494 = vmatpush.msra.mxu0 0.0
        %495 = vmatpush.msra.mxu0 0.0
        %496 = vmatpush.msra.mxu0 0.0
        %497 = vmatpush.msra.mxu0 0.0
        %498 = vmatpush.msra.mxu0 0.0
        %499 = vmatpush.msra.mxu0 0.0
        %500 = vmatpush.msra.mxu0 0.0
        %501 = vmatpush.msra.mxu0 0.0
        %502 = vmatpush.msra.mxu0 0.0
        %503 = vmatpush.msra.mxu0 0.0
        %504 = vmatpush.msra.mxu0 %v484
        %505 = vmatmul.f32.gmra.mxu0 %v487
        %v506 = vpop.f32.mrf.mxu0
        %v507 = vadd.f32 0.0, %v506
        %508 = vdwg.mxu0
        %509 = vrot.lane.b32.xlu0 %v434, 120
        %v510 = vpop.permute.xlu0 %509
        %511 = vrot.lane.b32.xlu0 %v434, 88
        %v512 = vpop.permute.xlu0 %511
        %v513 = vsel %vm444, %v510, 0
        %v515 = vsel %vm444, %v512, 0
        %517 = vmatpush.xpose.msra.mxu0 0.0
        %518 = vmatpush.xpose.msra.mxu0 0.0
        %519 = vmatpush.xpose.msra.mxu0 0.0
        %520 = vmatpush.xpose.msra.mxu0 0.0
        %521 = vmatpush.xpose.msra.mxu0 0.0
        %522 = vmatpush.xpose.msra.mxu0 0.0
        %523 = vmatpush.xpose.msra.mxu0 0.0
        %524 = vmatpush.xpose.msra.mxu0 0.0
        %525 = vmatpush.xpose.msra.mxu0 0.0
        %526 = vmatpush.xpose.msra.mxu0 0.0
        %527 = vmatpush.xpose.msra.mxu0 0.0
        %528 = vmatpush.xpose.msra.mxu0 0.0
        %529 = vmatpush.xpose.msra.mxu0 0.0
        %530 = vmatpush.xpose.msra.mxu0 0.0
        %531 = vmatpush.xpose.msra.mxu0 0.0
        %532 = vmatpush.xpose.msra.mxu0 %v515
        %533 = vmatmul.f32.gmra.mxu0 %v513
        %v534 = vpop.f32.mrf.mxu0
        %v535 = vadd.f32 0.0, %v534
        %536 = vdwg.mxu0
        %v537 = vmul.f32 %v535, 0.35355338
        %v538 = vsel %vm470, -1e+09, %v537
        %v539 = vsel %vm444, %v538, -inf
        %540 = vmax.xlane.f32.xlu0 %v539
        %v541 = vpop.xlane.xlu0 %540
        %v542 = vsub.f32 %v538, %v541
        %v543 = vmul.f32 %v542, 1.442695
        %v544 = vpow.pop %v543
        %v545 = vsel %vm444, %v544, 0.0
        %546 = vadd.xlane.f32.xlu0 %v545
        %v547 = vpop.xlane.xlu0 %546
        %v548 = vrcp.pop %v547
        %v549 = vmul.f32 %v544, %v548
        %550 = vrot.lane.b32.xlu0 %v434, 56
        %v551 = vpop.permute.xlu0 %550
        %v554 = vsel %vm444, %v549, 0
        %556 = vmatpush.msra.mxu0 0.0
        %557 = vmatpush.msra.mxu0 0.0
        %558 = vmatpush.msra.mxu0 0.0
        %559 = vmatpush.msra.mxu0 0.0
        %560 = vmatpush.msra.mxu0 0.0
        %561 = vmatpush.msra.mxu0 0.0
        %562 = vmatpush.msra.mxu0 0.0
        %563 = vmatpush.msra.mxu0 0.0
        %564 = vmatpush.msra.mxu0 0.0
        %565 = vmatpush.msra.mxu0 0.0
        %566 = vmatpush.msra.mxu0 0.0
        %567 = vmatpush.msra.mxu0 0.0
        %568 = vmatpush.msra.mxu0 0.0
        %569 = vmatpush.msra.mxu0 0.0
        %570 = vmatpush.msra.mxu0 0.0
        %571 = vmatpush.msra.mxu0 %v551
        %572 = vmatmul.f32.gmra.mxu0 %v554
        %v573 = vpop.f32.mrf.mxu0
        %v574 = vadd.f32 0.0, %v573
        %575 = vdwg.mxu0
        %v577 = vsel %vm444, %v574, 0
        %579 = vmatpush.msra.mxu0 0.0
        %580 = vmatpush.msra.mxu0 0.0
        %581 = vmatpush.msra.mxu0 0.0
        %582 = vmatpush.msra.mxu0 0.0
        %583 = vmatpush.msra.mxu0 0.0
        %584 = vmatpush.msra.mxu0 0.0
        %585 = vmatpush.msra.mxu0 0.0
        %586 = vmatpush.msra.mxu0 0.0
        %587 = vmatpush.msra.mxu0 0.0
        %588 = vmatpush.msra.mxu0 0.0
        %589 = vmatpush.msra.mxu0 0.0
        %590 = vmatpush.msra.mxu0 0.0
        %591 = vmatpush.msra.mxu0 0.0
        %592 = vmatpush.msra.mxu0 0.0
        %593 = vmatpush.msra.mxu0 0.0
        %594 = vmatpush.msra.mxu0 %v438
        %595 = vmatmul.f32.gmra.mxu0 %v577
        %v596 = vpop.f32.mrf.mxu0
        %v597 = vadd.f32 0.0, %v596
        %598 = vdwg.mxu0
        %v600 = vsel %vm444, %v507, 0
        %602 = vmatpush.msra.mxu0 0.0
        %603 = vmatpush.msra.mxu0 0.0
        %604 = vmatpush.msra.mxu0 0.0
        %605 = vmatpush.msra.mxu0 0.0
        %606 = vmatpush.msra.mxu0 0.0
        %607 = vmatpush.msra.mxu0 0.0
        %608 = vmatpush.msra.mxu0 0.0
        %609 = vmatpush.msra.mxu0 0.0
        %610 = vmatpush.msra.mxu0 0.0
        %611 = vmatpush.msra.mxu0 0.0
        %612 = vmatpush.msra.mxu0 0.0
        %613 = vmatpush.msra.mxu0 0.0
        %614 = vmatpush.msra.mxu0 0.0
        %615 = vmatpush.msra.mxu0 0.0
        %616 = vmatpush.msra.mxu0 0.0
        %617 = vmatpush.msra.mxu0 %v437
        %618 = vmatmul.f32.gmra.mxu0 %v600
        %v619 = vpop.f32.mrf.mxu0
        %v620 = vadd.f32 %v597, %v619
        %621 = vdwg.mxu0
        %622 = vrot.lane.b32.xlu0 %v434, 112
        %v623 = vpop.permute.xlu0 %622
        %624 = vrot.lane.b32.xlu0 %v434, 80
        %v625 = vpop.permute.xlu0 %624
        %v626 = vsel %vm444, %v623, 0
        %v628 = vsel %vm444, %v625, 0
        %630 = vmatpush.xpose.msra.mxu0 0.0
        %631 = vmatpush.xpose.msra.mxu0 0.0
        %632 = vmatpush.xpose.msra.mxu0 0.0
        %633 = vmatpush.xpose.msra.mxu0 0.0
        %634 = vmatpush.xpose.msra.mxu0 0.0
        %635 = vmatpush.xpose.msra.mxu0 0.0
        %636 = vmatpush.xpose.msra.mxu0 0.0
        %637 = vmatpush.xpose.msra.mxu0 0.0
        %638 = vmatpush.xpose.msra.mxu0 0.0
        %639 = vmatpush.xpose.msra.mxu0 0.0
        %640 = vmatpush.xpose.msra.mxu0 0.0
        %641 = vmatpush.xpose.msra.mxu0 0.0
        %642 = vmatpush.xpose.msra.mxu0 0.0
        %643 = vmatpush.xpose.msra.mxu0 0.0
        %644 = vmatpush.xpose.msra.mxu0 0.0
        %645 = vmatpush.xpose.msra.mxu0 %v628
        %646 = vmatmul.f32.gmra.mxu0 %v626
        %v647 = vpop.f32.mrf.mxu0
        %v648 = vadd.f32 0.0, %v647
        %649 = vdwg.mxu0
        %v650 = vmul.f32 %v648, 0.35355338
        %v651 = vsel %vm470, -1e+09, %v650
        %v652 = vsel %vm444, %v651, -inf
        %653 = vmax.xlane.f32.xlu0 %v652
        %v654 = vpop.xlane.xlu0 %653
        %v655 = vsub.f32 %v651, %v654
        %v656 = vmul.f32 %v655, 1.442695
        %v657 = vpow.pop %v656
        %v658 = vsel %vm444, %v657, 0.0
        %659 = vadd.xlane.f32.xlu0 %v658
        %v660 = vpop.xlane.xlu0 %659
        %v661 = vrcp.pop %v660
        %v662 = vmul.f32 %v657, %v661
        %663 = vrot.lane.b32.xlu0 %v434, 48
        %v664 = vpop.permute.xlu0 %663
        %v667 = vsel %vm444, %v662, 0
        %669 = vmatpush.msra.mxu0 0.0
        %670 = vmatpush.msra.mxu0 0.0
        %671 = vmatpush.msra.mxu0 0.0
        %672 = vmatpush.msra.mxu0 0.0
        %673 = vmatpush.msra.mxu0 0.0
        %674 = vmatpush.msra.mxu0 0.0
        %675 = vmatpush.msra.mxu0 0.0
        %676 = vmatpush.msra.mxu0 0.0
        %677 = vmatpush.msra.mxu0 0.0
        %678 = vmatpush.msra.mxu0 0.0
        %679 = vmatpush.msra.mxu0 0.0
        %680 = vmatpush.msra.mxu0 0.0
        %681 = vmatpush.msra.mxu0 0.0
        %682 = vmatpush.msra.mxu0 0.0
        %683 = vmatpush.msra.mxu0 0.0
        %684 = vmatpush.msra.mxu0 %v664
        %685 = vmatmul.f32.gmra.mxu0 %v667
        %v686 = vpop.f32.mrf.mxu0
        %v687 = vadd.f32 0.0, %v686
        %688 = vdwg.mxu0
        %v690 = vsel %vm444, %v687, 0
        %692 = vmatpush.msra.mxu0 0.0
        %693 = vmatpush.msra.mxu0 0.0
        %694 = vmatpush.msra.mxu0 0.0
        %695 = vmatpush.msra.mxu0 0.0
        %696 = vmatpush.msra.mxu0 0.0
        %697 = vmatpush.msra.mxu0 0.0
        %698 = vmatpush.msra.mxu0 0.0
        %699 = vmatpush.msra.mxu0 0.0
        %700 = vmatpush.msra.mxu0 0.0
        %701 = vmatpush.msra.mxu0 0.0
        %702 = vmatpush.msra.mxu0 0.0
        %703 = vmatpush.msra.mxu0 0.0
        %704 = vmatpush.msra.mxu0 0.0
        %705 = vmatpush.msra.mxu0 0.0
        %706 = vmatpush.msra.mxu0 0.0
        %707 = vmatpush.msra.mxu0 %v439
        %708 = vmatmul.f32.gmra.mxu0 %v690
        %v709 = vpop.f32.mrf.mxu0
        %v710 = vadd.f32 0.0, %v709
        %711 = vdwg.mxu0
        %v712 = vadd.f32 %v620, %v710
        %713 = vrot.lane.b32.xlu0 %v434, 104
        %v714 = vpop.permute.xlu0 %713
        %715 = vrot.lane.b32.xlu0 %v434, 72
        %v716 = vpop.permute.xlu0 %715
        %v717 = vsel %vm444, %v714, 0
        %v719 = vsel %vm444, %v716, 0
        %721 = vmatpush.xpose.msra.mxu0 0.0
        %722 = vmatpush.xpose.msra.mxu0 0.0
        %723 = vmatpush.xpose.msra.mxu0 0.0
        %724 = vmatpush.xpose.msra.mxu0 0.0
        %725 = vmatpush.xpose.msra.mxu0 0.0
        %726 = vmatpush.xpose.msra.mxu0 0.0
        %727 = vmatpush.xpose.msra.mxu0 0.0
        %728 = vmatpush.xpose.msra.mxu0 0.0
        %729 = vmatpush.xpose.msra.mxu0 0.0
        %730 = vmatpush.xpose.msra.mxu0 0.0
        %731 = vmatpush.xpose.msra.mxu0 0.0
        %732 = vmatpush.xpose.msra.mxu0 0.0
        %733 = vmatpush.xpose.msra.mxu0 0.0
        %734 = vmatpush.xpose.msra.mxu0 0.0
        %735 = vmatpush.xpose.msra.mxu0 0.0
        %736 = vmatpush.xpose.msra.mxu0 %v719
        %737 = vmatmul.f32.gmra.mxu0 %v717
        %v738 = vpop.f32.mrf.mxu0
        %v739 = vadd.f32 0.0, %v738
        %740 = vdwg.mxu0
        %v741 = vmul.f32 %v739, 0.35355338
        %v742 = vsel %vm470, -1e+09, %v741
        %v743 = vsel %vm444, %v742, -inf
        %744 = vmax.xlane.f32.xlu0 %v743
        %v745 = vpop.xlane.xlu0 %744
        %v746 = vsub.f32 %v742, %v745
        %v747 = vmul.f32 %v746, 1.442695
        %v748 = vpow.pop %v747
        %v749 = vsel %vm444, %v748, 0.0
        %750 = vadd.xlane.f32.xlu0 %v749
        %v751 = vpop.xlane.xlu0 %750
        %v752 = vrcp.pop %v751
        %v753 = vmul.f32 %v748, %v752
        %754 = vrot.lane.b32.xlu0 %v434, 40
        %v755 = vpop.permute.xlu0 %754
        %v758 = vsel %vm444, %v753, 0
        %760 = vmatpush.msra.mxu0 0.0
        %761 = vmatpush.msra.mxu0 0.0
        %762 = vmatpush.msra.mxu0 0.0
        %763 = vmatpush.msra.mxu0 0.0
        %764 = vmatpush.msra.mxu0 0.0
        %765 = vmatpush.msra.mxu0 0.0
        %766 = vmatpush.msra.mxu0 0.0
        %767 = vmatpush.msra.mxu0 0.0
        %768 = vmatpush.msra.mxu0 0.0
        %769 = vmatpush.msra.mxu0 0.0
        %770 = vmatpush.msra.mxu0 0.0
        %771 = vmatpush.msra.mxu0 0.0
        %772 = vmatpush.msra.mxu0 0.0
        %773 = vmatpush.msra.mxu0 0.0
        %774 = vmatpush.msra.mxu0 0.0
        %775 = vmatpush.msra.mxu0 %v755
        %776 = vmatmul.f32.gmra.mxu0 %v758
        %v777 = vpop.f32.mrf.mxu0
        %v778 = vadd.f32 0.0, %v777
        %779 = vdwg.mxu0
        %v781 = vsel %vm444, %v778, 0
        %783 = vmatpush.msra.mxu0 0.0
        %784 = vmatpush.msra.mxu0 0.0
        %785 = vmatpush.msra.mxu0 0.0
        %786 = vmatpush.msra.mxu0 0.0
        %787 = vmatpush.msra.mxu0 0.0
        %788 = vmatpush.msra.mxu0 0.0
        %789 = vmatpush.msra.mxu0 0.0
        %790 = vmatpush.msra.mxu0 0.0
        %791 = vmatpush.msra.mxu0 0.0
        %792 = vmatpush.msra.mxu0 0.0
        %793 = vmatpush.msra.mxu0 0.0
        %794 = vmatpush.msra.mxu0 0.0
        %795 = vmatpush.msra.mxu0 0.0
        %796 = vmatpush.msra.mxu0 0.0
        %797 = vmatpush.msra.mxu0 0.0
        %798 = vmatpush.msra.mxu0 %v440
        %799 = vmatmul.f32.gmra.mxu0 %v781
        %v800 = vpop.f32.mrf.mxu0
        %v801 = vadd.f32 0.0, %v800
        %802 = vdwg.mxu0
        %v803 = vadd.f32 %v712, %v801
        %v804 = vadd.f32 %v348, %v803
        %v805 = vld [vmem:[%s7] sm:$0x1]
        %v807 = vperm.slane %v805, 0
        %v809 = vadd.f32 %v804, %v807
        %810 = vst.msk [vmem:[%s347] sm:$0xff] %vm351, %v809
        %p811 = scmp.lt.s32.totalorder %s21, 1
        %s812 = scalar_select %p811, %s21, 1
        %s813 = smul.addr %s812, 8
        %s814 = scalar_lea.vmem %s8, %s813
        // Predicated region
        $region61: #{_lambda_.10} parent=51 // pred_check
          %p815 = pneg %p217
        $region62: #{_lambda_.10} parent=51 // pred_check_branch
          %817 = sbr.rel (%p815) target = $region64
        $region63: #{_lambda_.10} parent=51 // pred_region
          _
        $region64: #{_lambda_.10} parent=51 // pred_fallthru
          _
      $region52: #{_lambda_.10} parent=5 // pred_fallthru
        _
      %p818 = scmp.le.s32.totalorder 2, %s16
      // Predicated region
      $region65: #{_lambda_.10} parent=5 // pred_check
        %p819 = pneg %p818
      $region66: #{_lambda_.10} parent=5 // pred_check_branch
        %821 = sbr.rel (%p819) target = $region68
      $region67: #{_lambda_.10} parent=5 // pred_region
        %s822 = ssub.s32 %s16, 2
        // Predicated region
        $region69: #{_lambda_.10} parent=67 // pred_check
          %p823 = pneg %p223
        $region70: #{_lambda_.10} parent=67 // pred_check_branch
          %825 = sbr.rel (%p823) target = $region72
        $region71: #{_lambda_.10} parent=67 // pred_region
          %p826 = scmp.lt.s32.totalorder %s22, 1
          %s827 = scalar_select %p826, %s22, 1
          %s828 = smul.addr %s827, 8
          %s829 = scalar_lea.vmem %s8, %s828
        $region72: #{_lambda_.10} parent=67 // pred_fallthru
          _
      $region68: #{_lambda_.10} parent=5 // pred_fallthru
        _
    $region6: #{_lambda_.10} parent=1 // loop_footer
      %s20 = sadd.s32 1, %s16
    $region7: #{_lambda_.10} parent=1 // loop_footer_branch
      %15 = sbr.rel target = $region3
    $region8: #{_lambda_.10} parent=1 // loop_exit
      _
    %830 = vsyncpa [#allocation3], 1
    %s831 = scalar_lea.sflag [#allocation3], 1
    %832 = vsyncpa %s831, 1
    %833 = vsyncpa [#allocation5], 1

// kernel: _lambda_.13
$region0: #{_lambda_.13}
  #allocation0 [shape = 'u32[]', space=smem, size = 0x4, offset = 0x4, fixed_abs, tag = 'smem constant byte address 0x4 - core index']
  #allocation1 [shape = 'u32[72,128]{1,0:T(1,128)}', space=vmem, size = 0x9000, scoped, tag = 'internal scratch']
  %s0 = inlined_call_operand.vmem [shape: f32[2,8,32], index: 0, kind: input, shape index: {}]
  %s1 = inlined_call_operand.vmem [shape: f32[1,32], index: 1, kind: input, shape index: {}]
  %s2 = inlined_call_operand.vmem [shape: f32[1,32], index: 2, kind: input, shape index: {}]
  %s3 = inlined_call_operand.hbm [shape: f32[2,8,32], index: 3, kind: output, shape index: {}]
  %s4 = sld [smem:[#allocation0]]
  $region45: #{_lambda_.13} parent=0
    _
  %s6 = ssub.s32 1, %s4
  %s7 = scalar_select 0, %s6, %s4
  $region1: #{_lambda_.13} parent=0
    #allocation2 [shape = 'u8[8192]{0}', space=vmem, size = 0x2000, scoped, tag = 'output window, operand 0']
    #allocation3 [shape = 's32[2]{0}', space=sflag, size = 0x8, scoped, tag = 'scoped memory for _lambda_.13']
    %8 = vsyncpa [#allocation3], 0
    %s9 = scalar_lea.sflag [#allocation3], 1
    %10 = vsyncpa %s9, 0
    loop: start=0, step=1, limit=4
    $region2: #{_lambda_.13} parent=1 // loop_pre_header
      _
    $region3: #{_lambda_.13} parent=1 // loop_header
      %s12 = sphi 0, %s16
      %p13 = scmp.ge.s32.totalorder %s12, 4
      %s22 = sphi 0, %s24
      %s25 = sphi 0, %s22
      %s26 = sphi 0, %s25
      %s42 = sphi 0, %s26
      %s46 = sphi 0, %s46
      %s48 = sphi 0, %s46
      %s49 = sphi 0, %s48
      %s63 = sphi 0, %s49
      %s67 = sphi 0, %s67
      %s69 = sphi 0, %s67
      %s70 = sphi 0, %s69
      %s84 = sphi 0, %s70
      %s90 = sphi 0, %s92
      %s93 = sphi 0, %s90
      %s94 = sphi 0, %s93
      %s110 = sphi 0, %s94
    $region4: #{_lambda_.13} parent=1 // loop_header_branch
      %15 = sbr.rel (%p13) target = $region8
    $region5: #{_lambda_.13} parent=1 // loop_body
      %s17 = ssub.s32 %s12, 1
      %s18 = ssub.s32 %s12, 2
      %s19 = sadd.s32 %s12, 1
      %s20 = ssub.s32 %s12, %s19
      %p21 = scmp.eq.s32.totalorder %s20, 0
      %s23 = sadd.s32 %s22, 1
      %s24 = scalar_select %p21, %s22, %s23
      %p27 = pneg %p21
      %p28 = scmp.eq.s32.totalorder %s12, 1
      %p29 = por %p27, %p28
      %p30 = scmp.ne.s32.totalorder %s22, %s25
      %p31 = scmp.eq.s32.totalorder %s12, 0
      %p32 = por %p30, %p31
      %p33 = scmp.ne.s32.totalorder %s22, %s25
      %p34 = scmp.eq.s32.totalorder %s17, 1
      %p35 = por %p33, %p34
      %p36 = scmp.ne.s32.totalorder %s25, %s26
      %p37 = scmp.eq.s32.totalorder %s17, 0
      %p38 = por %p36, %p37
      %p39 = scmp.ne.s32.totalorder %s25, %s26
      %p40 = scmp.eq.s32.totalorder %s18, 1
      %p41 = por %p39, %p40
      %p43 = scmp.ne.s32.totalorder %s26, %s42
      %p44 = scmp.eq.s32.totalorder %s18, 0
      %p45 = por %p43, %p44
      %s47 = sadd.s32 %s46, 1
      %p50 = scmp.eq.s32.totalorder %s12, 1
      %p51 = scmp.ne.s32.totalorder %s46, %s48
      %p52 = scmp.eq.s32.totalorder %s12, 0
      %p53 = por %p51, %p52
      %p54 = scmp.ne.s32.totalorder %s46, %s48
      %p55 = scmp.eq.s32.totalorder %s17, 1
      %p56 = por %p54, %p55
      %p57 = scmp.ne.s32.totalorder %s48, %s49
      %p58 = scmp.eq.s32.totalorder %s17, 0
      %p59 = por %p57, %p58
      %p60 = scmp.ne.s32.totalorder %s48, %s49
      %p61 = scmp.eq.s32.totalorder %s18, 1
      %p62 = por %p60, %p61
      %p64 = scmp.ne.s32.totalorder %s49, %s63
      %p65 = scmp.eq.s32.totalorder %s18, 0
      %p66 = por %p64, %p65
      %s68 = sadd.s32 %s67, 1
      %p71 = scmp.eq.s32.totalorder %s12, 1
      %p72 = scmp.ne.s32.totalorder %s67, %s69
      %p73 = scmp.eq.s32.totalorder %s12, 0
      %p74 = por %p72, %p73
      %p75 = scmp.ne.s32.totalorder %s67, %s69
      %p76 = scmp.eq.s32.totalorder %s17, 1
      %p77 = por %p75, %p76
      %p78 = scmp.ne.s32.totalorder %s69, %s70
      %p79 = scmp.eq.s32.totalorder %s17, 0
      %p80 = por %p78, %p79
      %p81 = scmp.ne.s32.totalorder %s69, %s70
      %p82 = scmp.eq.s32.totalorder %s18, 1
      %p83 = por %p81, %p82
      %p85 = scmp.ne.s32.totalorder %s70, %s84
      %p86 = scmp.eq.s32.totalorder %s18, 0
      %p87 = por %p85, %p86
      %s88 = ssub.s32 %s12, %s19
      %p89 = scmp.eq.s32.totalorder %s88, 0
      %s91 = sadd.s32 %s90, 1
      %s92 = scalar_select %p89, %s90, %s91
      %p95 = pneg %p89
      %p96 = scmp.eq.s32.totalorder %s12, 1
      %p97 = por %p95, %p96
      %p98 = scmp.ne.s32.totalorder %s90, %s93
      %p99 = scmp.eq.s32.totalorder %s12, 0
      %p100 = por %p98, %p99
      %p101 = scmp.ne.s32.totalorder %s90, %s93
      %p102 = scmp.eq.s32.totalorder %s17, 1
      %p103 = por %p101, %p102
      %p104 = scmp.ne.s32.totalorder %s93, %s94
      %p105 = scmp.eq.s32.totalorder %s17, 0
      %p106 = por %p104, %p105
      %p107 = scmp.ne.s32.totalorder %s93, %s94
      %p108 = scmp.eq.s32.totalorder %s18, 1
      %p109 = por %p107, %p108
      %p111 = scmp.ne.s32.totalorder %s94, %s110
      %p112 = scmp.eq.s32.totalorder %s18, 0
      %p113 = por %p111, %p112
      %p114 = scmp.le.s32.totalorder 1, %s12
      %p115 = scmp.lt.s32.totalorder %s12, 3
      %p116 = pnand %p114, %p115
      %p117 = pneg %p116
      // Predicated region
      $region9: #{_lambda_.13} parent=5 // pred_check
        _
      $region10: #{_lambda_.13} parent=5 // pred_check_branch
        %119 = sbr.rel (%p116) target = $region12
      $region11: #{_lambda_.13} parent=5 // pred_region
        %s120 = ssub.s32 %s12, 1
        // Predicated region
        $region13: #{_lambda_.13} parent=11 // pred_check
          %p121 = pneg %p59
        $region14: #{_lambda_.13} parent=11 // pred_check_branch
          %123 = sbr.rel (%p121) target = $region16
        $region15: #{_lambda_.13} parent=11 // pred_region
          _
        $region16: #{_lambda_.13} parent=11 // pred_fallthru
          _
        // Predicated region
        $region17: #{_lambda_.13} parent=11 // pred_check
          %p124 = pneg %p80
        $region18: #{_lambda_.13} parent=11 // pred_check_branch
          %126 = sbr.rel (%p124) target = $region20
        $region19: #{_lambda_.13} parent=11 // pred_region
          _
        $region20: #{_lambda_.13} parent=11 // pred_fallthru
          _
      $region12: #{_lambda_.13} parent=5 // pred_fallthru
        _
      %p127 = scmp.lt.s32.totalorder %s12, 2
      // Predicated region
      $region21: #{_lambda_.13} parent=5 // pred_check
        %p128 = pneg %p127
      $region22: #{_lambda_.13} parent=5 // pred_check_branch
        %130 = sbr.rel (%p128) target = $region24
      $region23: #{_lambda_.13} parent=5 // pred_region
        // Predicated region
        $region25: #{_lambda_.13} parent=23 // pred_check
          %p131 = pneg %p32
        $region26: #{_lambda_.13} parent=23 // pred_check_branch
          %133 = sbr.rel (%p131) target = $region28
        $region27: #{_lambda_.13} parent=23 // pred_region
          %p134 = scmp.lt.s32.totalorder %s12, 1
          %s135 = scalar_select %p134, %s12, 1
          %s136 = smul.addr %s135, 8
          %s137 = scalar_lea.vmem %s0, %s136
        $region28: #{_lambda_.13} parent=23 // pred_fallthru
          _
      $region24: #{_lambda_.13} parent=5 // pred_fallthru
        _
      %p138 = scmp.le.s32.totalorder 1, %s12
      %p139 = scmp.lt.s32.totalorder %s12, 3
      %p140 = pnand %p138, %p139
      %p141 = pneg %p140
      // Predicated region
      $region29: #{_lambda_.13} parent=5 // pred_check
        _
      $region30: #{_lambda_.13} parent=5 // pred_check_branch
        %143 = sbr.rel (%p140) target = $region32
      $region31: #{_lambda_.13} parent=5 // pred_region
        %s144 = ssub.s32 %s12, 1
        %p145 = scmp.lt.s32.totalorder %s17, 1
        %s146 = scalar_select %p145, %s17, 1
        %s147 = smul.addr %s146, 8
        %s148 = scalar_lea.vmem %s0, %s147
        %p149 = pneg %p38
        %p150 = pneg %p35
        %p151 = pneg %p59
        %p152 = pneg %p56
        %p153 = pneg %p80
        %p154 = pneg %p77
        %p155 = pneg %p106
        %p156 = pneg %p103
        %s157 = sand.u32 %s93, 1
        %s158 = scalar_lea.sflag [#allocation3], %s157
        %s159 = sand.u32 %s93, 1
        %s160 = smul.addr %s159, 8
        %s161 = scalar_lea.vmem [#allocation2], %s160
        %p162 = scmp.lt.s32.totalorder %s17, 1
        %s163 = scalar_select %p162, %s17, 1
        %s164 = smul.addr %s163, 8
        %s165 = scalar_lea.vmem %s0, %s164
        %v166 = vld [vmem:[%s165] sm:$0xff]
        %v167 = vld [vmem:[%s1] sm:$0x1]
        %v168 = vld [vmem:[%s2] sm:$0x1]
        %vm169 = vcmask 261120
        %v170 = vsel %vm169, %v166, 0.0
        %171 = vadd.xlane.f32.xlu0 %v170
        %v172 = vpop.xlane.xlu0 %171
        %v173 = vrcp.pop 32.0
        %v174 = vmul.f32 32.0, %v173
        %v175 = vsub.f32 1.0, %v174
        %v176 = vmul.f32 %v173, %v175
        %v177 = vadd.f32 %v173, %v176
        %vm178 = vweird.f32 %v173
        %v179 = vsel %vm178, %v173, %v177
        %v180 = vmul.f32 %v172, %v179
        %v181 = vsub.f32 %v166, %v180
        %v182 = vmul.f32 %v181, %v181
        %v183 = vsel %vm169, %v182, 0.0
        %184 = vadd.xlane.f32.xlu0 %v183
        %v185 = vpop.xlane.xlu0 %184
        %v186 = vmul.f32 %v185, 0.032258064
        %v187 = vrsqrt.pop %v186
        %v188 = vmul.f32 %v187, %v186
        %v189 = vmul.f32 %v188, %v187
        %v190 = vmul.f32 0.5, %v189
        %v191 = vsub.f32 1.5, %v190
        %v192 = vmul.f32 %v187, %v191
        %v193 = vmul.f32 %v186, %v192
        %vm194 = vcmp.eq.f32.partialorder %v186, inf
        %v195 = vsel %vm194, %v186, %v193
        %vm196 = vcmp.eq.f32.partialorder %v186, 0.0
        %v197 = vand.u32 %v186, 2147483648
        %v198 = vsel %vm196, %v197, %v195
        %v199 = vadd.f32 %v198, 1e-06
        %v200 = vrcp.pop %v199
        %v201 = vmul.f32 %v199, %v200
        %v202 = vsub.f32 1.0, %v201
        %v203 = vmul.f32 %v200, %v202
        %v204 = vadd.f32 %v200, %v203
        %vm205 = vweird.f32 %v199
        %vm206 = vweird.f32 %v200
        %vm207 = vmor %vm205, %vm206
        %v208 = vsel %vm207, %v200, %v204
        %v209 = vand.u32 2147483647, %v199
        %vm210 = vcmp.eq.f32.partialorder %v209, 8.507059e+37
        %v211 = vand.u32 %v199, 2147483648
        %v212 = vor.u32 1.1754944e-38, %v211
        %v213 = vsel %vm210, %v212, %v208
        %v215 = vperm.slane %v167, 0
        %v217 = vmul.f32 %v215, %v181
        %v218 = vmul.f32 %v217, %v213
        %v220 = vperm.slane %v168, 0
        %v222 = vadd.f32 %v218, %v220
        %223 = vst.msk [vmem:[%s161] sm:$0xff] %vm169, %v222
        %s224 = sand.u32 %s93, 1
        %s225 = scalar_lea.sflag [#allocation3], %s224
        %s226 = sand.u32 %s93, 1
        %s227 = smul.addr %s226, 8
        %s228 = scalar_lea.vmem [#allocation2], %s227
        // Predicated region
        $region33: #{_lambda_.13} parent=31 // pred_check
          %p229 = pneg %p103
        $region34: #{_lambda_.13} parent=31 // pred_check_branch
          %231 = sbr.rel (%p229) target = $region36
        $region35: #{_lambda_.13} parent=31 // pred_region
          %233 = vsyncadd %s225, 0
          %s234 = smul.addr %s17, 8
          %s235 = scalar_lea.hbm %s3, %s234
          %s237 = sshll.u32 %s228, 4
          %s238 = int_to_ptr.vmem [resolvable:$true] %s237
          %s239 = sshll.u32 %s235, 4
          %s240 = int_to_ptr.hbm [resolvable:$true] %s239
          %242 = dma.vmem_to_hbm [thread:$0]  %s238, 128, %s240, %s225
        $region36: #{_lambda_.13} parent=31 // pred_fallthru
          _
      $region32: #{_lambda_.13} parent=5 // pred_fallthru
        _
      %p243 = scmp.le.s32.totalorder 2, %s12
      // Predicated region
      $region37: #{_lambda_.13} parent=5 // pred_check
        %p244 = pneg %p243
      $region38: #{_lambda_.13} parent=5 // pred_check_branch
        %246 = sbr.rel (%p244) target = $region40
      $region39: #{_lambda_.13} parent=5 // pred_region
        %s247 = ssub.s32 %s12, 2
        // Predicated region
        $region41: #{_lambda_.13} parent=39 // pred_check
          %p248 = pneg %p109
        $region42: #{_lambda_.13} parent=39 // pred_check_branch
          %250 = sbr.rel (%p248) target = $region44
        $region43: #{_lambda_.13} parent=39 // pred_region
          %s251 = sand.u32 %s94, 1
          %s252 = scalar_lea.sflag [#allocation3], %s251
          %s253 = sand.u32 %s94, 1
          %s254 = smul.addr %s253, 8
          %s255 = scalar_lea.vmem [#allocation2], %s254
          %257 = dma.done %s252, 128
        $region44: #{_lambda_.13} parent=39 // pred_fallthru
          _
      $region40: #{_lambda_.13} parent=5 // pred_fallthru
        _
    $region6: #{_lambda_.13} parent=1 // loop_footer
      %s16 = sadd.s32 1, %s12
    $region7: #{_lambda_.13} parent=1 // loop_footer_branch
      %11 = sbr.rel target = $region3
    $region8: #{_lambda_.13} parent=1 // loop_exit
      _
    %258 = vsyncpa [#allocation3], 1
    %s259 = scalar_lea.sflag [#allocation3], 1
    %260 = vsyncpa %s259, 1

// kernel: _lambda_.12
$region0: #{_lambda_.12}
  #allocation0 [shape = 'u32[]', space=smem, size = 0x4, offset = 0x4, fixed_abs, tag = 'smem constant byte address 0x4 - core index']
  #allocation1 [shape = 'u32[72,128]{1,0:T(1,128)}', space=vmem, size = 0x9000, scoped, tag = 'internal scratch']
  %s0 = inlined_call_operand.vmem [shape: f32[2,8,32], index: 0, kind: input, shape index: {}]
  %s1 = inlined_call_operand.vmem [shape: f32[1,32], index: 1, kind: input, shape index: {}]
  %s2 = inlined_call_operand.vmem [shape: f32[1,32], index: 2, kind: input, shape index: {}]
  %s3 = inlined_call_operand.vmem [shape: f32[32,64], index: 3, kind: input, shape index: {}]
  %s4 = inlined_call_operand.vmem [shape: f32[1,64], index: 4, kind: input, shape index: {}]
  %s5 = inlined_call_operand.vmem [shape: f32[64,32], index: 5, kind: input, shape index: {}]
  %s6 = inlined_call_operand.vmem [shape: f32[1,32], index: 6, kind: input, shape index: {}]
  %s7 = inlined_call_operand.vmem [shape: f32[2,8,32], index: 7, kind: output, shape index: {}]
  %s8 = sld [smem:[#allocation0]]
  $region61: #{_lambda_.12} parent=0
    _
  %s10 = ssub.s32 1, %s8
  %s11 = scalar_select 0, %s10, %s8
  loop: start=0, step=1, limit=4
  $region2: #{_lambda_.12} parent=0 // loop_pre_header
    _
  $region3: #{_lambda_.12} parent=0 // loop_header
    %s13 = sphi 0, %s17
    %p14 = scmp.ge.s32.totalorder %s13, 4
    %s23 = sphi 0, %s25
    %s26 = sphi 0, %s23
    %s27 = sphi 0, %s26
    %s43 = sphi 0, %s27
    %s47 = sphi 0, %s47
    %s49 = sphi 0, %s47
    %s50 = sphi 0, %s49
    %s64 = sphi 0, %s50
    %s68 = sphi 0, %s68
    %s70 = sphi 0, %s68
    %s71 = sphi 0, %s70
    %s85 = sphi 0, %s71
    %s89 = sphi 0, %s89
    %s91 = sphi 0, %s89
    %s92 = sphi 0, %s91
    %s106 = sphi 0, %s92
    %s110 = sphi 0, %s110
    %s112 = sphi 0, %s110
    %s113 = sphi 0, %s112
    %s127 = sphi 0, %s113
    %s131 = sphi 0, %s131
    %s133 = sphi 0, %s131
    %s134 = sphi 0, %s133
    %s148 = sphi 0, %s134
    %s152 = sphi 0, %s152
    %s154 = sphi 0, %s152
    %s155 = sphi 0, %s154
    %s169 = sphi 0, %s155
    %s175 = sphi 0, %s177
    %s178 = sphi 0, %s175
    %s179 = sphi 0, %s178
    %s195 = sphi 0, %s179
  $region4: #{_lambda_.12} parent=0 // loop_header_branch
    %16 = sbr.rel (%p14) target = $region8
  $region5: #{_lambda_.12} parent=0 // loop_body
    %s18 = ssub.s32 %s13, 1
    %s19 = ssub.s32 %s13, 2
    %s20 = sadd.s32 %s13, 1
    %s21 = ssub.s32 %s13, %s20
    %p22 = scmp.eq.s32.totalorder %s21, 0
    %s24 = sadd.s32 %s23, 1
    %s25 = scalar_select %p22, %s23, %s24
    %p28 = pneg %p22
    %p29 = scmp.eq.s32.totalorder %s13, 1
    %p30 = por %p28, %p29
    %p31 = scmp.ne.s32.totalorder %s23, %s26
    %p32 = scmp.eq.s32.totalorder %s13, 0
    %p33 = por %p31, %p32
    %p34 = scmp.ne.s32.totalorder %s23, %s26
    %p35 = scmp.eq.s32.totalorder %s18, 1
    %p36 = por %p34, %p35
    %p37 = scmp.ne.s32.totalorder %s26, %s27
    %p38 = scmp.eq.s32.totalorder %s18, 0
    %p39 = por %p37, %p38
    %p40 = scmp.ne.s32.totalorder %s26, %s27
    %p41 = scmp.eq.s32.totalorder %s19, 1
    %p42 = por %p40, %p41
    %p44 = scmp.ne.s32.totalorder %s27, %s43
    %p45 = scmp.eq.s32.totalorder %s19, 0
    %p46 = por %p44, %p45
    %s48 = sadd.s32 %s47, 1
    %p51 = scmp.eq.s32.totalorder %s13, 1
    %p52 = scmp.ne.s32.totalorder %s47, %s49
    %p53 = scmp.eq.s32.totalorder %s13, 0
    %p54 = por %p52, %p53
    %p55 = scmp.ne.s32.totalorder %s47, %s49
    %p56 = scmp.eq.s32.totalorder %s18, 1
    %p57 = por %p55, %p56
    %p58 = scmp.ne.s32.totalorder %s49, %s50
    %p59 = scmp.eq.s32.totalorder %s18, 0
    %p60 = por %p58, %p59
    %p61 = scmp.ne.s32.totalorder %s49, %s50
    %p62 = scmp.eq.s32.totalorder %s19, 1
    %p63 = por %p61, %p62
    %p65 = scmp.ne.s32.totalorder %s50, %s64
    %p66 = scmp.eq.s32.totalorder %s19, 0
    %p67 = por %p65, %p66
    %s69 = sadd.s32 %s68, 1
    %p72 = scmp.eq.s32.totalorder %s13, 1
    %p73 = scmp.ne.s32.totalorder %s68, %s70
    %p74 = scmp.eq.s32.totalorder %s13, 0
    %p75 = por %p73, %p74
    %p76 = scmp.ne.s32.totalorder %s68, %s70
    %p77 = scmp.eq.s32.totalorder %s18, 1
    %p78 = por %p76, %p77
    %p79 = scmp.ne.s32.totalorder %s70, %s71
    %p80 = scmp.eq.s32.totalorder %s18, 0
    %p81 = por %p79, %p80
    %p82 = scmp.ne.s32.totalorder %s70, %s71
    %p83 = scmp.eq.s32.totalorder %s19, 1
    %p84 = por %p82, %p83
    %p86 = scmp.ne.s32.totalorder %s71, %s85
    %p87 = scmp.eq.s32.totalorder %s19, 0
    %p88 = por %p86, %p87
    %s90 = sadd.s32 %s89, 1
    %p93 = scmp.eq.s32.totalorder %s13, 1
    %p94 = scmp.ne.s32.totalorder %s89, %s91
    %p95 = scmp.eq.s32.totalorder %s13, 0
    %p96 = por %p94, %p95
    %p97 = scmp.ne.s32.totalorder %s89, %s91
    %p98 = scmp.eq.s32.totalorder %s18, 1
    %p99 = por %p97, %p98
    %p100 = scmp.ne.s32.totalorder %s91, %s92
    %p101 = scmp.eq.s32.totalorder %s18, 0
    %p102 = por %p100, %p101
    %p103 = scmp.ne.s32.totalorder %s91, %s92
    %p104 = scmp.eq.s32.totalorder %s19, 1
    %p105 = por %p103, %p104
    %p107 = scmp.ne.s32.totalorder %s92, %s106
    %p108 = scmp.eq.s32.totalorder %s19, 0
    %p109 = por %p107, %p108
    %s111 = sadd.s32 %s110, 1
    %p114 = scmp.eq.s32.totalorder %s13, 1
    %p115 = scmp.ne.s32.totalorder %s110, %s112
    %p116 = scmp.eq.s32.totalorder %s13, 0
    %p117 = por %p115, %p116
    %p118 = scmp.ne.s32.totalorder %s110, %s112
    %p119 = scmp.eq.s32.totalorder %s18, 1
    %p120 = por %p118, %p119
    %p121 = scmp.ne.s32.totalorder %s112, %s113
    %p122 = scmp.eq.s32.totalorder %s18, 0
    %p123 = por %p121, %p122
    %p124 = scmp.ne.s32.totalorder %s112, %s113
    %p125 = scmp.eq.s32.totalorder %s19, 1
    %p126 = por %p124, %p125
    %p128 = scmp.ne.s32.totalorder %s113, %s127
    %p129 = scmp.eq.s32.totalorder %s19, 0
    %p130 = por %p128, %p129
    %s132 = sadd.s32 %s131, 1
    %p135 = scmp.eq.s32.totalorder %s13, 1
    %p136 = scmp.ne.s32.totalorder %s131, %s133
    %p137 = scmp.eq.s32.totalorder %s13, 0
    %p138 = por %p136, %p137
    %p139 = scmp.ne.s32.totalorder %s131, %s133
    %p140 = scmp.eq.s32.totalorder %s18, 1
    %p141 = por %p139, %p140
    %p142 = scmp.ne.s32.totalorder %s133, %s134
    %p143 = scmp.eq.s32.totalorder %s18, 0
    %p144 = por %p142, %p143
    %p145 = scmp.ne.s32.totalorder %s133, %s134
    %p146 = scmp.eq.s32.totalorder %s19, 1
    %p147 = por %p145, %p146
    %p149 = scmp.ne.s32.totalorder %s134, %s148
    %p150 = scmp.eq.s32.totalorder %s19, 0
    %p151 = por %p149, %p150
    %s153 = sadd.s32 %s152, 1
    %p156 = scmp.eq.s32.totalorder %s13, 1
    %p157 = scmp.ne.s32.totalorder %s152, %s154
    %p158 = scmp.eq.s32.totalorder %s13, 0
    %p159 = por %p157, %p158
    %p160 = scmp.ne.s32.totalorder %s152, %s154
    %p161 = scmp.eq.s32.totalorder %s18, 1
    %p162 = por %p160, %p161
    %p163 = scmp.ne.s32.totalorder %s154, %s155
    %p164 = scmp.eq.s32.totalorder %s18, 0
    %p165 = por %p163, %p164
    %p166 = scmp.ne.s32.totalorder %s154, %s155
    %p167 = scmp.eq.s32.totalorder %s19, 1
    %p168 = por %p166, %p167
    %p170 = scmp.ne.s32.totalorder %s155, %s169
    %p171 = scmp.eq.s32.totalorder %s19, 0
    %p172 = por %p170, %p171
    %s173 = ssub.s32 %s13, %s20
    %p174 = scmp.eq.s32.totalorder %s173, 0
    %s176 = sadd.s32 %s175, 1
    %s177 = scalar_select %p174, %s175, %s176
    %p180 = pneg %p174
    %p181 = scmp.eq.s32.totalorder %s13, 1
    %p182 = por %p180, %p181
    %p183 = scmp.ne.s32.totalorder %s175, %s178
    %p184 = scmp.eq.s32.totalorder %s13, 0
    %p185 = por %p183, %p184
    %p186 = scmp.ne.s32.totalorder %s175, %s178
    %p187 = scmp.eq.s32.totalorder %s18, 1
    %p188 = por %p186, %p187
    %p189 = scmp.ne.s32.totalorder %s178, %s179
    %p190 = scmp.eq.s32.totalorder %s18, 0
    %p191 = por %p189, %p190
    %p192 = scmp.ne.s32.totalorder %s178, %s179
    %p193 = scmp.eq.s32.totalorder %s19, 1
    %p194 = por %p192, %p193
    %p196 = scmp.ne.s32.totalorder %s179, %s195
    %p197 = scmp.eq.s32.totalorder %s19, 0
    %p198 = por %p196, %p197
    %p199 = scmp.le.s32.totalorder 1, %s13
    %p200 = scmp.lt.s32.totalorder %s13, 3
    %p201 = pnand %p199, %p200
    %p202 = pneg %p201
    // Predicated region
    $region9: #{_lambda_.12} parent=5 // pred_check
      _
    $region10: #{_lambda_.12} parent=5 // pred_check_branch
      %204 = sbr.rel (%p201) target = $region12
    $region11: #{_lambda_.12} parent=5 // pred_region
      %s205 = ssub.s32 %s13, 1
      // Predicated region
      $region13: #{_lambda_.12} parent=11 // pred_check
        %p206 = pneg %p60
      $region14: #{_lambda_.12} parent=11 // pred_check_branch
        %208 = sbr.rel (%p206) target = $region16
      $region15: #{_lambda_.12} parent=11 // pred_region
        _
      $region16: #{_lambda_.12} parent=11 // pred_fallthru
        _
      // Predicated region
      $region17: #{_lambda_.12} parent=11 // pred_check
        %p209 = pneg %p81
      $region18: #{_lambda_.12} parent=11 // pred_check_branch
        %211 = sbr.rel (%p209) target = $region20
      $region19: #{_lambda_.12} parent=11 // pred_region
        _
      $region20: #{_lambda_.12} parent=11 // pred_fallthru
        _
      // Predicated region
      $region21: #{_lambda_.12} parent=11 // pred_check
        %p212 = pneg %p102
      $region22: #{_lambda_.12} parent=11 // pred_check_branch
        %214 = sbr.rel (%p212) target = $region24
      $region23: #{_lambda_.12} parent=11 // pred_region
        _
      $region24: #{_lambda_.12} parent=11 // pred_fallthru
        _
      // Predicated region
      $region25: #{_lambda_.12} parent=11 // pred_check
        %p215 = pneg %p123
      $region26: #{_lambda_.12} parent=11 // pred_check_branch
        %217 = sbr.rel (%p215) target = $region28
      $region27: #{_lambda_.12} parent=11 // pred_region
        _
      $region28: #{_lambda_.12} parent=11 // pred_fallthru
        _
      // Predicated region
      $region29: #{_lambda_.12} parent=11 // pred_check
        %p218 = pneg %p144
      $region30: #{_lambda_.12} parent=11 // pred_check_branch
        %220 = sbr.rel (%p218) target = $region32
      $region31: #{_lambda_.12} parent=11 // pred_region
        _
      $region32: #{_lambda_.12} parent=11 // pred_fallthru
        _
      // Predicated region
      $region33: #{_lambda_.12} parent=11 // pred_check
        %p221 = pneg %p165
      $region34: #{_lambda_.12} parent=11 // pred_check_branch
        %223 = sbr.rel (%p221) target = $region36
      $region35: #{_lambda_.12} parent=11 // pred_region
        _
      $region36: #{_lambda_.12} parent=11 // pred_fallthru
        _
    $region12: #{_lambda_.12} parent=5 // pred_fallthru
      _
    %p224 = scmp.lt.s32.totalorder %s13, 2
    // Predicated region
    $region37: #{_lambda_.12} parent=5 // pred_check
      %p225 = pneg %p224
    $region38: #{_lambda_.12} parent=5 // pred_check_branch
      %227 = sbr.rel (%p225) target = $region40
    $region39: #{_lambda_.12} parent=5 // pred_region
      // Predicated region
      $region41: #{_lambda_.12} parent=39 // pred_check
        %p228 = pneg %p33
      $region42: #{_lambda_.12} parent=39 // pred_check_branch
        %230 = sbr.rel (%p228) target = $region44
      $region43: #{_lambda_.12} parent=39 // pred_region
        %p231 = scmp.lt.s32.totalorder %s13, 1
        %s232 = scalar_select %p231, %s13, 1
        %s233 = smul.addr %s232, 8
        %s234 = scalar_lea.vmem %s0, %s233
      $region44: #{_lambda_.12} parent=39 // pred_fallthru
        _
    $region40: #{_lambda_.12} parent=5 // pred_fallthru
      _
    %p235 = scmp.le.s32.totalorder 1, %s13
    %p236 = scmp.lt.s32.totalorder %s13, 3
    %p237 = pnand %p235, %p236
    %p238 = pneg %p237
    // Predicated region
    $region45: #{_lambda_.12} parent=5 // pred_check
      _
    $region46: #{_lambda_.12} parent=5 // pred_check_branch
      %240 = sbr.rel (%p237) target = $region48
    $region47: #{_lambda_.12} parent=5 // pred_region
      %s241 = ssub.s32 %s13, 1
      %p242 = scmp.lt.s32.totalorder %s18, 1
      %s243 = scalar_select %p242, %s18, 1
      %s244 = smul.addr %s243, 8
      %s245 = scalar_lea.vmem %s0, %s244
      %p246 = pneg %p39
      %p247 = pneg %p36
      %p248 = pneg %p60
      %p249 = pneg %p57
      %p250 = pneg %p81
      %p251 = pneg %p78
      %p252 = pneg %p102
      %p253 = pneg %p99
      %p254 = pneg %p123
      %p255 = pneg %p120
      %p256 = pneg %p144
      %p257 = pneg %p141
      %p258 = pneg %p165
      %p259 = pneg %p162
      %p260 = pneg %p191
      %p261 = pneg %p188
      %p262 = scmp.lt.s32.totalorder %s18, 1
      %s263 = scalar_select %p262, %s18, 1
      %s264 = smul.addr %s263, 8
      %s265 = scalar_lea.vmem %s7, %s264
      %p266 = scmp.lt.s32.totalorder %s18, 1
      %s267 = scalar_select %p266, %s18, 1
      %s268 = smul.addr %s267, 8
      %s269 = scalar_lea.vmem %s0, %s268
      %p270 = scmp.lt.s32.totalorder %s18, 1
      %s271 = scalar_select %p270, %s18, 1
      %s272 = smul.addr %s271, 8
      %s273 = scalar_lea.vmem %s7, %s272
      %v274 = vld [vmem:[%s269] sm:$0xff]
      %v275 = vld [vmem:[%s1] sm:$0x1]
      %v276 = vld [vmem:[%s2] sm:$0x1]
      %vm277 = vcmask 261120
      %v278 = vsel %vm277, %v274, 0.0
      %279 = vadd.xlane.f32.xlu0 %v278
      %v280 = vpop.xlane.xlu0 %279
      %v281 = vrcp.pop 32.0
      %v282 = vmul.f32 32.0, %v281
      %v283 = vsub.f32 1.0, %v282
      %v284 = vmul.f32 %v281, %v283
      %v285 = vadd.f32 %v281, %v284
      %vm286 = vweird.f32 %v281
      %v287 = vsel %vm286, %v281, %v285
      %v288 = vmul.f32 %v280, %v287
      %v289 = vsub.f32 %v274, %v288
      %v290 = vmul.f32 %v289, %v289
      %v291 = vsel %vm277, %v290, 0.0
      %292 = vadd.xlane.f32.xlu0 %v291
      %v293 = vpop.xlane.xlu0 %292
      %v294 = vmul.f32 %v293, 0.032258064
      %v295 = vrsqrt.pop %v294
      %v296 = vmul.f32 %v295, %v294
      %v297 = vmul.f32 %v296, %v295
      %v298 = vmul.f32 0.5, %v297
      %v299 = vsub.f32 1.5, %v298
      %v300 = vmul.f32 %v295, %v299
      %v301 = vmul.f32 %v294, %v300
      %vm302 = vcmp.eq.f32.partialorder %v294, inf
      %v303 = vsel %vm302, %v294, %v301
      %vm304 = vcmp.eq.f32.partialorder %v294, 0.0
      %v305 = vand.u32 %v294, 2147483648
      %v306 = vsel %vm304, %v305, %v303
      %v307 = vadd.f32 %v306, 1e-06
      %v308 = vrcp.pop %v307
      %v309 = vmul.f32 %v307, %v308
      %v310 = vsub.f32 1.0, %v309
      %v311 = vmul.f32 %v308, %v310
      %v312 = vadd.f32 %v308, %v311
      %vm313 = vweird.f32 %v307
      %vm314 = vweird.f32 %v308
      %vm315 = vmor %vm313, %vm314
      %v316 = vsel %vm315, %v308, %v312
      %v317 = vand.u32 2147483647, %v307
      %vm318 = vcmp.eq.f32.partialorder %v317, 8.507059e+37
      %v319 = vand.u32 %v307, 2147483648
      %v320 = vor.u32 1.1754944e-38, %v319
      %v321 = vsel %vm318, %v320, %v316
      %v323 = vperm.slane %v275, 0
      %v325 = vmul.f32 %v323, %v289
      %v326 = vmul.f32 %v325, %v321
      %v328 = vperm.slane %v276, 0
      %v330 = vadd.f32 %v326, %v328
      %v331 = vld [vmem:[%s3] sm:$0xff]
      %v332 = vld [vmem:[%s3 + $0x8] sm:$0xff]
      %v333 = vld [vmem:[%s3 + $0x10] sm:$0xff]
      %v334 = vld [vmem:[%s3 + $0x18] sm:$0xff]
      %v335 = vld [vmem:[%s4] sm:$0x1]
      %v337 = vperm.slane %v335, 0
      %v340 = vsel %vm277, %v330, 0
      %342 = vmatpush.msra.mxu0 0.0
      %343 = vmatpush.msra.mxu0 0.0
      %344 = vmatpush.msra.mxu0 0.0
      %345 = vmatpush.msra.mxu0 0.0
      %346 = vmatpush.msra.mxu0 0.0
      %347 = vmatpush.msra.mxu0 0.0
      %348 = vmatpush.msra.mxu0 0.0
      %349 = vmatpush.msra.mxu0 0.0
      %350 = vmatpush.msra.mxu0 0.0
      %351 = vmatpush.msra.mxu0 0.0
      %352 = vmatpush.msra.mxu0 0.0
      %353 = vmatpush.msra.mxu0 0.0
      %354 = vmatpush.msra.mxu0 %v334
      %355 = vmatpush.msra.mxu0 %v333
      %356 = vmatpush.msra.mxu0 %v332
      %357 = vmatpush.msra.mxu0 %v331
      %358 = vmatmul.f32.gmra.mxu0 %v340
      %v359 = vpop.f32.mrf.mxu0
      %v360 = vadd.f32 %v337, %v359
      %361 = vdwg.mxu0
      %v362 = vmax.f32 %v360, 0.0
      %v363 = vld [vmem:[%s5] sm:$0xff]
      %v364 = vld [vmem:[%s5 + $0x8] sm:$0xff]
      %v365 = vld [vmem:[%s5 + $0x10] sm:$0xff]
      %v366 = vld [vmem:[%s5 + $0x18] sm:$0xff]
      %v367 = vld [vmem:[%s5 + $0x20] sm:$0xff]
      %v368 = vld [vmem:[%s5 + $0x28] sm:$0xff]
      %v369 = vld [vmem:[%s5 + $0x30] sm:$0xff]
      %v370 = vld [vmem:[%s5 + $0x38] sm:$0xff]
      %v371 = vld [vmem:[%s6] sm:$0x1]
      %v373 = vperm.slane %v371, 0
      %vm375 = vcmask 523264
      %v377 = vsel %vm375, %v362, 0
      %379 = vmatpush.msra.mxu0 0.0
      %380 = vmatpush.msra.mxu0 0.0
      %381 = vmatpush.msra.mxu0 0.0
      %382 = vmatpush.msra.mxu0 0.0
      %383 = vmatpush.msra.mxu0 0.0
      %384 = vmatpush.msra.mxu0 0.0
      %385 = vmatpush.msra.mxu0 0.0
      %386 = vmatpush.msra.mxu0 0.0
      %387 = vmatpush.msra.mxu0 %v370
      %388 = vmatpush.msra.mxu0 %v369
      %389 = vmatpush.msra.mxu0 %v368
      %390 = vmatpush.msra.mxu0 %v367
      %391 = vmatpush.msra.mxu0 %v366
      %392 = vmatpush.msra.mxu0 %v365
      %393 = vmatpush.msra.mxu0 %v364
      %394 = vmatpush.msra.mxu0 %v363
      %395 = vmatmul.f32.gmra.mxu0 %v377
      %v396 = vpop.f32.mrf.mxu0
      %v397 = vadd.f32 %v373, %v396
      %398 = vdwg.mxu0
      %v399 = vadd.f32 %v274, %v397
      %400 = vst.msk [vmem:[%s273] sm:$0xff] %vm277, %v399
      %p401 = scmp.lt.s32.totalorder %s18, 1
      %s402 = scalar_select %p401, %s18, 1
      %s403 = smul.addr %s402, 8
      %s404 = scalar_lea.vmem %s7, %s403
      // Predicated region
      $region49: #{_lambda_.12} parent=47 // pred_check
        %p405 = pneg %p188
      $region50: #{_lambda_.12} parent=47 // pred_check_branch
        %407 = sbr.rel (%p405) target = $region52
      $region51: #{_lambda_.12} parent=47 // pred_region
        _
      $region52: #{_lambda_.12} parent=47 // pred_fallthru
        _
    $region48: #{_lambda_.12} parent=5 // pred_fallthru
      _
    %p408 = scmp.le.s32.totalorder 2, %s13
    // Predicated region
    $region53: #{_lambda_.12} parent=5 // pred_check
      %p409 = pneg %p408
    $region54: #{_lambda_.12} parent=5 // pred_check_branch
      %411 = sbr.rel (%p409) target = $region56
    $region55: #{_lambda_.12} parent=5 // pred_region
      %s412 = ssub.s32 %s13, 2
      // Predicated region
      $region57: #{_lambda_.12} parent=55 // pred_check
        %p413 = pneg %p194
      $region58: #{_lambda_.12} parent=55 // pred_check_branch
        %415 = sbr.rel (%p413) target = $region60
      $region59: #{_lambda_.12} parent=55 // pred_region
        %p416 = scmp.lt.s32.totalorder %s19, 1
        %s417 = scalar_select %p416, %s19, 1
        %s418 = smul.addr %s417, 8
        %s419 = scalar_lea.vmem %s7, %s418
      $region60: #{_lambda_.12} parent=55 // pred_fallthru
        _
    $region56: #{_lambda_.12} parent=5 // pred_fallthru
      _
  $region6: #{_lambda_.12} parent=0 // loop_footer
    %s17 = sadd.s32 1, %s13
  $region7: #{_lambda_.12} parent=0 // loop_footer_branch
    %12 = sbr.rel target = $region3
  $region8: #{_lambda_.12} parent=0 // loop_exit
    _

// kernel: _lambda_.11
$region0: #{_lambda_.11}
  #allocation0 [shape = 'u32[]', space=smem, size = 0x4, offset = 0x4, fixed_abs, tag = 'smem constant byte address 0x4 - core index']
  #allocation1 [shape = 'u32[72,128]{1,0:T(1,128)}', space=vmem, size = 0x9000, scoped, tag = 'internal scratch']
  %s0 = inlined_call_operand.vmem [shape: f32[2,8,32], index: 0, kind: input, shape index: {}]
  %s1 = inlined_call_operand.hbm [shape: f32[2,16,32], index: 1, kind: input, shape index: {}]
  %s2 = inlined_call_operand.vmem [shape: s32[2,1,16], index: 2, kind: input, shape index: {}]
  %s3 = inlined_call_operand.vmem [shape: f32[1,32], index: 3, kind: input, shape index: {}]
  %s4 = inlined_call_operand.hbm [shape: f32[1,32], index: 4, kind: input, shape index: {}]
  %s5 = inlined_call_operand.hbm [shape: f32[32,32], index: 5, kind: input, shape index: {}]
  %s6 = inlined_call_operand.vmem [shape: f32[1,32], index: 6, kind: input, shape index: {}]
  %s7 = inlined_call_operand.hbm [shape: f32[32,64], index: 7, kind: input, shape index: {}]
  %s8 = inlined_call_operand.vmem [shape: f32[1,64], index: 8, kind: input, shape index: {}]
  %s9 = inlined_call_operand.hbm [shape: f32[32,32], index: 9, kind: input, shape index: {}]
  %s10 = inlined_call_operand.vmem [shape: f32[1,32], index: 10, kind: input, shape index: {}]
  %s11 = inlined_call_operand.vmem [shape: f32[2,8,32], index: 11, kind: output, shape index: {}]
  %s12 = sld [smem:[#allocation0]]
  $region97: #{_lambda_.11} parent=0
    _
  %s14 = ssub.s32 1, %s12
  %s15 = scalar_select 0, %s14, %s12
  $region1: #{_lambda_.11} parent=0
    #allocation2 [shape = 'u8[16384]{0}', space=vmem, size = 0x4000, scoped, tag = 'input window, operand 1']
    #allocation3 [shape = 's32[2]{0}', space=sflag, size = 0x8, scoped, tag = 'scoped memory for _lambda_.11']
    #allocation4 [shape = 'u8[512]{0}', space=vmem, size = 0x400, scoped, tag = 'input window, operand 4, single buffered']
    #allocation5 [shape = 's32[1]{0}', space=sflag, size = 0x4, scoped, tag = 'scoped memory for _lambda_.11']
    #allocation6 [shape = 'u8[16384]{0}', space=vmem, size = 0x4000, scoped, tag = 'input window, operand 5, single buffered']
    #allocation7 [shape = 'u8[16384]{0}', space=vmem, size = 0x4000, scoped, tag = 'input window, operand 7, single buffered']
    #allocation8 [shape = 's32[1]{0}', space=sflag, size = 0x4, scoped, tag = 'scoped memory for _lambda_.11']
    #allocation9 [shape = 'u8[16384]{0}', space=vmem, size = 0x4000, scoped, tag = 'input window, operand 9, single buffered']
    %16 = vsyncpa [#allocation3], 0
    %s17 = scalar_lea.sflag [#allocation3], 1
    %18 = vsyncpa %s17, 0
    %19 = vsyncpa [#allocation5], 0
    %20 = vsyncpa [#allocation8], 0
    loop: start=0, step=1, limit=4
    $region2: #{_lambda_.11} parent=1 // loop_pre_header
      _
    $region3: #{_lambda_.11} parent=1 // loop_header
      %s22 = sphi 0, %s26
      %p23 = scmp.ge.s32.totalorder %s22, 4
      %s32 = sphi 0, %s34
      %s35 = sphi 0, %s32
      %s36 = sphi 0, %s35
      %s52 = sphi 0, %s36
      %s58 = sphi 0, %s60
      %s61 = sphi 0, %s58
      %s62 = sphi 0, %s61
      %s78 = sphi 0, %s62
      %s84 = sphi 0, %s86
      %s87 = sphi 0, %s84
      %s88 = sphi 0, %s87
      %s104 = sphi 0, %s88
      %s108 = sphi 0, %s108
      %s110 = sphi 0, %s108
      %s111 = sphi 0, %s110
      %s125 = sphi 0, %s111
      %s129 = sphi 0, %s129
      %s131 = sphi 0, %s129
      %s132 = sphi 0, %s131
      %s146 = sphi 0, %s132
      %s150 = sphi 0, %s150
      %s152 = sphi 0, %s150
      %s153 = sphi 0, %s152
      %s167 = sphi 0, %s153
      %s171 = sphi 0, %s171
      %s173 = sphi 0, %s171
      %s174 = sphi 0, %s173
      %s188 = sphi 0, %s174
      %s192 = sphi 0, %s192
      %s194 = sphi 0, %s192
      %s195 = sphi 0, %s194
      %s209 = sphi 0, %s195
      %s213 = sphi 0, %s213
      %s215 = sphi 0, %s213
      %s216 = sphi 0, %s215
      %s230 = sphi 0, %s216
      %s234 = sphi 0, %s234
      %s236 = sphi 0, %s234
      %s237 = sphi 0, %s236
      %s251 = sphi 0, %s237
      %s255 = sphi 0, %s255
      %s257 = sphi 0, %s255
      %s258 = sphi 0, %s257
      %s272 = sphi 0, %s258
      %s278 = sphi 0, %s280
      %s281 = sphi 0, %s278
      %s282 = sphi 0, %s281
      %s298 = sphi 0, %s282
    $region4: #{_lambda_.11} parent=1 // loop_header_branch
      %25 = sbr.rel (%p23) target = $region8
    $region5: #{_lambda_.11} parent=1 // loop_body
      %s27 = ssub.s32 %s22, 1
      %s28 = ssub.s32 %s22, 2
      %s29 = sadd.s32 %s22, 1
      %s30 = ssub.s32 %s22, %s29
      %p31 = scmp.eq.s32.totalorder %s30, 0
      %s33 = sadd.s32 %s32, 1
      %s34 = scalar_select %p31, %s32, %s33
      %p37 = pneg %p31
      %p38 = scmp.eq.s32.totalorder %s22, 1
      %p39 = por %p37, %p38
      %p40 = scmp.ne.s32.totalorder %s32, %s35
      %p41 = scmp.eq.s32.totalorder %s22, 0
      %p42 = por %p40, %p41
      %p43 = scmp.ne.s32.totalorder %s32, %s35
      %p44 = scmp.eq.s32.totalorder %s27, 1
      %p45 = por %p43, %p44
      %p46 = scmp.ne.s32.totalorder %s35, %s36
      %p47 = scmp.eq.s32.totalorder %s27, 0
      %p48 = por %p46, %p47
      %p49 = scmp.ne.s32.totalorder %s35, %s36
      %p50 = scmp.eq.s32.totalorder %s28, 1
      %p51 = por %p49, %p50
      %p53 = scmp.ne.s32.totalorder %s36, %s52
      %p54 = scmp.eq.s32.totalorder %s28, 0
      %p55 = por %p53, %p54
      %s56 = ssub.s32 %s22, %s29
      %p57 = scmp.eq.s32.totalorder %s56, 0
      %s59 = sadd.s32 %s58, 1
      %s60 = scalar_select %p57, %s58, %s59
      %p63 = pneg %p57
      %p64 = scmp.eq.s32.totalorder %s22, 1
      %p65 = por %p63, %p64
      %p66 = scmp.ne.s32.totalorder %s58, %s61
      %p67 = scmp.eq.s32.totalorder %s22, 0
      %p68 = por %p66, %p67
      %p69 = scmp.ne.s32.totalorder %s58, %s61
      %p70 = scmp.eq.s32.totalorder %s27, 1
      %p71 = por %p69, %p70
      %p72 = scmp.ne.s32.totalorder %s61, %s62
      %p73 = scmp.eq.s32.totalorder %s27, 0
      %p74 = por %p72, %p73
      %p75 = scmp.ne.s32.totalorder %s61, %s62
      %p76 = scmp.eq.s32.totalorder %s28, 1
      %p77 = por %p75, %p76
      %p79 = scmp.ne.s32.totalorder %s62, %s78
      %p80 = scmp.eq.s32.totalorder %s28, 0
      %p81 = por %p79, %p80
      %s82 = ssub.s32 %s22, %s29
      %p83 = scmp.eq.s32.totalorder %s82, 0
      %s85 = sadd.s32 %s84, 1
      %s86 = scalar_select %p83, %s84, %s85
      %p89 = pneg %p83
      %p90 = scmp.eq.s32.totalorder %s22, 1
      %p91 = por %p89, %p90
      %p92 = scmp.ne.s32.totalorder %s84, %s87
      %p93 = scmp.eq.s32.totalorder %s22, 0
      %p94 = por %p92, %p93
      %p95 = scmp.ne.s32.totalorder %s84, %s87
      %p96 = scmp.eq.s32.totalorder %s27, 1
      %p97 = por %p95, %p96
      %p98 = scmp.ne.s32.totalorder %s87, %s88
      %p99 = scmp.eq.s32.totalorder %s27, 0
      %p100 = por %p98, %p99
      %p101 = scmp.ne.s32.totalorder %s87, %s88
      %p102 = scmp.eq.s32.totalorder %s28, 1
      %p103 = por %p101, %p102
      %p105 = scmp.ne.s32.totalorder %s88, %s104
      %p106 = scmp.eq.s32.totalorder %s28, 0
      %p107 = por %p105, %p106
      %s109 = sadd.s32 %s108, 1
      %p112 = scmp.eq.s32.totalorder %s22, 1
      %p113 = scmp.ne.s32.totalorder %s108, %s110
      %p114 = scmp.eq.s32.totalorder %s22, 0
      %p115 = por %p113, %p114
      %p116 = scmp.ne.s32.totalorder %s108, %s110
      %p117 = scmp.eq.s32.totalorder %s27, 1
      %p118 = por %p116, %p117
      %p119 = scmp.ne.s32.totalorder %s110, %s111
      %p120 = scmp.eq.s32.totalorder %s27, 0
      %p121 = por %p119, %p120
      %p122 = scmp.ne.s32.totalorder %s110, %s111
      %p123 = scmp.eq.s32.totalorder %s28, 1
      %p124 = por %p122, %p123
      %p126 = scmp.ne.s32.totalorder %s111, %s125
      %p127 = scmp.eq.s32.totalorder %s28, 0
      %p128 = por %p126, %p127
      %s130 = sadd.s32 %s129, 1
      %p133 = scmp.eq.s32.totalorder %s22, 1
      %p134 = scmp.ne.s32.totalorder %s129, %s131
      %p135 = scmp.eq.s32.totalorder %s22, 0
      %p136 = por %p134, %p135
      %p137 = scmp.ne.s32.totalorder %s129, %s131
      %p138 = scmp.eq.s32.totalorder %s27, 1
      %p139 = por %p137, %p138
      %p140 = scmp.ne.s32.totalorder %s131, %s132
      %p141 = scmp.eq.s32.totalorder %s27, 0
      %p142 = por %p140, %p141
      %p143 = scmp.ne.s32.totalorder %s131, %s132
      %p144 = scmp.eq.s32.totalorder %s28, 1
      %p145 = por %p143, %p144
      %p147 = scmp.ne.s32.totalorder %s132, %s146
      %p148 = scmp.eq.s32.totalorder %s28, 0
      %p149 = por %p147, %p148
      %s151 = sadd.s32 %s150, 1
      %p154 = scmp.eq.s32.totalorder %s22, 1
      %p155 = scmp.ne.s32.totalorder %s150, %s152
      %p156 = scmp.eq.s32.totalorder %s22, 0
      %p157 = por %p155, %p156
      %p158 = scmp.ne.s32.totalorder %s150, %s152
      %p159 = scmp.eq.s32.totalorder %s27, 1
      %p160 = por %p158, %p159
      %p161 = scmp.ne.s32.totalorder %s152, %s153
      %p162 = scmp.eq.s32.totalorder %s27, 0
      %p163 = por %p161, %p162
      %p164 = scmp.ne.s32.totalorder %s152, %s153
      %p165 = scmp.eq.s32.totalorder %s28, 1
      %p166 = por %p164, %p165
      %p168 = scmp.ne.s32.totalorder %s153, %s167
      %p169 = scmp.eq.s32.totalorder %s28, 0
      %p170 = por %p168, %p169
      %s172 = sadd.s32 %s171, 1
      %p175 = scmp.eq.s32.totalorder %s22, 1
      %p176 = scmp.ne.s32.totalorder %s171, %s173
      %p177 = scmp.eq.s32.totalorder %s22, 0
      %p178 = por %p176, %p177
      %p179 = scmp.ne.s32.totalorder %s171, %s173
      %p180 = scmp.eq.s32.totalorder %s27, 1
      %p181 = por %p179, %p180
      %p182 = scmp.ne.s32.totalorder %s173, %s174
      %p183 = scmp.eq.s32.totalorder %s27, 0
      %p184 = por %p182, %p183
      %p185 = scmp.ne.s32.totalorder %s173, %s174
      %p186 = scmp.eq.s32.totalorder %s28, 1
      %p187 = por %p185, %p186
      %p189 = scmp.ne.s32.totalorder %s174, %s188
      %p190 = scmp.eq.s32.totalorder %s28, 0
      %p191 = por %p189, %p190
      %s193 = sadd.s32 %s192, 1
      %p196 = scmp.eq.s32.totalorder %s22, 1
      %p197 = scmp.ne.s32.totalorder %s192, %s194
      %p198 = scmp.eq.s32.totalorder %s22, 0
      %p199 = por %p197, %p198
      %p200 = scmp.ne.s32.totalorder %s192, %s194
      %p201 = scmp.eq.s32.totalorder %s27, 1
      %p202 = por %p200, %p201
      %p203 = scmp.ne.s32.totalorder %s194, %s195
      %p204 = scmp.eq.s32.totalorder %s27, 0
      %p205 = por %p203, %p204
      %p206 = scmp.ne.s32.totalorder %s194, %s195
      %p207 = scmp.eq.s32.totalorder %s28, 1
      %p208 = por %p206, %p207
      %p210 = scmp.ne.s32.totalorder %s195, %s209
      %p211 = scmp.eq.s32.totalorder %s28, 0
      %p212 = por %p210, %p211
      %s214 = sadd.s32 %s213, 1
      %p217 = scmp.eq.s32.totalorder %s22, 1
      %p218 = scmp.ne.s32.totalorder %s213, %s215
      %p219 = scmp.eq.s32.totalorder %s22, 0
      %p220 = por %p218, %p219
      %p221 = scmp.ne.s32.totalorder %s213, %s215
      %p222 = scmp.eq.s32.totalorder %s27, 1
      %p223 = por %p221, %p222
      %p224 = scmp.ne.s32.totalorder %s215, %s216
      %p225 = scmp.eq.s32.totalorder %s27, 0
      %p226 = por %p224, %p225
      %p227 = scmp.ne.s32.totalorder %s215, %s216
      %p228 = scmp.eq.s32.totalorder %s28, 1
      %p229 = por %p227, %p228
      %p231 = scmp.ne.s32.totalorder %s216, %s230
      %p232 = scmp.eq.s32.totalorder %s28, 0
      %p233 = por %p231, %p232
      %s235 = sadd.s32 %s234, 1
      %p238 = scmp.eq.s32.totalorder %s22, 1
      %p239 = scmp.ne.s32.totalorder %s234, %s236
      %p240 = scmp.eq.s32.totalorder %s22, 0
      %p241 = por %p239, %p240
      %p242 = scmp.ne.s32.totalorder %s234, %s236
      %p243 = scmp.eq.s32.totalorder %s27, 1
      %p244 = por %p242, %p243
      %p245 = scmp.ne.s32.totalorder %s236, %s237
      %p246 = scmp.eq.s32.totalorder %s27, 0
      %p247 = por %p245, %p246
      %p248 = scmp.ne.s32.totalorder %s236, %s237
      %p249 = scmp.eq.s32.totalorder %s28, 1
      %p250 = por %p248, %p249
      %p252 = scmp.ne.s32.totalorder %s237, %s251
      %p253 = scmp.eq.s32.totalorder %s28, 0
      %p254 = por %p252, %p253
      %s256 = sadd.s32 %s255, 1
      %p259 = scmp.eq.s32.totalorder %s22, 1
      %p260 = scmp.ne.s32.totalorder %s255, %s257
      %p261 = scmp.eq.s32.totalorder %s22, 0
      %p262 = por %p260, %p261
      %p263 = scmp.ne.s32.totalorder %s255, %s257
      %p264 = scmp.eq.s32.totalorder %s27, 1
      %p265 = por %p263, %p264
      %p266 = scmp.ne.s32.totalorder %s257, %s258
      %p267 = scmp.eq.s32.totalorder %s27, 0
      %p268 = por %p266, %p267
      %p269 = scmp.ne.s32.totalorder %s257, %s258
      %p270 = scmp.eq.s32.totalorder %s28, 1
      %p271 = por %p269, %p270
      %p273 = scmp.ne.s32.totalorder %s258, %s272
      %p274 = scmp.eq.s32.totalorder %s28, 0
      %p275 = por %p273, %p274
      %s276 = ssub.s32 %s22, %s29
      %p277 = scmp.eq.s32.totalorder %s276, 0
      %s279 = sadd.s32 %s278, 1
      %s280 = scalar_select %p277, %s278, %s279
      %p283 = pneg %p277
      %p284 = scmp.eq.s32.totalorder %s22, 1
      %p285 = por %p283, %p284
      %p286 = scmp.ne.s32.totalorder %s278, %s281
      %p287 = scmp.eq.s32.totalorder %s22, 0
      %p288 = por %p286, %p287
      %p289 = scmp.ne.s32.totalorder %s278, %s281
      %p290 = scmp.eq.s32.totalorder %s27, 1
      %p291 = por %p289, %p290
      %p292 = scmp.ne.s32.totalorder %s281, %s282
      %p293 = scmp.eq.s32.totalorder %s27, 0
      %p294 = por %p292, %p293
      %p295 = scmp.ne.s32.totalorder %s281, %s282
      %p296 = scmp.eq.s32.totalorder %s28, 1
      %p297 = por %p295, %p296
      %p299 = scmp.ne.s32.totalorder %s282, %s298
      %p300 = scmp.eq.s32.totalorder %s28, 0
      %p301 = por %p299, %p300
      %p302 = scmp.le.s32.totalorder 1, %s22
      %p303 = scmp.lt.s32.totalorder %s22, 3
      %p304 = pnand %p302, %p303
      %p305 = pneg %p304
      // Predicated region
      $region9: #{_lambda_.11} parent=5 // pred_check
        _
      $region10: #{_lambda_.11} parent=5 // pred_check_branch
        %307 = sbr.rel (%p304) target = $region12
      $region11: #{_lambda_.11} parent=5 // pred_region
        %s308 = ssub.s32 %s22, 1
        // Predicated region
        $region13: #{_lambda_.11} parent=11 // pred_check
          %p309 = pneg %p121
        $region14: #{_lambda_.11} parent=11 // pred_check_branch
          %311 = sbr.rel (%p309) target = $region16
        $region15: #{_lambda_.11} parent=11 // pred_region
          _
        $region16: #{_lambda_.11} parent=11 // pred_fallthru
          _
        // Predicated region
        $region17: #{_lambda_.11} parent=11 // pred_check
          %p312 = pneg %p142
        $region18: #{_lambda_.11} parent=11 // pred_check_branch
          %314 = sbr.rel (%p312) target = $region20
        $region19: #{_lambda_.11} parent=11 // pred_region
          %316 = vsyncadd [#allocation5], 0
          %s318 = sshll.u32 %s4, 4
          %s319 = int_to_ptr.hbm [resolvable:$true] %s318
          %s320 = sshll.u32 [#allocation4], 4
          %s321 = int_to_ptr.vmem [resolvable:$true] %s320
          %323 = dma.hbm_to_vmem [thread:$0]  %s319, 16, %s321, [#allocation5]
        $region20: #{_lambda_.11} parent=11 // pred_fallthru
          _
        // Predicated region
        $region21: #{_lambda_.11} parent=11 // pred_check
          %p324 = pneg %p163
        $region22: #{_lambda_.11} parent=11 // pred_check_branch
          %326 = sbr.rel (%p324) target = $region24
        $region23: #{_lambda_.11} parent=11 // pred_region
          %328 = vsyncadd [#allocation5], 0
          %s329 = sshll.u32 %s5, 4
          %s330 = int_to_ptr.hbm [resolvable:$true] %s329
          %s331 = sshll.u32 [#allocation6], 4
          %s332 = int_to_ptr.vmem [resolvable:$true] %s331
          %337 = dma.hbm_to_vmem [thread:$0]  %s330, 512, %s332, [#allocation5], 128, 128, 8
        $region24: #{_lambda_.11} parent=11 // pred_fallthru
          _
        // Predicated region
        $region25: #{_lambda_.11} parent=11 // pred_check
          %p338 = pneg %p184
        $region26: #{_lambda_.11} parent=11 // pred_check_branch
          %340 = sbr.rel (%p338) target = $region28
        $region27: #{_lambda_.11} parent=11 // pred_region
          _
        $region28: #{_lambda_.11} parent=11 // pred_fallthru
          _
        // Predicated region
        $region29: #{_lambda_.11} parent=11 // pred_check
          %p341 = pneg %p205
        $region30: #{_lambda_.11} parent=11 // pred_check_branch
          %343 = sbr.rel (%p341) target = $region32
        $region31: #{_lambda_.11} parent=11 // pred_region
          %345 = vsyncadd [#allocation8], 0
          %s346 = sshll.u32 %s7, 4
          %s347 = int_to_ptr.hbm [resolvable:$true] %s346
          %s348 = sshll.u32 [#allocation7], 4
          %s349 = int_to_ptr.vmem [resolvable:$true] %s348
          %354 = dma.hbm_to_vmem [thread:$0]  %s347, 512, %s349, [#allocation8], 128, 128, 8
        $region32: #{_lambda_.11} parent=11 // pred_fallthru
          _
        // Predicated region
        $region33: #{_lambda_.11} parent=11 // pred_check
          %p355 = pneg %p226
        $region34: #{_lambda_.11} parent=11 // pred_check_branch
          %357 = sbr.rel (%p355) target = $region36
        $region35: #{_lambda_.11} parent=11 // pred_region
          _
        $region36: #{_lambda_.11} parent=11 // pred_fallthru
          _
        // Predicated region
        $region37: #{_lambda_.11} parent=11 // pred_check
          %p358 = pneg %p247
        $region38: #{_lambda_.11} parent=11 // pred_check_branch
          %360 = sbr.rel (%p358) target = $region40
        $region39: #{_lambda_.11} parent=11 // pred_region
          %362 = vsyncadd [#allocation8], 0
          %s363 = sshll.u32 %s9, 4
          %s364 = int_to_ptr.hbm [resolvable:$true] %s363
          %s365 = sshll.u32 [#allocation9], 4
          %s366 = int_to_ptr.vmem [resolvable:$true] %s365
          %371 = dma.hbm_to_vmem [thread:$0]  %s364, 512, %s366, [#allocation8], 128, 128, 8
        $region40: #{_lambda_.11} parent=11 // pred_fallthru
          _
        // Predicated region
        $region41: #{_lambda_.11} parent=11 // pred_check
          %p372 = pneg %p268
        $region42: #{_lambda_.11} parent=11 // pred_check_branch
          %374 = sbr.rel (%p372) target = $region44
        $region43: #{_lambda_.11} parent=11 // pred_region
          _
        $region44: #{_lambda_.11} parent=11 // pred_fallthru
          _
      $region12: #{_lambda_.11} parent=5 // pred_fallthru
        _
      %p375 = scmp.lt.s32.totalorder %s22, 2
      // Predicated region
      $region45: #{_lambda_.11} parent=5 // pred_check
        %p376 = pneg %p375
      $region46: #{_lambda_.11} parent=5 // pred_check_branch
        %378 = sbr.rel (%p376) target = $region48
      $region47: #{_lambda_.11} parent=5 // pred_region
        // Predicated region
        $region49: #{_lambda_.11} parent=47 // pred_check
          %p379 = pneg %p42
        $region50: #{_lambda_.11} parent=47 // pred_check_branch
          %381 = sbr.rel (%p379) target = $region52
        $region51: #{_lambda_.11} parent=47 // pred_region
          %p382 = scmp.lt.s32.totalorder %s22, 1
          %s383 = scalar_select %p382, %s22, 1
          %s384 = smul.addr %s383, 8
          %s385 = scalar_lea.vmem %s0, %s384
        $region52: #{_lambda_.11} parent=47 // pred_fallthru
          _
        // Predicated region
        $region53: #{_lambda_.11} parent=47 // pred_check
          %p386 = pneg %p68
        $region54: #{_lambda_.11} parent=47 // pred_check_branch
          %388 = sbr.rel (%p386) target = $region56
        $region55: #{_lambda_.11} parent=47 // pred_region
          %s389 = sand.u32 %s58, 1
          %s390 = scalar_lea.sflag [#allocation3], %s389
          %s391 = sand.u32 %s58, 1
          %s392 = smul.addr %s391, 16
          %s393 = scalar_lea.vmem [#allocation2], %s392
          %395 = vsyncadd %s390, 0
          %s396 = smul.addr %s22, 2
          %s397 = smul.addr %s396, 8
          %s398 = scalar_lea.hbm %s1, %s397
          %s399 = sshll.u32 %s398, 4
          %s400 = int_to_ptr.hbm [resolvable:$true] %s399
          %s401 = sshll.u32 %s393, 4
          %s402 = int_to_ptr.vmem [resolvable:$true] %s401
          %407 = dma.hbm_to_vmem [thread:$0]  %s400, 256, %s402, %s390, 128, 128, 8
        $region56: #{_lambda_.11} parent=47 // pred_fallthru
          _
        // Predicated region
        $region57: #{_lambda_.11} parent=47 // pred_check
          %p408 = pneg %p94
        $region58: #{_lambda_.11} parent=47 // pred_check_branch
          %410 = sbr.rel (%p408) target = $region60
        $region59: #{_lambda_.11} parent=47 // pred_region
          %p411 = scmp.lt.s32.totalorder %s22, 1
          %s412 = scalar_select %p411, %s22, 1
          %s413 = scalar_lea.vmem %s2, %s412
        $region60: #{_lambda_.11} parent=47 // pred_fallthru
          _
      $region48: #{_lambda_.11} parent=5 // pred_fallthru
        _
      %p414 = scmp.le.s32.totalorder 1, %s22
      %p415 = scmp.lt.s32.totalorder %s22, 3
      %p416 = pnand %p414, %p415
      %p417 = pneg %p416
      // Predicated region
      $region61: #{_lambda_.11} parent=5 // pred_check
        _
      $region62: #{_lambda_.11} parent=5 // pred_check_branch
        %419 = sbr.rel (%p416) target = $region64
      $region63: #{_lambda_.11} parent=5 // pred_region
        %s420 = ssub.s32 %s22, 1
        %s421 = sand.u32 %s61, 1
        %s422 = scalar_lea.sflag [#allocation3], %s421
        %s423 = sand.u32 %s61, 1
        %s424 = smul.addr %s423, 16
        %s425 = scalar_lea.vmem [#allocation2], %s424
        // Predicated region
        $region65: #{_lambda_.11} parent=63 // pred_check
          %p426 = pneg %p74
        $region66: #{_lambda_.11} parent=63 // pred_check_branch
          %428 = sbr.rel (%p426) target = $region68
        $region67: #{_lambda_.11} parent=63 // pred_region
          %430 = dma.done %s422, 256
        $region68: #{_lambda_.11} parent=63 // pred_fallthru
          _
        // Predicated region
        $region69: #{_lambda_.11} parent=63 // pred_check
          %p431 = pneg %p142
        $region70: #{_lambda_.11} parent=63 // pred_check_branch
          %433 = sbr.rel (%p431) target = $region72
        $region71: #{_lambda_.11} parent=63 // pred_region
          %435 = dma.done [#allocation5], 16
        $region72: #{_lambda_.11} parent=63 // pred_fallthru
          _
        // Predicated region
        $region73: #{_lambda_.11} parent=63 // pred_check
          %p436 = pneg %p163
        $region74: #{_lambda_.11} parent=63 // pred_check_branch
          %438 = sbr.rel (%p436) target = $region76
        $region75: #{_lambda_.11} parent=63 // pred_region
          %440 = dma.done [#allocation5], 512
        $region76: #{_lambda_.11} parent=63 // pred_fallthru
          _
        // Predicated region
        $region77: #{_lambda_.11} parent=63 // pred_check
          %p441 = pneg %p205
        $region78: #{_lambda_.11} parent=63 // pred_check_branch
          %443 = sbr.rel (%p441) target = $region80
        $region79: #{_lambda_.11} parent=63 // pred_region
          %445 = dma.done [#allocation8], 512
        $region80: #{_lambda_.11} parent=63 // pred_fallthru
          _
        // Predicated region
        $region81: #{_lambda_.11} parent=63 // pred_check
          %p446 = pneg %p247
        $region82: #{_lambda_.11} parent=63 // pred_check_branch
          %448 = sbr.rel (%p446) target = $region84
        $region83: #{_lambda_.11} parent=63 // pred_region
          %450 = dma.done [#allocation8], 512
        $region84: #{_lambda_.11} parent=63 // pred_fallthru
          _
        %p451 = scmp.lt.s32.totalorder %s27, 1
        %s452 = scalar_select %p451, %s27, 1
        %s453 = smul.addr %s452, 8
        %s454 = scalar_lea.vmem %s0, %s453
        %p455 = pneg %p48
        %p456 = pneg %p45
        %s457 = sand.u32 %s61, 1
        %s458 = scalar_lea.sflag [#allocation3], %s457
        %s459 = sand.u32 %s61, 1
        %s460 = smul.addr %s459, 16
        %s461 = scalar_lea.vmem [#allocation2], %s460
        %p462 = pneg %p74
        %p463 = pneg %p71
        %p464 = scmp.lt.s32.totalorder %s27, 1
        %s465 = scalar_select %p464, %s27, 1
        %s466 = scalar_lea.vmem %s2, %s465
        %p467 = pneg %p100
        %p468 = pneg %p97
        %p469 = pneg %p121
        %p470 = pneg %p118
        %p471 = pneg %p142
        %p472 = pneg %p139
        %p473 = pneg %p163
        %p474 = pneg %p160
        %p475 = pneg %p184
        %p476 = pneg %p181
        %p477 = pneg %p205
        %p478 = pneg %p202
        %p479 = pneg %p226
        %p480 = pneg %p223
        %p481 = pneg %p247
        %p482 = pneg %p244
        %p483 = pneg %p268
        %p484 = pneg %p265
        %p485 = pneg %p294
        %p486 = pneg %p291
        %p487 = scmp.lt.s32.totalorder %s27, 1
        %s488 = scalar_select %p487, %s27, 1
        %s489 = smul.addr %s488, 8
        %s490 = scalar_lea.vmem %s11, %s489
        %p491 = scmp.lt.s32.totalorder %s27, 1
        %s492 = scalar_select %p491, %s27, 1
        %s493 = smul.addr %s492, 8
        %s494 = scalar_lea.vmem %s0, %s493
        %p495 = scmp.lt.s32.totalorder %s27, 1
        %s496 = scalar_select %p495, %s27, 1
        %s497 = scalar_lea.vmem %s2, %s496
        %p498 = scmp.lt.s32.totalorder %s27, 1
        %s499 = scalar_select %p498, %s27, 1
        %s500 = smul.addr %s499, 8
        %s501 = scalar_lea.vmem %s11, %s500
        %v502 = vld [vmem:[%s494] sm:$0xff]
        %v503 = vld [vmem:[%s3] sm:$0x1]
        %v504 = vld [vmem:[#allocation4] sm:$0x1]
        %vm505 = vcmask 261120
        %v506 = vsel %vm505, %v502, 0.0
        %507 = vadd.xlane.f32.xlu0 %v506
        %v508 = vpop.xlane.xlu0 %507
        %v509 = vrcp.pop 32.0
        %v510 = vmul.f32 32.0, %v509
        %v511 = vsub.f32 1.0, %v510
        %v512 = vmul.f32 %v509, %v511
        %v513 = vadd.f32 %v509, %v512
        %vm514 = vweird.f32 %v509
        %v515 = vsel %vm514, %v509, %v513
        %v516 = vmul.f32 %v508, %v515
        %v517 = vsub.f32 %v502, %v516
        %v518 = vmul.f32 %v517, %v517
        %v519 = vsel %vm505, %v518, 0.0
        %520 = vadd.xlane.f32.xlu0 %v519
        %v521 = vpop.xlane.xlu0 %520
        %v522 = vmul.f32 %v521, 0.032258064
        %v523 = vrsqrt.pop %v522
        %v524 = vmul.f32 %v523, %v522
        %v525 = vmul.f32 %v524, %v523
        %v526 = vmul.f32 0.5, %v525
        %v527 = vsub.f32 1.5, %v526
        %v528 = vmul.f32 %v523, %v527
        %v529 = vmul.f32 %v522, %v528
        %vm530 = vcmp.eq.f32.partialorder %v522, inf
        %v531 = vsel %vm530, %v522, %v529
        %vm532 = vcmp.eq.f32.partialorder %v522, 0.0
        %v533 = vand.u32 %v522, 2147483648
        %v534 = vsel %vm532, %v533, %v531
        %v535 = vadd.f32 %v534, 1e-06
        %v536 = vrcp.pop %v535
        %v537 = vmul.f32 %v535, %v536
        %v538 = vsub.f32 1.0, %v537
        %v539 = vmul.f32 %v536, %v538
        %v540 = vadd.f32 %v536, %v539
        %vm541 = vweird.f32 %v535
        %vm542 = vweird.f32 %v536
        %vm543 = vmor %vm541, %vm542
        %v544 = vsel %vm543, %v536, %v540
        %v545 = vand.u32 2147483647, %v535
        %vm546 = vcmp.eq.f32.partialorder %v545, 8.507059e+37
        %v547 = vand.u32 %v535, 2147483648
        %v548 = vor.u32 1.1754944e-38, %v547
        %v549 = vsel %vm546, %v548, %v544
        %v551 = vperm.slane %v503, 0
        %v553 = vmul.f32 %v551, %v517
        %v554 = vmul.f32 %v553, %v549
        %v556 = vperm.slane %v504, 0
        %v558 = vadd.f32 %v554, %v556
        %v559 = vld [vmem:[#allocation6] sm:$0xff]
        %v560 = vld [vmem:[#allocation6 + $0x8] sm:$0xff]
        %v561 = vld [vmem:[#allocation6 + $0x10] sm:$0xff]
        %v562 = vld [vmem:[#allocation6 + $0x18] sm:$0xff]
        %v563 = vld [vmem:[%s6] sm:$0x1]
        %v565 = vperm.slane %v563, 0
        %v568 = vsel %vm505, %v558, 0
        %570 = vmatpush.msra.mxu0 0.0
        %571 = vmatpush.msra.mxu0 0.0
        %572 = vmatpush.msra.mxu0 0.0
        %573 = vmatpush.msra.mxu0 0.0
        %574 = vmatpush.msra.mxu0 0.0
        %575 = vmatpush.msra.mxu0 0.0
        %576 = vmatpush.msra.mxu0 0.0
        %577 = vmatpush.msra.mxu0 0.0
        %578 = vmatpush.msra.mxu0 0.0
        %579 = vmatpush.msra.mxu0 0.0
        %580 = vmatpush.msra.mxu0 0.0
        %581 = vmatpush.msra.mxu0 0.0
        %582 = vmatpush.msra.mxu0 %v562
        %583 = vmatpush.msra.mxu0 %v561
        %584 = vmatpush.msra.mxu0 %v560
        %585 = vmatpush.msra.mxu0 %v559
        %586 = vmatmul.f32.gmra.mxu0 %v568
        %v587 = vpop.f32.mrf.mxu0
        %v588 = vadd.f32 %v565, %v587
        %589 = vdwg.mxu0
        %v590 = vld [vmem:[%s425] sm:$0xff]
        %v591 = vld [vmem:[%s425 + $0x8] sm:$0xff]
        %v592 = vld [vmem:[#allocation7] sm:$0xff]
        %v593 = vld [vmem:[#allocation7 + $0x8] sm:$0xff]
        %v594 = vld [vmem:[#allocation7 + $0x10] sm:$0xff]
        %v595 = vld [vmem:[#allocation7 + $0x18] sm:$0xff]
        %v596 = vld [vmem:[%s8] sm:$0x1]
        %v598 = vperm.slane %v596, 0
        %v601 = vsel %vm505, %v590, 0
        %v604 = vsel %vm505, %v591, 0
        %606 = vmatpush.msra.mxu0 0.0
        %607 = vmatpush.msra.mxu0 0.0
        %608 = vmatpush.msra.mxu0 0.0
        %609 = vmatpush.msra.mxu0 0.0
        %610 = vmatpush.msra.mxu0 0.0
        %611 = vmatpush.msra.mxu0 0.0
        %612 = vmatpush.msra.mxu0 0.0
        %613 = vmatpush.msra.mxu0 0.0
        %614 = vmatpush.msra.mxu0 0.0
        %615 = vmatpush.msra.mxu0 0.0
        %616 = vmatpush.msra.mxu0 0.0
        %617 = vmatpush.msra.mxu0 0.0
        %618 = vmatpush.msra.mxu0 %v595
        %619 = vmatpush.msra.mxu0 %v594
        %620 = vmatpush.msra.mxu0 %v593
        %621 = vmatpush.msra.mxu0 %v592
        %622 = vmatmul.f32.gmra.mxu0 %v601
        %v623 = vpop.f32.mrf.mxu0
        %v624 = vadd.f32 %v598, %v623
        %625 = vmatmul.f32.gmra.mxu0 %v604
        %v626 = vpop.f32.mrf.mxu0
        %v627 = vadd.f32 %v598, %v626
        %628 = vdwg.mxu0
        %v629 = vld [vmem:[%s497] sm:$0x1]
        %v630 = vld [vmem:[#allocation9] sm:$0xff]
        %v631 = vld [vmem:[#allocation9 + $0x8] sm:$0xff]
        %v632 = vld [vmem:[#allocation9 + $0x10] sm:$0xff]
        %v633 = vld [vmem:[#allocation9 + $0x18] sm:$0xff]
        %vm634 = vcmask 64512
        %v636 = vsel %vm634, %v588, 0
        %v639 = vsel %vm634, %v624, 0
        %v642 = vsel %vm634, %v627, 0
        %644 = vmatpush.xpose.msra.mxu0 0.0
        %645 = vmatpush.xpose.msra.mxu0 0.0
        %646 = vmatpush.xpose.msra.mxu0 0.0
        %647 = vmatpush.xpose.msra.mxu0 0.0
        %648 = vmatpush.xpose.msra.mxu0 0.0
        %649 = vmatpush.xpose.msra.mxu0 0.0
        %650 = vmatpush.xpose.msra.mxu0 0.0
        %651 = vmatpush.xpose.msra.mxu0 0.0
        %652 = vmatpush.xpose.msra.mxu0 0.0
        %653 = vmatpush.xpose.msra.mxu0 0.0
        %654 = vmatpush.xpose.msra.mxu0 0.0
        %655 = vmatpush.xpose.msra.mxu0 0.0
        %656 = vmatpush.xpose.msra.mxu0 0.0
        %657 = vmatpush.xpose.msra.mxu0 0.0
        %658 = vmatpush.xpose.msra.mxu0 %v642
        %659 = vmatpush.xpose.msra.mxu0 %v639
        %660 = vmatmul.f32.gmra.mxu0 %v636
        %v661 = vpop.f32.mrf.mxu0
        %v662 = vadd.f32 0.0, %v661
        %663 = vdwg.mxu0
        %v664 = vmul.f32 %v662, 0.35355338
        %vm665 = vcmp.eq.s32.totalorder %v629, 0
        %v666 = vsel %vm665, 1, 0
        %v667 = vperm.slane %v666, 0
        %vm668 = vcmp.eq.s32.totalorder %v667, 1
        %v669 = vsel %vm668, -1e+09, %v664
        %vm670 = vcmask 130048
        %v671 = vsel %vm670, %v669, -inf
        %672 = vmax.xlane.f32.xlu0 %v671
        %v673 = vpop.xlane.xlu0 %672
        %v674 = vsub.f32 %v669, %v673
        %v675 = vmul.f32 %v674, 1.442695
        %v676 = vpow.pop %v675
        %v677 = vsel %vm670, %v676, 0.0
        %678 = vadd.xlane.f32.xlu0 %v677
        %v679 = vpop.xlane.xlu0 %678
        %v680 = vrcp.pop %v679
        %v681 = vmul.f32 %v676, %v680
        %682 = vrot.lane.b32.xlu0 %v624, 96
        %v683 = vpop.permute.xlu0 %682
        %684 = vrot.lane.b32.xlu0 %v627, 96
        %v685 = vpop.permute.xlu0 %684
        %v689 = vsel %vm670, %v681, 0
        %691 = vmatpush.msra.mxu0 0.0
        %692 = vmatpush.msra.mxu0 0.0
        %693 = vmatpush.msra.mxu0 0.0
        %694 = vmatpush.msra.mxu0 0.0
        %695 = vmatpush.msra.mxu0 0.0
        %696 = vmatpush.msra.mxu0 0.0
        %697 = vmatpush.msra.mxu0 0.0
        %698 = vmatpush.msra.mxu0 0.0
        %699 = vmatpush.msra.mxu0 0.0
        %700 = vmatpush.msra.mxu0 0.0
        %701 = vmatpush.msra.mxu0 0.0
        %702 = vmatpush.msra.mxu0 0.0
        %703 = vmatpush.msra.mxu0 0.0
        %704 = vmatpush.msra.mxu0 0.0
        %705 = vmatpush.msra.mxu0 %v685
        %706 = vmatpush.msra.mxu0 %v683
        %707 = vmatmul.f32.gmra.mxu0 %v689
        %v708 = vpop.f32.mrf.mxu0
        %v709 = vadd.f32 0.0, %v708
        %710 = vdwg.mxu0
        %711 = vrot.lane.b32.xlu0 %v588, 120
        %v712 = vpop.permute.xlu0 %711
        %713 = vrot.lane.b32.xlu0 %v624, 120
        %v714 = vpop.permute.xlu0 %713
        %715 = vrot.lane.b32.xlu0 %v627, 120
        %v716 = vpop.permute.xlu0 %715
        %v717 = vsel %vm634, %v712, 0
        %v719 = vsel %vm634, %v714, 0
        %v721 = vsel %vm634, %v716, 0
        %723 = vmatpush.xpose.msra.mxu0 0.0
        %724 = vmatpush.xpose.msra.mxu0 0.0
        %725 = vmatpush.xpose.msra.mxu0 0.0
        %726 = vmatpush.xpose.msra.mxu0 0.0
        %727 = vmatpush.xpose.msra.mxu0 0.0
        %728 = vmatpush.xpose.msra.mxu0 0.0
        %729 = vmatpush.xpose.msra.mxu0 0.0
        %730 = vmatpush.xpose.msra.mxu0 0.0
        %731 = vmatpush.xpose.msra.mxu0 0.0
        %732 = vmatpush.xpose.msra.mxu0 0.0
        %733 = vmatpush.xpose.msra.mxu0 0.0
        %734 = vmatpush.xpose.msra.mxu0 0.0
        %735 = vmatpush.xpose.msra.mxu0 0.0
        %736 = vmatpush.xpose.msra.mxu0 0.0
        %737 = vmatpush.xpose.msra.mxu0 %v721
        %738 = vmatpush.xpose.msra.mxu0 %v719
        %739 = vmatmul.f32.gmra.mxu0 %v717
        %v740 = vpop.f32.mrf.mxu0
        %v741 = vadd.f32 0.0, %v740
        %742 = vdwg.mxu0
        %v743 = vmul.f32 %v741, 0.35355338
        %v744 = vsel %vm668, -1e+09, %v743
        %v745 = vsel %vm670, %v744, -inf
        %746 = vmax.xlane.f32.xlu0 %v745
        %v747 = vpop.xlane.xlu0 %746
        %v748 = vsub.f32 %v744, %v747
        %v749 = vmul.f32 %v748, 1.442695
        %v750 = vpow.pop %v749
        %v751 = vsel %vm670, %v750, 0.0
        %752 = vadd.xlane.f32.xlu0 %v751
        %v753 = vpop.xlane.xlu0 %752
        %v754 = vrcp.pop %v753
        %v755 = vmul.f32 %v750, %v754
        %756 = vrot.lane.b32.xlu0 %v624, 88
        %v757 = vpop.permute.xlu0 %756
        %758 = vrot.lane.b32.xlu0 %v627, 88
        %v759 = vpop.permute.xlu0 %758
        %v763 = vsel %vm670, %v755, 0
        %765 = vmatpush.msra.mxu0 0.0
        %766 = vmatpush.msra.mxu0 0.0
        %767 = vmatpush.msra.mxu0 0.0
        %768 = vmatpush.msra.mxu0 0.0
        %769 = vmatpush.msra.mxu0 0.0
        %770 = vmatpush.msra.mxu0 0.0
        %771 = vmatpush.msra.mxu0 0.0
        %772 = vmatpush.msra.mxu0 0.0
        %773 = vmatpush.msra.mxu0 0.0
        %774 = vmatpush.msra.mxu0 0.0
        %775 = vmatpush.msra.mxu0 0.0
        %776 = vmatpush.msra.mxu0 0.0
        %777 = vmatpush.msra.mxu0 0.0
        %778 = vmatpush.msra.mxu0 0.0
        %779 = vmatpush.msra.mxu0 %v759
        %780 = vmatpush.msra.mxu0 %v757
        %781 = vmatmul.f32.gmra.mxu0 %v763
        %v782 = vpop.f32.mrf.mxu0
        %v783 = vadd.f32 0.0, %v782
        %784 = vdwg.mxu0
        %v786 = vsel %vm634, %v783, 0
        %788 = vmatpush.msra.mxu0 0.0
        %789 = vmatpush.msra.mxu0 0.0
        %790 = vmatpush.msra.mxu0 0.0
        %791 = vmatpush.msra.mxu0 0.0
        %792 = vmatpush.msra.mxu0 0.0
        %793 = vmatpush.msra.mxu0 0.0
        %794 = vmatpush.msra.mxu0 0.0
        %795 = vmatpush.msra.mxu0 0.0
        %796 = vmatpush.msra.mxu0 0.0
        %797 = vmatpush.msra.mxu0 0.0
        %798 = vmatpush.msra.mxu0 0.0
        %799 = vmatpush.msra.mxu0 0.0
        %800 = vmatpush.msra.mxu0 0.0
        %801 = vmatpush.msra.mxu0 0.0
        %802 = vmatpush.msra.mxu0 0.0
        %803 = vmatpush.msra.mxu0 %v631
        %804 = vmatmul.f32.gmra.mxu0 %v786
        %v805 = vpop.f32.mrf.mxu0
        %v806 = vadd.f32 0.0, %v805
        %807 = vdwg.mxu0
        %v809 = vsel %vm634, %v709, 0
        %811 = vmatpush.msra.mxu0 0.0
        %812 = vmatpush.msra.mxu0 0.0
        %813 = vmatpush.msra.mxu0 0.0
        %814 = vmatpush.msra.mxu0 0.0
        %815 = vmatpush.msra.mxu0 0.0
        %816 = vmatpush.msra.mxu0 0.0
        %817 = vmatpush.msra.mxu0 0.0
        %818 = vmatpush.msra.mxu0 0.0
        %819 = vmatpush.msra.mxu0 0.0
        %820 = vmatpush.msra.mxu0 0.0
        %821 = vmatpush.msra.mxu0 0.0
        %822 = vmatpush.msra.mxu0 0.0
        %823 = vmatpush.msra.mxu0 0.0
        %824 = vmatpush.msra.mxu0 0.0
        %825 = vmatpush.msra.mxu0 0.0
        %826 = vmatpush.msra.mxu0 %v630
        %827 = vmatmul.f32.gmra.mxu0 %v809
        %v828 = vpop.f32.mrf.mxu0
        %v829 = vadd.f32 %v806, %v828
        %830 = vdwg.mxu0
        %831 = vrot.lane.b32.xlu0 %v588, 112
        %v832 = vpop.permute.xlu0 %831
        %833 = vrot.lane.b32.xlu0 %v624, 112
        %v834 = vpop.permute.xlu0 %833
        %835 = vrot.lane.b32.xlu0 %v627, 112
        %v836 = vpop.permute.xlu0 %835
        %v837 = vsel %vm634, %v832, 0
        %v839 = vsel %vm634, %v834, 0
        %v841 = vsel %vm634, %v836, 0
        %843 = vmatpush.xpose.msra.mxu0 0.0
        %844 = vmatpush.xpose.msra.mxu0 0.0
        %845 = vmatpush.xpose.msra.mxu0 0.0
        %846 = vmatpush.xpose.msra.mxu0 0.0
        %847 = vmatpush.xpose.msra.mxu0 0.0
        %848 = vmatpush.xpose.msra.mxu0 0.0
        %849 = vmatpush.xpose.msra.mxu0 0.0
        %850 = vmatpush.xpose.msra.mxu0 0.0
        %851 = vmatpush.xpose.msra.mxu0 0.0
        %852 = vmatpush.xpose.msra.mxu0 0.0
        %853 = vmatpush.xpose.msra.mxu0 0.0
        %854 = vmatpush.xpose.msra.mxu0 0.0
        %855 = vmatpush.xpose.msra.mxu0 0.0
        %856 = vmatpush.xpose.msra.mxu0 0.0
        %857 = vmatpush.xpose.msra.mxu0 %v841
        %858 = vmatpush.xpose.msra.mxu0 %v839
        %859 = vmatmul.f32.gmra.mxu0 %v837
        %v860 = vpop.f32.mrf.mxu0
        %v861 = vadd.f32 0.0, %v860
        %862 = vdwg.mxu0
        %v863 = vmul.f32 %v861, 0.35355338
        %v864 = vsel %vm668, -1e+09, %v863
        %v865 = vsel %vm670, %v864, -inf
        %866 = vmax.xlane.f32.xlu0 %v865
        %v867 = vpop.xlane.xlu0 %866
        %v868 = vsub.f32 %v864, %v867
        %v869 = vmul.f32 %v868, 1.442695
        %v870 = vpow.pop %v869
        %v871 = vsel %vm670, %v870, 0.0
        %872 = vadd.xlane.f32.xlu0 %v871
        %v873 = vpop.xlane.xlu0 %872
        %v874 = vrcp.pop %v873
        %v875 = vmul.f32 %v870, %v874
        %876 = vrot.lane.b32.xlu0 %v624, 80
        %v877 = vpop.permute.xlu0 %876
        %878 = vrot.lane.b32.xlu0 %v627, 80
        %v879 = vpop.permute.xlu0 %878
        %v883 = vsel %vm670, %v875, 0
        %885 = vmatpush.msra.mxu0 0.0
        %886 = vmatpush.msra.mxu0 0.0
        %887 = vmatpush.msra.mxu0 0.0
        %888 = vmatpush.msra.mxu0 0.0
        %889 = vmatpush.msra.mxu0 0.0
        %890 = vmatpush.msra.mxu0 0.0
        %891 = vmatpush.msra.mxu0 0.0
        %892 = vmatpush.msra.mxu0 0.0
        %893 = vmatpush.msra.mxu0 0.0
        %894 = vmatpush.msra.mxu0 0.0
        %895 = vmatpush.msra.mxu0 0.0
        %896 = vmatpush.msra.mxu0 0.0
        %897 = vmatpush.msra.mxu0 0.0
        %898 = vmatpush.msra.mxu0 0.0
        %899 = vmatpush.msra.mxu0 %v879
        %900 = vmatpush.msra.mxu0 %v877
        %901 = vmatmul.f32.gmra.mxu0 %v883
        %v902 = vpop.f32.mrf.mxu0
        %v903 = vadd.f32 0.0, %v902
        %904 = vdwg.mxu0
        %v906 = vsel %vm634, %v903, 0
        %908 = vmatpush.msra.mxu0 0.0
        %909 = vmatpush.msra.mxu0 0.0
        %910 = vmatpush.msra.mxu0 0.0
        %911 = vmatpush.msra.mxu0 0.0
        %912 = vmatpush.msra.mxu0 0.0
        %913 = vmatpush.msra.mxu0 0.0
        %914 = vmatpush.msra.mxu0 0.0
        %915 = vmatpush.msra.mxu0 0.0
        %916 = vmatpush.msra.mxu0 0.0
        %917 = vmatpush.msra.mxu0 0.0
        %918 = vmatpush.msra.mxu0 0.0
        %919 = vmatpush.msra.mxu0 0.0
        %920 = vmatpush.msra.mxu0 0.0
        %921 = vmatpush.msra.mxu0 0.0
        %922 = vmatpush.msra.mxu0 0.0
        %923 = vmatpush.msra.mxu0 %v632
        %924 = vmatmul.f32.gmra.mxu0 %v906
        %v925 = vpop.f32.mrf.mxu0
        %v926 = vadd.f32 0.0, %v925
        %927 = vdwg.mxu0
        %v928 = vadd.f32 %v829, %v926
        %929 = vrot.lane.b32.xlu0 %v588, 104
        %v930 = vpop.permute.xlu0 %929
        %931 = vrot.lane.b32.xlu0 %v624, 104
        %v932 = vpop.permute.xlu0 %931
        %933 = vrot.lane.b32.xlu0 %v627, 104
        %v934 = vpop.permute.xlu0 %933
        %v935 = vsel %vm634, %v930, 0
        %v937 = vsel %vm634, %v932, 0
        %v939 = vsel %vm634, %v934, 0
        %941 = vmatpush.xpose.msra.mxu0 0.0
        %942 = vmatpush.xpose.msra.mxu0 0.0
        %943 = vmatpush.xpose.msra.mxu0 0.0
        %944 = vmatpush.xpose.msra.mxu0 0.0
        %945 = vmatpush.xpose.msra.mxu0 0.0
        %946 = vmatpush.xpose.msra.mxu0 0.0
        %947 = vmatpush.xpose.msra.mxu0 0.0
        %948 = vmatpush.xpose.msra.mxu0 0.0
        %949 = vmatpush.xpose.msra.mxu0 0.0
        %950 = vmatpush.xpose.msra.mxu0 0.0
        %951 = vmatpush.xpose.msra.mxu0 0.0
        %952 = vmatpush.xpose.msra.mxu0 0.0
        %953 = vmatpush.xpose.msra.mxu0 0.0
        %954 = vmatpush.xpose.msra.mxu0 0.0
        %955 = vmatpush.xpose.msra.mxu0 %v939
        %956 = vmatpush.xpose.msra.mxu0 %v937
        %957 = vmatmul.f32.gmra.mxu0 %v935
        %v958 = vpop.f32.mrf.mxu0
        %v959 = vadd.f32 0.0, %v958
        %960 = vdwg.mxu0
        %v961 = vmul.f32 %v959, 0.35355338
        %v962 = vsel %vm668, -1e+09, %v961
        %v963 = vsel %vm670, %v962, -inf
        %964 = vmax.xlane.f32.xlu0 %v963
        %v965 = vpop.xlane.xlu0 %964
        %v966 = vsub.f32 %v962, %v965
        %v967 = vmul.f32 %v966, 1.442695
        %v968 = vpow.pop %v967
        %v969 = vsel %vm670, %v968, 0.0
        %970 = vadd.xlane.f32.xlu0 %v969
        %v971 = vpop.xlane.xlu0 %970
        %v972 = vrcp.pop %v971
        %v973 = vmul.f32 %v968, %v972
        %974 = vrot.lane.b32.xlu0 %v624, 72
        %v975 = vpop.permute.xlu0 %974
        %976 = vrot.lane.b32.xlu0 %v627, 72
        %v977 = vpop.permute.xlu0 %976
        %v981 = vsel %vm670, %v973, 0
        %983 = vmatpush.msra.mxu0 0.0
        %984 = vmatpush.msra.mxu0 0.0
        %985 = vmatpush.msra.mxu0 0.0
        %986 = vmatpush.msra.mxu0 0.0
        %987 = vmatpush.msra.mxu0 0.0
        %988 = vmatpush.msra.mxu0 0.0
        %989 = vmatpush.msra.mxu0 0.0
        %990 = vmatpush.msra.mxu0 0.0
        %991 = vmatpush.msra.mxu0 0.0
        %992 = vmatpush.msra.mxu0 0.0
        %993 = vmatpush.msra.mxu0 0.0
        %994 = vmatpush.msra.mxu0 0.0
        %995 = vmatpush.msra.mxu0 0.0
        %996 = vmatpush.msra.mxu0 0.0
        %997 = vmatpush.msra.mxu0 %v977
        %998 = vmatpush.msra.mxu0 %v975
        %999 = vmatmul.f32.gmra.mxu0 %v981
        %v1000 = vpop.f32.mrf.mxu0
        %v1001 = vadd.f32 0.0, %v1000
        %1002 = vdwg.mxu0
        %v1004 = vsel %vm634, %v1001, 0
        %1006 = vmatpush.msra.mxu0 0.0
        %1007 = vmatpush.msra.mxu0 0.0
        %1008 = vmatpush.msra.mxu0 0.0
        %1009 = vmatpush.msra.mxu0 0.0
        %1010 = vmatpush.msra.mxu0 0.0
        %1011 = vmatpush.msra.mxu0 0.0
        %1012 = vmatpush.msra.mxu0 0.0
        %1013 = vmatpush.msra.mxu0 0.0
        %1014 = vmatpush.msra.mxu0 0.0
        %1015 = vmatpush.msra.mxu0 0.0
        %1016 = vmatpush.msra.mxu0 0.0
        %1017 = vmatpush.msra.mxu0 0.0
        %1018 = vmatpush.msra.mxu0 0.0
        %1019 = vmatpush.msra.mxu0 0.0
        %1020 = vmatpush.msra.mxu0 0.0
        %1021 = vmatpush.msra.mxu0 %v633
        %1022 = vmatmul.f32.gmra.mxu0 %v1004
        %v1023 = vpop.f32.mrf.mxu0
        %v1024 = vadd.f32 0.0, %v1023
        %1025 = vdwg.mxu0
        %v1026 = vadd.f32 %v928, %v1024
        %v1027 = vadd.f32 %v502, %v1026
        %v1028 = vld [vmem:[%s10] sm:$0x1]
        %v1030 = vperm.slane %v1028, 0
        %v1032 = vadd.f32 %v1027, %v1030
        %1033 = vst.msk [vmem:[%s501] sm:$0xff] %vm505, %v1032
        %p1034 = scmp.lt.s32.totalorder %s27, 1
        %s1035 = scalar_select %p1034, %s27, 1
        %s1036 = smul.addr %s1035, 8
        %s1037 = scalar_lea.vmem %s11, %s1036
        // Predicated region
        $region85: #{_lambda_.11} parent=63 // pred_check
          %p1038 = pneg %p291
        $region86: #{_lambda_.11} parent=63 // pred_check_branch
          %1040 = sbr.rel (%p1038) target = $region88
        $region87: #{_lambda_.11} parent=63 // pred_region
          _
        $region88: #{_lambda_.11} parent=63 // pred_fallthru
          _
      $region64: #{_lambda_.11} parent=5 // pred_fallthru
        _
      %p1041 = scmp.le.s32.totalorder 2, %s22
      // Predicated region
      $region89: #{_lambda_.11} parent=5 // pred_check
        %p1042 = pneg %p1041
      $region90: #{_lambda_.11} parent=5 // pred_check_branch
        %1044 = sbr.rel (%p1042) target = $region92
      $region91: #{_lambda_.11} parent=5 // pred_region
        %s1045 = ssub.s32 %s22, 2
        // Predicated region
        $region93: #{_lambda_.11} parent=91 // pred_check
          %p1046 = pneg %p297
        $region94: #{_lambda_.11} parent=91 // pred_check_branch
          %1048 = sbr.rel (%p1046) target = $region96
        $region95: #{_lambda_.11} parent=91 // pred_region
          %p1049 = scmp.lt.s32.totalorder %s28, 1
          %s1050 = scalar_select %p1049, %s28, 1
          %s1051 = smul.addr %s1050, 8
          %s1052 = scalar_lea.vmem %s11, %s1051
        $region96: #{_lambda_.11} parent=91 // pred_fallthru
          _
      $region92: #{_lambda_.11} parent=5 // pred_fallthru
        _
    $region6: #{_lambda_.11} parent=1 // loop_footer
      %s26 = sadd.s32 1, %s22
    $region7: #{_lambda_.11} parent=1 // loop_footer_branch
      %21 = sbr.rel target = $region3
    $region8: #{_lambda_.11} parent=1 // loop_exit
      _
    %1053 = vsyncpa [#allocation3], 1
    %s1054 = scalar_lea.sflag [#allocation3], 1
    %1055 = vsyncpa %s1054, 1
    %1056 = vsyncpa [#allocation5], 1
    %1057 = vsyncpa [#allocation8], 1

</llo_original>
